<compile_context>
chip_gen: v5e
topology: v5e:2x2
jax: 0.10.0
libtpu: 0.0.40
codegen_flags: <defaults>
</compile_context>

<pallas_src>
import functools

import jax
import jax.numpy as jnp
from jax.experimental import pallas as pl
from jax.experimental.pallas import tpu as pltpu


# ----------------------------------------------------------------------------
# Pallas kernel 1: fused GEMM + bias + activation (used by every convT layer)
# ----------------------------------------------------------------------------
def _gemm_bias_act_kernel(x_ref, w_ref, b_ref, o_ref, *, activation):
    acc = jnp.dot(x_ref[...], w_ref[...], preferred_element_type=jnp.float32)
    acc = acc + b_ref[...]
    if activation == "relu":
        acc = jnp.maximum(acc, 0.0)
    elif activation == "sigmoid":
        acc = jax.nn.sigmoid(acc)
    o_ref[...] = acc.astype(o_ref.dtype)


def fused_gemm(x, w, b, activation="none"):
    """act(x @ w + b); x:(M,K) bf16, w:(K,N) bf16, b:(N,) f32, N % 128 == 0."""
    M, K = x.shape
    K2, N = w.shape
    assert K == K2 and N % 128 == 0, (K, K2, N)
    # >=2 grid steps for the larger layers (keeps both v7x TensorCores busy),
    # single step for the tiny ones.  tm is always a multiple of 16 (bf16 tile).
    if M >= 256 and M % 16 == 0:
        tm = min(M // 2, 1024)
    else:
        tm = M
    assert M % tm == 0, (M, tm)
    grid = (M // tm,)
    kern = functools.partial(_gemm_bias_act_kernel, activation=activation)
    return pl.pallas_call(
        kern,
        out_shape=jax.ShapeDtypeStruct((M, N), jnp.float32),
        grid_spec=pltpu.PrefetchScalarGridSpec(
            num_scalar_prefetch=0,
            grid=grid,
            in_specs=[
                pl.BlockSpec((tm, K), lambda i: (i, 0)),
                pl.BlockSpec((K, N), lambda i: (0, 0)),   # weight stays resident
                pl.BlockSpec((1, N), lambda i: (0, 0)),
            ],
            out_specs=pl.BlockSpec((tm, N), lambda i: (i, 0)),
        ),
        compiler_params=pltpu.CompilerParams(
            dimension_semantics=("parallel",)),
    )(x, w, b.reshape(1, N).astype(jnp.float32))


# ----------------------------------------------------------------------------
# Pallas kernel 2: fused decoder MLP (lin1 -> relu -> lin2 -> relu -> lin3 -> relu)
# ----------------------------------------------------------------------------
def _decoder_mlp_kernel(z_ref, w1_ref, b1_ref, w2_ref, b2_ref, w3_ref, b3_ref,
                        o_ref):
    h = jnp.dot(z_ref[...], w1_ref[...], preferred_element_type=jnp.float32)
    h = jnp.maximum(h + b1_ref[...], 0.0)
    h = jnp.dot(h, w2_ref[...], preferred_element_type=jnp.float32)
    h = jnp.maximum(h + b2_ref[...], 0.0)
    h = jnp.dot(h, w3_ref[...], preferred_element_type=jnp.float32)
    h = jnp.maximum(h + b3_ref[...], 0.0)
    o_ref[...] = h


def _full2d(shape):
    return pl.BlockSpec(shape, lambda i: (0, 0))


def decoder_mlp(z, p1, p2, p3):
    """z:(B,L) -> relu(lin3(relu(lin2(relu(lin1(z)))))) in one pallas_call."""
    B = z.shape[0]
    d1, d2, d3 = p1["w"].shape[0], p2["w"].shape[0], p3["w"].shape[0]
    args = (
        z.astype(jnp.float32),
        p1["w"].T.astype(jnp.float32), p1["b"].reshape(1, d1).astype(jnp.float32),
        p2["w"].T.astype(jnp.float32), p2["b"].reshape(1, d2).astype(jnp.float32),
        p3["w"].T.astype(jnp.float32), p3["b"].reshape(1, d3).astype(jnp.float32),
    )
    return pl.pallas_call(
        _decoder_mlp_kernel,
        out_shape=jax.ShapeDtypeStruct((B, d3), jnp.float32),
        grid_spec=pltpu.PrefetchScalarGridSpec(
            num_scalar_prefetch=0,
            grid=(1,),
            in_specs=[_full2d(a.shape) for a in args],
            out_specs=_full2d((B, d3)),
        ),
    )(*args)


# ----------------------------------------------------------------------------
# ConvTranspose2d(kernel=4, stride=2, padding=1) via sub-pixel phase GEMM
# ----------------------------------------------------------------------------
# For output row oy = 2q + py (py = parity phase):
#   py=0 uses input rows {q-1, q} with kernel taps {ky=3, ky=1}
#   py=1 uses input rows {q, q+1} with kernel taps {ky=2, ky=0}
# A 3x3 patch of the once-padded input (rows q-1, q, q+1) therefore covers all
# four (py, px) phases; tap index 4 below points at an appended zero tap.
_TAP = ((3, 1, 4), (4, 2, 0))  # [phase][patch_offset] -> kernel index (4 == 0)


def _convT_phase_weight(w):
    """w: (Cin, Cout, 4, 4) PyTorch ConvTranspose2d -> (9*Cin, 4*Cout)."""
    Cin, Cout = w.shape[0], w.shape[1]
    wk = jnp.pad(w, ((0, 0), (0, 0), (0, 1), (0, 1)))      # tap 4 is all-zero
    kidx = jnp.array(_TAP, dtype=jnp.int32)                # (phase, offset)
    # wc[ci, co, py, dy, px, dx] = wk[ci, co, kidx[py,dy], kidx[px,dx]]
    wc = wk[:, :, kidx[:, :, None, None], kidx[None, None, :, :]]
    wc = wc.transpose(3, 5, 0, 2, 4, 1)                    # (dy,dx,ci,py,px,co)
    return wc.reshape(9 * Cin, 4 * Cout)


def _im2col_3x3(x):
    """x: (B,H,W,C) NHWC -> (B*H*W, 9*C) 3x3 patches of the zero-padded input."""
    B, H, W, C = x.shape
    xp = jnp.pad(x, ((0, 0), (1, 1), (1, 1), (0, 0)))
    cols = [xp[:, dy:dy + H, dx:dx + W, :] for dy in range(3) for dx in range(3)]
    p = jnp.stack(cols, axis=3)                            # (B,H,W,9,C)
    return p.reshape(B * H * W, 9 * C)


def conv_transpose2d_s2p1(x, w, b, activation):
    """NHWC ConvTranspose2d(k=4, s=2, p=1) as a single lane-dense Pallas GEMM."""
    B, H, W, Cin = x.shape
    Cout = w.shape[1]
    n_real = 4 * Cout
    n_pad = ((n_real + 127) // 128) * 128                  # lane-dense N
    wc = _convT_phase_weight(w)                            # (9*Cin, 4*Cout)
    bc = jnp.tile(b, 4)                                    # (4*Cout,)
    if n_pad != n_real:
        wc = jnp.pad(wc, ((0, 0), (0, n_pad - n_real)))
        bc = jnp.pad(bc, (0, n_pad - n_real))
    patches = _im2col_3x3(x.astype(jnp.bfloat16))          # (B*H*W, 9*Cin) bf16
    y = fused_gemm(patches, wc.astype(jnp.bfloat16), bc, activation)
    y = y[:, :n_real].reshape(B, H, W, 2, 2, Cout)         # (..., py, px, co)
    y = y.transpose(0, 1, 3, 2, 4, 5).reshape(B, 2 * H, 2 * W, Cout)
    return y


# ----------------------------------------------------------------------------
# Parameters (shapes / init convention match the PyTorch module)
# ----------------------------------------------------------------------------
def _uniform(key, shape, fan_in):
    bound = 1.0 / jnp.sqrt(float(fan_in))
    return jax.random.uniform(key, shape, jnp.float32, -bound, bound)


def init_params(key, n_latents=8):
    hid, k, hdim, n_chan = 32, 4, 256, 3
    flat = hid * k * k                                     # 512
    keys = iter(jax.random.split(key, 32))

    def lin_p(din, dout):
        return {"w": _uniform(next(keys), (dout, din), din),
                "b": _uniform(next(keys), (dout,), din)}

    def convT_p(cin, cout):
        fan = cin * k * k
        return {"w": _uniform(next(keys), (cin, cout, k, k), fan),
                "b": _uniform(next(keys), (cout,), fan)}

    return {
        "lin1": lin_p(n_latents, hdim),
        "lin2": lin_p(hdim, hdim),
        "lin3": lin_p(hdim, flat),
        "convT_128": convT_p(hid, hid),
        "convT1": convT_p(hid, hid),
        "convT2": convT_p(hid, hid),
        "convT3": convT_p(hid, n_chan),
    }


# ----------------------------------------------------------------------------
# ImageDecoder64 forward
# ----------------------------------------------------------------------------
def image_decoder64(params, z):
    B = z.shape[0]
    h = decoder_mlp(z, params["lin1"], params["lin2"], params["lin3"])  # (B,512)
    # PyTorch view(B, 32, 4, 4) is NCHW; convert once to NHWC and stay there.
    x = h.reshape(B, 32, 4, 4).transpose(0, 2, 3, 1)                    # (B,4,4,32)
    x = conv_transpose2d_s2p1(x, params["convT_128"]["w"],
                              params["convT_128"]["b"], "relu")         # (B,8,8,32)
    x = conv_transpose2d_s2p1(x, params["convT1"]["w"],
                              params["convT1"]["b"], "relu")            # (B,16,16,32)
    x = conv_transpose2d_s2p1(x, params["convT2"]["w"],
                              params["convT2"]["b"], "relu")            # (B,32,32,32)
    x = conv_transpose2d_s2p1(x, params["convT3"]["w"],
                              params["convT3"]["b"], "sigmoid")         # (B,64,64,3)
    return x.transpose(0, 3, 1, 2)                                      # NCHW


# ----------------------------------------------------------------------------
# Pure-JAX (XLA) reference for correctness checking
# ----------------------------------------------------------------------------
def _convT_ref(x, w, b, activation):
    # x: (B,Cin,H,W) NCHW, w: (Cin,Cout,4,4); equivalent of PyTorch ConvTranspose2d
    k = w.shape[2]
    wc = jnp.flip(w, (2, 3)).transpose(1, 0, 2, 3)
    y = jax.lax.conv_general_dilated(
        x, wc, window_strides=(1, 1), padding=[(k - 2, k - 2)] * 2,
        lhs_dilation=(2, 2), dimension_numbers=("NCHW", "OIHW", "NCHW"))
    y = y + b.reshape(1, -1, 1, 1)
    return jnp.maximum(y, 0.0) if activation == "relu" else jax.nn.sigmoid(y)


def image_decoder64_ref(p, z):
    B = z.shape[0]
    h = jnp.maximum(z @ p["lin1"]["w"].T + p["lin1"]["b"], 0.0)
    h = jnp.maximum(h @ p["lin2"]["w"].T + p["lin2"]["b"], 0.0)
    h = jnp.maximum(h @ p["lin3"]["w"].T + p["lin3"]["b"], 0.0)
    x = h.reshape(B, 32, 4, 4)
    x = _convT_ref(x, p["convT_128"]["w"], p["convT_128"]["b"], "relu")
    x = _convT_ref(x, p["convT1"]["w"], p["convT1"]["b"], "relu")
    x = _convT_ref(x, p["convT2"]["w"], p["convT2"]["b"], "relu")
    x = _convT_ref(x, p["convT3"]["w"], p["convT3"]["b"], "sigmoid")
    return x


# ----------------------------------------------------------------------------
if __name__ == "__main__":
    n_latents = 8
    batch = 2
    key = jax.random.PRNGKey(0)
    k_params, k_z = jax.random.split(key)

    params = init_params(k_params, n_latents=n_latents)
    z = jax.random.normal(k_z, (batch, n_latents), jnp.float32)

    fwd = jax.jit(image_decoder64)
    recon = fwd(params, z)
    jax.block_until_ready(recon)

    assert recon.shape == (batch, 3, 64, 64), recon.shape
    assert bool(jnp.all(jnp.isfinite(recon)))
    assert bool(jnp.all((recon >= 0.0) & (recon <= 1.0)))   # sigmoid output

    ref = jax.jit(image_decoder64_ref)(params, z)
    jax.block_until_ready(ref)
    max_err = float(jnp.max(jnp.abs(recon - ref)))
    assert max_err < 5e-2, f"max abs error vs reference: {max_err}"

    print("KERNEL_OK")
</pallas_src>

<mosaic_0001>
module attributes {stable_mosaic.version = 11 : i64} {
  func.func @_decoder_mlp_kernel(%arg0: i32, %arg1: memref<2x8xf32, #tpu.memory_space<vmem>>, %arg2: memref<8x256xf32, #tpu.memory_space<vmem>>, %arg3: memref<1x256xf32, #tpu.memory_space<vmem>>, %arg4: memref<256x256xf32, #tpu.memory_space<vmem>>, %arg5: memref<1x256xf32, #tpu.memory_space<vmem>>, %arg6: memref<256x512xf32, #tpu.memory_space<vmem>>, %arg7: memref<1x512xf32, #tpu.memory_space<vmem>>, %arg8: memref<2x512xf32, #tpu.memory_space<vmem>>) attributes {dimension_semantics = [#tpu.dimension_semantics<arbitrary>], iteration_bounds = array<i64: 1>, scalar_prefetch = 0 : i64, scratch_operands = 0 : i64, tpu.core_type = #tpu.core_type<tc>, window_params = [{pipeline_mode = #tpu.pipeline_mode<synchronous>, transform_indices = @transform_0, window_bounds = array<i64: 2, 8>}, {pipeline_mode = #tpu.pipeline_mode<synchronous>, transform_indices = @transform_1, window_bounds = array<i64: 8, 256>}, {pipeline_mode = #tpu.pipeline_mode<synchronous>, transform_indices = @transform_2, window_bounds = array<i64: 1, 256>}, {pipeline_mode = #tpu.pipeline_mode<synchronous>, transform_indices = @transform_3, window_bounds = array<i64: 256, 256>}, {pipeline_mode = #tpu.pipeline_mode<synchronous>, transform_indices = @transform_4, window_bounds = array<i64: 1, 256>}, {pipeline_mode = #tpu.pipeline_mode<synchronous>, transform_indices = @transform_5, window_bounds = array<i64: 256, 512>}, {pipeline_mode = #tpu.pipeline_mode<synchronous>, transform_indices = @transform_6, window_bounds = array<i64: 1, 512>}, {pipeline_mode = #tpu.pipeline_mode<synchronous>, transform_indices = @transform_7, window_bounds = array<i64: 2, 512>}]} {
    %c0 = arith.constant 0 : index
    %c0_0 = arith.constant 0 : index
    %0 = vector.load %arg1[%c0, %c0_0] : memref<2x8xf32, #tpu.memory_space<vmem>>, vector<2x8xf32>
    %c0_1 = arith.constant 0 : index
    %c0_2 = arith.constant 0 : index
    %1 = vector.load %arg2[%c0_1, %c0_2] : memref<8x256xf32, #tpu.memory_space<vmem>>, vector<8x256xf32>
    %cst = arith.constant dense<0.000000e+00> : vector<2x256xf32>
    %2 = tpu.matmul %0, %1, %cst {dimension_numbers = #tpu.dot_dimension_numbers<[1], [0], [0], [1], [0, 0, 1, 1], [], []>} : vector<2x8xf32>, vector<8x256xf32>, vector<2x256xf32> -> vector<2x256xf32>
    %c0_3 = arith.constant 0 : index
    %c0_4 = arith.constant 0 : index
    %3 = vector.load %arg3[%c0_3, %c0_4] : memref<1x256xf32, #tpu.memory_space<vmem>>, vector<1x256xf32>
    %4 = vector.broadcast %3 : vector<1x256xf32> to vector<2x256xf32>
    %5 = arith.addf %2, %4 : vector<2x256xf32>
    %cst_5 = arith.constant 0.000000e+00 : f32
    %6 = vector.broadcast %cst_5 : f32 to vector<2x256xf32>
    %7 = arith.maximumf %5, %6 : vector<2x256xf32>
    %c0_6 = arith.constant 0 : index
    %c0_7 = arith.constant 0 : index
    %8 = vector.load %arg4[%c0_6, %c0_7] : memref<256x256xf32, #tpu.memory_space<vmem>>, vector<256x256xf32>
    %cst_8 = arith.constant dense<0.000000e+00> : vector<2x256xf32>
    %9 = tpu.matmul %7, %8, %cst_8 {dimension_numbers = #tpu.dot_dimension_numbers<[1], [0], [0], [1], [0, 0, 1, 1], [], []>} : vector<2x256xf32>, vector<256x256xf32>, vector<2x256xf32> -> vector<2x256xf32>
    %c0_9 = arith.constant 0 : index
    %c0_10 = arith.constant 0 : index
    %10 = vector.load %arg5[%c0_9, %c0_10] : memref<1x256xf32, #tpu.memory_space<vmem>>, vector<1x256xf32>
    %11 = vector.broadcast %10 : vector<1x256xf32> to vector<2x256xf32>
    %12 = arith.addf %9, %11 : vector<2x256xf32>
    %cst_11 = arith.constant 0.000000e+00 : f32
    %13 = vector.broadcast %cst_11 : f32 to vector<2x256xf32>
    %14 = arith.maximumf %12, %13 : vector<2x256xf32>
    %c0_12 = arith.constant 0 : index
    %c0_13 = arith.constant 0 : index
    %15 = vector.load %arg6[%c0_12, %c0_13] : memref<256x512xf32, #tpu.memory_space<vmem>>, vector<256x512xf32>
    %cst_14 = arith.constant dense<0.000000e+00> : vector<2x512xf32>
    %16 = tpu.matmul %14, %15, %cst_14 {dimension_numbers = #tpu.dot_dimension_numbers<[1], [0], [0], [1], [0, 0, 1, 1], [], []>} : vector<2x256xf32>, vector<256x512xf32>, vector<2x512xf32> -> vector<2x512xf32>
    %c0_15 = arith.constant 0 : index
    %c0_16 = arith.constant 0 : index
    %17 = vector.load %arg7[%c0_15, %c0_16] : memref<1x512xf32, #tpu.memory_space<vmem>>, vector<1x512xf32>
    %18 = vector.broadcast %17 : vector<1x512xf32> to vector<2x512xf32>
    %19 = arith.addf %16, %18 : vector<2x512xf32>
    %cst_17 = arith.constant 0.000000e+00 : f32
    %20 = vector.broadcast %cst_17 : f32 to vector<2x512xf32>
    %21 = arith.maximumf %19, %20 : vector<2x512xf32>
    %c0_18 = arith.constant 0 : index
    %c0_19 = arith.constant 0 : index
    %22 = vector.load %arg8[%c0_18, %c0_19] : memref<2x512xf32, #tpu.memory_space<vmem>>, vector<2x512xf32>
    tpu.vector_store %arg8[%c0_18, %c0_19], %21 {strides = array<i32>} : memref<2x512xf32, #tpu.memory_space<vmem>>, vector<2x512xf32>,
    return
  }
  func.func @transform_0(%arg0: i32) -> (i32, i32) {
    %c0_i32 = arith.constant 0 : i32
    %c0_i32_0 = arith.constant 0 : i32
    %c0_i32_1 = arith.constant 0 : i32
    return %c0_i32, %c0_i32_0 : i32, i32
  }
  func.func @transform_1(%arg0: i32) -> (i32, i32) {
    %c0_i32 = arith.constant 0 : i32
    %c0_i32_0 = arith.constant 0 : i32
    %c0_i32_1 = arith.constant 0 : i32
    return %c0_i32, %c0_i32_0 : i32, i32
  }
  func.func @transform_2(%arg0: i32) -> (i32, i32) {
    %c0_i32 = arith.constant 0 : i32
    %c0_i32_0 = arith.constant 0 : i32
    %c0_i32_1 = arith.constant 0 : i32
    return %c0_i32, %c0_i32_0 : i32, i32
  }
  func.func @transform_3(%arg0: i32) -> (i32, i32) {
    %c0_i32 = arith.constant 0 : i32
    %c0_i32_0 = arith.constant 0 : i32
    %c0_i32_1 = arith.constant 0 : i32
    return %c0_i32, %c0_i32_0 : i32, i32
  }
  func.func @transform_4(%arg0: i32) -> (i32, i32) {
    %c0_i32 = arith.constant 0 : i32
    %c0_i32_0 = arith.constant 0 : i32
    %c0_i32_1 = arith.constant 0 : i32
    return %c0_i32, %c0_i32_0 : i32, i32
  }
  func.func @transform_5(%arg0: i32) -> (i32, i32) {
    %c0_i32 = arith.constant 0 : i32
    %c0_i32_0 = arith.constant 0 : i32
    %c0_i32_1 = arith.constant 0 : i32
    return %c0_i32, %c0_i32_0 : i32, i32
  }
  func.func @transform_6(%arg0: i32) -> (i32, i32) {
    %c0_i32 = arith.constant 0 : i32
    %c0_i32_0 = arith.constant 0 : i32
    %c0_i32_1 = arith.constant 0 : i32
    return %c0_i32, %c0_i32_0 : i32, i32
  }
  func.func @transform_7(%arg0: i32) -> (i32, i32) {
    %c0_i32 = arith.constant 0 : i32
    %c0_i32_0 = arith.constant 0 : i32
    %c0_i32_1 = arith.constant 0 : i32
    return %c0_i32, %c0_i32_0 : i32, i32
  }
}

module attributes {stable_mosaic.version = 11 : i64} {
  func.func @_gemm_bias_act_kernel(%arg0: i32, %arg1: memref<32x288xbf16, #tpu.memory_space<vmem>>, %arg2: memref<288x128xbf16, #tpu.memory_space<vmem>>, %arg3: memref<1x128xf32, #tpu.memory_space<vmem>>, %arg4: memref<32x128xf32, #tpu.memory_space<vmem>>) attributes {dimension_semantics = [#tpu.dimension_semantics<parallel>], iteration_bounds = array<i64: 1>, scalar_prefetch = 0 : i64, scratch_operands = 0 : i64, tpu.core_type = #tpu.core_type<tc>, window_params = [{transform_indices = @transform_0, window_bounds = array<i64: 32, 288>}, {pipeline_mode = #tpu.pipeline_mode<synchronous>, transform_indices = @transform_1, window_bounds = array<i64: 288, 128>}, {pipeline_mode = #tpu.pipeline_mode<synchronous>, transform_indices = @transform_2, window_bounds = array<i64: 1, 128>}, {transform_indices = @transform_3, window_bounds = array<i64: 32, 128>}]} {
    %c0 = arith.constant 0 : index
    %c0_0 = arith.constant 0 : index
    %0 = vector.load %arg1[%c0, %c0_0] : memref<32x288xbf16, #tpu.memory_space<vmem>>, vector<32x288xbf16>
    %c0_1 = arith.constant 0 : index
    %c0_2 = arith.constant 0 : index
    %1 = vector.load %arg2[%c0_1, %c0_2] : memref<288x128xbf16, #tpu.memory_space<vmem>>, vector<288x128xbf16>
    %cst = arith.constant dense<0.000000e+00> : vector<32x128xf32>
    %2 = tpu.matmul %0, %1, %cst {dimension_numbers = #tpu.dot_dimension_numbers<[1], [0], [0], [1], [0, 0, 1, 1], [], []>} : vector<32x288xbf16>, vector<288x128xbf16>, vector<32x128xf32> -> vector<32x128xf32>
    %c0_3 = arith.constant 0 : index
    %c0_4 = arith.constant 0 : index
    %3 = vector.load %arg3[%c0_3, %c0_4] : memref<1x128xf32, #tpu.memory_space<vmem>>, vector<1x128xf32>
    %4 = vector.broadcast %3 : vector<1x128xf32> to vector<32x128xf32>
    %5 = arith.addf %2, %4 : vector<32x128xf32>
    %cst_5 = arith.constant 0.000000e+00 : f32
    %6 = vector.broadcast %cst_5 : f32 to vector<32x128xf32>
    %7 = arith.maximumf %5, %6 : vector<32x128xf32>
    %c0_6 = arith.constant 0 : index
    %c0_7 = arith.constant 0 : index
    %8 = vector.load %arg4[%c0_6, %c0_7] : memref<32x128xf32, #tpu.memory_space<vmem>>, vector<32x128xf32>
    tpu.vector_store %arg4[%c0_6, %c0_7], %7 {strides = array<i32>} : memref<32x128xf32, #tpu.memory_space<vmem>>, vector<32x128xf32>,
    return
  }
  func.func @transform_0(%arg0: i32) -> (i32, i32) {
    %c0_i32 = arith.constant 0 : i32
    %c0_i32_0 = arith.constant 0 : i32
    return %arg0, %c0_i32 : i32, i32
  }
  func.func @transform_1(%arg0: i32) -> (i32, i32) {
    %c0_i32 = arith.constant 0 : i32
    %c0_i32_0 = arith.constant 0 : i32
    %c0_i32_1 = arith.constant 0 : i32
    return %c0_i32, %c0_i32_0 : i32, i32
  }
  func.func @transform_2(%arg0: i32) -> (i32, i32) {
    %c0_i32 = arith.constant 0 : i32
    %c0_i32_0 = arith.constant 0 : i32
    %c0_i32_1 = arith.constant 0 : i32
    return %c0_i32, %c0_i32_0 : i32, i32
  }
  func.func @transform_3(%arg0: i32) -> (i32, i32) {
    %c0_i32 = arith.constant 0 : i32
    %c0_i32_0 = arith.constant 0 : i32
    return %arg0, %c0_i32 : i32, i32
  }
}

module attributes {stable_mosaic.version = 11 : i64} {
  func.func @_gemm_bias_act_kernel(%arg0: i32, %arg1: memref<128x288xbf16, #tpu.memory_space<vmem>>, %arg2: memref<288x128xbf16, #tpu.memory_space<vmem>>, %arg3: memref<1x128xf32, #tpu.memory_space<vmem>>, %arg4: memref<128x128xf32, #tpu.memory_space<vmem>>) attributes {dimension_semantics = [#tpu.dimension_semantics<parallel>], iteration_bounds = array<i64: 1>, scalar_prefetch = 0 : i64, scratch_operands = 0 : i64, tpu.core_type = #tpu.core_type<tc>, window_params = [{transform_indices = @transform_0, window_bounds = array<i64: 128, 288>}, {pipeline_mode = #tpu.pipeline_mode<synchronous>, transform_indices = @transform_1, window_bounds = array<i64: 288, 128>}, {pipeline_mode = #tpu.pipeline_mode<synchronous>, transform_indices = @transform_2, window_bounds = array<i64: 1, 128>}, {transform_indices = @transform_3, window_bounds = array<i64: 128, 128>}]} {
    %c0 = arith.constant 0 : index
    %c0_0 = arith.constant 0 : index
    %0 = vector.load %arg1[%c0, %c0_0] : memref<128x288xbf16, #tpu.memory_space<vmem>>, vector<128x288xbf16>
    %c0_1 = arith.constant 0 : index
    %c0_2 = arith.constant 0 : index
    %1 = vector.load %arg2[%c0_1, %c0_2] : memref<288x128xbf16, #tpu.memory_space<vmem>>, vector<288x128xbf16>
    %cst = arith.constant dense<0.000000e+00> : vector<128x128xf32>
    %2 = tpu.matmul %0, %1, %cst {dimension_numbers = #tpu.dot_dimension_numbers<[1], [0], [0], [1], [0, 0, 1, 1], [], []>} : vector<128x288xbf16>, vector<288x128xbf16>, vector<128x128xf32> -> vector<128x128xf32>
    %c0_3 = arith.constant 0 : index
    %c0_4 = arith.constant 0 : index
    %3 = vector.load %arg3[%c0_3, %c0_4] : memref<1x128xf32, #tpu.memory_space<vmem>>, vector<1x128xf32>
    %4 = vector.broadcast %3 : vector<1x128xf32> to vector<128x128xf32>
    %5 = arith.addf %2, %4 : vector<128x128xf32>
    %cst_5 = arith.constant 0.000000e+00 : f32
    %6 = vector.broadcast %cst_5 : f32 to vector<128x128xf32>
    %7 = arith.maximumf %5, %6 : vector<128x128xf32>
    %c0_6 = arith.constant 0 : index
    %c0_7 = arith.constant 0 : index
    %8 = vector.load %arg4[%c0_6, %c0_7] : memref<128x128xf32, #tpu.memory_space<vmem>>, vector<128x128xf32>
    tpu.vector_store %arg4[%c0_6, %c0_7], %7 {strides = array<i32>} : memref<128x128xf32, #tpu.memory_space<vmem>>, vector<128x128xf32>,
    return
  }
  func.func @transform_0(%arg0: i32) -> (i32, i32) {
    %c0_i32 = arith.constant 0 : i32
    %c0_i32_0 = arith.constant 0 : i32
    return %arg0, %c0_i32 : i32, i32
  }
  func.func @transform_1(%arg0: i32) -> (i32, i32) {
    %c0_i32 = arith.constant 0 : i32
    %c0_i32_0 = arith.constant 0 : i32
    %c0_i32_1 = arith.constant 0 : i32
    return %c0_i32, %c0_i32_0 : i32, i32
  }
  func.func @transform_2(%arg0: i32) -> (i32, i32) {
    %c0_i32 = arith.constant 0 : i32
    %c0_i32_0 = arith.constant 0 : i32
    %c0_i32_1 = arith.constant 0 : i32
    return %c0_i32, %c0_i32_0 : i32, i32
  }
  func.func @transform_3(%arg0: i32) -> (i32, i32) {
    %c0_i32 = arith.constant 0 : i32
    %c0_i32_0 = arith.constant 0 : i32
    return %arg0, %c0_i32 : i32, i32
  }
}

module attributes {stable_mosaic.version = 11 : i64} {
  func.func @_gemm_bias_act_kernel(%arg0: i32, %arg1: memref<256x288xbf16, #tpu.memory_space<vmem>>, %arg2: memref<288x128xbf16, #tpu.memory_space<vmem>>, %arg3: memref<1x128xf32, #tpu.memory_space<vmem>>, %arg4: memref<256x128xf32, #tpu.memory_space<vmem>>) attributes {dimension_semantics = [#tpu.dimension_semantics<parallel>], iteration_bounds = array<i64: 2>, scalar_prefetch = 0 : i64, scratch_operands = 0 : i64, tpu.core_type = #tpu.core_type<tc>, window_params = [{transform_indices = @transform_0, window_bounds = array<i64: 256, 288>}, {pipeline_mode = #tpu.pipeline_mode<synchronous>, transform_indices = @transform_1, window_bounds = array<i64: 288, 128>}, {pipeline_mode = #tpu.pipeline_mode<synchronous>, transform_indices = @transform_2, window_bounds = array<i64: 1, 128>}, {transform_indices = @transform_3, window_bounds = array<i64: 256, 128>}]} {
    %c0 = arith.constant 0 : index
    %c0_0 = arith.constant 0 : index
    %0 = vector.load %arg1[%c0, %c0_0] : memref<256x288xbf16, #tpu.memory_space<vmem>>, vector<256x288xbf16>
    %c0_1 = arith.constant 0 : index
    %c0_2 = arith.constant 0 : index
    %1 = vector.load %arg2[%c0_1, %c0_2] : memref<288x128xbf16, #tpu.memory_space<vmem>>, vector<288x128xbf16>
    %cst = arith.constant dense<0.000000e+00> : vector<256x128xf32>
    %2 = tpu.matmul %0, %1, %cst {dimension_numbers = #tpu.dot_dimension_numbers<[1], [0], [0], [1], [0, 0, 1, 1], [], []>} : vector<256x288xbf16>, vector<288x128xbf16>, vector<256x128xf32> -> vector<256x128xf32>
    %c0_3 = arith.constant 0 : index
    %c0_4 = arith.constant 0 : index
    %3 = vector.load %arg3[%c0_3, %c0_4] : memref<1x128xf32, #tpu.memory_space<vmem>>, vector<1x128xf32>
    %4 = vector.broadcast %3 : vector<1x128xf32> to vector<256x128xf32>
    %5 = arith.addf %2, %4 : vector<256x128xf32>
    %cst_5 = arith.constant 0.000000e+00 : f32
    %6 = vector.broadcast %cst_5 : f32 to vector<256x128xf32>
    %7 = arith.maximumf %5, %6 : vector<256x128xf32>
    %c0_6 = arith.constant 0 : index
    %c0_7 = arith.constant 0 : index
    %8 = vector.load %arg4[%c0_6, %c0_7] : memref<256x128xf32, #tpu.memory_space<vmem>>, vector<256x128xf32>
    tpu.vector_store %arg4[%c0_6, %c0_7], %7 {strides = array<i32>} : memref<256x128xf32, #tpu.memory_space<vmem>>, vector<256x128xf32>,
    return
  }
  func.func @transform_0(%arg0: i32) -> (i32, i32) {
    %c0_i32 = arith.constant 0 : i32
    %c0_i32_0 = arith.constant 0 : i32
    return %arg0, %c0_i32 : i32, i32
  }
  func.func @transform_1(%arg0: i32) -> (i32, i32) {
    %c0_i32 = arith.constant 0 : i32
    %c0_i32_0 = arith.constant 0 : i32
    %c0_i32_1 = arith.constant 0 : i32
    return %c0_i32, %c0_i32_0 : i32, i32
  }
  func.func @transform_2(%arg0: i32) -> (i32, i32) {
    %c0_i32 = arith.constant 0 : i32
    %c0_i32_0 = arith.constant 0 : i32
    %c0_i32_1 = arith.constant 0 : i32
    return %c0_i32, %c0_i32_0 : i32, i32
  }
  func.func @transform_3(%arg0: i32) -> (i32, i32) {
    %c0_i32 = arith.constant 0 : i32
    %c0_i32_0 = arith.constant 0 : i32
    return %arg0, %c0_i32 : i32, i32
  }
}

module attributes {stable_mosaic.version = 11 : i64} {
  func.func @_gemm_bias_act_kernel(%arg0: i32, %arg1: memref<1024x288xbf16, #tpu.memory_space<vmem>>, %arg2: memref<288x128xbf16, #tpu.memory_space<vmem>>, %arg3: memref<1x128xf32, #tpu.memory_space<vmem>>, %arg4: memref<1024x128xf32, #tpu.memory_space<vmem>>) attributes {dimension_semantics = [#tpu.dimension_semantics<parallel>], iteration_bounds = array<i64: 2>, scalar_prefetch = 0 : i64, scratch_operands = 0 : i64, tpu.core_type = #tpu.core_type<tc>, window_params = [{transform_indices = @transform_0, window_bounds = array<i64: 1024, 288>}, {pipeline_mode = #tpu.pipeline_mode<synchronous>, transform_indices = @transform_1, window_bounds = array<i64: 288, 128>}, {pipeline_mode = #tpu.pipeline_mode<synchronous>, transform_indices = @transform_2, window_bounds = array<i64: 1, 128>}, {transform_indices = @transform_3, window_bounds = array<i64: 1024, 128>}]} {
    %c0 = arith.constant 0 : index
    %c0_0 = arith.constant 0 : index
    %0 = vector.load %arg1[%c0, %c0_0] : memref<1024x288xbf16, #tpu.memory_space<vmem>>, vector<1024x288xbf16>
    %c0_1 = arith.constant 0 : index
    %c0_2 = arith.constant 0 : index
    %1 = vector.load %arg2[%c0_1, %c0_2] : memref<288x128xbf16, #tpu.memory_space<vmem>>, vector<288x128xbf16>
    %cst = arith.constant dense<0.000000e+00> : vector<1024x128xf32>
    %2 = tpu.matmul %0, %1, %cst {dimension_numbers = #tpu.dot_dimension_numbers<[1], [0], [0], [1], [0, 0, 1, 1], [], []>} : vector<1024x288xbf16>, vector<288x128xbf16>, vector<1024x128xf32> -> vector<1024x128xf32>
    %c0_3 = arith.constant 0 : index
    %c0_4 = arith.constant 0 : index
    %3 = vector.load %arg3[%c0_3, %c0_4] : memref<1x128xf32, #tpu.memory_space<vmem>>, vector<1x128xf32>
    %4 = vector.broadcast %3 : vector<1x128xf32> to vector<1024x128xf32>
    %5 = arith.addf %2, %4 : vector<1024x128xf32>
    %6 = arith.negf %5 : vector<1024x128xf32>
    %7 = math.exp %6 : vector<1024x128xf32>
    %cst_5 = arith.constant 1.000000e+00 : f32
    %8 = vector.broadcast %cst_5 : f32 to vector<1024x128xf32>
    %9 = arith.addf %8, %7 : vector<1024x128xf32>
    %10 = arith.divf %8, %9 : vector<1024x128xf32>
    %c0_6 = arith.constant 0 : index
    %c0_7 = arith.constant 0 : index
    %11 = vector.load %arg4[%c0_6, %c0_7] : memref<1024x128xf32, #tpu.memory_space<vmem>>, vector<1024x128xf32>
    tpu.vector_store %arg4[%c0_6, %c0_7], %10 {strides = array<i32>} : memref<1024x128xf32, #tpu.memory_space<vmem>>, vector<1024x128xf32>,
    return
  }
  func.func @transform_0(%arg0: i32) -> (i32, i32) {
    %c0_i32 = arith.constant 0 : i32
    %c0_i32_0 = arith.constant 0 : i32
    return %arg0, %c0_i32 : i32, i32
  }
  func.func @transform_1(%arg0: i32) -> (i32, i32) {
    %c0_i32 = arith.constant 0 : i32
    %c0_i32_0 = arith.constant 0 : i32
    %c0_i32_1 = arith.constant 0 : i32
    return %c0_i32, %c0_i32_0 : i32, i32
  }
  func.func @transform_2(%arg0: i32) -> (i32, i32) {
    %c0_i32 = arith.constant 0 : i32
    %c0_i32_0 = arith.constant 0 : i32
    %c0_i32_1 = arith.constant 0 : i32
    return %c0_i32, %c0_i32_0 : i32, i32
  }
  func.func @transform_3(%arg0: i32) -> (i32, i32) {
    %c0_i32 = arith.constant 0 : i32
    %c0_i32_0 = arith.constant 0 : i32
    return %arg0, %c0_i32 : i32, i32
  }
}

</mosaic_0001>

<llo_original>
// kernel: image_decoder64.5
$region0: #{image_decoder64.5}
  #allocation0 [shape = 'u32[]', space=smem, size = 0x4, offset = 0x4, fixed_abs, tag = 'smem constant byte address 0x4 - core index']
  #allocation1 [shape = 'u32[72,128]{1,0:T(1,128)}', space=vmem, size = 0x9000, scoped, tag = 'internal scratch']
  %s0 = inlined_call_operand.hbm [shape: f32[2,8], index: 0, kind: input, shape index: {}]
  %s1 = inlined_call_operand.hbm [shape: f32[8,256], index: 1, kind: input, shape index: {}]
  %s2 = inlined_call_operand.hbm [shape: f32[1,256], index: 2, kind: input, shape index: {}]
  %s3 = inlined_call_operand.vmem [shape: f32[256,256], index: 3, kind: input, shape index: {}]
  %s4 = inlined_call_operand.hbm [shape: f32[1,256], index: 4, kind: input, shape index: {}]
  %s5 = inlined_call_operand.vmem [shape: f32[256,512], index: 5, kind: input, shape index: {}]
  %s6 = inlined_call_operand.hbm [shape: f32[1,512], index: 6, kind: input, shape index: {}]
  %s7 = inlined_call_operand.vmem [shape: f32[2,512], index: 7, kind: output, shape index: {}]
  %s8 = sld [smem:[#allocation0]]
  $region58: #{image_decoder64.5} parent=0
    _
  %s10 = ssub.s32 1, %s8
  %s11 = scalar_select 0, %s10, %s8
  $region1: #{image_decoder64.5} parent=0
    #allocation2 [shape = 'u8[1024]{0}', space=vmem, size = 0x400, scoped, tag = 'input window, operand 0, single buffered']
    #allocation3 [shape = 's32[1]{0}', space=sflag, size = 0x4, scoped, tag = 'scoped memory for image_decoder64.5']
    #allocation4 [shape = 'u8[8192]{0}', space=vmem, size = 0x2000, scoped, tag = 'input window, operand 1, single buffered']
    #allocation5 [shape = 's32[1]{0}', space=sflag, size = 0x4, scoped, tag = 'scoped memory for image_decoder64.5']
    #allocation6 [shape = 'u8[1024]{0}', space=vmem, size = 0x400, scoped, tag = 'input window, operand 2, single buffered']
    #allocation7 [shape = 'u8[1024]{0}', space=vmem, size = 0x400, scoped, tag = 'input window, operand 4, single buffered']
    #allocation8 [shape = 's32[1]{0}', space=sflag, size = 0x4, scoped, tag = 'scoped memory for image_decoder64.5']
    #allocation9 [shape = 'u8[2048]{0}', space=vmem, size = 0x800, scoped, tag = 'input window, operand 6, single buffered']
    %12 = vsyncpa [#allocation3], 0
    %13 = vsyncpa [#allocation5], 0
    %14 = vsyncpa [#allocation8], 0
    // Predicated region
    $region2: #{image_decoder64.5} parent=1 // pred_check
      _
    $region3: #{image_decoder64.5} parent=1 // pred_check_branch
      %16 = sbr.rel (0) target = $region5
    $region4: #{image_decoder64.5} parent=1 // pred_region
      %18 = vsyncadd [#allocation3], 0
      %s20 = sshll.u32 %s0, 4
      %s21 = int_to_ptr.hbm [resolvable:$true] %s20
      %s22 = sshll.u32 [#allocation2], 4
      %s23 = int_to_ptr.vmem [resolvable:$true] %s22
      %25 = dma.hbm_to_vmem [thread:$0]  %s21, 32, %s23, [#allocation3]
    $region5: #{image_decoder64.5} parent=1 // pred_fallthru
      _
    // Predicated region
    $region6: #{image_decoder64.5} parent=1 // pred_check
      _
    $region7: #{image_decoder64.5} parent=1 // pred_check_branch
      %27 = sbr.rel (0) target = $region9
    $region8: #{image_decoder64.5} parent=1 // pred_region
      %29 = vsyncadd [#allocation5], 0
      %s31 = sshll.u32 %s1, 4
      %s32 = int_to_ptr.hbm [resolvable:$true] %s31
      %s33 = sshll.u32 [#allocation4], 4
      %s34 = int_to_ptr.vmem [resolvable:$true] %s33
      %36 = dma.hbm_to_vmem [thread:$0]  %s32, 256, %s34, [#allocation5]
    $region9: #{image_decoder64.5} parent=1 // pred_fallthru
      _
    // Predicated region
    $region10: #{image_decoder64.5} parent=1 // pred_check
      _
    $region11: #{image_decoder64.5} parent=1 // pred_check_branch
      %38 = sbr.rel (0) target = $region13
    $region12: #{image_decoder64.5} parent=1 // pred_region
      %40 = vsyncadd [#allocation5], 0
      %s42 = sshll.u32 %s2, 4
      %s43 = int_to_ptr.hbm [resolvable:$true] %s42
      %s44 = sshll.u32 [#allocation6], 4
      %s45 = int_to_ptr.vmem [resolvable:$true] %s44
      %47 = dma.hbm_to_vmem [thread:$0]  %s43, 32, %s45, [#allocation5]
    $region13: #{image_decoder64.5} parent=1 // pred_fallthru
      _
    // Predicated region
    $region14: #{image_decoder64.5} parent=1 // pred_check
      _
    $region15: #{image_decoder64.5} parent=1 // pred_check_branch
      %49 = sbr.rel (0) target = $region17
    $region16: #{image_decoder64.5} parent=1 // pred_region
      _
    $region17: #{image_decoder64.5} parent=1 // pred_fallthru
      _
    // Predicated region
    $region18: #{image_decoder64.5} parent=1 // pred_check
      _
    $region19: #{image_decoder64.5} parent=1 // pred_check_branch
      %51 = sbr.rel (0) target = $region21
    $region20: #{image_decoder64.5} parent=1 // pred_region
      %53 = vsyncadd [#allocation8], 0
      %s55 = sshll.u32 %s4, 4
      %s56 = int_to_ptr.hbm [resolvable:$true] %s55
      %s57 = sshll.u32 [#allocation7], 4
      %s58 = int_to_ptr.vmem [resolvable:$true] %s57
      %60 = dma.hbm_to_vmem [thread:$0]  %s56, 32, %s58, [#allocation8]
    $region21: #{image_decoder64.5} parent=1 // pred_fallthru
      _
    // Predicated region
    $region22: #{image_decoder64.5} parent=1 // pred_check
      _
    $region23: #{image_decoder64.5} parent=1 // pred_check_branch
      %62 = sbr.rel (0) target = $region25
    $region24: #{image_decoder64.5} parent=1 // pred_region
      _
    $region25: #{image_decoder64.5} parent=1 // pred_fallthru
      _
    // Predicated region
    $region26: #{image_decoder64.5} parent=1 // pred_check
      _
    $region27: #{image_decoder64.5} parent=1 // pred_check_branch
      %64 = sbr.rel (0) target = $region29
    $region28: #{image_decoder64.5} parent=1 // pred_region
      %66 = vsyncadd [#allocation8], 0
      %s68 = sshll.u32 %s6, 4
      %s69 = int_to_ptr.hbm [resolvable:$true] %s68
      %s70 = sshll.u32 [#allocation9], 4
      %s71 = int_to_ptr.vmem [resolvable:$true] %s70
      %73 = dma.hbm_to_vmem [thread:$0]  %s69, 64, %s71, [#allocation8]
    $region29: #{image_decoder64.5} parent=1 // pred_fallthru
      _
    // Predicated region
    $region30: #{image_decoder64.5} parent=1 // pred_check
      _
    $region31: #{image_decoder64.5} parent=1 // pred_check_branch
      %75 = sbr.rel (0) target = $region33
    $region32: #{image_decoder64.5} parent=1 // pred_region
      %77 = dma.done [#allocation3], 32
    $region33: #{image_decoder64.5} parent=1 // pred_fallthru
      _
    // Predicated region
    $region34: #{image_decoder64.5} parent=1 // pred_check
      _
    $region35: #{image_decoder64.5} parent=1 // pred_check_branch
      %79 = sbr.rel (0) target = $region37
    $region36: #{image_decoder64.5} parent=1 // pred_region
      %81 = dma.done [#allocation5], 256
    $region37: #{image_decoder64.5} parent=1 // pred_fallthru
      _
    // Predicated region
    $region38: #{image_decoder64.5} parent=1 // pred_check
      _
    $region39: #{image_decoder64.5} parent=1 // pred_check_branch
      %83 = sbr.rel (0) target = $region41
    $region40: #{image_decoder64.5} parent=1 // pred_region
      %85 = dma.done [#allocation5], 32
    $region41: #{image_decoder64.5} parent=1 // pred_fallthru
      _
    // Predicated region
    $region42: #{image_decoder64.5} parent=1 // pred_check
      _
    $region43: #{image_decoder64.5} parent=1 // pred_check_branch
      %87 = sbr.rel (0) target = $region45
    $region44: #{image_decoder64.5} parent=1 // pred_region
      %89 = dma.done [#allocation8], 32
    $region45: #{image_decoder64.5} parent=1 // pred_fallthru
      _
    // Predicated region
    $region46: #{image_decoder64.5} parent=1 // pred_check
      _
    $region47: #{image_decoder64.5} parent=1 // pred_check_branch
      %91 = sbr.rel (0) target = $region49
    $region48: #{image_decoder64.5} parent=1 // pred_region
      %93 = dma.done [#allocation8], 64
    $region49: #{image_decoder64.5} parent=1 // pred_fallthru
      _
    %v94 = vld [vmem:[#allocation2] sm:$0x3]
    %v95 = vld [vmem:[#allocation4] sm:$0xff]
    %v96 = vld [vmem:[#allocation4 + $0x8] sm:$0xff]
    %v97 = vld [vmem:[#allocation6] sm:$0x3]
    %v99 = vperm.slane %v97, 0
    %v100 = vperm.slane %v97, 1
    %vm103 = vcmask 64512
    %v105 = vsel %vm103, %v94, 0
    %107 = vmatpush.msra.mxu0 0.0
    %108 = vmatpush.msra.mxu0 0.0
    %109 = vmatpush.msra.mxu0 0.0
    %110 = vmatpush.msra.mxu0 0.0
    %111 = vmatpush.msra.mxu0 0.0
    %112 = vmatpush.msra.mxu0 0.0
    %113 = vmatpush.msra.mxu0 0.0
    %114 = vmatpush.msra.mxu0 0.0
    %115 = vmatpush.msra.mxu0 0.0
    %116 = vmatpush.msra.mxu0 0.0
    %117 = vmatpush.msra.mxu0 0.0
    %118 = vmatpush.msra.mxu0 0.0
    %119 = vmatpush.msra.mxu0 0.0
    %120 = vmatpush.msra.mxu0 0.0
    %121 = vmatpush.msra.mxu0 0.0
    %122 = vmatpush.msra.mxu0 %v95
    %123 = vmatmul.f32.gmra.mxu0 %v105
    %v124 = vpop.f32.mrf.mxu0
    %v125 = vadd.f32 %v99, %v124
    %126 = vdwg.mxu0
    %127 = vmatpush.msra.mxu0 0.0
    %128 = vmatpush.msra.mxu0 0.0
    %129 = vmatpush.msra.mxu0 0.0
    %130 = vmatpush.msra.mxu0 0.0
    %131 = vmatpush.msra.mxu0 0.0
    %132 = vmatpush.msra.mxu0 0.0
    %133 = vmatpush.msra.mxu0 0.0
    %134 = vmatpush.msra.mxu0 0.0
    %135 = vmatpush.msra.mxu0 0.0
    %136 = vmatpush.msra.mxu0 0.0
    %137 = vmatpush.msra.mxu0 0.0
    %138 = vmatpush.msra.mxu0 0.0
    %139 = vmatpush.msra.mxu0 0.0
    %140 = vmatpush.msra.mxu0 0.0
    %141 = vmatpush.msra.mxu0 0.0
    %142 = vmatpush.msra.mxu0 %v96
    %143 = vmatmul.f32.gmra.mxu0 %v105
    %v144 = vpop.f32.mrf.mxu0
    %v145 = vadd.f32 %v100, %v144
    %146 = vdwg.mxu0
    %v147 = vmax.f32 %v125, 0.0
    %v148 = vmax.f32 %v145, 0.0
    %v149 = vld [vmem:[%s3] sm:$0xff]
    %v150 = vld [vmem:[%s3 + $0x8] sm:$0xff]
    %v151 = vld [vmem:[%s3 + $0x10] sm:$0xff]
    %v152 = vld [vmem:[%s3 + $0x18] sm:$0xff]
    %v153 = vld [vmem:[%s3 + $0x20] sm:$0xff]
    %v154 = vld [vmem:[%s3 + $0x28] sm:$0xff]
    %v155 = vld [vmem:[%s3 + $0x30] sm:$0xff]
    %v156 = vld [vmem:[%s3 + $0x38] sm:$0xff]
    %v157 = vld [vmem:[%s3 + $0x40] sm:$0xff]
    %v158 = vld [vmem:[%s3 + $0x48] sm:$0xff]
    %v159 = vld [vmem:[%s3 + $0x50] sm:$0xff]
    %v160 = vld [vmem:[%s3 + $0x58] sm:$0xff]
    %v161 = vld [vmem:[%s3 + $0x60] sm:$0xff]
    %v162 = vld [vmem:[%s3 + $0x68] sm:$0xff]
    %v163 = vld [vmem:[%s3 + $0x70] sm:$0xff]
    %v164 = vld [vmem:[%s3 + $0x78] sm:$0xff]
    %v165 = vld [vmem:[%s3 + $0x80] sm:$0xff]
    %v166 = vld [vmem:[%s3 + $0x88] sm:$0xff]
    %v167 = vld [vmem:[%s3 + $0x90] sm:$0xff]
    %v168 = vld [vmem:[%s3 + $0x98] sm:$0xff]
    %v169 = vld [vmem:[%s3 + $0xa0] sm:$0xff]
    %v170 = vld [vmem:[%s3 + $0xa8] sm:$0xff]
    %v171 = vld [vmem:[%s3 + $0xb0] sm:$0xff]
    %v172 = vld [vmem:[%s3 + $0xb8] sm:$0xff]
    %v173 = vld [vmem:[%s3 + $0xc0] sm:$0xff]
    %v174 = vld [vmem:[%s3 + $0xc8] sm:$0xff]
    %v175 = vld [vmem:[%s3 + $0xd0] sm:$0xff]
    %v176 = vld [vmem:[%s3 + $0xd8] sm:$0xff]
    %v177 = vld [vmem:[%s3 + $0xe0] sm:$0xff]
    %v178 = vld [vmem:[%s3 + $0xe8] sm:$0xff]
    %v179 = vld [vmem:[%s3 + $0xf0] sm:$0xff]
    %v180 = vld [vmem:[%s3 + $0xf8] sm:$0xff]
    %v181 = vld [vmem:[%s3 + $0x100] sm:$0xff]
    %v182 = vld [vmem:[%s3 + $0x108] sm:$0xff]
    %v183 = vld [vmem:[%s3 + $0x110] sm:$0xff]
    %v184 = vld [vmem:[%s3 + $0x118] sm:$0xff]
    %v185 = vld [vmem:[%s3 + $0x120] sm:$0xff]
    %v186 = vld [vmem:[%s3 + $0x128] sm:$0xff]
    %v187 = vld [vmem:[%s3 + $0x130] sm:$0xff]
    %v188 = vld [vmem:[%s3 + $0x138] sm:$0xff]
    %v189 = vld [vmem:[%s3 + $0x140] sm:$0xff]
    %v190 = vld [vmem:[%s3 + $0x148] sm:$0xff]
    %v191 = vld [vmem:[%s3 + $0x150] sm:$0xff]
    %v192 = vld [vmem:[%s3 + $0x158] sm:$0xff]
    %v193 = vld [vmem:[%s3 + $0x160] sm:$0xff]
    %v194 = vld [vmem:[%s3 + $0x168] sm:$0xff]
    %v195 = vld [vmem:[%s3 + $0x170] sm:$0xff]
    %v196 = vld [vmem:[%s3 + $0x178] sm:$0xff]
    %v197 = vld [vmem:[%s3 + $0x180] sm:$0xff]
    %v198 = vld [vmem:[%s3 + $0x188] sm:$0xff]
    %v199 = vld [vmem:[%s3 + $0x190] sm:$0xff]
    %v200 = vld [vmem:[%s3 + $0x198] sm:$0xff]
    %v201 = vld [vmem:[%s3 + $0x1a0] sm:$0xff]
    %v202 = vld [vmem:[%s3 + $0x1a8] sm:$0xff]
    %v203 = vld [vmem:[%s3 + $0x1b0] sm:$0xff]
    %v204 = vld [vmem:[%s3 + $0x1b8] sm:$0xff]
    %v205 = vld [vmem:[%s3 + $0x1c0] sm:$0xff]
    %v206 = vld [vmem:[%s3 + $0x1c8] sm:$0xff]
    %v207 = vld [vmem:[%s3 + $0x1d0] sm:$0xff]
    %v208 = vld [vmem:[%s3 + $0x1d8] sm:$0xff]
    %v209 = vld [vmem:[%s3 + $0x1e0] sm:$0xff]
    %v210 = vld [vmem:[%s3 + $0x1e8] sm:$0xff]
    %v211 = vld [vmem:[%s3 + $0x1f0] sm:$0xff]
    %v212 = vld [vmem:[%s3 + $0x1f8] sm:$0xff]
    %v213 = vld [vmem:[#allocation7] sm:$0x3]
    %v215 = vperm.slane %v213, 0
    %v216 = vperm.slane %v213, 1
    %219 = vmatpush.msra.mxu0 %v179
    %220 = vmatpush.msra.mxu0 %v177
    %221 = vmatpush.msra.mxu0 %v175
    %222 = vmatpush.msra.mxu0 %v173
    %223 = vmatpush.msra.mxu0 %v171
    %224 = vmatpush.msra.mxu0 %v169
    %225 = vmatpush.msra.mxu0 %v167
    %226 = vmatpush.msra.mxu0 %v165
    %227 = vmatpush.msra.mxu0 %v163
    %228 = vmatpush.msra.mxu0 %v161
    %229 = vmatpush.msra.mxu0 %v159
    %230 = vmatpush.msra.mxu0 %v157
    %231 = vmatpush.msra.mxu0 %v155
    %232 = vmatpush.msra.mxu0 %v153
    %233 = vmatpush.msra.mxu0 %v151
    %234 = vmatpush.msra.mxu0 %v149
    %235 = vmatmul.f32.gmra.mxu0 %v147
    %v236 = vpop.f32.mrf.mxu0
    %v237 = vadd.f32 %v215, %v236
    %238 = vdwg.mxu0
    %239 = vmatpush.msra.mxu0 %v211
    %240 = vmatpush.msra.mxu0 %v209
    %241 = vmatpush.msra.mxu0 %v207
    %242 = vmatpush.msra.mxu0 %v205
    %243 = vmatpush.msra.mxu0 %v203
    %244 = vmatpush.msra.mxu0 %v201
    %245 = vmatpush.msra.mxu0 %v199
    %246 = vmatpush.msra.mxu0 %v197
    %247 = vmatpush.msra.mxu0 %v195
    %248 = vmatpush.msra.mxu0 %v193
    %249 = vmatpush.msra.mxu0 %v191
    %250 = vmatpush.msra.mxu0 %v189
    %251 = vmatpush.msra.mxu0 %v187
    %252 = vmatpush.msra.mxu0 %v185
    %253 = vmatpush.msra.mxu0 %v183
    %254 = vmatpush.msra.mxu0 %v181
    %255 = vmatmul.f32.gmra.mxu0 %v148
    %v256 = vpop.f32.mrf.mxu0
    %v257 = vadd.f32 %v237, %v256
    %258 = vdwg.mxu0
    %259 = vmatpush.msra.mxu0 %v180
    %260 = vmatpush.msra.mxu0 %v178
    %261 = vmatpush.msra.mxu0 %v176
    %262 = vmatpush.msra.mxu0 %v174
    %263 = vmatpush.msra.mxu0 %v172
    %264 = vmatpush.msra.mxu0 %v170
    %265 = vmatpush.msra.mxu0 %v168
    %266 = vmatpush.msra.mxu0 %v166
    %267 = vmatpush.msra.mxu0 %v164
    %268 = vmatpush.msra.mxu0 %v162
    %269 = vmatpush.msra.mxu0 %v160
    %270 = vmatpush.msra.mxu0 %v158
    %271 = vmatpush.msra.mxu0 %v156
    %272 = vmatpush.msra.mxu0 %v154
    %273 = vmatpush.msra.mxu0 %v152
    %274 = vmatpush.msra.mxu0 %v150
    %275 = vmatmul.f32.gmra.mxu0 %v147
    %v276 = vpop.f32.mrf.mxu0
    %v277 = vadd.f32 %v216, %v276
    %278 = vdwg.mxu0
    %279 = vmatpush.msra.mxu0 %v212
    %280 = vmatpush.msra.mxu0 %v210
    %281 = vmatpush.msra.mxu0 %v208
    %282 = vmatpush.msra.mxu0 %v206
    %283 = vmatpush.msra.mxu0 %v204
    %284 = vmatpush.msra.mxu0 %v202
    %285 = vmatpush.msra.mxu0 %v200
    %286 = vmatpush.msra.mxu0 %v198
    %287 = vmatpush.msra.mxu0 %v196
    %288 = vmatpush.msra.mxu0 %v194
    %289 = vmatpush.msra.mxu0 %v192
    %290 = vmatpush.msra.mxu0 %v190
    %291 = vmatpush.msra.mxu0 %v188
    %292 = vmatpush.msra.mxu0 %v186
    %293 = vmatpush.msra.mxu0 %v184
    %294 = vmatpush.msra.mxu0 %v182
    %295 = vmatmul.f32.gmra.mxu0 %v148
    %v296 = vpop.f32.mrf.mxu0
    %v297 = vadd.f32 %v277, %v296
    %298 = vdwg.mxu0
    %v299 = vmax.f32 %v257, 0.0
    %v300 = vmax.f32 %v297, 0.0
    %v301 = vld [vmem:[%s5] sm:$0xff]
    %v302 = vld [vmem:[%s5 + $0x8] sm:$0xff]
    %v303 = vld [vmem:[%s5 + $0x10] sm:$0xff]
    %v304 = vld [vmem:[%s5 + $0x18] sm:$0xff]
    %v305 = vld [vmem:[%s5 + $0x20] sm:$0xff]
    %v306 = vld [vmem:[%s5 + $0x28] sm:$0xff]
    %v307 = vld [vmem:[%s5 + $0x30] sm:$0xff]
    %v308 = vld [vmem:[%s5 + $0x38] sm:$0xff]
    %v309 = vld [vmem:[%s5 + $0x40] sm:$0xff]
    %v310 = vld [vmem:[%s5 + $0x48] sm:$0xff]
    %v311 = vld [vmem:[%s5 + $0x50] sm:$0xff]
    %v312 = vld [vmem:[%s5 + $0x58] sm:$0xff]
    %v313 = vld [vmem:[%s5 + $0x60] sm:$0xff]
    %v314 = vld [vmem:[%s5 + $0x68] sm:$0xff]
    %v315 = vld [vmem:[%s5 + $0x70] sm:$0xff]
    %v316 = vld [vmem:[%s5 + $0x78] sm:$0xff]
    %v317 = vld [vmem:[%s5 + $0x80] sm:$0xff]
    %v318 = vld [vmem:[%s5 + $0x88] sm:$0xff]
    %v319 = vld [vmem:[%s5 + $0x90] sm:$0xff]
    %v320 = vld [vmem:[%s5 + $0x98] sm:$0xff]
    %v321 = vld [vmem:[%s5 + $0xa0] sm:$0xff]
    %v322 = vld [vmem:[%s5 + $0xa8] sm:$0xff]
    %v323 = vld [vmem:[%s5 + $0xb0] sm:$0xff]
    %v324 = vld [vmem:[%s5 + $0xb8] sm:$0xff]
    %v325 = vld [vmem:[%s5 + $0xc0] sm:$0xff]
    %v326 = vld [vmem:[%s5 + $0xc8] sm:$0xff]
    %v327 = vld [vmem:[%s5 + $0xd0] sm:$0xff]
    %v328 = vld [vmem:[%s5 + $0xd8] sm:$0xff]
    %v329 = vld [vmem:[%s5 + $0xe0] sm:$0xff]
    %v330 = vld [vmem:[%s5 + $0xe8] sm:$0xff]
    %v331 = vld [vmem:[%s5 + $0xf0] sm:$0xff]
    %v332 = vld [vmem:[%s5 + $0xf8] sm:$0xff]
    %v333 = vld [vmem:[%s5 + $0x100] sm:$0xff]
    %v334 = vld [vmem:[%s5 + $0x108] sm:$0xff]
    %v335 = vld [vmem:[%s5 + $0x110] sm:$0xff]
    %v336 = vld [vmem:[%s5 + $0x118] sm:$0xff]
    %v337 = vld [vmem:[%s5 + $0x120] sm:$0xff]
    %v338 = vld [vmem:[%s5 + $0x128] sm:$0xff]
    %v339 = vld [vmem:[%s5 + $0x130] sm:$0xff]
    %v340 = vld [vmem:[%s5 + $0x138] sm:$0xff]
    %v341 = vld [vmem:[%s5 + $0x140] sm:$0xff]
    %v342 = vld [vmem:[%s5 + $0x148] sm:$0xff]
    %v343 = vld [vmem:[%s5 + $0x150] sm:$0xff]
    %v344 = vld [vmem:[%s5 + $0x158] sm:$0xff]
    %v345 = vld [vmem:[%s5 + $0x160] sm:$0xff]
    %v346 = vld [vmem:[%s5 + $0x168] sm:$0xff]
    %v347 = vld [vmem:[%s5 + $0x170] sm:$0xff]
    %v348 = vld [vmem:[%s5 + $0x178] sm:$0xff]
    %v349 = vld [vmem:[%s5 + $0x180] sm:$0xff]
    %v350 = vld [vmem:[%s5 + $0x188] sm:$0xff]
    %v351 = vld [vmem:[%s5 + $0x190] sm:$0xff]
    %v352 = vld [vmem:[%s5 + $0x198] sm:$0xff]
    %v353 = vld [vmem:[%s5 + $0x1a0] sm:$0xff]
    %v354 = vld [vmem:[%s5 + $0x1a8] sm:$0xff]
    %v355 = vld [vmem:[%s5 + $0x1b0] sm:$0xff]
    %v356 = vld [vmem:[%s5 + $0x1b8] sm:$0xff]
    %v357 = vld [vmem:[%s5 + $0x1c0] sm:$0xff]
    %v358 = vld [vmem:[%s5 + $0x1c8] sm:$0xff]
    %v359 = vld [vmem:[%s5 + $0x1d0] sm:$0xff]
    %v360 = vld [vmem:[%s5 + $0x1d8] sm:$0xff]
    %v361 = vld [vmem:[%s5 + $0x1e0] sm:$0xff]
    %v362 = vld [vmem:[%s5 + $0x1e8] sm:$0xff]
    %v363 = vld [vmem:[%s5 + $0x1f0] sm:$0xff]
    %v364 = vld [vmem:[%s5 + $0x1f8] sm:$0xff]
    %v365 = vld [vmem:[%s5 + $0x200] sm:$0xff]
    %v366 = vld [vmem:[%s5 + $0x208] sm:$0xff]
    %v367 = vld [vmem:[%s5 + $0x210] sm:$0xff]
    %v368 = vld [vmem:[%s5 + $0x218] sm:$0xff]
    %v369 = vld [vmem:[%s5 + $0x220] sm:$0xff]
    %v370 = vld [vmem:[%s5 + $0x228] sm:$0xff]
    %v371 = vld [vmem:[%s5 + $0x230] sm:$0xff]
    %v372 = vld [vmem:[%s5 + $0x238] sm:$0xff]
    %v373 = vld [vmem:[%s5 + $0x240] sm:$0xff]
    %v374 = vld [vmem:[%s5 + $0x248] sm:$0xff]
    %v375 = vld [vmem:[%s5 + $0x250] sm:$0xff]
    %v376 = vld [vmem:[%s5 + $0x258] sm:$0xff]
    %v377 = vld [vmem:[%s5 + $0x260] sm:$0xff]
    %v378 = vld [vmem:[%s5 + $0x268] sm:$0xff]
    %v379 = vld [vmem:[%s5 + $0x270] sm:$0xff]
    %v380 = vld [vmem:[%s5 + $0x278] sm:$0xff]
    %v381 = vld [vmem:[%s5 + $0x280] sm:$0xff]
    %v382 = vld [vmem:[%s5 + $0x288] sm:$0xff]
    %v383 = vld [vmem:[%s5 + $0x290] sm:$0xff]
    %v384 = vld [vmem:[%s5 + $0x298] sm:$0xff]
    %v385 = vld [vmem:[%s5 + $0x2a0] sm:$0xff]
    %v386 = vld [vmem:[%s5 + $0x2a8] sm:$0xff]
    %v387 = vld [vmem:[%s5 + $0x2b0] sm:$0xff]
    %v388 = vld [vmem:[%s5 + $0x2b8] sm:$0xff]
    %v389 = vld [vmem:[%s5 + $0x2c0] sm:$0xff]
    %v390 = vld [vmem:[%s5 + $0x2c8] sm:$0xff]
    %v391 = vld [vmem:[%s5 + $0x2d0] sm:$0xff]
    %v392 = vld [vmem:[%s5 + $0x2d8] sm:$0xff]
    %v393 = vld [vmem:[%s5 + $0x2e0] sm:$0xff]
    %v394 = vld [vmem:[%s5 + $0x2e8] sm:$0xff]
    %v395 = vld [vmem:[%s5 + $0x2f0] sm:$0xff]
    %v396 = vld [vmem:[%s5 + $0x2f8] sm:$0xff]
    %v397 = vld [vmem:[%s5 + $0x300] sm:$0xff]
    %v398 = vld [vmem:[%s5 + $0x308] sm:$0xff]
    %v399 = vld [vmem:[%s5 + $0x310] sm:$0xff]
    %v400 = vld [vmem:[%s5 + $0x318] sm:$0xff]
    %v401 = vld [vmem:[%s5 + $0x320] sm:$0xff]
    %v402 = vld [vmem:[%s5 + $0x328] sm:$0xff]
    %v403 = vld [vmem:[%s5 + $0x330] sm:$0xff]
    %v404 = vld [vmem:[%s5 + $0x338] sm:$0xff]
    %v405 = vld [vmem:[%s5 + $0x340] sm:$0xff]
    %v406 = vld [vmem:[%s5 + $0x348] sm:$0xff]
    %v407 = vld [vmem:[%s5 + $0x350] sm:$0xff]
    %v408 = vld [vmem:[%s5 + $0x358] sm:$0xff]
    %v409 = vld [vmem:[%s5 + $0x360] sm:$0xff]
    %v410 = vld [vmem:[%s5 + $0x368] sm:$0xff]
    %v411 = vld [vmem:[%s5 + $0x370] sm:$0xff]
    %v412 = vld [vmem:[%s5 + $0x378] sm:$0xff]
    %v413 = vld [vmem:[%s5 + $0x380] sm:$0xff]
    %v414 = vld [vmem:[%s5 + $0x388] sm:$0xff]
    %v415 = vld [vmem:[%s5 + $0x390] sm:$0xff]
    %v416 = vld [vmem:[%s5 + $0x398] sm:$0xff]
    %v417 = vld [vmem:[%s5 + $0x3a0] sm:$0xff]
    %v418 = vld [vmem:[%s5 + $0x3a8] sm:$0xff]
    %v419 = vld [vmem:[%s5 + $0x3b0] sm:$0xff]
    %v420 = vld [vmem:[%s5 + $0x3b8] sm:$0xff]
    %v421 = vld [vmem:[%s5 + $0x3c0] sm:$0xff]
    %v422 = vld [vmem:[%s5 + $0x3c8] sm:$0xff]
    %v423 = vld [vmem:[%s5 + $0x3d0] sm:$0xff]
    %v424 = vld [vmem:[%s5 + $0x3d8] sm:$0xff]
    %v425 = vld [vmem:[%s5 + $0x3e0] sm:$0xff]
    %v426 = vld [vmem:[%s5 + $0x3e8] sm:$0xff]
    %v427 = vld [vmem:[%s5 + $0x3f0] sm:$0xff]
    %v428 = vld [vmem:[%s5 + $0x3f8] sm:$0xff]
    %v429 = vld [vmem:[#allocation9] sm:$0xf]
    %v431 = vperm.slane %v429, 0
    %v432 = vperm.slane %v429, 1
    %v433 = vperm.slane %v429, 2
    %v434 = vperm.slane %v429, 3
    %439 = vmatpush.msra.mxu0 %v361
    %440 = vmatpush.msra.mxu0 %v357
    %441 = vmatpush.msra.mxu0 %v353
    %442 = vmatpush.msra.mxu0 %v349
    %443 = vmatpush.msra.mxu0 %v345
    %444 = vmatpush.msra.mxu0 %v341
    %445 = vmatpush.msra.mxu0 %v337
    %446 = vmatpush.msra.mxu0 %v333
    %447 = vmatpush.msra.mxu0 %v329
    %448 = vmatpush.msra.mxu0 %v325
    %449 = vmatpush.msra.mxu0 %v321
    %450 = vmatpush.msra.mxu0 %v317
    %451 = vmatpush.msra.mxu0 %v313
    %452 = vmatpush.msra.mxu0 %v309
    %453 = vmatpush.msra.mxu0 %v305
    %454 = vmatpush.msra.mxu0 %v301
    %455 = vmatmul.f32.gmra.mxu0 %v299
    %v456 = vpop.f32.mrf.mxu0
    %v457 = vadd.f32 %v431, %v456
    %458 = vdwg.mxu0
    %459 = vmatpush.msra.mxu0 %v425
    %460 = vmatpush.msra.mxu0 %v421
    %461 = vmatpush.msra.mxu0 %v417
    %462 = vmatpush.msra.mxu0 %v413
    %463 = vmatpush.msra.mxu0 %v409
    %464 = vmatpush.msra.mxu0 %v405
    %465 = vmatpush.msra.mxu0 %v401
    %466 = vmatpush.msra.mxu0 %v397
    %467 = vmatpush.msra.mxu0 %v393
    %468 = vmatpush.msra.mxu0 %v389
    %469 = vmatpush.msra.mxu0 %v385
    %470 = vmatpush.msra.mxu0 %v381
    %471 = vmatpush.msra.mxu0 %v377
    %472 = vmatpush.msra.mxu0 %v373
    %473 = vmatpush.msra.mxu0 %v369
    %474 = vmatpush.msra.mxu0 %v365
    %475 = vmatmul.f32.gmra.mxu0 %v300
    %v476 = vpop.f32.mrf.mxu0
    %v477 = vadd.f32 %v457, %v476
    %478 = vdwg.mxu0
    %479 = vmatpush.msra.mxu0 %v362
    %480 = vmatpush.msra.mxu0 %v358
    %481 = vmatpush.msra.mxu0 %v354
    %482 = vmatpush.msra.mxu0 %v350
    %483 = vmatpush.msra.mxu0 %v346
    %484 = vmatpush.msra.mxu0 %v342
    %485 = vmatpush.msra.mxu0 %v338
    %486 = vmatpush.msra.mxu0 %v334
    %487 = vmatpush.msra.mxu0 %v330
    %488 = vmatpush.msra.mxu0 %v326
    %489 = vmatpush.msra.mxu0 %v322
    %490 = vmatpush.msra.mxu0 %v318
    %491 = vmatpush.msra.mxu0 %v314
    %492 = vmatpush.msra.mxu0 %v310
    %493 = vmatpush.msra.mxu0 %v306
    %494 = vmatpush.msra.mxu0 %v302
    %495 = vmatmul.f32.gmra.mxu0 %v299
    %v496 = vpop.f32.mrf.mxu0
    %v497 = vadd.f32 %v432, %v496
    %498 = vdwg.mxu0
    %499 = vmatpush.msra.mxu0 %v426
    %500 = vmatpush.msra.mxu0 %v422
    %501 = vmatpush.msra.mxu0 %v418
    %502 = vmatpush.msra.mxu0 %v414
    %503 = vmatpush.msra.mxu0 %v410
    %504 = vmatpush.msra.mxu0 %v406
    %505 = vmatpush.msra.mxu0 %v402
    %506 = vmatpush.msra.mxu0 %v398
    %507 = vmatpush.msra.mxu0 %v394
    %508 = vmatpush.msra.mxu0 %v390
    %509 = vmatpush.msra.mxu0 %v386
    %510 = vmatpush.msra.mxu0 %v382
    %511 = vmatpush.msra.mxu0 %v378
    %512 = vmatpush.msra.mxu0 %v374
    %513 = vmatpush.msra.mxu0 %v370
    %514 = vmatpush.msra.mxu0 %v366
    %515 = vmatmul.f32.gmra.mxu0 %v300
    %v516 = vpop.f32.mrf.mxu0
    %v517 = vadd.f32 %v497, %v516
    %518 = vdwg.mxu0
    %519 = vmatpush.msra.mxu0 %v363
    %520 = vmatpush.msra.mxu0 %v359
    %521 = vmatpush.msra.mxu0 %v355
    %522 = vmatpush.msra.mxu0 %v351
    %523 = vmatpush.msra.mxu0 %v347
    %524 = vmatpush.msra.mxu0 %v343
    %525 = vmatpush.msra.mxu0 %v339
    %526 = vmatpush.msra.mxu0 %v335
    %527 = vmatpush.msra.mxu0 %v331
    %528 = vmatpush.msra.mxu0 %v327
    %529 = vmatpush.msra.mxu0 %v323
    %530 = vmatpush.msra.mxu0 %v319
    %531 = vmatpush.msra.mxu0 %v315
    %532 = vmatpush.msra.mxu0 %v311
    %533 = vmatpush.msra.mxu0 %v307
    %534 = vmatpush.msra.mxu0 %v303
    %535 = vmatmul.f32.gmra.mxu0 %v299
    %v536 = vpop.f32.mrf.mxu0
    %v537 = vadd.f32 %v433, %v536
    %538 = vdwg.mxu0
    %539 = vmatpush.msra.mxu0 %v427
    %540 = vmatpush.msra.mxu0 %v423
    %541 = vmatpush.msra.mxu0 %v419
    %542 = vmatpush.msra.mxu0 %v415
    %543 = vmatpush.msra.mxu0 %v411
    %544 = vmatpush.msra.mxu0 %v407
    %545 = vmatpush.msra.mxu0 %v403
    %546 = vmatpush.msra.mxu0 %v399
    %547 = vmatpush.msra.mxu0 %v395
    %548 = vmatpush.msra.mxu0 %v391
    %549 = vmatpush.msra.mxu0 %v387
    %550 = vmatpush.msra.mxu0 %v383
    %551 = vmatpush.msra.mxu0 %v379
    %552 = vmatpush.msra.mxu0 %v375
    %553 = vmatpush.msra.mxu0 %v371
    %554 = vmatpush.msra.mxu0 %v367
    %555 = vmatmul.f32.gmra.mxu0 %v300
    %v556 = vpop.f32.mrf.mxu0
    %v557 = vadd.f32 %v537, %v556
    %558 = vdwg.mxu0
    %559 = vmatpush.msra.mxu0 %v364
    %560 = vmatpush.msra.mxu0 %v360
    %561 = vmatpush.msra.mxu0 %v356
    %562 = vmatpush.msra.mxu0 %v352
    %563 = vmatpush.msra.mxu0 %v348
    %564 = vmatpush.msra.mxu0 %v344
    %565 = vmatpush.msra.mxu0 %v340
    %566 = vmatpush.msra.mxu0 %v336
    %567 = vmatpush.msra.mxu0 %v332
    %568 = vmatpush.msra.mxu0 %v328
    %569 = vmatpush.msra.mxu0 %v324
    %570 = vmatpush.msra.mxu0 %v320
    %571 = vmatpush.msra.mxu0 %v316
    %572 = vmatpush.msra.mxu0 %v312
    %573 = vmatpush.msra.mxu0 %v308
    %574 = vmatpush.msra.mxu0 %v304
    %575 = vmatmul.f32.gmra.mxu0 %v299
    %v576 = vpop.f32.mrf.mxu0
    %v577 = vadd.f32 %v434, %v576
    %578 = vdwg.mxu0
    %579 = vmatpush.msra.mxu0 %v428
    %580 = vmatpush.msra.mxu0 %v424
    %581 = vmatpush.msra.mxu0 %v420
    %582 = vmatpush.msra.mxu0 %v416
    %583 = vmatpush.msra.mxu0 %v412
    %584 = vmatpush.msra.mxu0 %v408
    %585 = vmatpush.msra.mxu0 %v404
    %586 = vmatpush.msra.mxu0 %v400
    %587 = vmatpush.msra.mxu0 %v396
    %588 = vmatpush.msra.mxu0 %v392
    %589 = vmatpush.msra.mxu0 %v388
    %590 = vmatpush.msra.mxu0 %v384
    %591 = vmatpush.msra.mxu0 %v380
    %592 = vmatpush.msra.mxu0 %v376
    %593 = vmatpush.msra.mxu0 %v372
    %594 = vmatpush.msra.mxu0 %v368
    %595 = vmatmul.f32.gmra.mxu0 %v300
    %v596 = vpop.f32.mrf.mxu0
    %v597 = vadd.f32 %v577, %v596
    %598 = vdwg.mxu0
    %v599 = vmax.f32 %v477, 0.0
    %v600 = vmax.f32 %v517, 0.0
    %v601 = vmax.f32 %v557, 0.0
    %v602 = vmax.f32 %v597, 0.0
    %v607 = vrot.slane %v600, 6
    %v608 = vrot.slane %v601, 4
    %v609 = vrot.slane %v602, 2
    %vm610 = vcmask 1041408
    %v611 = vsel %vm610, %v599, %v607
    %vm612 = vcmask 1045508
    %v613 = vsel %vm612, %v608, %v609
    %vm614 = vcmask 1043456
    %v615 = vsel %vm614, %v611, %v613
    %617 = vst [vmem:[%s7] sm:$0xff] %v615
    // Predicated region
    $region50: #{image_decoder64.5} parent=1 // pred_check
      _
    $region51: #{image_decoder64.5} parent=1 // pred_check_branch
      %619 = sbr.rel (0) target = $region53
    $region52: #{image_decoder64.5} parent=1 // pred_region
      _
    $region53: #{image_decoder64.5} parent=1 // pred_fallthru
      _
    // Predicated region
    $region54: #{image_decoder64.5} parent=1 // pred_check
      _
    $region55: #{image_decoder64.5} parent=1 // pred_check_branch
      %621 = sbr.rel (0) target = $region57
    $region56: #{image_decoder64.5} parent=1 // pred_region
      _
    $region57: #{image_decoder64.5} parent=1 // pred_fallthru
      _
    %622 = vsyncpa [#allocation3], 1
    %623 = vsyncpa [#allocation5], 1
    %624 = vsyncpa [#allocation8], 1

// kernel: tile.24
$region0: #{tile.24}
  %s0 = inlined_call_operand.vmem [shape: f32[4,32], index: 0, kind: input, shape index: {}]
  %s1 = inlined_call_operand.vmem [shape: f32[1,128], index: 1, kind: output, shape index: {}]
  $region1: #{tile.24} parent=0
    #allocation0 [shape = 'u8[4096]{0}', space=vmem, size = 0x1000, scoped, tag = 'scoped mem for output reshape']
    #allocation1 [shape = 'u8[4096]{0}', space=vmem, size = 0x1000, scoped, tag = 'scoped mem for input reshape']
    %s3 = ssub.s32 16, 1
    %v4 = vld [vmem:[%s0] sm:%s3]
    %5 = vst [vmem:[#allocation1] sm:%s3] %v4
    %v6 = vld [vmem:[#allocation1] sm:$0x1]
    %vm7 = vcmask 261120
    %8 = vst.msk [vmem:[#allocation0] sm:$0x1] %vm7, %v6
    %s9 = scalar_lea.vmem [#allocation1], 3
    %v10 = vld [vmem:[%s9] sm:$0x1]
    %11 = vrot.lane.b32.xlu0 %v10, 96
    %v12 = vpop.permute.xlu0 %11
    %vm13 = vcmask 1048320
    %14 = vst.msk [vmem:[#allocation0] sm:$0x1] %vm13, %v12
    %s15 = scalar_lea.vmem [#allocation1], 2
    %v16 = vld [vmem:[%s15] sm:$0x1]
    %17 = vrot.lane.b32.xlu0 %v16, 64
    %v18 = vpop.permute.xlu0 %17
    %vm19 = vcmask 785920
    %20 = vst.msk [vmem:[#allocation0] sm:$0x1] %vm19, %v18
    %s21 = scalar_lea.vmem [#allocation1], 1
    %v22 = vld [vmem:[%s21] sm:$0x1]
    %23 = vrot.lane.b32.xlu0 %v22, 32
    %v24 = vpop.permute.xlu0 %23
    %vm25 = vcmask 523520
    %26 = vst.msk [vmem:[#allocation0] sm:$0x1] %vm25, %v24
    %s28 = ssub.s32 2, 1
    %v29 = vld [vmem:[#allocation0] sm:%s28]
    %s31 = ssub.s32 2, 1
    %32 = vst [vmem:[%s1] sm:%s31] %v29

// kernel: tile.23
$region0: #{tile.23}
  #allocation0 [shape = 's32[1]{0}', space=sflag, size = 0x4, scoped, tag = 'scoped memory for tile.23']
  %s0 = inlined_call_operand.vmem [shape: f32[32], index: 0, kind: input, shape index: {}]
  %s1 = inlined_call_operand.vmem [shape: f32[4,32], index: 1, kind: output, shape index: {}]
  // Predicated region
  $region2: #{tile.23} parent=0 // pred_check
    _
  $region3: #{tile.23} parent=0 // pred_check_branch
    %3 = sbr.rel (0) target = $region5
  $region4: #{tile.23} parent=0 // pred_region
    _
  $region5: #{tile.23} parent=0 // pred_fallthru
    _
  %v4 = vld [vmem:[%s0] ss:$0 sm:$0xff]
  %5 = vst [vmem:[%s1] sm:$0xf] %v4

// kernel: image_decoder64.6
$region0: #{image_decoder64.6}
  #allocation0 [shape = 'u32[]', space=smem, size = 0x4, offset = 0x4, fixed_abs, tag = 'smem constant byte address 0x4 - core index']
  #allocation1 [shape = 'u32[72,128]{1,0:T(1,128)}', space=vmem, size = 0x9000, scoped, tag = 'internal scratch']
  %s0 = inlined_call_operand.vmem [shape: bf16[32,288], index: 0, kind: input, shape index: {}]
  %s1 = inlined_call_operand.vmem [shape: bf16[288,128], index: 1, kind: input, shape index: {}]
  %s2 = inlined_call_operand.vmem [shape: f32[1,128], index: 2, kind: input, shape index: {}]
  %s3 = inlined_call_operand.vmem [shape: f32[32,128], index: 3, kind: output, shape index: {}]
  %s4 = sld [smem:[#allocation0]]
  $region22: #{image_decoder64.6} parent=0
    _
  %s6 = ssub.s32 1, %s4
  %s7 = scalar_select 0, %s6, %s4
  // Predicated region
  $region2: #{image_decoder64.6} parent=0 // pred_check
    _
  $region3: #{image_decoder64.6} parent=0 // pred_check_branch
    %9 = sbr.rel (0) target = $region5
  $region4: #{image_decoder64.6} parent=0 // pred_region
    _
  $region5: #{image_decoder64.6} parent=0 // pred_fallthru
    _
  // Predicated region
  $region6: #{image_decoder64.6} parent=0 // pred_check
    _
  $region7: #{image_decoder64.6} parent=0 // pred_check_branch
    %11 = sbr.rel (0) target = $region9
  $region8: #{image_decoder64.6} parent=0 // pred_region
    _
  $region9: #{image_decoder64.6} parent=0 // pred_fallthru
    _
  // Predicated region
  $region10: #{image_decoder64.6} parent=0 // pred_check
    _
  $region11: #{image_decoder64.6} parent=0 // pred_check_branch
    %13 = sbr.rel (0) target = $region13
  $region12: #{image_decoder64.6} parent=0 // pred_region
    _
  $region13: #{image_decoder64.6} parent=0 // pred_fallthru
    _
  %v15 = vld [vmem:[%s0] sm:$0xff]
  %v16 = vld [vmem:[%s0 + $0x8] sm:$0xf]
  %v17 = vld [vmem:[%s0 + $0xc] sm:$0xff]
  %v18 = vld [vmem:[%s0 + $0x14] sm:$0xf]
  %v19 = vld [vmem:[%s0 + $0x18] sm:$0xff]
  %v20 = vld [vmem:[%s0 + $0x20] sm:$0xf]
  %v21 = vld [vmem:[%s0 + $0x24] sm:$0xff]
  %v22 = vld [vmem:[%s0 + $0x2c] sm:$0xf]
  %v23 = vld [vmem:[%s1] sm:$0xf]
  %v24 = vld [vmem:[%s1 + $0x4] sm:$0xf]
  %v25 = vld [vmem:[%s1 + $0x8] sm:$0xf]
  %v26 = vld [vmem:[%s1 + $0xc] sm:$0xf]
  %v27 = vld [vmem:[%s1 + $0x10] sm:$0xf]
  %v28 = vld [vmem:[%s1 + $0x14] sm:$0xf]
  %v29 = vld [vmem:[%s1 + $0x18] sm:$0xf]
  %v30 = vld [vmem:[%s1 + $0x1c] sm:$0xf]
  %v31 = vld [vmem:[%s1 + $0x20] sm:$0xf]
  %v32 = vld [vmem:[%s1 + $0x24] sm:$0xf]
  %v33 = vld [vmem:[%s1 + $0x28] sm:$0xf]
  %v34 = vld [vmem:[%s1 + $0x2c] sm:$0xf]
  %v35 = vld [vmem:[%s1 + $0x30] sm:$0xf]
  %v36 = vld [vmem:[%s1 + $0x34] sm:$0xf]
  %v37 = vld [vmem:[%s1 + $0x38] sm:$0xf]
  %v38 = vld [vmem:[%s1 + $0x3c] sm:$0xf]
  %v39 = vld [vmem:[%s1 + $0x40] sm:$0xf]
  %v40 = vld [vmem:[%s1 + $0x44] sm:$0xf]
  %v41 = vld [vmem:[%s1 + $0x48] sm:$0xf]
  %v42 = vld [vmem:[%s1 + $0x4c] sm:$0xf]
  %v43 = vld [vmem:[%s1 + $0x50] sm:$0xf]
  %v44 = vld [vmem:[%s1 + $0x54] sm:$0xf]
  %v45 = vld [vmem:[%s1 + $0x58] sm:$0xf]
  %v46 = vld [vmem:[%s1 + $0x5c] sm:$0xf]
  %v47 = vld [vmem:[%s1 + $0x60] sm:$0xf]
  %v48 = vld [vmem:[%s1 + $0x64] sm:$0xf]
  %v49 = vld [vmem:[%s1 + $0x68] sm:$0xf]
  %v50 = vld [vmem:[%s1 + $0x6c] sm:$0xf]
  %v51 = vld [vmem:[%s1 + $0x70] sm:$0xf]
  %v52 = vld [vmem:[%s1 + $0x74] sm:$0xf]
  %v53 = vld [vmem:[%s1 + $0x78] sm:$0xf]
  %v54 = vld [vmem:[%s1 + $0x7c] sm:$0xf]
  %v55 = vld [vmem:[%s1 + $0x80] sm:$0xf]
  %v56 = vld [vmem:[%s1 + $0x84] sm:$0xf]
  %v57 = vld [vmem:[%s1 + $0x88] sm:$0xf]
  %v58 = vld [vmem:[%s1 + $0x8c] sm:$0xf]
  %v59 = vld [vmem:[%s2] sm:$0x1]
  %v61 = vperm.slane %v59, 0
  %v71 = vunpack.c.l.b16 %v15
  %v72 = vunpack.c.h.b16 %v15
  %v73 = vunpack.c.l.b16 %v16
  %v74 = vunpack.c.l.b16 %v17
  %v75 = vunpack.c.h.b16 %v17
  %v76 = vunpack.c.l.b16 %v18
  %v77 = vunpack.c.l.b16 %v19
  %v78 = vunpack.c.h.b16 %v19
  %v79 = vunpack.c.l.b16 %v20
  %v80 = vunpack.c.l.b16 %v21
  %v81 = vunpack.c.h.b16 %v21
  %v82 = vunpack.c.l.b16 %v22
  %v83 = vpack.c.b16 %v74, %v71
  %v84 = vpack.c.b16 %v75, %v72
  %v85 = vpack.c.b16 %v76, %v73
  %v86 = vpack.c.b16 %v80, %v77
  %v87 = vpack.c.b16 %v81, %v78
  %v88 = vpack.c.b16 %v82, %v79
  %v129 = vunpack.c.l.b16 %v23
  %v130 = vunpack.c.l.b16 %v24
  %v131 = vunpack.c.l.b16 %v25
  %v132 = vunpack.c.l.b16 %v26
  %v133 = vunpack.c.l.b16 %v27
  %v134 = vunpack.c.l.b16 %v28
  %v135 = vunpack.c.l.b16 %v29
  %v136 = vunpack.c.l.b16 %v30
  %v137 = vunpack.c.l.b16 %v31
  %v138 = vunpack.c.l.b16 %v32
  %v139 = vunpack.c.l.b16 %v33
  %v140 = vunpack.c.l.b16 %v34
  %v141 = vunpack.c.l.b16 %v35
  %v142 = vunpack.c.l.b16 %v36
  %v143 = vunpack.c.l.b16 %v37
  %v144 = vunpack.c.l.b16 %v38
  %v145 = vunpack.c.l.b16 %v39
  %v146 = vunpack.c.l.b16 %v40
  %v147 = vunpack.c.l.b16 %v41
  %v148 = vunpack.c.l.b16 %v42
  %v149 = vunpack.c.l.b16 %v43
  %v150 = vunpack.c.l.b16 %v44
  %v151 = vunpack.c.l.b16 %v45
  %v152 = vunpack.c.l.b16 %v46
  %v153 = vunpack.c.l.b16 %v47
  %v154 = vunpack.c.l.b16 %v48
  %v155 = vunpack.c.l.b16 %v49
  %v156 = vunpack.c.l.b16 %v50
  %v157 = vunpack.c.l.b16 %v51
  %v158 = vunpack.c.l.b16 %v52
  %v159 = vunpack.c.l.b16 %v53
  %v160 = vunpack.c.l.b16 %v54
  %v161 = vunpack.c.l.b16 %v55
  %v162 = vunpack.c.l.b16 %v56
  %v163 = vunpack.c.l.b16 %v57
  %v164 = vunpack.c.l.b16 %v58
  %v165 = vpack.c.b16 %v130, %v129
  %v166 = vpack.c.b16 %v132, %v131
  %v167 = vpack.c.b16 %v134, %v133
  %v168 = vpack.c.b16 %v136, %v135
  %v169 = vpack.c.b16 %v138, %v137
  %v170 = vpack.c.b16 %v140, %v139
  %v171 = vpack.c.b16 %v142, %v141
  %v172 = vpack.c.b16 %v144, %v143
  %v173 = vpack.c.b16 %v146, %v145
  %v174 = vpack.c.b16 %v148, %v147
  %v175 = vpack.c.b16 %v150, %v149
  %v176 = vpack.c.b16 %v152, %v151
  %v177 = vpack.c.b16 %v154, %v153
  %v178 = vpack.c.b16 %v156, %v155
  %v179 = vpack.c.b16 %v158, %v157
  %v180 = vpack.c.b16 %v160, %v159
  %v181 = vpack.c.b16 %v162, %v161
  %v182 = vpack.c.b16 %v164, %v163
  %vm201 = vcmask 261120
  %v203 = vsel %vm201, %v85, 0
  %v206 = vsel %vm201, %v88, 0
  %208 = vmatpush.bf16.msra.mxu0 %v172
  %209 = vmatpush.bf16.msra.mxu0 %v171
  %210 = vmatpush.bf16.msra.mxu0 %v170
  %211 = vmatpush.bf16.msra.mxu0 %v169
  %212 = vmatpush.bf16.msra.mxu0 %v168
  %213 = vmatpush.bf16.msra.mxu0 %v167
  %214 = vmatpush.bf16.msra.mxu0 %v166
  %215 = vmatpush.bf16.msra.mxu0 %v165
  %216 = vmatmul.bf16.gmra.mxu0 %v83
  %v217 = vpop.f32.mrf.mxu0
  %v218 = vadd.f32 %v61, %v217
  %v219 = vpop.f32.mrf.mxu0
  %v220 = vadd.f32 %v61, %v219
  %221 = vmatmul.bf16.gmra.mxu0 %v86
  %v222 = vpop.f32.mrf.mxu0
  %v223 = vadd.f32 %v61, %v222
  %v224 = vpop.f32.mrf.mxu0
  %v225 = vadd.f32 %v61, %v224
  %226 = vdwg.mxu0
  %227 = vmatpush.bf16.msra.mxu0 %v180
  %228 = vmatpush.bf16.msra.mxu0 %v179
  %229 = vmatpush.bf16.msra.mxu0 %v178
  %230 = vmatpush.bf16.msra.mxu0 %v177
  %231 = vmatpush.bf16.msra.mxu0 %v176
  %232 = vmatpush.bf16.msra.mxu0 %v175
  %233 = vmatpush.bf16.msra.mxu0 %v174
  %234 = vmatpush.bf16.msra.mxu0 %v173
  %235 = vmatmul.bf16.gmra.mxu0 %v84
  %v236 = vpop.f32.mrf.mxu0
  %v237 = vadd.f32 %v218, %v236
  %v238 = vpop.f32.mrf.mxu0
  %v239 = vadd.f32 %v220, %v238
  %240 = vmatmul.bf16.gmra.mxu0 %v87
  %v241 = vpop.f32.mrf.mxu0
  %v242 = vadd.f32 %v223, %v241
  %v243 = vpop.f32.mrf.mxu0
  %v244 = vadd.f32 %v225, %v243
  %245 = vdwg.mxu0
  %246 = vmatpush.bf16.msra.mxu0 0
  %247 = vmatpush.bf16.msra.mxu0 0
  %248 = vmatpush.bf16.msra.mxu0 0
  %249 = vmatpush.bf16.msra.mxu0 0
  %250 = vmatpush.bf16.msra.mxu0 0
  %251 = vmatpush.bf16.msra.mxu0 0
  %252 = vmatpush.bf16.msra.mxu0 %v182
  %253 = vmatpush.bf16.msra.mxu0 %v181
  %254 = vmatmul.bf16.gmra.mxu0 %v203
  %v255 = vpop.f32.mrf.mxu0
  %v256 = vadd.f32 %v237, %v255
  %v257 = vpop.f32.mrf.mxu0
  %v258 = vadd.f32 %v239, %v257
  %259 = vmatmul.bf16.gmra.mxu0 %v206
  %v260 = vpop.f32.mrf.mxu0
  %v261 = vadd.f32 %v242, %v260
  %v262 = vpop.f32.mrf.mxu0
  %v263 = vadd.f32 %v244, %v262
  %264 = vdwg.mxu0
  %v265 = vmax.f32 %v256, 0.0
  %v266 = vmax.f32 %v258, 0.0
  %v267 = vmax.f32 %v261, 0.0
  %v268 = vmax.f32 %v263, 0.0
  %269 = vst [vmem:[%s3] sm:$0xff] %v265
  %270 = vst [vmem:[%s3 + $0x8] sm:$0xff] %v266
  %271 = vst [vmem:[%s3 + $0x10] sm:$0xff] %v267
  %272 = vst [vmem:[%s3 + $0x18] sm:$0xff] %v268
  // Predicated region
  $region14: #{image_decoder64.6} parent=0 // pred_check
    _
  $region15: #{image_decoder64.6} parent=0 // pred_check_branch
    %274 = sbr.rel (0) target = $region17
  $region16: #{image_decoder64.6} parent=0 // pred_region
    _
  $region17: #{image_decoder64.6} parent=0 // pred_fallthru
    _
  // Predicated region
  $region18: #{image_decoder64.6} parent=0 // pred_check
    _
  $region19: #{image_decoder64.6} parent=0 // pred_check_branch
    %276 = sbr.rel (0) target = $region21
  $region20: #{image_decoder64.6} parent=0 // pred_region
    _
  $region21: #{image_decoder64.6} parent=0 // pred_fallthru
    _

// kernel: image_decoder64.7
$region0: #{image_decoder64.7}
  #allocation0 [shape = 'u32[]', space=smem, size = 0x4, offset = 0x4, fixed_abs, tag = 'smem constant byte address 0x4 - core index']
  #allocation1 [shape = 'u32[72,128]{1,0:T(1,128)}', space=vmem, size = 0x9000, scoped, tag = 'internal scratch']
  %s0 = inlined_call_operand.vmem [shape: bf16[128,288], index: 0, kind: input, shape index: {}]
  %s1 = inlined_call_operand.vmem [shape: bf16[288,128], index: 1, kind: input, shape index: {}]
  %s2 = inlined_call_operand.vmem [shape: f32[1,128], index: 2, kind: input, shape index: {}]
  %s3 = inlined_call_operand.vmem [shape: f32[128,128], index: 3, kind: output, shape index: {}]
  %s4 = sld [smem:[#allocation0]]
  $region22: #{image_decoder64.7} parent=0
    _
  %s6 = ssub.s32 1, %s4
  %s7 = scalar_select 0, %s6, %s4
  // Predicated region
  $region2: #{image_decoder64.7} parent=0 // pred_check
    _
  $region3: #{image_decoder64.7} parent=0 // pred_check_branch
    %9 = sbr.rel (0) target = $region5
  $region4: #{image_decoder64.7} parent=0 // pred_region
    _
  $region5: #{image_decoder64.7} parent=0 // pred_fallthru
    _
  // Predicated region
  $region6: #{image_decoder64.7} parent=0 // pred_check
    _
  $region7: #{image_decoder64.7} parent=0 // pred_check_branch
    %11 = sbr.rel (0) target = $region9
  $region8: #{image_decoder64.7} parent=0 // pred_region
    _
  $region9: #{image_decoder64.7} parent=0 // pred_fallthru
    _
  // Predicated region
  $region10: #{image_decoder64.7} parent=0 // pred_check
    _
  $region11: #{image_decoder64.7} parent=0 // pred_check_branch
    %13 = sbr.rel (0) target = $region13
  $region12: #{image_decoder64.7} parent=0 // pred_region
    _
  $region13: #{image_decoder64.7} parent=0 // pred_fallthru
    _
  %v15 = vld [vmem:[%s0] sm:$0xff]
  %v16 = vld [vmem:[%s0 + $0x8] sm:$0xf]
  %v17 = vld [vmem:[%s0 + $0xc] sm:$0xff]
  %v18 = vld [vmem:[%s0 + $0x14] sm:$0xf]
  %v19 = vld [vmem:[%s0 + $0x18] sm:$0xff]
  %v20 = vld [vmem:[%s0 + $0x20] sm:$0xf]
  %v21 = vld [vmem:[%s0 + $0x24] sm:$0xff]
  %v22 = vld [vmem:[%s0 + $0x2c] sm:$0xf]
  %v23 = vld [vmem:[%s0 + $0x30] sm:$0xff]
  %v24 = vld [vmem:[%s0 + $0x38] sm:$0xf]
  %v25 = vld [vmem:[%s0 + $0x3c] sm:$0xff]
  %v26 = vld [vmem:[%s0 + $0x44] sm:$0xf]
  %v27 = vld [vmem:[%s0 + $0x48] sm:$0xff]
  %v28 = vld [vmem:[%s0 + $0x50] sm:$0xf]
  %v29 = vld [vmem:[%s0 + $0x54] sm:$0xff]
  %v30 = vld [vmem:[%s0 + $0x5c] sm:$0xf]
  %v31 = vld [vmem:[%s0 + $0x60] sm:$0xff]
  %v32 = vld [vmem:[%s0 + $0x68] sm:$0xf]
  %v33 = vld [vmem:[%s0 + $0x6c] sm:$0xff]
  %v34 = vld [vmem:[%s0 + $0x74] sm:$0xf]
  %v35 = vld [vmem:[%s0 + $0x78] sm:$0xff]
  %v36 = vld [vmem:[%s0 + $0x80] sm:$0xf]
  %v37 = vld [vmem:[%s0 + $0x84] sm:$0xff]
  %v38 = vld [vmem:[%s0 + $0x8c] sm:$0xf]
  %v39 = vld [vmem:[%s0 + $0x90] sm:$0xff]
  %v40 = vld [vmem:[%s0 + $0x98] sm:$0xf]
  %v41 = vld [vmem:[%s0 + $0x9c] sm:$0xff]
  %v42 = vld [vmem:[%s0 + $0xa4] sm:$0xf]
  %v43 = vld [vmem:[%s0 + $0xa8] sm:$0xff]
  %v44 = vld [vmem:[%s0 + $0xb0] sm:$0xf]
  %v45 = vld [vmem:[%s0 + $0xb4] sm:$0xff]
  %v46 = vld [vmem:[%s0 + $0xbc] sm:$0xf]
  %v47 = vld [vmem:[%s1] sm:$0xf]
  %v48 = vld [vmem:[%s1 + $0x4] sm:$0xf]
  %v49 = vld [vmem:[%s1 + $0x8] sm:$0xf]
  %v50 = vld [vmem:[%s1 + $0xc] sm:$0xf]
  %v51 = vld [vmem:[%s1 + $0x10] sm:$0xf]
  %v52 = vld [vmem:[%s1 + $0x14] sm:$0xf]
  %v53 = vld [vmem:[%s1 + $0x18] sm:$0xf]
  %v54 = vld [vmem:[%s1 + $0x1c] sm:$0xf]
  %v55 = vld [vmem:[%s1 + $0x20] sm:$0xf]
  %v56 = vld [vmem:[%s1 + $0x24] sm:$0xf]
  %v57 = vld [vmem:[%s1 + $0x28] sm:$0xf]
  %v58 = vld [vmem:[%s1 + $0x2c] sm:$0xf]
  %v59 = vld [vmem:[%s1 + $0x30] sm:$0xf]
  %v60 = vld [vmem:[%s1 + $0x34] sm:$0xf]
  %v61 = vld [vmem:[%s1 + $0x38] sm:$0xf]
  %v62 = vld [vmem:[%s1 + $0x3c] sm:$0xf]
  %v63 = vld [vmem:[%s1 + $0x40] sm:$0xf]
  %v64 = vld [vmem:[%s1 + $0x44] sm:$0xf]
  %v65 = vld [vmem:[%s1 + $0x48] sm:$0xf]
  %v66 = vld [vmem:[%s1 + $0x4c] sm:$0xf]
  %v67 = vld [vmem:[%s1 + $0x50] sm:$0xf]
  %v68 = vld [vmem:[%s1 + $0x54] sm:$0xf]
  %v69 = vld [vmem:[%s1 + $0x58] sm:$0xf]
  %v70 = vld [vmem:[%s1 + $0x5c] sm:$0xf]
  %v71 = vld [vmem:[%s1 + $0x60] sm:$0xf]
  %v72 = vld [vmem:[%s1 + $0x64] sm:$0xf]
  %v73 = vld [vmem:[%s1 + $0x68] sm:$0xf]
  %v74 = vld [vmem:[%s1 + $0x6c] sm:$0xf]
  %v75 = vld [vmem:[%s1 + $0x70] sm:$0xf]
  %v76 = vld [vmem:[%s1 + $0x74] sm:$0xf]
  %v77 = vld [vmem:[%s1 + $0x78] sm:$0xf]
  %v78 = vld [vmem:[%s1 + $0x7c] sm:$0xf]
  %v79 = vld [vmem:[%s1 + $0x80] sm:$0xf]
  %v80 = vld [vmem:[%s1 + $0x84] sm:$0xf]
  %v81 = vld [vmem:[%s1 + $0x88] sm:$0xf]
  %v82 = vld [vmem:[%s1 + $0x8c] sm:$0xf]
  %v83 = vld [vmem:[%s2] sm:$0x1]
  %v85 = vperm.slane %v83, 0
  %v119 = vunpack.c.l.b16 %v15
  %v120 = vunpack.c.h.b16 %v15
  %v121 = vunpack.c.l.b16 %v16
  %v122 = vunpack.c.l.b16 %v17
  %v123 = vunpack.c.h.b16 %v17
  %v124 = vunpack.c.l.b16 %v18
  %v125 = vunpack.c.l.b16 %v19
  %v126 = vunpack.c.h.b16 %v19
  %v127 = vunpack.c.l.b16 %v20
  %v128 = vunpack.c.l.b16 %v21
  %v129 = vunpack.c.h.b16 %v21
  %v130 = vunpack.c.l.b16 %v22
  %v131 = vunpack.c.l.b16 %v23
  %v132 = vunpack.c.h.b16 %v23
  %v133 = vunpack.c.l.b16 %v24
  %v134 = vunpack.c.l.b16 %v25
  %v135 = vunpack.c.h.b16 %v25
  %v136 = vunpack.c.l.b16 %v26
  %v137 = vunpack.c.l.b16 %v27
  %v138 = vunpack.c.h.b16 %v27
  %v139 = vunpack.c.l.b16 %v28
  %v140 = vunpack.c.l.b16 %v29
  %v141 = vunpack.c.h.b16 %v29
  %v142 = vunpack.c.l.b16 %v30
  %v143 = vunpack.c.l.b16 %v31
  %v144 = vunpack.c.h.b16 %v31
  %v145 = vunpack.c.l.b16 %v32
  %v146 = vunpack.c.l.b16 %v33
  %v147 = vunpack.c.h.b16 %v33
  %v148 = vunpack.c.l.b16 %v34
  %v149 = vunpack.c.l.b16 %v35
  %v150 = vunpack.c.h.b16 %v35
  %v151 = vunpack.c.l.b16 %v36
  %v152 = vunpack.c.l.b16 %v37
  %v153 = vunpack.c.h.b16 %v37
  %v154 = vunpack.c.l.b16 %v38
  %v155 = vunpack.c.l.b16 %v39
  %v156 = vunpack.c.h.b16 %v39
  %v157 = vunpack.c.l.b16 %v40
  %v158 = vunpack.c.l.b16 %v41
  %v159 = vunpack.c.h.b16 %v41
  %v160 = vunpack.c.l.b16 %v42
  %v161 = vunpack.c.l.b16 %v43
  %v162 = vunpack.c.h.b16 %v43
  %v163 = vunpack.c.l.b16 %v44
  %v164 = vunpack.c.l.b16 %v45
  %v165 = vunpack.c.h.b16 %v45
  %v166 = vunpack.c.l.b16 %v46
  %v167 = vpack.c.b16 %v122, %v119
  %v168 = vpack.c.b16 %v123, %v120
  %v169 = vpack.c.b16 %v124, %v121
  %v170 = vpack.c.b16 %v128, %v125
  %v171 = vpack.c.b16 %v129, %v126
  %v172 = vpack.c.b16 %v130, %v127
  %v173 = vpack.c.b16 %v134, %v131
  %v174 = vpack.c.b16 %v135, %v132
  %v175 = vpack.c.b16 %v136, %v133
  %v176 = vpack.c.b16 %v140, %v137
  %v177 = vpack.c.b16 %v141, %v138
  %v178 = vpack.c.b16 %v142, %v139
  %v179 = vpack.c.b16 %v146, %v143
  %v180 = vpack.c.b16 %v147, %v144
  %v181 = vpack.c.b16 %v148, %v145
  %v182 = vpack.c.b16 %v152, %v149
  %v183 = vpack.c.b16 %v153, %v150
  %v184 = vpack.c.b16 %v154, %v151
  %v185 = vpack.c.b16 %v158, %v155
  %v186 = vpack.c.b16 %v159, %v156
  %v187 = vpack.c.b16 %v160, %v157
  %v188 = vpack.c.b16 %v164, %v161
  %v189 = vpack.c.b16 %v165, %v162
  %v190 = vpack.c.b16 %v166, %v163
  %v243 = vunpack.c.l.b16 %v47
  %v244 = vunpack.c.l.b16 %v48
  %v245 = vunpack.c.l.b16 %v49
  %v246 = vunpack.c.l.b16 %v50
  %v247 = vunpack.c.l.b16 %v51
  %v248 = vunpack.c.l.b16 %v52
  %v249 = vunpack.c.l.b16 %v53
  %v250 = vunpack.c.l.b16 %v54
  %v251 = vunpack.c.l.b16 %v55
  %v252 = vunpack.c.l.b16 %v56
  %v253 = vunpack.c.l.b16 %v57
  %v254 = vunpack.c.l.b16 %v58
  %v255 = vunpack.c.l.b16 %v59
  %v256 = vunpack.c.l.b16 %v60
  %v257 = vunpack.c.l.b16 %v61
  %v258 = vunpack.c.l.b16 %v62
  %v259 = vunpack.c.l.b16 %v63
  %v260 = vunpack.c.l.b16 %v64
  %v261 = vunpack.c.l.b16 %v65
  %v262 = vunpack.c.l.b16 %v66
  %v263 = vunpack.c.l.b16 %v67
  %v264 = vunpack.c.l.b16 %v68
  %v265 = vunpack.c.l.b16 %v69
  %v266 = vunpack.c.l.b16 %v70
  %v267 = vunpack.c.l.b16 %v71
  %v268 = vunpack.c.l.b16 %v72
  %v269 = vunpack.c.l.b16 %v73
  %v270 = vunpack.c.l.b16 %v74
  %v271 = vunpack.c.l.b16 %v75
  %v272 = vunpack.c.l.b16 %v76
  %v273 = vunpack.c.l.b16 %v77
  %v274 = vunpack.c.l.b16 %v78
  %v275 = vunpack.c.l.b16 %v79
  %v276 = vunpack.c.l.b16 %v80
  %v277 = vunpack.c.l.b16 %v81
  %v278 = vunpack.c.l.b16 %v82
  %v279 = vpack.c.b16 %v244, %v243
  %v280 = vpack.c.b16 %v246, %v245
  %v281 = vpack.c.b16 %v248, %v247
  %v282 = vpack.c.b16 %v250, %v249
  %v283 = vpack.c.b16 %v252, %v251
  %v284 = vpack.c.b16 %v254, %v253
  %v285 = vpack.c.b16 %v256, %v255
  %v286 = vpack.c.b16 %v258, %v257
  %v287 = vpack.c.b16 %v260, %v259
  %v288 = vpack.c.b16 %v262, %v261
  %v289 = vpack.c.b16 %v264, %v263
  %v290 = vpack.c.b16 %v266, %v265
  %v291 = vpack.c.b16 %v268, %v267
  %v292 = vpack.c.b16 %v270, %v269
  %v293 = vpack.c.b16 %v272, %v271
  %v294 = vpack.c.b16 %v274, %v273
  %v295 = vpack.c.b16 %v276, %v275
  %v296 = vpack.c.b16 %v278, %v277
  %vm315 = vcmask 261120
  %v317 = vsel %vm315, %v169, 0
  %v320 = vsel %vm315, %v172, 0
  %v323 = vsel %vm315, %v175, 0
  %v326 = vsel %vm315, %v178, 0
  %v329 = vsel %vm315, %v181, 0
  %v332 = vsel %vm315, %v184, 0
  %v335 = vsel %vm315, %v187, 0
  %v338 = vsel %vm315, %v190, 0
  %340 = vmatpush.bf16.msra.mxu0 %v286
  %341 = vmatpush.bf16.msra.mxu0 %v285
  %342 = vmatpush.bf16.msra.mxu0 %v284
  %343 = vmatpush.bf16.msra.mxu0 %v283
  %344 = vmatpush.bf16.msra.mxu0 %v282
  %345 = vmatpush.bf16.msra.mxu0 %v281
  %346 = vmatpush.bf16.msra.mxu0 %v280
  %347 = vmatpush.bf16.msra.mxu0 %v279
  %348 = vmatmul.bf16.gmra.mxu0 %v167
  %v349 = vpop.f32.mrf.mxu0
  %v350 = vadd.f32 %v85, %v349
  %v351 = vpop.f32.mrf.mxu0
  %v352 = vadd.f32 %v85, %v351
  %353 = vmatmul.bf16.gmra.mxu0 %v170
  %v354 = vpop.f32.mrf.mxu0
  %v355 = vadd.f32 %v85, %v354
  %v356 = vpop.f32.mrf.mxu0
  %v357 = vadd.f32 %v85, %v356
  %358 = vmatmul.bf16.gmra.mxu0 %v173
  %v359 = vpop.f32.mrf.mxu0
  %v360 = vadd.f32 %v85, %v359
  %v361 = vpop.f32.mrf.mxu0
  %v362 = vadd.f32 %v85, %v361
  %363 = vmatmul.bf16.gmra.mxu0 %v176
  %v364 = vpop.f32.mrf.mxu0
  %v365 = vadd.f32 %v85, %v364
  %v366 = vpop.f32.mrf.mxu0
  %v367 = vadd.f32 %v85, %v366
  %368 = vmatmul.bf16.gmra.mxu0 %v179
  %v369 = vpop.f32.mrf.mxu0
  %v370 = vadd.f32 %v85, %v369
  %v371 = vpop.f32.mrf.mxu0
  %v372 = vadd.f32 %v85, %v371
  %373 = vmatmul.bf16.gmra.mxu0 %v182
  %v374 = vpop.f32.mrf.mxu0
  %v375 = vadd.f32 %v85, %v374
  %v376 = vpop.f32.mrf.mxu0
  %v377 = vadd.f32 %v85, %v376
  %378 = vmatmul.bf16.gmra.mxu0 %v185
  %v379 = vpop.f32.mrf.mxu0
  %v380 = vadd.f32 %v85, %v379
  %v381 = vpop.f32.mrf.mxu0
  %v382 = vadd.f32 %v85, %v381
  %383 = vmatmul.bf16.gmra.mxu0 %v188
  %v384 = vpop.f32.mrf.mxu0
  %v385 = vadd.f32 %v85, %v384
  %v386 = vpop.f32.mrf.mxu0
  %v387 = vadd.f32 %v85, %v386
  %388 = vdwg.mxu0
  %389 = vmatpush.bf16.msra.mxu0 %v294
  %390 = vmatpush.bf16.msra.mxu0 %v293
  %391 = vmatpush.bf16.msra.mxu0 %v292
  %392 = vmatpush.bf16.msra.mxu0 %v291
  %393 = vmatpush.bf16.msra.mxu0 %v290
  %394 = vmatpush.bf16.msra.mxu0 %v289
  %395 = vmatpush.bf16.msra.mxu0 %v288
  %396 = vmatpush.bf16.msra.mxu0 %v287
  %397 = vmatmul.bf16.gmra.mxu0 %v168
  %v398 = vpop.f32.mrf.mxu0
  %v399 = vadd.f32 %v350, %v398
  %v400 = vpop.f32.mrf.mxu0
  %v401 = vadd.f32 %v352, %v400
  %402 = vmatmul.bf16.gmra.mxu0 %v171
  %v403 = vpop.f32.mrf.mxu0
  %v404 = vadd.f32 %v355, %v403
  %v405 = vpop.f32.mrf.mxu0
  %v406 = vadd.f32 %v357, %v405
  %407 = vmatmul.bf16.gmra.mxu0 %v174
  %v408 = vpop.f32.mrf.mxu0
  %v409 = vadd.f32 %v360, %v408
  %v410 = vpop.f32.mrf.mxu0
  %v411 = vadd.f32 %v362, %v410
  %412 = vmatmul.bf16.gmra.mxu0 %v177
  %v413 = vpop.f32.mrf.mxu0
  %v414 = vadd.f32 %v365, %v413
  %v415 = vpop.f32.mrf.mxu0
  %v416 = vadd.f32 %v367, %v415
  %417 = vmatmul.bf16.gmra.mxu0 %v180
  %v418 = vpop.f32.mrf.mxu0
  %v419 = vadd.f32 %v370, %v418
  %v420 = vpop.f32.mrf.mxu0
  %v421 = vadd.f32 %v372, %v420
  %422 = vmatmul.bf16.gmra.mxu0 %v183
  %v423 = vpop.f32.mrf.mxu0
  %v424 = vadd.f32 %v375, %v423
  %v425 = vpop.f32.mrf.mxu0
  %v426 = vadd.f32 %v377, %v425
  %427 = vmatmul.bf16.gmra.mxu0 %v186
  %v428 = vpop.f32.mrf.mxu0
  %v429 = vadd.f32 %v380, %v428
  %v430 = vpop.f32.mrf.mxu0
  %v431 = vadd.f32 %v382, %v430
  %432 = vmatmul.bf16.gmra.mxu0 %v189
  %v433 = vpop.f32.mrf.mxu0
  %v434 = vadd.f32 %v385, %v433
  %v435 = vpop.f32.mrf.mxu0
  %v436 = vadd.f32 %v387, %v435
  %437 = vdwg.mxu0
  %438 = vmatpush.bf16.msra.mxu0 0
  %439 = vmatpush.bf16.msra.mxu0 0
  %440 = vmatpush.bf16.msra.mxu0 0
  %441 = vmatpush.bf16.msra.mxu0 0
  %442 = vmatpush.bf16.msra.mxu0 0
  %443 = vmatpush.bf16.msra.mxu0 0
  %444 = vmatpush.bf16.msra.mxu0 %v296
  %445 = vmatpush.bf16.msra.mxu0 %v295
  %446 = vmatmul.bf16.gmra.mxu0 %v317
  %v447 = vpop.f32.mrf.mxu0
  %v448 = vadd.f32 %v399, %v447
  %v449 = vpop.f32.mrf.mxu0
  %v450 = vadd.f32 %v401, %v449
  %451 = vmatmul.bf16.gmra.mxu0 %v320
  %v452 = vpop.f32.mrf.mxu0
  %v453 = vadd.f32 %v404, %v452
  %v454 = vpop.f32.mrf.mxu0
  %v455 = vadd.f32 %v406, %v454
  %456 = vmatmul.bf16.gmra.mxu0 %v323
  %v457 = vpop.f32.mrf.mxu0
  %v458 = vadd.f32 %v409, %v457
  %v459 = vpop.f32.mrf.mxu0
  %v460 = vadd.f32 %v411, %v459
  %461 = vmatmul.bf16.gmra.mxu0 %v326
  %v462 = vpop.f32.mrf.mxu0
  %v463 = vadd.f32 %v414, %v462
  %v464 = vpop.f32.mrf.mxu0
  %v465 = vadd.f32 %v416, %v464
  %466 = vmatmul.bf16.gmra.mxu0 %v329
  %v467 = vpop.f32.mrf.mxu0
  %v468 = vadd.f32 %v419, %v467
  %v469 = vpop.f32.mrf.mxu0
  %v470 = vadd.f32 %v421, %v469
  %471 = vmatmul.bf16.gmra.mxu0 %v332
  %v472 = vpop.f32.mrf.mxu0
  %v473 = vadd.f32 %v424, %v472
  %v474 = vpop.f32.mrf.mxu0
  %v475 = vadd.f32 %v426, %v474
  %476 = vmatmul.bf16.gmra.mxu0 %v335
  %v477 = vpop.f32.mrf.mxu0
  %v478 = vadd.f32 %v429, %v477
  %v479 = vpop.f32.mrf.mxu0
  %v480 = vadd.f32 %v431, %v479
  %481 = vmatmul.bf16.gmra.mxu0 %v338
  %v482 = vpop.f32.mrf.mxu0
  %v483 = vadd.f32 %v434, %v482
  %v484 = vpop.f32.mrf.mxu0
  %v485 = vadd.f32 %v436, %v484
  %486 = vdwg.mxu0
  %v487 = vmax.f32 %v448, 0.0
  %v488 = vmax.f32 %v450, 0.0
  %v489 = vmax.f32 %v453, 0.0
  %v490 = vmax.f32 %v455, 0.0
  %v491 = vmax.f32 %v458, 0.0
  %v492 = vmax.f32 %v460, 0.0
  %v493 = vmax.f32 %v463, 0.0
  %v494 = vmax.f32 %v465, 0.0
  %v495 = vmax.f32 %v468, 0.0
  %v496 = vmax.f32 %v470, 0.0
  %v497 = vmax.f32 %v473, 0.0
  %v498 = vmax.f32 %v475, 0.0
  %v499 = vmax.f32 %v478, 0.0
  %v500 = vmax.f32 %v480, 0.0
  %v501 = vmax.f32 %v483, 0.0
  %v502 = vmax.f32 %v485, 0.0
  %503 = vst [vmem:[%s3] sm:$0xff] %v487
  %504 = vst [vmem:[%s3 + $0x8] sm:$0xff] %v488
  %505 = vst [vmem:[%s3 + $0x10] sm:$0xff] %v489
  %506 = vst [vmem:[%s3 + $0x18] sm:$0xff] %v490
  %507 = vst [vmem:[%s3 + $0x20] sm:$0xff] %v491
  %508 = vst [vmem:[%s3 + $0x28] sm:$0xff] %v492
  %509 = vst [vmem:[%s3 + $0x30] sm:$0xff] %v493
  %510 = vst [vmem:[%s3 + $0x38] sm:$0xff] %v494
  %511 = vst [vmem:[%s3 + $0x40] sm:$0xff] %v495
  %512 = vst [vmem:[%s3 + $0x48] sm:$0xff] %v496
  %513 = vst [vmem:[%s3 + $0x50] sm:$0xff] %v497
  %514 = vst [vmem:[%s3 + $0x58] sm:$0xff] %v498
  %515 = vst [vmem:[%s3 + $0x60] sm:$0xff] %v499
  %516 = vst [vmem:[%s3 + $0x68] sm:$0xff] %v500
  %517 = vst [vmem:[%s3 + $0x70] sm:$0xff] %v501
  %518 = vst [vmem:[%s3 + $0x78] sm:$0xff] %v502
  // Predicated region
  $region14: #{image_decoder64.7} parent=0 // pred_check
    _
  $region15: #{image_decoder64.7} parent=0 // pred_check_branch
    %520 = sbr.rel (0) target = $region17
  $region16: #{image_decoder64.7} parent=0 // pred_region
    _
  $region17: #{image_decoder64.7} parent=0 // pred_fallthru
    _
  // Predicated region
  $region18: #{image_decoder64.7} parent=0 // pred_check
    _
  $region19: #{image_decoder64.7} parent=0 // pred_check_branch
    %522 = sbr.rel (0) target = $region21
  $region20: #{image_decoder64.7} parent=0 // pred_region
    _
  $region21: #{image_decoder64.7} parent=0 // pred_fallthru
    _

// kernel: image_decoder64.8
$region0: #{image_decoder64.8}
  #allocation0 [shape = 'u32[]', space=smem, size = 0x4, offset = 0x4, fixed_abs, tag = 'smem constant byte address 0x4 - core index']
  #allocation1 [shape = 'u32[72,128]{1,0:T(1,128)}', space=vmem, size = 0x9000, scoped, tag = 'internal scratch']
  %s0 = inlined_call_operand.vmem [shape: bf16[512,288], index: 0, kind: input, shape index: {}]
  %s1 = inlined_call_operand.vmem [shape: bf16[288,128], index: 1, kind: input, shape index: {}]
  %s2 = inlined_call_operand.vmem [shape: f32[1,128], index: 2, kind: input, shape index: {}]
  %s3 = inlined_call_operand.vmem [shape: f32[512,128], index: 3, kind: output, shape index: {}]
  %s4 = sld [smem:[#allocation0]]
  $region45: #{image_decoder64.8} parent=0
    _
  %s6 = ssub.s32 1, %s4
  %s7 = scalar_select 0, %s6, %s4
  loop: start=0, step=1, limit=4
  $region2: #{image_decoder64.8} parent=0 // loop_pre_header
    _
  $region3: #{image_decoder64.8} parent=0 // loop_header
    %s9 = sphi 0, %s13
    %p10 = scmp.ge.s32.totalorder %s9, 4
    %s19 = sphi 0, %s21
    %s22 = sphi 0, %s19
    %s23 = sphi 0, %s22
    %s39 = sphi 0, %s23
    %s43 = sphi 0, %s43
    %s45 = sphi 0, %s43
    %s46 = sphi 0, %s45
    %s60 = sphi 0, %s46
    %s64 = sphi 0, %s64
    %s66 = sphi 0, %s64
    %s67 = sphi 0, %s66
    %s81 = sphi 0, %s67
    %s87 = sphi 0, %s89
    %s90 = sphi 0, %s87
    %s91 = sphi 0, %s90
    %s107 = sphi 0, %s91
  $region4: #{image_decoder64.8} parent=0 // loop_header_branch
    %12 = sbr.rel (%p10) target = $region8
  $region5: #{image_decoder64.8} parent=0 // loop_body
    %s14 = ssub.s32 %s9, 1
    %s15 = ssub.s32 %s9, 2
    %s16 = sadd.s32 %s9, 1
    %s17 = ssub.s32 %s9, %s16
    %p18 = scmp.eq.s32.totalorder %s17, 0
    %s20 = sadd.s32 %s19, 1
    %s21 = scalar_select %p18, %s19, %s20
    %p24 = pneg %p18
    %p25 = scmp.eq.s32.totalorder %s9, 1
    %p26 = por %p24, %p25
    %p27 = scmp.ne.s32.totalorder %s19, %s22
    %p28 = scmp.eq.s32.totalorder %s9, 0
    %p29 = por %p27, %p28
    %p30 = scmp.ne.s32.totalorder %s19, %s22
    %p31 = scmp.eq.s32.totalorder %s14, 1
    %p32 = por %p30, %p31
    %p33 = scmp.ne.s32.totalorder %s22, %s23
    %p34 = scmp.eq.s32.totalorder %s14, 0
    %p35 = por %p33, %p34
    %p36 = scmp.ne.s32.totalorder %s22, %s23
    %p37 = scmp.eq.s32.totalorder %s15, 1
    %p38 = por %p36, %p37
    %p40 = scmp.ne.s32.totalorder %s23, %s39
    %p41 = scmp.eq.s32.totalorder %s15, 0
    %p42 = por %p40, %p41
    %s44 = sadd.s32 %s43, 1
    %p47 = scmp.eq.s32.totalorder %s9, 1
    %p48 = scmp.ne.s32.totalorder %s43, %s45
    %p49 = scmp.eq.s32.totalorder %s9, 0
    %p50 = por %p48, %p49
    %p51 = scmp.ne.s32.totalorder %s43, %s45
    %p52 = scmp.eq.s32.totalorder %s14, 1
    %p53 = por %p51, %p52
    %p54 = scmp.ne.s32.totalorder %s45, %s46
    %p55 = scmp.eq.s32.totalorder %s14, 0
    %p56 = por %p54, %p55
    %p57 = scmp.ne.s32.totalorder %s45, %s46
    %p58 = scmp.eq.s32.totalorder %s15, 1
    %p59 = por %p57, %p58
    %p61 = scmp.ne.s32.totalorder %s46, %s60
    %p62 = scmp.eq.s32.totalorder %s15, 0
    %p63 = por %p61, %p62
    %s65 = sadd.s32 %s64, 1
    %p68 = scmp.eq.s32.totalorder %s9, 1
    %p69 = scmp.ne.s32.totalorder %s64, %s66
    %p70 = scmp.eq.s32.totalorder %s9, 0
    %p71 = por %p69, %p70
    %p72 = scmp.ne.s32.totalorder %s64, %s66
    %p73 = scmp.eq.s32.totalorder %s14, 1
    %p74 = por %p72, %p73
    %p75 = scmp.ne.s32.totalorder %s66, %s67
    %p76 = scmp.eq.s32.totalorder %s14, 0
    %p77 = por %p75, %p76
    %p78 = scmp.ne.s32.totalorder %s66, %s67
    %p79 = scmp.eq.s32.totalorder %s15, 1
    %p80 = por %p78, %p79
    %p82 = scmp.ne.s32.totalorder %s67, %s81
    %p83 = scmp.eq.s32.totalorder %s15, 0
    %p84 = por %p82, %p83
    %s85 = ssub.s32 %s9, %s16
    %p86 = scmp.eq.s32.totalorder %s85, 0
    %s88 = sadd.s32 %s87, 1
    %s89 = scalar_select %p86, %s87, %s88
    %p92 = pneg %p86
    %p93 = scmp.eq.s32.totalorder %s9, 1
    %p94 = por %p92, %p93
    %p95 = scmp.ne.s32.totalorder %s87, %s90
    %p96 = scmp.eq.s32.totalorder %s9, 0
    %p97 = por %p95, %p96
    %p98 = scmp.ne.s32.totalorder %s87, %s90
    %p99 = scmp.eq.s32.totalorder %s14, 1
    %p100 = por %p98, %p99
    %p101 = scmp.ne.s32.totalorder %s90, %s91
    %p102 = scmp.eq.s32.totalorder %s14, 0
    %p103 = por %p101, %p102
    %p104 = scmp.ne.s32.totalorder %s90, %s91
    %p105 = scmp.eq.s32.totalorder %s15, 1
    %p106 = por %p104, %p105
    %p108 = scmp.ne.s32.totalorder %s91, %s107
    %p109 = scmp.eq.s32.totalorder %s15, 0
    %p110 = por %p108, %p109
    %p111 = scmp.le.s32.totalorder 1, %s9
    %p112 = scmp.lt.s32.totalorder %s9, 3
    %p113 = pnand %p111, %p112
    %p114 = pneg %p113
    // Predicated region
    $region9: #{image_decoder64.8} parent=5 // pred_check
      _
    $region10: #{image_decoder64.8} parent=5 // pred_check_branch
      %116 = sbr.rel (%p113) target = $region12
    $region11: #{image_decoder64.8} parent=5 // pred_region
      %s117 = ssub.s32 %s9, 1
      // Predicated region
      $region13: #{image_decoder64.8} parent=11 // pred_check
        %p118 = pneg %p56
      $region14: #{image_decoder64.8} parent=11 // pred_check_branch
        %120 = sbr.rel (%p118) target = $region16
      $region15: #{image_decoder64.8} parent=11 // pred_region
        _
      $region16: #{image_decoder64.8} parent=11 // pred_fallthru
        _
      // Predicated region
      $region17: #{image_decoder64.8} parent=11 // pred_check
        %p121 = pneg %p77
      $region18: #{image_decoder64.8} parent=11 // pred_check_branch
        %123 = sbr.rel (%p121) target = $region20
      $region19: #{image_decoder64.8} parent=11 // pred_region
        _
      $region20: #{image_decoder64.8} parent=11 // pred_fallthru
        _
    $region12: #{image_decoder64.8} parent=5 // pred_fallthru
      _
    %p124 = scmp.lt.s32.totalorder %s9, 2
    // Predicated region
    $region21: #{image_decoder64.8} parent=5 // pred_check
      %p125 = pneg %p124
    $region22: #{image_decoder64.8} parent=5 // pred_check_branch
      %127 = sbr.rel (%p125) target = $region24
    $region23: #{image_decoder64.8} parent=5 // pred_region
      // Predicated region
      $region25: #{image_decoder64.8} parent=23 // pred_check
        %p128 = pneg %p29
      $region26: #{image_decoder64.8} parent=23 // pred_check_branch
        %130 = sbr.rel (%p128) target = $region28
      $region27: #{image_decoder64.8} parent=23 // pred_region
        %s131 = smul.u32 32, %s9
        %p132 = scmp.lt.s32.totalorder %s131, 63
        %s133 = scalar_select %p132, %s131, 63
        %s134 = smul.addr %s133, 3
        %s135 = smul.addr %s134, 4
        %s136 = scalar_lea.vmem %s0, %s135
        %s137 = smul.u32 32, %s9
      $region28: #{image_decoder64.8} parent=23 // pred_fallthru
        _
    $region24: #{image_decoder64.8} parent=5 // pred_fallthru
      _
    %p138 = scmp.le.s32.totalorder 1, %s9
    %p139 = scmp.lt.s32.totalorder %s9, 3
    %p140 = pnand %p138, %p139
    %p141 = pneg %p140
    // Predicated region
    $region29: #{image_decoder64.8} parent=5 // pred_check
      _
    $region30: #{image_decoder64.8} parent=5 // pred_check_branch
      %143 = sbr.rel (%p140) target = $region32
    $region31: #{image_decoder64.8} parent=5 // pred_region
      %s144 = ssub.s32 %s9, 1
      %s145 = smul.u32 32, %s14
      %p146 = scmp.lt.s32.totalorder %s145, 63
      %s147 = scalar_select %p146, %s145, 63
      %s148 = smul.addr %s147, 3
      %s149 = smul.addr %s148, 4
      %s150 = scalar_lea.vmem %s0, %s149
      %p151 = pneg %p35
      %p152 = pneg %p32
      %p153 = pneg %p56
      %p154 = pneg %p53
      %p155 = pneg %p77
      %p156 = pneg %p74
      %p157 = pneg %p103
      %p158 = pneg %p100
      %s159 = smul.u32 32, %s14
      %p160 = scmp.lt.s32.totalorder %s159, 63
      %s161 = scalar_select %p160, %s159, 63
      %s162 = smul.addr %s161, 8
      %s163 = scalar_lea.vmem %s3, %s162
      %s164 = smul.u32 32, %s14
      %p165 = scmp.lt.s32.totalorder %s164, 63
      %s166 = scalar_select %p165, %s164, 63
      %s167 = smul.addr %s166, 3
      %s168 = smul.addr %s167, 4
      %s169 = scalar_lea.vmem %s0, %s168
      %s170 = smul.u32 32, %s14
      %s171 = smul.u32 32, %s14
      %p172 = scmp.lt.s32.totalorder %s171, 63
      %s173 = scalar_select %p172, %s171, 63
      %s174 = smul.addr %s173, 8
      %s175 = scalar_lea.vmem %s3, %s174
      %s176 = smul.u32 32, %s14
      %v178 = vld [vmem:[%s169] sm:$0xff]
      %v179 = vld [vmem:[%s169 + $0x8] sm:$0xf]
      %v180 = vld [vmem:[%s169 + $0xc] sm:$0xff]
      %v181 = vld [vmem:[%s169 + $0x14] sm:$0xf]
      %v182 = vld [vmem:[%s169 + $0x18] sm:$0xff]
      %v183 = vld [vmem:[%s169 + $0x20] sm:$0xf]
      %v184 = vld [vmem:[%s169 + $0x24] sm:$0xff]
      %v185 = vld [vmem:[%s169 + $0x2c] sm:$0xf]
      %v186 = vld [vmem:[%s169 + $0x30] sm:$0xff]
      %v187 = vld [vmem:[%s169 + $0x38] sm:$0xf]
      %v188 = vld [vmem:[%s169 + $0x3c] sm:$0xff]
      %v189 = vld [vmem:[%s169 + $0x44] sm:$0xf]
      %v190 = vld [vmem:[%s169 + $0x48] sm:$0xff]
      %v191 = vld [vmem:[%s169 + $0x50] sm:$0xf]
      %v192 = vld [vmem:[%s169 + $0x54] sm:$0xff]
      %v193 = vld [vmem:[%s169 + $0x5c] sm:$0xf]
      %v194 = vld [vmem:[%s169 + $0x60] sm:$0xff]
      %v195 = vld [vmem:[%s169 + $0x68] sm:$0xf]
      %v196 = vld [vmem:[%s169 + $0x6c] sm:$0xff]
      %v197 = vld [vmem:[%s169 + $0x74] sm:$0xf]
      %v198 = vld [vmem:[%s169 + $0x78] sm:$0xff]
      %v199 = vld [vmem:[%s169 + $0x80] sm:$0xf]
      %v200 = vld [vmem:[%s169 + $0x84] sm:$0xff]
      %v201 = vld [vmem:[%s169 + $0x8c] sm:$0xf]
      %v202 = vld [vmem:[%s169 + $0x90] sm:$0xff]
      %v203 = vld [vmem:[%s169 + $0x98] sm:$0xf]
      %v204 = vld [vmem:[%s169 + $0x9c] sm:$0xff]
      %v205 = vld [vmem:[%s169 + $0xa4] sm:$0xf]
      %v206 = vld [vmem:[%s169 + $0xa8] sm:$0xff]
      %v207 = vld [vmem:[%s169 + $0xb0] sm:$0xf]
      %v208 = vld [vmem:[%s169 + $0xb4] sm:$0xff]
      %v209 = vld [vmem:[%s169 + $0xbc] sm:$0xf]
      %v210 = vld [vmem:[%s169 + $0xc0] sm:$0xff]
      %v211 = vld [vmem:[%s169 + $0xc8] sm:$0xf]
      %v212 = vld [vmem:[%s169 + $0xcc] sm:$0xff]
      %v213 = vld [vmem:[%s169 + $0xd4] sm:$0xf]
      %v214 = vld [vmem:[%s169 + $0xd8] sm:$0xff]
      %v215 = vld [vmem:[%s169 + $0xe0] sm:$0xf]
      %v216 = vld [vmem:[%s169 + $0xe4] sm:$0xff]
      %v217 = vld [vmem:[%s169 + $0xec] sm:$0xf]
      %v218 = vld [vmem:[%s169 + $0xf0] sm:$0xff]
      %v219 = vld [vmem:[%s169 + $0xf8] sm:$0xf]
      %v220 = vld [vmem:[%s169 + $0xfc] sm:$0xff]
      %v221 = vld [vmem:[%s169 + $0x104] sm:$0xf]
      %v222 = vld [vmem:[%s169 + $0x108] sm:$0xff]
      %v223 = vld [vmem:[%s169 + $0x110] sm:$0xf]
      %v224 = vld [vmem:[%s169 + $0x114] sm:$0xff]
      %v225 = vld [vmem:[%s169 + $0x11c] sm:$0xf]
      %v226 = vld [vmem:[%s169 + $0x120] sm:$0xff]
      %v227 = vld [vmem:[%s169 + $0x128] sm:$0xf]
      %v228 = vld [vmem:[%s169 + $0x12c] sm:$0xff]
      %v229 = vld [vmem:[%s169 + $0x134] sm:$0xf]
      %v230 = vld [vmem:[%s169 + $0x138] sm:$0xff]
      %v231 = vld [vmem:[%s169 + $0x140] sm:$0xf]
      %v232 = vld [vmem:[%s169 + $0x144] sm:$0xff]
      %v233 = vld [vmem:[%s169 + $0x14c] sm:$0xf]
      %v234 = vld [vmem:[%s169 + $0x150] sm:$0xff]
      %v235 = vld [vmem:[%s169 + $0x158] sm:$0xf]
      %v236 = vld [vmem:[%s169 + $0x15c] sm:$0xff]
      %v237 = vld [vmem:[%s169 + $0x164] sm:$0xf]
      %v238 = vld [vmem:[%s169 + $0x168] sm:$0xff]
      %v239 = vld [vmem:[%s169 + $0x170] sm:$0xf]
      %v240 = vld [vmem:[%s169 + $0x174] sm:$0xff]
      %v241 = vld [vmem:[%s169 + $0x17c] sm:$0xf]
      %v242 = vld [vmem:[%s1] sm:$0xf]
      %v243 = vld [vmem:[%s1 + $0x4] sm:$0xf]
      %v244 = vld [vmem:[%s1 + $0x8] sm:$0xf]
      %v245 = vld [vmem:[%s1 + $0xc] sm:$0xf]
      %v246 = vld [vmem:[%s1 + $0x10] sm:$0xf]
      %v247 = vld [vmem:[%s1 + $0x14] sm:$0xf]
      %v248 = vld [vmem:[%s1 + $0x18] sm:$0xf]
      %v249 = vld [vmem:[%s1 + $0x1c] sm:$0xf]
      %v250 = vld [vmem:[%s1 + $0x20] sm:$0xf]
      %v251 = vld [vmem:[%s1 + $0x24] sm:$0xf]
      %v252 = vld [vmem:[%s1 + $0x28] sm:$0xf]
      %v253 = vld [vmem:[%s1 + $0x2c] sm:$0xf]
      %v254 = vld [vmem:[%s1 + $0x30] sm:$0xf]
      %v255 = vld [vmem:[%s1 + $0x34] sm:$0xf]
      %v256 = vld [vmem:[%s1 + $0x38] sm:$0xf]
      %v257 = vld [vmem:[%s1 + $0x3c] sm:$0xf]
      %v258 = vld [vmem:[%s1 + $0x40] sm:$0xf]
      %v259 = vld [vmem:[%s1 + $0x44] sm:$0xf]
      %v260 = vld [vmem:[%s1 + $0x48] sm:$0xf]
      %v261 = vld [vmem:[%s1 + $0x4c] sm:$0xf]
      %v262 = vld [vmem:[%s1 + $0x50] sm:$0xf]
      %v263 = vld [vmem:[%s1 + $0x54] sm:$0xf]
      %v264 = vld [vmem:[%s1 + $0x58] sm:$0xf]
      %v265 = vld [vmem:[%s1 + $0x5c] sm:$0xf]
      %v266 = vld [vmem:[%s1 + $0x60] sm:$0xf]
      %v267 = vld [vmem:[%s1 + $0x64] sm:$0xf]
      %v268 = vld [vmem:[%s1 + $0x68] sm:$0xf]
      %v269 = vld [vmem:[%s1 + $0x6c] sm:$0xf]
      %v270 = vld [vmem:[%s1 + $0x70] sm:$0xf]
      %v271 = vld [vmem:[%s1 + $0x74] sm:$0xf]
      %v272 = vld [vmem:[%s1 + $0x78] sm:$0xf]
      %v273 = vld [vmem:[%s1 + $0x7c] sm:$0xf]
      %v274 = vld [vmem:[%s1 + $0x80] sm:$0xf]
      %v275 = vld [vmem:[%s1 + $0x84] sm:$0xf]
      %v276 = vld [vmem:[%s1 + $0x88] sm:$0xf]
      %v277 = vld [vmem:[%s1 + $0x8c] sm:$0xf]
      %v278 = vld [vmem:[%s2] sm:$0x1]
      %v280 = vperm.slane %v278, 0
      %v346 = vunpack.c.l.b16 %v178
      %v347 = vunpack.c.h.b16 %v178
      %v348 = vunpack.c.l.b16 %v179
      %v349 = vunpack.c.l.b16 %v180
      %v350 = vunpack.c.h.b16 %v180
      %v351 = vunpack.c.l.b16 %v181
      %v352 = vunpack.c.l.b16 %v182
      %v353 = vunpack.c.h.b16 %v182
      %v354 = vunpack.c.l.b16 %v183
      %v355 = vunpack.c.l.b16 %v184
      %v356 = vunpack.c.h.b16 %v184
      %v357 = vunpack.c.l.b16 %v185
      %v358 = vunpack.c.l.b16 %v186
      %v359 = vunpack.c.h.b16 %v186
      %v360 = vunpack.c.l.b16 %v187
      %v361 = vunpack.c.l.b16 %v188
      %v362 = vunpack.c.h.b16 %v188
      %v363 = vunpack.c.l.b16 %v189
      %v364 = vunpack.c.l.b16 %v190
      %v365 = vunpack.c.h.b16 %v190
      %v366 = vunpack.c.l.b16 %v191
      %v367 = vunpack.c.l.b16 %v192
      %v368 = vunpack.c.h.b16 %v192
      %v369 = vunpack.c.l.b16 %v193
      %v370 = vunpack.c.l.b16 %v194
      %v371 = vunpack.c.h.b16 %v194
      %v372 = vunpack.c.l.b16 %v195
      %v373 = vunpack.c.l.b16 %v196
      %v374 = vunpack.c.h.b16 %v196
      %v375 = vunpack.c.l.b16 %v197
      %v376 = vunpack.c.l.b16 %v198
      %v377 = vunpack.c.h.b16 %v198
      %v378 = vunpack.c.l.b16 %v199
      %v379 = vunpack.c.l.b16 %v200
      %v380 = vunpack.c.h.b16 %v200
      %v381 = vunpack.c.l.b16 %v201
      %v382 = vunpack.c.l.b16 %v202
      %v383 = vunpack.c.h.b16 %v202
      %v384 = vunpack.c.l.b16 %v203
      %v385 = vunpack.c.l.b16 %v204
      %v386 = vunpack.c.h.b16 %v204
      %v387 = vunpack.c.l.b16 %v205
      %v388 = vunpack.c.l.b16 %v206
      %v389 = vunpack.c.h.b16 %v206
      %v390 = vunpack.c.l.b16 %v207
      %v391 = vunpack.c.l.b16 %v208
      %v392 = vunpack.c.h.b16 %v208
      %v393 = vunpack.c.l.b16 %v209
      %v394 = vunpack.c.l.b16 %v210
      %v395 = vunpack.c.h.b16 %v210
      %v396 = vunpack.c.l.b16 %v211
      %v397 = vunpack.c.l.b16 %v212
      %v398 = vunpack.c.h.b16 %v212
      %v399 = vunpack.c.l.b16 %v213
      %v400 = vunpack.c.l.b16 %v214
      %v401 = vunpack.c.h.b16 %v214
      %v402 = vunpack.c.l.b16 %v215
      %v403 = vunpack.c.l.b16 %v216
      %v404 = vunpack.c.h.b16 %v216
      %v405 = vunpack.c.l.b16 %v217
      %v406 = vunpack.c.l.b16 %v218
      %v407 = vunpack.c.h.b16 %v218
      %v408 = vunpack.c.l.b16 %v219
      %v409 = vunpack.c.l.b16 %v220
      %v410 = vunpack.c.h.b16 %v220
      %v411 = vunpack.c.l.b16 %v221
      %v412 = vunpack.c.l.b16 %v222
      %v413 = vunpack.c.h.b16 %v222
      %v414 = vunpack.c.l.b16 %v223
      %v415 = vunpack.c.l.b16 %v224
      %v416 = vunpack.c.h.b16 %v224
      %v417 = vunpack.c.l.b16 %v225
      %v418 = vunpack.c.l.b16 %v226
      %v419 = vunpack.c.h.b16 %v226
      %v420 = vunpack.c.l.b16 %v227
      %v421 = vunpack.c.l.b16 %v228
      %v422 = vunpack.c.h.b16 %v228
      %v423 = vunpack.c.l.b16 %v229
      %v424 = vunpack.c.l.b16 %v230
      %v425 = vunpack.c.h.b16 %v230
      %v426 = vunpack.c.l.b16 %v231
      %v427 = vunpack.c.l.b16 %v232
      %v428 = vunpack.c.h.b16 %v232
      %v429 = vunpack.c.l.b16 %v233
      %v430 = vunpack.c.l.b16 %v234
      %v431 = vunpack.c.h.b16 %v234
      %v432 = vunpack.c.l.b16 %v235
      %v433 = vunpack.c.l.b16 %v236
      %v434 = vunpack.c.h.b16 %v236
      %v435 = vunpack.c.l.b16 %v237
      %v436 = vunpack.c.l.b16 %v238
      %v437 = vunpack.c.h.b16 %v238
      %v438 = vunpack.c.l.b16 %v239
      %v439 = vunpack.c.l.b16 %v240
      %v440 = vunpack.c.h.b16 %v240
      %v441 = vunpack.c.l.b16 %v241
      %v442 = vpack.c.b16 %v349, %v346
      %v443 = vpack.c.b16 %v350, %v347
      %v444 = vpack.c.b16 %v351, %v348
      %v445 = vpack.c.b16 %v355, %v352
      %v446 = vpack.c.b16 %v356, %v353
      %v447 = vpack.c.b16 %v357, %v354
      %v448 = vpack.c.b16 %v361, %v358
      %v449 = vpack.c.b16 %v362, %v359
      %v450 = vpack.c.b16 %v363, %v360
      %v451 = vpack.c.b16 %v367, %v364
      %v452 = vpack.c.b16 %v368, %v365
      %v453 = vpack.c.b16 %v369, %v366
      %v454 = vpack.c.b16 %v373, %v370
      %v455 = vpack.c.b16 %v374, %v371
      %v456 = vpack.c.b16 %v375, %v372
      %v457 = vpack.c.b16 %v379, %v376
      %v458 = vpack.c.b16 %v380, %v377
      %v459 = vpack.c.b16 %v381, %v378
      %v460 = vpack.c.b16 %v385, %v382
      %v461 = vpack.c.b16 %v386, %v383
      %v462 = vpack.c.b16 %v387, %v384
      %v463 = vpack.c.b16 %v391, %v388
      %v464 = vpack.c.b16 %v392, %v389
      %v465 = vpack.c.b16 %v393, %v390
      %v466 = vpack.c.b16 %v397, %v394
      %v467 = vpack.c.b16 %v398, %v395
      %v468 = vpack.c.b16 %v399, %v396
      %v469 = vpack.c.b16 %v403, %v400
      %v470 = vpack.c.b16 %v404, %v401
      %v471 = vpack.c.b16 %v405, %v402
      %v472 = vpack.c.b16 %v409, %v406
      %v473 = vpack.c.b16 %v410, %v407
      %v474 = vpack.c.b16 %v411, %v408
      %v475 = vpack.c.b16 %v415, %v412
      %v476 = vpack.c.b16 %v416, %v413
      %v477 = vpack.c.b16 %v417, %v414
      %v478 = vpack.c.b16 %v421, %v418
      %v479 = vpack.c.b16 %v422, %v419
      %v480 = vpack.c.b16 %v423, %v420
      %v481 = vpack.c.b16 %v427, %v424
      %v482 = vpack.c.b16 %v428, %v425
      %v483 = vpack.c.b16 %v429, %v426
      %v484 = vpack.c.b16 %v433, %v430
      %v485 = vpack.c.b16 %v434, %v431
      %v486 = vpack.c.b16 %v435, %v432
      %v487 = vpack.c.b16 %v439, %v436
      %v488 = vpack.c.b16 %v440, %v437
      %v489 = vpack.c.b16 %v441, %v438
      %v558 = vunpack.c.l.b16 %v242
      %v559 = vunpack.c.l.b16 %v243
      %v560 = vunpack.c.l.b16 %v244
      %v561 = vunpack.c.l.b16 %v245
      %v562 = vunpack.c.l.b16 %v246
      %v563 = vunpack.c.l.b16 %v247
      %v564 = vunpack.c.l.b16 %v248
      %v565 = vunpack.c.l.b16 %v249
      %v566 = vunpack.c.l.b16 %v250
      %v567 = vunpack.c.l.b16 %v251
      %v568 = vunpack.c.l.b16 %v252
      %v569 = vunpack.c.l.b16 %v253
      %v570 = vunpack.c.l.b16 %v254
      %v571 = vunpack.c.l.b16 %v255
      %v572 = vunpack.c.l.b16 %v256
      %v573 = vunpack.c.l.b16 %v257
      %v574 = vunpack.c.l.b16 %v258
      %v575 = vunpack.c.l.b16 %v259
      %v576 = vunpack.c.l.b16 %v260
      %v577 = vunpack.c.l.b16 %v261
      %v578 = vunpack.c.l.b16 %v262
      %v579 = vunpack.c.l.b16 %v263
      %v580 = vunpack.c.l.b16 %v264
      %v581 = vunpack.c.l.b16 %v265
      %v582 = vunpack.c.l.b16 %v266
      %v583 = vunpack.c.l.b16 %v267
      %v584 = vunpack.c.l.b16 %v268
      %v585 = vunpack.c.l.b16 %v269
      %v586 = vunpack.c.l.b16 %v270
      %v587 = vunpack.c.l.b16 %v271
      %v588 = vunpack.c.l.b16 %v272
      %v589 = vunpack.c.l.b16 %v273
      %v590 = vunpack.c.l.b16 %v274
      %v591 = vunpack.c.l.b16 %v275
      %v592 = vunpack.c.l.b16 %v276
      %v593 = vunpack.c.l.b16 %v277
      %v594 = vpack.c.b16 %v559, %v558
      %v595 = vpack.c.b16 %v561, %v560
      %v596 = vpack.c.b16 %v563, %v562
      %v597 = vpack.c.b16 %v565, %v564
      %v598 = vpack.c.b16 %v567, %v566
      %v599 = vpack.c.b16 %v569, %v568
      %v600 = vpack.c.b16 %v571, %v570
      %v601 = vpack.c.b16 %v573, %v572
      %v602 = vpack.c.b16 %v575, %v574
      %v603 = vpack.c.b16 %v577, %v576
      %v604 = vpack.c.b16 %v579, %v578
      %v605 = vpack.c.b16 %v581, %v580
      %v606 = vpack.c.b16 %v583, %v582
      %v607 = vpack.c.b16 %v585, %v584
      %v608 = vpack.c.b16 %v587, %v586
      %v609 = vpack.c.b16 %v589, %v588
      %v610 = vpack.c.b16 %v591, %v590
      %v611 = vpack.c.b16 %v593, %v592
      %vm630 = vcmask 261120
      %v632 = vsel %vm630, %v444, 0
      %v635 = vsel %vm630, %v447, 0
      %v638 = vsel %vm630, %v450, 0
      %v641 = vsel %vm630, %v453, 0
      %v644 = vsel %vm630, %v456, 0
      %v647 = vsel %vm630, %v459, 0
      %v650 = vsel %vm630, %v462, 0
      %v653 = vsel %vm630, %v465, 0
      %v656 = vsel %vm630, %v468, 0
      %v659 = vsel %vm630, %v471, 0
      %v662 = vsel %vm630, %v474, 0
      %v665 = vsel %vm630, %v477, 0
      %v668 = vsel %vm630, %v480, 0
      %v671 = vsel %vm630, %v483, 0
      %v674 = vsel %vm630, %v486, 0
      %v677 = vsel %vm630, %v489, 0
      %679 = vmatpush.bf16.msra.mxu0 %v601
      %680 = vmatpush.bf16.msra.mxu0 %v600
      %681 = vmatpush.bf16.msra.mxu0 %v599
      %682 = vmatpush.bf16.msra.mxu0 %v598
      %683 = vmatpush.bf16.msra.mxu0 %v597
      %684 = vmatpush.bf16.msra.mxu0 %v596
      %685 = vmatpush.bf16.msra.mxu0 %v595
      %686 = vmatpush.bf16.msra.mxu0 %v594
      %687 = vmatmul.bf16.gmra.mxu0 %v442
      %v688 = vpop.f32.mrf.mxu0
      %v689 = vadd.f32 %v280, %v688
      %v690 = vpop.f32.mrf.mxu0
      %v691 = vadd.f32 %v280, %v690
      %692 = vmatmul.bf16.gmra.mxu0 %v445
      %v693 = vpop.f32.mrf.mxu0
      %v694 = vadd.f32 %v280, %v693
      %v695 = vpop.f32.mrf.mxu0
      %v696 = vadd.f32 %v280, %v695
      %697 = vmatmul.bf16.gmra.mxu0 %v448
      %v698 = vpop.f32.mrf.mxu0
      %v699 = vadd.f32 %v280, %v698
      %v700 = vpop.f32.mrf.mxu0
      %v701 = vadd.f32 %v280, %v700
      %702 = vmatmul.bf16.gmra.mxu0 %v451
      %v703 = vpop.f32.mrf.mxu0
      %v704 = vadd.f32 %v280, %v703
      %v705 = vpop.f32.mrf.mxu0
      %v706 = vadd.f32 %v280, %v705
      %707 = vmatmul.bf16.gmra.mxu0 %v454
      %v708 = vpop.f32.mrf.mxu0
      %v709 = vadd.f32 %v280, %v708
      %v710 = vpop.f32.mrf.mxu0
      %v711 = vadd.f32 %v280, %v710
      %712 = vmatmul.bf16.gmra.mxu0 %v457
      %v713 = vpop.f32.mrf.mxu0
      %v714 = vadd.f32 %v280, %v713
      %v715 = vpop.f32.mrf.mxu0
      %v716 = vadd.f32 %v280, %v715
      %717 = vmatmul.bf16.gmra.mxu0 %v460
      %v718 = vpop.f32.mrf.mxu0
      %v719 = vadd.f32 %v280, %v718
      %v720 = vpop.f32.mrf.mxu0
      %v721 = vadd.f32 %v280, %v720
      %722 = vmatmul.bf16.gmra.mxu0 %v463
      %v723 = vpop.f32.mrf.mxu0
      %v724 = vadd.f32 %v280, %v723
      %v725 = vpop.f32.mrf.mxu0
      %v726 = vadd.f32 %v280, %v725
      %727 = vmatmul.bf16.gmra.mxu0 %v466
      %v728 = vpop.f32.mrf.mxu0
      %v729 = vadd.f32 %v280, %v728
      %v730 = vpop.f32.mrf.mxu0
      %v731 = vadd.f32 %v280, %v730
      %732 = vmatmul.bf16.gmra.mxu0 %v469
      %v733 = vpop.f32.mrf.mxu0
      %v734 = vadd.f32 %v280, %v733
      %v735 = vpop.f32.mrf.mxu0
      %v736 = vadd.f32 %v280, %v735
      %737 = vmatmul.bf16.gmra.mxu0 %v472
      %v738 = vpop.f32.mrf.mxu0
      %v739 = vadd.f32 %v280, %v738
      %v740 = vpop.f32.mrf.mxu0
      %v741 = vadd.f32 %v280, %v740
      %742 = vmatmul.bf16.gmra.mxu0 %v475
      %v743 = vpop.f32.mrf.mxu0
      %v744 = vadd.f32 %v280, %v743
      %v745 = vpop.f32.mrf.mxu0
      %v746 = vadd.f32 %v280, %v745
      %747 = vmatmul.bf16.gmra.mxu0 %v478
      %v748 = vpop.f32.mrf.mxu0
      %v749 = vadd.f32 %v280, %v748
      %v750 = vpop.f32.mrf.mxu0
      %v751 = vadd.f32 %v280, %v750
      %752 = vmatmul.bf16.gmra.mxu0 %v481
      %v753 = vpop.f32.mrf.mxu0
      %v754 = vadd.f32 %v280, %v753
      %v755 = vpop.f32.mrf.mxu0
      %v756 = vadd.f32 %v280, %v755
      %757 = vmatmul.bf16.gmra.mxu0 %v484
      %v758 = vpop.f32.mrf.mxu0
      %v759 = vadd.f32 %v280, %v758
      %v760 = vpop.f32.mrf.mxu0
      %v761 = vadd.f32 %v280, %v760
      %762 = vmatmul.bf16.gmra.mxu0 %v487
      %v763 = vpop.f32.mrf.mxu0
      %v764 = vadd.f32 %v280, %v763
      %v765 = vpop.f32.mrf.mxu0
      %v766 = vadd.f32 %v280, %v765
      %767 = vdwg.mxu0
      %768 = vmatpush.bf16.msra.mxu0 %v609
      %769 = vmatpush.bf16.msra.mxu0 %v608
      %770 = vmatpush.bf16.msra.mxu0 %v607
      %771 = vmatpush.bf16.msra.mxu0 %v606
      %772 = vmatpush.bf16.msra.mxu0 %v605
      %773 = vmatpush.bf16.msra.mxu0 %v604
      %774 = vmatpush.bf16.msra.mxu0 %v603
      %775 = vmatpush.bf16.msra.mxu0 %v602
      %776 = vmatmul.bf16.gmra.mxu0 %v443
      %v777 = vpop.f32.mrf.mxu0
      %v778 = vadd.f32 %v689, %v777
      %v779 = vpop.f32.mrf.mxu0
      %v780 = vadd.f32 %v691, %v779
      %781 = vmatmul.bf16.gmra.mxu0 %v446
      %v782 = vpop.f32.mrf.mxu0
      %v783 = vadd.f32 %v694, %v782
      %v784 = vpop.f32.mrf.mxu0
      %v785 = vadd.f32 %v696, %v784
      %786 = vmatmul.bf16.gmra.mxu0 %v449
      %v787 = vpop.f32.mrf.mxu0
      %v788 = vadd.f32 %v699, %v787
      %v789 = vpop.f32.mrf.mxu0
      %v790 = vadd.f32 %v701, %v789
      %791 = vmatmul.bf16.gmra.mxu0 %v452
      %v792 = vpop.f32.mrf.mxu0
      %v793 = vadd.f32 %v704, %v792
      %v794 = vpop.f32.mrf.mxu0
      %v795 = vadd.f32 %v706, %v794
      %796 = vmatmul.bf16.gmra.mxu0 %v455
      %v797 = vpop.f32.mrf.mxu0
      %v798 = vadd.f32 %v709, %v797
      %v799 = vpop.f32.mrf.mxu0
      %v800 = vadd.f32 %v711, %v799
      %801 = vmatmul.bf16.gmra.mxu0 %v458
      %v802 = vpop.f32.mrf.mxu0
      %v803 = vadd.f32 %v714, %v802
      %v804 = vpop.f32.mrf.mxu0
      %v805 = vadd.f32 %v716, %v804
      %806 = vmatmul.bf16.gmra.mxu0 %v461
      %v807 = vpop.f32.mrf.mxu0
      %v808 = vadd.f32 %v719, %v807
      %v809 = vpop.f32.mrf.mxu0
      %v810 = vadd.f32 %v721, %v809
      %811 = vmatmul.bf16.gmra.mxu0 %v464
      %v812 = vpop.f32.mrf.mxu0
      %v813 = vadd.f32 %v724, %v812
      %v814 = vpop.f32.mrf.mxu0
      %v815 = vadd.f32 %v726, %v814
      %816 = vmatmul.bf16.gmra.mxu0 %v467
      %v817 = vpop.f32.mrf.mxu0
      %v818 = vadd.f32 %v729, %v817
      %v819 = vpop.f32.mrf.mxu0
      %v820 = vadd.f32 %v731, %v819
      %821 = vmatmul.bf16.gmra.mxu0 %v470
      %v822 = vpop.f32.mrf.mxu0
      %v823 = vadd.f32 %v734, %v822
      %v824 = vpop.f32.mrf.mxu0
      %v825 = vadd.f32 %v736, %v824
      %826 = vmatmul.bf16.gmra.mxu0 %v473
      %v827 = vpop.f32.mrf.mxu0
      %v828 = vadd.f32 %v739, %v827
      %v829 = vpop.f32.mrf.mxu0
      %v830 = vadd.f32 %v741, %v829
      %831 = vmatmul.bf16.gmra.mxu0 %v476
      %v832 = vpop.f32.mrf.mxu0
      %v833 = vadd.f32 %v744, %v832
      %v834 = vpop.f32.mrf.mxu0
      %v835 = vadd.f32 %v746, %v834
      %836 = vmatmul.bf16.gmra.mxu0 %v479
      %v837 = vpop.f32.mrf.mxu0
      %v838 = vadd.f32 %v749, %v837
      %v839 = vpop.f32.mrf.mxu0
      %v840 = vadd.f32 %v751, %v839
      %841 = vmatmul.bf16.gmra.mxu0 %v482
      %v842 = vpop.f32.mrf.mxu0
      %v843 = vadd.f32 %v754, %v842
      %v844 = vpop.f32.mrf.mxu0
      %v845 = vadd.f32 %v756, %v844
      %846 = vmatmul.bf16.gmra.mxu0 %v485
      %v847 = vpop.f32.mrf.mxu0
      %v848 = vadd.f32 %v759, %v847
      %v849 = vpop.f32.mrf.mxu0
      %v850 = vadd.f32 %v761, %v849
      %851 = vmatmul.bf16.gmra.mxu0 %v488
      %v852 = vpop.f32.mrf.mxu0
      %v853 = vadd.f32 %v764, %v852
      %v854 = vpop.f32.mrf.mxu0
      %v855 = vadd.f32 %v766, %v854
      %856 = vdwg.mxu0
      %857 = vmatpush.bf16.msra.mxu0 0
      %858 = vmatpush.bf16.msra.mxu0 0
      %859 = vmatpush.bf16.msra.mxu0 0
      %860 = vmatpush.bf16.msra.mxu0 0
      %861 = vmatpush.bf16.msra.mxu0 0
      %862 = vmatpush.bf16.msra.mxu0 0
      %863 = vmatpush.bf16.msra.mxu0 %v611
      %864 = vmatpush.bf16.msra.mxu0 %v610
      %865 = vmatmul.bf16.gmra.mxu0 %v632
      %v866 = vpop.f32.mrf.mxu0
      %v867 = vadd.f32 %v778, %v866
      %v868 = vpop.f32.mrf.mxu0
      %v869 = vadd.f32 %v780, %v868
      %870 = vmatmul.bf16.gmra.mxu0 %v635
      %v871 = vpop.f32.mrf.mxu0
      %v872 = vadd.f32 %v783, %v871
      %v873 = vpop.f32.mrf.mxu0
      %v874 = vadd.f32 %v785, %v873
      %875 = vmatmul.bf16.gmra.mxu0 %v638
      %v876 = vpop.f32.mrf.mxu0
      %v877 = vadd.f32 %v788, %v876
      %v878 = vpop.f32.mrf.mxu0
      %v879 = vadd.f32 %v790, %v878
      %880 = vmatmul.bf16.gmra.mxu0 %v641
      %v881 = vpop.f32.mrf.mxu0
      %v882 = vadd.f32 %v793, %v881
      %v883 = vpop.f32.mrf.mxu0
      %v884 = vadd.f32 %v795, %v883
      %885 = vmatmul.bf16.gmra.mxu0 %v644
      %v886 = vpop.f32.mrf.mxu0
      %v887 = vadd.f32 %v798, %v886
      %v888 = vpop.f32.mrf.mxu0
      %v889 = vadd.f32 %v800, %v888
      %890 = vmatmul.bf16.gmra.mxu0 %v647
      %v891 = vpop.f32.mrf.mxu0
      %v892 = vadd.f32 %v803, %v891
      %v893 = vpop.f32.mrf.mxu0
      %v894 = vadd.f32 %v805, %v893
      %895 = vmatmul.bf16.gmra.mxu0 %v650
      %v896 = vpop.f32.mrf.mxu0
      %v897 = vadd.f32 %v808, %v896
      %v898 = vpop.f32.mrf.mxu0
      %v899 = vadd.f32 %v810, %v898
      %900 = vmatmul.bf16.gmra.mxu0 %v653
      %v901 = vpop.f32.mrf.mxu0
      %v902 = vadd.f32 %v813, %v901
      %v903 = vpop.f32.mrf.mxu0
      %v904 = vadd.f32 %v815, %v903
      %905 = vmatmul.bf16.gmra.mxu0 %v656
      %v906 = vpop.f32.mrf.mxu0
      %v907 = vadd.f32 %v818, %v906
      %v908 = vpop.f32.mrf.mxu0
      %v909 = vadd.f32 %v820, %v908
      %910 = vmatmul.bf16.gmra.mxu0 %v659
      %v911 = vpop.f32.mrf.mxu0
      %v912 = vadd.f32 %v823, %v911
      %v913 = vpop.f32.mrf.mxu0
      %v914 = vadd.f32 %v825, %v913
      %915 = vmatmul.bf16.gmra.mxu0 %v662
      %v916 = vpop.f32.mrf.mxu0
      %v917 = vadd.f32 %v828, %v916
      %v918 = vpop.f32.mrf.mxu0
      %v919 = vadd.f32 %v830, %v918
      %920 = vmatmul.bf16.gmra.mxu0 %v665
      %v921 = vpop.f32.mrf.mxu0
      %v922 = vadd.f32 %v833, %v921
      %v923 = vpop.f32.mrf.mxu0
      %v924 = vadd.f32 %v835, %v923
      %925 = vmatmul.bf16.gmra.mxu0 %v668
      %v926 = vpop.f32.mrf.mxu0
      %v927 = vadd.f32 %v838, %v926
      %v928 = vpop.f32.mrf.mxu0
      %v929 = vadd.f32 %v840, %v928
      %930 = vmatmul.bf16.gmra.mxu0 %v671
      %v931 = vpop.f32.mrf.mxu0
      %v932 = vadd.f32 %v843, %v931
      %v933 = vpop.f32.mrf.mxu0
      %v934 = vadd.f32 %v845, %v933
      %935 = vmatmul.bf16.gmra.mxu0 %v674
      %v936 = vpop.f32.mrf.mxu0
      %v937 = vadd.f32 %v848, %v936
      %v938 = vpop.f32.mrf.mxu0
      %v939 = vadd.f32 %v850, %v938
      %940 = vmatmul.bf16.gmra.mxu0 %v677
      %v941 = vpop.f32.mrf.mxu0
      %v942 = vadd.f32 %v853, %v941
      %v943 = vpop.f32.mrf.mxu0
      %v944 = vadd.f32 %v855, %v943
      %945 = vdwg.mxu0
      %v946 = vmax.f32 %v867, 0.0
      %v947 = vmax.f32 %v869, 0.0
      %v948 = vmax.f32 %v872, 0.0
      %v949 = vmax.f32 %v874, 0.0
      %v950 = vmax.f32 %v877, 0.0
      %v951 = vmax.f32 %v879, 0.0
      %v952 = vmax.f32 %v882, 0.0
      %v953 = vmax.f32 %v884, 0.0
      %v954 = vmax.f32 %v887, 0.0
      %v955 = vmax.f32 %v889, 0.0
      %v956 = vmax.f32 %v892, 0.0
      %v957 = vmax.f32 %v894, 0.0
      %v958 = vmax.f32 %v897, 0.0
      %v959 = vmax.f32 %v899, 0.0
      %v960 = vmax.f32 %v902, 0.0
      %v961 = vmax.f32 %v904, 0.0
      %v962 = vmax.f32 %v907, 0.0
      %v963 = vmax.f32 %v909, 0.0
      %v964 = vmax.f32 %v912, 0.0
      %v965 = vmax.f32 %v914, 0.0
      %v966 = vmax.f32 %v917, 0.0
      %v967 = vmax.f32 %v919, 0.0
      %v968 = vmax.f32 %v922, 0.0
      %v969 = vmax.f32 %v924, 0.0
      %v970 = vmax.f32 %v927, 0.0
      %v971 = vmax.f32 %v929, 0.0
      %v972 = vmax.f32 %v932, 0.0
      %v973 = vmax.f32 %v934, 0.0
      %v974 = vmax.f32 %v937, 0.0
      %v975 = vmax.f32 %v939, 0.0
      %v976 = vmax.f32 %v942, 0.0
      %v977 = vmax.f32 %v944, 0.0
      %978 = vst [vmem:[%s175] sm:$0xff] %v946
      %979 = vst [vmem:[%s175 + $0x8] sm:$0xff] %v947
      %980 = vst [vmem:[%s175 + $0x10] sm:$0xff] %v948
      %981 = vst [vmem:[%s175 + $0x18] sm:$0xff] %v949
      %982 = vst [vmem:[%s175 + $0x20] sm:$0xff] %v950
      %983 = vst [vmem:[%s175 + $0x28] sm:$0xff] %v951
      %984 = vst [vmem:[%s175 + $0x30] sm:$0xff] %v952
      %985 = vst [vmem:[%s175 + $0x38] sm:$0xff] %v953
      %986 = vst [vmem:[%s175 + $0x40] sm:$0xff] %v954
      %987 = vst [vmem:[%s175 + $0x48] sm:$0xff] %v955
      %988 = vst [vmem:[%s175 + $0x50] sm:$0xff] %v956
      %989 = vst [vmem:[%s175 + $0x58] sm:$0xff] %v957
      %990 = vst [vmem:[%s175 + $0x60] sm:$0xff] %v958
      %991 = vst [vmem:[%s175 + $0x68] sm:$0xff] %v959
      %992 = vst [vmem:[%s175 + $0x70] sm:$0xff] %v960
      %993 = vst [vmem:[%s175 + $0x78] sm:$0xff] %v961
      %994 = vst [vmem:[%s175 + $0x80] sm:$0xff] %v962
      %995 = vst [vmem:[%s175 + $0x88] sm:$0xff] %v963
      %996 = vst [vmem:[%s175 + $0x90] sm:$0xff] %v964
      %997 = vst [vmem:[%s175 + $0x98] sm:$0xff] %v965
      %998 = vst [vmem:[%s175 + $0xa0] sm:$0xff] %v966
      %999 = vst [vmem:[%s175 + $0xa8] sm:$0xff] %v967
      %1000 = vst [vmem:[%s175 + $0xb0] sm:$0xff] %v968
      %1001 = vst [vmem:[%s175 + $0xb8] sm:$0xff] %v969
      %1002 = vst [vmem:[%s175 + $0xc0] sm:$0xff] %v970
      %1003 = vst [vmem:[%s175 + $0xc8] sm:$0xff] %v971
      %1004 = vst [vmem:[%s175 + $0xd0] sm:$0xff] %v972
      %1005 = vst [vmem:[%s175 + $0xd8] sm:$0xff] %v973
      %1006 = vst [vmem:[%s175 + $0xe0] sm:$0xff] %v974
      %1007 = vst [vmem:[%s175 + $0xe8] sm:$0xff] %v975
      %1008 = vst [vmem:[%s175 + $0xf0] sm:$0xff] %v976
      %1009 = vst [vmem:[%s175 + $0xf8] sm:$0xff] %v977
      %s1010 = smul.u32 32, %s14
      %p1011 = scmp.lt.s32.totalorder %s1010, 63
      %s1012 = scalar_select %p1011, %s1010, 63
      %s1013 = smul.addr %s1012, 8
      %s1014 = scalar_lea.vmem %s3, %s1013
      // Predicated region
      $region33: #{image_decoder64.8} parent=31 // pred_check
        %p1015 = pneg %p100
      $region34: #{image_decoder64.8} parent=31 // pred_check_branch
        %1017 = sbr.rel (%p1015) target = $region36
      $region35: #{image_decoder64.8} parent=31 // pred_region
        %s1018 = smul.u32 32, %s14
      $region36: #{image_decoder64.8} parent=31 // pred_fallthru
        _
    $region32: #{image_decoder64.8} parent=5 // pred_fallthru
      _
    %p1019 = scmp.le.s32.totalorder 2, %s9
    // Predicated region
    $region37: #{image_decoder64.8} parent=5 // pred_check
      %p1020 = pneg %p1019
    $region38: #{image_decoder64.8} parent=5 // pred_check_branch
      %1022 = sbr.rel (%p1020) target = $region40
    $region39: #{image_decoder64.8} parent=5 // pred_region
      %s1023 = ssub.s32 %s9, 2
      // Predicated region
      $region41: #{image_decoder64.8} parent=39 // pred_check
        %p1024 = pneg %p106
      $region42: #{image_decoder64.8} parent=39 // pred_check_branch
        %1026 = sbr.rel (%p1024) target = $region44
      $region43: #{image_decoder64.8} parent=39 // pred_region
        %s1027 = smul.u32 32, %s15
        %p1028 = scmp.lt.s32.totalorder %s1027, 63
        %s1029 = scalar_select %p1028, %s1027, 63
        %s1030 = smul.addr %s1029, 8
        %s1031 = scalar_lea.vmem %s3, %s1030
      $region44: #{image_decoder64.8} parent=39 // pred_fallthru
        _
    $region40: #{image_decoder64.8} parent=5 // pred_fallthru
      _
  $region6: #{image_decoder64.8} parent=0 // loop_footer
    %s13 = sadd.s32 1, %s9
  $region7: #{image_decoder64.8} parent=0 // loop_footer_branch
    %8 = sbr.rel target = $region3
  $region8: #{image_decoder64.8} parent=0 // loop_exit
    _

// kernel: tile.38
$region0: #{tile.38}
  #allocation0 [shape = 's32[1]{0}', space=sflag, size = 0x4, scoped, tag = 'scoped memory for tile.38']
  %s0 = inlined_call_operand.vmem [shape: f32[3], index: 0, kind: input, shape index: {}]
  %s1 = inlined_call_operand.vmem [shape: f32[4,3], index: 1, kind: output, shape index: {}]
  // Predicated region
  $region2: #{tile.38} parent=0 // pred_check
    _
  $region3: #{tile.38} parent=0 // pred_check_branch
    %3 = sbr.rel (0) target = $region5
  $region4: #{tile.38} parent=0 // pred_region
    _
  $region5: #{tile.38} parent=0 // pred_fallthru
    _
  %v4 = vld [vmem:[%s0] ss:$0 sm:$0xff]
  %5 = vst [vmem:[%s1] sm:$0xf] %v4

// kernel: tile.39
$region0: #{tile.39}
  %s0 = inlined_call_operand.vmem [shape: f32[4,3], index: 0, kind: input, shape index: {}]
  %s1 = inlined_call_operand.vmem [shape: f32[12], index: 1, kind: output, shape index: {}]
  $region1: #{tile.39} parent=0
    #allocation0 [shape = 'u8[4096]{0}', space=vmem, size = 0x1000, scoped, tag = 'scoped mem for output reshape']
    #allocation1 [shape = 'u8[4096]{0}', space=vmem, size = 0x1000, scoped, tag = 'scoped mem for input reshape']
    %s3 = ssub.s32 16, 1
    %v4 = vld [vmem:[%s0] sm:%s3]
    %5 = vst [vmem:[#allocation1] sm:%s3] %v4
    %v6 = vld [vmem:[#allocation1] sm:$0x1]
    %vm7 = vcmask 23552
    %8 = vst.msk [vmem:[#allocation0] sm:$0x1] %vm7, %v6
    %s9 = scalar_lea.vmem [#allocation1], 3
    %v10 = vld [vmem:[%s9] sm:$0x1]
    %11 = vrot.lane.b32.xlu0 %v10, 9
    %v12 = vpop.permute.xlu0 %11
    %vm13 = vcmask 97352
    %14 = vst.msk [vmem:[#allocation0] sm:$0x1] %vm13, %v12
    %s15 = scalar_lea.vmem [#allocation1], 2
    %v16 = vld [vmem:[%s15] sm:$0x1]
    %17 = vrot.lane.b32.xlu0 %v16, 6
    %v18 = vpop.permute.xlu0 %17
    %vm19 = vcmask 72752
    %20 = vst.msk [vmem:[#allocation0] sm:$0x1] %vm19, %v18
    %s21 = scalar_lea.vmem [#allocation1], 1
    %v22 = vld [vmem:[%s21] sm:$0x1]
    %23 = vrot.lane.b32.xlu0 %v22, 3
    %v24 = vpop.permute.xlu0 %23
    %vm25 = vcmask 48152
    %26 = vst.msk [vmem:[#allocation0] sm:$0x1] %vm25, %v24
    %s28 = ssub.s32 2, 1
    %v29 = vld [vmem:[#allocation0] sm:%s28]
    %s31 = ssub.s32 2, 1
    %32 = vst [vmem:[%s1] sm:%s31] %v29

// kernel: image_decoder64.9
$region0: #{image_decoder64.9}
  #allocation0 [shape = 'u32[]', space=smem, size = 0x4, offset = 0x4, fixed_abs, tag = 'smem constant byte address 0x4 - core index']
  #allocation1 [shape = 'u32[72,128]{1,0:T(1,128)}', space=vmem, size = 0x9000, scoped, tag = 'internal scratch']
  %s0 = inlined_call_operand.vmem [shape: bf16[2048,288], index: 0, kind: input, shape index: {}]
  %s1 = inlined_call_operand.vmem [shape: bf16[288,128], index: 1, kind: input, shape index: {}]
  %s2 = inlined_call_operand.vmem [shape: f32[1,128], index: 2, kind: input, shape index: {}]
  %s3 = inlined_call_operand.vmem [shape: f32[2048,128], index: 3, kind: output, shape index: {}]
  %s4 = sld [smem:[#allocation0]]
  $region45: #{image_decoder64.9} parent=0
    _
  %s6 = ssub.s32 1, %s4
  %s7 = scalar_select 0, %s6, %s4
  loop: start=0, step=1, limit=4
  $region2: #{image_decoder64.9} parent=0 // loop_pre_header
    _
  $region3: #{image_decoder64.9} parent=0 // loop_header
    %s9 = sphi 0, %s13
    %p10 = scmp.ge.s32.totalorder %s9, 4
    %s19 = sphi 0, %s21
    %s22 = sphi 0, %s19
    %s23 = sphi 0, %s22
    %s39 = sphi 0, %s23
    %s43 = sphi 0, %s43
    %s45 = sphi 0, %s43
    %s46 = sphi 0, %s45
    %s60 = sphi 0, %s46
    %s64 = sphi 0, %s64
    %s66 = sphi 0, %s64
    %s67 = sphi 0, %s66
    %s81 = sphi 0, %s67
    %s87 = sphi 0, %s89
    %s90 = sphi 0, %s87
    %s91 = sphi 0, %s90
    %s107 = sphi 0, %s91
  $region4: #{image_decoder64.9} parent=0 // loop_header_branch
    %12 = sbr.rel (%p10) target = $region8
  $region5: #{image_decoder64.9} parent=0 // loop_body
    %s14 = ssub.s32 %s9, 1
    %s15 = ssub.s32 %s9, 2
    %s16 = sadd.s32 %s9, 1
    %s17 = ssub.s32 %s9, %s16
    %p18 = scmp.eq.s32.totalorder %s17, 0
    %s20 = sadd.s32 %s19, 1
    %s21 = scalar_select %p18, %s19, %s20
    %p24 = pneg %p18
    %p25 = scmp.eq.s32.totalorder %s9, 1
    %p26 = por %p24, %p25
    %p27 = scmp.ne.s32.totalorder %s19, %s22
    %p28 = scmp.eq.s32.totalorder %s9, 0
    %p29 = por %p27, %p28
    %p30 = scmp.ne.s32.totalorder %s19, %s22
    %p31 = scmp.eq.s32.totalorder %s14, 1
    %p32 = por %p30, %p31
    %p33 = scmp.ne.s32.totalorder %s22, %s23
    %p34 = scmp.eq.s32.totalorder %s14, 0
    %p35 = por %p33, %p34
    %p36 = scmp.ne.s32.totalorder %s22, %s23
    %p37 = scmp.eq.s32.totalorder %s15, 1
    %p38 = por %p36, %p37
    %p40 = scmp.ne.s32.totalorder %s23, %s39
    %p41 = scmp.eq.s32.totalorder %s15, 0
    %p42 = por %p40, %p41
    %s44 = sadd.s32 %s43, 1
    %p47 = scmp.eq.s32.totalorder %s9, 1
    %p48 = scmp.ne.s32.totalorder %s43, %s45
    %p49 = scmp.eq.s32.totalorder %s9, 0
    %p50 = por %p48, %p49
    %p51 = scmp.ne.s32.totalorder %s43, %s45
    %p52 = scmp.eq.s32.totalorder %s14, 1
    %p53 = por %p51, %p52
    %p54 = scmp.ne.s32.totalorder %s45, %s46
    %p55 = scmp.eq.s32.totalorder %s14, 0
    %p56 = por %p54, %p55
    %p57 = scmp.ne.s32.totalorder %s45, %s46
    %p58 = scmp.eq.s32.totalorder %s15, 1
    %p59 = por %p57, %p58
    %p61 = scmp.ne.s32.totalorder %s46, %s60
    %p62 = scmp.eq.s32.totalorder %s15, 0
    %p63 = por %p61, %p62
    %s65 = sadd.s32 %s64, 1
    %p68 = scmp.eq.s32.totalorder %s9, 1
    %p69 = scmp.ne.s32.totalorder %s64, %s66
    %p70 = scmp.eq.s32.totalorder %s9, 0
    %p71 = por %p69, %p70
    %p72 = scmp.ne.s32.totalorder %s64, %s66
    %p73 = scmp.eq.s32.totalorder %s14, 1
    %p74 = por %p72, %p73
    %p75 = scmp.ne.s32.totalorder %s66, %s67
    %p76 = scmp.eq.s32.totalorder %s14, 0
    %p77 = por %p75, %p76
    %p78 = scmp.ne.s32.totalorder %s66, %s67
    %p79 = scmp.eq.s32.totalorder %s15, 1
    %p80 = por %p78, %p79
    %p82 = scmp.ne.s32.totalorder %s67, %s81
    %p83 = scmp.eq.s32.totalorder %s15, 0
    %p84 = por %p82, %p83
    %s85 = ssub.s32 %s9, %s16
    %p86 = scmp.eq.s32.totalorder %s85, 0
    %s88 = sadd.s32 %s87, 1
    %s89 = scalar_select %p86, %s87, %s88
    %p92 = pneg %p86
    %p93 = scmp.eq.s32.totalorder %s9, 1
    %p94 = por %p92, %p93
    %p95 = scmp.ne.s32.totalorder %s87, %s90
    %p96 = scmp.eq.s32.totalorder %s9, 0
    %p97 = por %p95, %p96
    %p98 = scmp.ne.s32.totalorder %s87, %s90
    %p99 = scmp.eq.s32.totalorder %s14, 1
    %p100 = por %p98, %p99
    %p101 = scmp.ne.s32.totalorder %s90, %s91
    %p102 = scmp.eq.s32.totalorder %s14, 0
    %p103 = por %p101, %p102
    %p104 = scmp.ne.s32.totalorder %s90, %s91
    %p105 = scmp.eq.s32.totalorder %s15, 1
    %p106 = por %p104, %p105
    %p108 = scmp.ne.s32.totalorder %s91, %s107
    %p109 = scmp.eq.s32.totalorder %s15, 0
    %p110 = por %p108, %p109
    %p111 = scmp.le.s32.totalorder 1, %s9
    %p112 = scmp.lt.s32.totalorder %s9, 3
    %p113 = pnand %p111, %p112
    %p114 = pneg %p113
    // Predicated region
    $region9: #{image_decoder64.9} parent=5 // pred_check
      _
    $region10: #{image_decoder64.9} parent=5 // pred_check_branch
      %116 = sbr.rel (%p113) target = $region12
    $region11: #{image_decoder64.9} parent=5 // pred_region
      %s117 = ssub.s32 %s9, 1
      // Predicated region
      $region13: #{image_decoder64.9} parent=11 // pred_check
        %p118 = pneg %p56
      $region14: #{image_decoder64.9} parent=11 // pred_check_branch
        %120 = sbr.rel (%p118) target = $region16
      $region15: #{image_decoder64.9} parent=11 // pred_region
        _
      $region16: #{image_decoder64.9} parent=11 // pred_fallthru
        _
      // Predicated region
      $region17: #{image_decoder64.9} parent=11 // pred_check
        %p121 = pneg %p77
      $region18: #{image_decoder64.9} parent=11 // pred_check_branch
        %123 = sbr.rel (%p121) target = $region20
      $region19: #{image_decoder64.9} parent=11 // pred_region
        _
      $region20: #{image_decoder64.9} parent=11 // pred_fallthru
        _
    $region12: #{image_decoder64.9} parent=5 // pred_fallthru
      _
    %p124 = scmp.lt.s32.totalorder %s9, 2
    // Predicated region
    $region21: #{image_decoder64.9} parent=5 // pred_check
      %p125 = pneg %p124
    $region22: #{image_decoder64.9} parent=5 // pred_check_branch
      %127 = sbr.rel (%p125) target = $region24
    $region23: #{image_decoder64.9} parent=5 // pred_region
      // Predicated region
      $region25: #{image_decoder64.9} parent=23 // pred_check
        %p128 = pneg %p29
      $region26: #{image_decoder64.9} parent=23 // pred_check_branch
        %130 = sbr.rel (%p128) target = $region28
      $region27: #{image_decoder64.9} parent=23 // pred_region
        %s131 = smul.u32 128, %s9
        %p132 = scmp.lt.s32.totalorder %s131, 255
        %s133 = scalar_select %p132, %s131, 255
        %s134 = smul.addr %s133, 3
        %s135 = smul.addr %s134, 4
        %s136 = scalar_lea.vmem %s0, %s135
        %s137 = smul.u32 128, %s9
      $region28: #{image_decoder64.9} parent=23 // pred_fallthru
        _
    $region24: #{image_decoder64.9} parent=5 // pred_fallthru
      _
    %p138 = scmp.le.s32.totalorder 1, %s9
    %p139 = scmp.lt.s32.totalorder %s9, 3
    %p140 = pnand %p138, %p139
    %p141 = pneg %p140
    // Predicated region
    $region29: #{image_decoder64.9} parent=5 // pred_check
      _
    $region30: #{image_decoder64.9} parent=5 // pred_check_branch
      %143 = sbr.rel (%p140) target = $region32
    $region31: #{image_decoder64.9} parent=5 // pred_region
      %s144 = ssub.s32 %s9, 1
      %s145 = smul.u32 128, %s14
      %p146 = scmp.lt.s32.totalorder %s145, 255
      %s147 = scalar_select %p146, %s145, 255
      %s148 = smul.addr %s147, 3
      %s149 = smul.addr %s148, 4
      %s150 = scalar_lea.vmem %s0, %s149
      %p151 = pneg %p35
      %p152 = pneg %p32
      %p153 = pneg %p56
      %p154 = pneg %p53
      %p155 = pneg %p77
      %p156 = pneg %p74
      %p157 = pneg %p103
      %p158 = pneg %p100
      %s159 = smul.u32 128, %s14
      %p160 = scmp.lt.s32.totalorder %s159, 255
      %s161 = scalar_select %p160, %s159, 255
      %s162 = smul.addr %s161, 8
      %s163 = scalar_lea.vmem %s3, %s162
      %s164 = smul.u32 128, %s14
      %p165 = scmp.lt.s32.totalorder %s164, 255
      %s166 = scalar_select %p165, %s164, 255
      %s167 = smul.addr %s166, 3
      %s168 = smul.addr %s167, 4
      %s169 = scalar_lea.vmem %s0, %s168
      %s170 = smul.u32 128, %s14
      %s171 = smul.u32 128, %s14
      %p172 = scmp.lt.s32.totalorder %s171, 255
      %s173 = scalar_select %p172, %s171, 255
      %s174 = smul.addr %s173, 8
      %s175 = scalar_lea.vmem %s3, %s174
      %s176 = smul.u32 128, %s14
      %v178 = vld [vmem:[%s169] sm:$0xff]
      %v179 = vld [vmem:[%s169 + $0x8] sm:$0xf]
      %v180 = vld [vmem:[%s169 + $0xc] sm:$0xff]
      %v181 = vld [vmem:[%s169 + $0x14] sm:$0xf]
      %v182 = vld [vmem:[%s169 + $0x18] sm:$0xff]
      %v183 = vld [vmem:[%s169 + $0x20] sm:$0xf]
      %v184 = vld [vmem:[%s169 + $0x24] sm:$0xff]
      %v185 = vld [vmem:[%s169 + $0x2c] sm:$0xf]
      %v186 = vld [vmem:[%s169 + $0x30] sm:$0xff]
      %v187 = vld [vmem:[%s169 + $0x38] sm:$0xf]
      %v188 = vld [vmem:[%s169 + $0x3c] sm:$0xff]
      %v189 = vld [vmem:[%s169 + $0x44] sm:$0xf]
      %v190 = vld [vmem:[%s169 + $0x48] sm:$0xff]
      %v191 = vld [vmem:[%s169 + $0x50] sm:$0xf]
      %v192 = vld [vmem:[%s169 + $0x54] sm:$0xff]
      %v193 = vld [vmem:[%s169 + $0x5c] sm:$0xf]
      %v194 = vld [vmem:[%s169 + $0x60] sm:$0xff]
      %v195 = vld [vmem:[%s169 + $0x68] sm:$0xf]
      %v196 = vld [vmem:[%s169 + $0x6c] sm:$0xff]
      %v197 = vld [vmem:[%s169 + $0x74] sm:$0xf]
      %v198 = vld [vmem:[%s169 + $0x78] sm:$0xff]
      %v199 = vld [vmem:[%s169 + $0x80] sm:$0xf]
      %v200 = vld [vmem:[%s169 + $0x84] sm:$0xff]
      %v201 = vld [vmem:[%s169 + $0x8c] sm:$0xf]
      %v202 = vld [vmem:[%s169 + $0x90] sm:$0xff]
      %v203 = vld [vmem:[%s169 + $0x98] sm:$0xf]
      %v204 = vld [vmem:[%s169 + $0x9c] sm:$0xff]
      %v205 = vld [vmem:[%s169 + $0xa4] sm:$0xf]
      %v206 = vld [vmem:[%s169 + $0xa8] sm:$0xff]
      %v207 = vld [vmem:[%s169 + $0xb0] sm:$0xf]
      %v208 = vld [vmem:[%s169 + $0xb4] sm:$0xff]
      %v209 = vld [vmem:[%s169 + $0xbc] sm:$0xf]
      %v210 = vld [vmem:[%s169 + $0xc0] sm:$0xff]
      %v211 = vld [vmem:[%s169 + $0xc8] sm:$0xf]
      %v212 = vld [vmem:[%s169 + $0xcc] sm:$0xff]
      %v213 = vld [vmem:[%s169 + $0xd4] sm:$0xf]
      %v214 = vld [vmem:[%s169 + $0xd8] sm:$0xff]
      %v215 = vld [vmem:[%s169 + $0xe0] sm:$0xf]
      %v216 = vld [vmem:[%s169 + $0xe4] sm:$0xff]
      %v217 = vld [vmem:[%s169 + $0xec] sm:$0xf]
      %v218 = vld [vmem:[%s169 + $0xf0] sm:$0xff]
      %v219 = vld [vmem:[%s169 + $0xf8] sm:$0xf]
      %v220 = vld [vmem:[%s169 + $0xfc] sm:$0xff]
      %v221 = vld [vmem:[%s169 + $0x104] sm:$0xf]
      %v222 = vld [vmem:[%s169 + $0x108] sm:$0xff]
      %v223 = vld [vmem:[%s169 + $0x110] sm:$0xf]
      %v224 = vld [vmem:[%s169 + $0x114] sm:$0xff]
      %v225 = vld [vmem:[%s169 + $0x11c] sm:$0xf]
      %v226 = vld [vmem:[%s169 + $0x120] sm:$0xff]
      %v227 = vld [vmem:[%s169 + $0x128] sm:$0xf]
      %v228 = vld [vmem:[%s169 + $0x12c] sm:$0xff]
      %v229 = vld [vmem:[%s169 + $0x134] sm:$0xf]
      %v230 = vld [vmem:[%s169 + $0x138] sm:$0xff]
      %v231 = vld [vmem:[%s169 + $0x140] sm:$0xf]
      %v232 = vld [vmem:[%s169 + $0x144] sm:$0xff]
      %v233 = vld [vmem:[%s169 + $0x14c] sm:$0xf]
      %v234 = vld [vmem:[%s169 + $0x150] sm:$0xff]
      %v235 = vld [vmem:[%s169 + $0x158] sm:$0xf]
      %v236 = vld [vmem:[%s169 + $0x15c] sm:$0xff]
      %v237 = vld [vmem:[%s169 + $0x164] sm:$0xf]
      %v238 = vld [vmem:[%s169 + $0x168] sm:$0xff]
      %v239 = vld [vmem:[%s169 + $0x170] sm:$0xf]
      %v240 = vld [vmem:[%s169 + $0x174] sm:$0xff]
      %v241 = vld [vmem:[%s169 + $0x17c] sm:$0xf]
      %v242 = vld [vmem:[%s169 + $0x180] sm:$0xff]
      %v243 = vld [vmem:[%s169 + $0x188] sm:$0xf]
      %v244 = vld [vmem:[%s169 + $0x18c] sm:$0xff]
      %v245 = vld [vmem:[%s169 + $0x194] sm:$0xf]
      %v246 = vld [vmem:[%s169 + $0x198] sm:$0xff]
      %v247 = vld [vmem:[%s169 + $0x1a0] sm:$0xf]
      %v248 = vld [vmem:[%s169 + $0x1a4] sm:$0xff]
      %v249 = vld [vmem:[%s169 + $0x1ac] sm:$0xf]
      %v250 = vld [vmem:[%s169 + $0x1b0] sm:$0xff]
      %v251 = vld [vmem:[%s169 + $0x1b8] sm:$0xf]
      %v252 = vld [vmem:[%s169 + $0x1bc] sm:$0xff]
      %v253 = vld [vmem:[%s169 + $0x1c4] sm:$0xf]
      %v254 = vld [vmem:[%s169 + $0x1c8] sm:$0xff]
      %v255 = vld [vmem:[%s169 + $0x1d0] sm:$0xf]
      %v256 = vld [vmem:[%s169 + $0x1d4] sm:$0xff]
      %v257 = vld [vmem:[%s169 + $0x1dc] sm:$0xf]
      %v258 = vld [vmem:[%s169 + $0x1e0] sm:$0xff]
      %v259 = vld [vmem:[%s169 + $0x1e8] sm:$0xf]
      %v260 = vld [vmem:[%s169 + $0x1ec] sm:$0xff]
      %v261 = vld [vmem:[%s169 + $0x1f4] sm:$0xf]
      %v262 = vld [vmem:[%s169 + $0x1f8] sm:$0xff]
      %v263 = vld [vmem:[%s169 + $0x200] sm:$0xf]
      %v264 = vld [vmem:[%s169 + $0x204] sm:$0xff]
      %v265 = vld [vmem:[%s169 + $0x20c] sm:$0xf]
      %v266 = vld [vmem:[%s169 + $0x210] sm:$0xff]
      %v267 = vld [vmem:[%s169 + $0x218] sm:$0xf]
      %v268 = vld [vmem:[%s169 + $0x21c] sm:$0xff]
      %v269 = vld [vmem:[%s169 + $0x224] sm:$0xf]
      %v270 = vld [vmem:[%s169 + $0x228] sm:$0xff]
      %v271 = vld [vmem:[%s169 + $0x230] sm:$0xf]
      %v272 = vld [vmem:[%s169 + $0x234] sm:$0xff]
      %v273 = vld [vmem:[%s169 + $0x23c] sm:$0xf]
      %v274 = vld [vmem:[%s169 + $0x240] sm:$0xff]
      %v275 = vld [vmem:[%s169 + $0x248] sm:$0xf]
      %v276 = vld [vmem:[%s169 + $0x24c] sm:$0xff]
      %v277 = vld [vmem:[%s169 + $0x254] sm:$0xf]
      %v278 = vld [vmem:[%s169 + $0x258] sm:$0xff]
      %v279 = vld [vmem:[%s169 + $0x260] sm:$0xf]
      %v280 = vld [vmem:[%s169 + $0x264] sm:$0xff]
      %v281 = vld [vmem:[%s169 + $0x26c] sm:$0xf]
      %v282 = vld [vmem:[%s169 + $0x270] sm:$0xff]
      %v283 = vld [vmem:[%s169 + $0x278] sm:$0xf]
      %v284 = vld [vmem:[%s169 + $0x27c] sm:$0xff]
      %v285 = vld [vmem:[%s169 + $0x284] sm:$0xf]
      %v286 = vld [vmem:[%s169 + $0x288] sm:$0xff]
      %v287 = vld [vmem:[%s169 + $0x290] sm:$0xf]
      %v288 = vld [vmem:[%s169 + $0x294] sm:$0xff]
      %v289 = vld [vmem:[%s169 + $0x29c] sm:$0xf]
      %v290 = vld [vmem:[%s169 + $0x2a0] sm:$0xff]
      %v291 = vld [vmem:[%s169 + $0x2a8] sm:$0xf]
      %v292 = vld [vmem:[%s169 + $0x2ac] sm:$0xff]
      %v293 = vld [vmem:[%s169 + $0x2b4] sm:$0xf]
      %v294 = vld [vmem:[%s169 + $0x2b8] sm:$0xff]
      %v295 = vld [vmem:[%s169 + $0x2c0] sm:$0xf]
      %v296 = vld [vmem:[%s169 + $0x2c4] sm:$0xff]
      %v297 = vld [vmem:[%s169 + $0x2cc] sm:$0xf]
      %v298 = vld [vmem:[%s169 + $0x2d0] sm:$0xff]
      %v299 = vld [vmem:[%s169 + $0x2d8] sm:$0xf]
      %v300 = vld [vmem:[%s169 + $0x2dc] sm:$0xff]
      %v301 = vld [vmem:[%s169 + $0x2e4] sm:$0xf]
      %v302 = vld [vmem:[%s169 + $0x2e8] sm:$0xff]
      %v303 = vld [vmem:[%s169 + $0x2f0] sm:$0xf]
      %v304 = vld [vmem:[%s169 + $0x2f4] sm:$0xff]
      %v305 = vld [vmem:[%s169 + $0x2fc] sm:$0xf]
      %v306 = vld [vmem:[%s169 + $0x300] sm:$0xff]
      %v307 = vld [vmem:[%s169 + $0x308] sm:$0xf]
      %v308 = vld [vmem:[%s169 + $0x30c] sm:$0xff]
      %v309 = vld [vmem:[%s169 + $0x314] sm:$0xf]
      %v310 = vld [vmem:[%s169 + $0x318] sm:$0xff]
      %v311 = vld [vmem:[%s169 + $0x320] sm:$0xf]
      %v312 = vld [vmem:[%s169 + $0x324] sm:$0xff]
      %v313 = vld [vmem:[%s169 + $0x32c] sm:$0xf]
      %v314 = vld [vmem:[%s169 + $0x330] sm:$0xff]
      %v315 = vld [vmem:[%s169 + $0x338] sm:$0xf]
      %v316 = vld [vmem:[%s169 + $0x33c] sm:$0xff]
      %v317 = vld [vmem:[%s169 + $0x344] sm:$0xf]
      %v318 = vld [vmem:[%s169 + $0x348] sm:$0xff]
      %v319 = vld [vmem:[%s169 + $0x350] sm:$0xf]
      %v320 = vld [vmem:[%s169 + $0x354] sm:$0xff]
      %v321 = vld [vmem:[%s169 + $0x35c] sm:$0xf]
      %v322 = vld [vmem:[%s169 + $0x360] sm:$0xff]
      %v323 = vld [vmem:[%s169 + $0x368] sm:$0xf]
      %v324 = vld [vmem:[%s169 + $0x36c] sm:$0xff]
      %v325 = vld [vmem:[%s169 + $0x374] sm:$0xf]
      %v326 = vld [vmem:[%s169 + $0x378] sm:$0xff]
      %v327 = vld [vmem:[%s169 + $0x380] sm:$0xf]
      %v328 = vld [vmem:[%s169 + $0x384] sm:$0xff]
      %v329 = vld [vmem:[%s169 + $0x38c] sm:$0xf]
      %v330 = vld [vmem:[%s169 + $0x390] sm:$0xff]
      %v331 = vld [vmem:[%s169 + $0x398] sm:$0xf]
      %v332 = vld [vmem:[%s169 + $0x39c] sm:$0xff]
      %v333 = vld [vmem:[%s169 + $0x3a4] sm:$0xf]
      %v334 = vld [vmem:[%s169 + $0x3a8] sm:$0xff]
      %v335 = vld [vmem:[%s169 + $0x3b0] sm:$0xf]
      %v336 = vld [vmem:[%s169 + $0x3b4] sm:$0xff]
      %v337 = vld [vmem:[%s169 + $0x3bc] sm:$0xf]
      %v338 = vld [vmem:[%s169 + $0x3c0] sm:$0xff]
      %v339 = vld [vmem:[%s169 + $0x3c8] sm:$0xf]
      %v340 = vld [vmem:[%s169 + $0x3cc] sm:$0xff]
      %v341 = vld [vmem:[%s169 + $0x3d4] sm:$0xf]
      %v342 = vld [vmem:[%s169 + $0x3d8] sm:$0xff]
      %v343 = vld [vmem:[%s169 + $0x3e0] sm:$0xf]
      %v344 = vld [vmem:[%s169 + $0x3e4] sm:$0xff]
      %v345 = vld [vmem:[%s169 + $0x3ec] sm:$0xf]
      %v346 = vld [vmem:[%s169 + $0x3f0] sm:$0xff]
      %v347 = vld [vmem:[%s169 + $0x3f8] sm:$0xf]
      %v348 = vld [vmem:[%s169 + $0x3fc] sm:$0xff]
      %v349 = vld [vmem:[%s169 + $0x404] sm:$0xf]
      %v350 = vld [vmem:[%s169 + $0x408] sm:$0xff]
      %v351 = vld [vmem:[%s169 + $0x410] sm:$0xf]
      %v352 = vld [vmem:[%s169 + $0x414] sm:$0xff]
      %v353 = vld [vmem:[%s169 + $0x41c] sm:$0xf]
      %v354 = vld [vmem:[%s169 + $0x420] sm:$0xff]
      %v355 = vld [vmem:[%s169 + $0x428] sm:$0xf]
      %v356 = vld [vmem:[%s169 + $0x42c] sm:$0xff]
      %v357 = vld [vmem:[%s169 + $0x434] sm:$0xf]
      %v358 = vld [vmem:[%s169 + $0x438] sm:$0xff]
      %v359 = vld [vmem:[%s169 + $0x440] sm:$0xf]
      %v360 = vld [vmem:[%s169 + $0x444] sm:$0xff]
      %v361 = vld [vmem:[%s169 + $0x44c] sm:$0xf]
      %v362 = vld [vmem:[%s169 + $0x450] sm:$0xff]
      %v363 = vld [vmem:[%s169 + $0x458] sm:$0xf]
      %v364 = vld [vmem:[%s169 + $0x45c] sm:$0xff]
      %v365 = vld [vmem:[%s169 + $0x464] sm:$0xf]
      %v366 = vld [vmem:[%s169 + $0x468] sm:$0xff]
      %v367 = vld [vmem:[%s169 + $0x470] sm:$0xf]
      %v368 = vld [vmem:[%s169 + $0x474] sm:$0xff]
      %v369 = vld [vmem:[%s169 + $0x47c] sm:$0xf]
      %v370 = vld [vmem:[%s169 + $0x480] sm:$0xff]
      %v371 = vld [vmem:[%s169 + $0x488] sm:$0xf]
      %v372 = vld [vmem:[%s169 + $0x48c] sm:$0xff]
      %v373 = vld [vmem:[%s169 + $0x494] sm:$0xf]
      %v374 = vld [vmem:[%s169 + $0x498] sm:$0xff]
      %v375 = vld [vmem:[%s169 + $0x4a0] sm:$0xf]
      %v376 = vld [vmem:[%s169 + $0x4a4] sm:$0xff]
      %v377 = vld [vmem:[%s169 + $0x4ac] sm:$0xf]
      %v378 = vld [vmem:[%s169 + $0x4b0] sm:$0xff]
      %v379 = vld [vmem:[%s169 + $0x4b8] sm:$0xf]
      %v380 = vld [vmem:[%s169 + $0x4bc] sm:$0xff]
      %v381 = vld [vmem:[%s169 + $0x4c4] sm:$0xf]
      %v382 = vld [vmem:[%s169 + $0x4c8] sm:$0xff]
      %v383 = vld [vmem:[%s169 + $0x4d0] sm:$0xf]
      %v384 = vld [vmem:[%s169 + $0x4d4] sm:$0xff]
      %v385 = vld [vmem:[%s169 + $0x4dc] sm:$0xf]
      %v386 = vld [vmem:[%s169 + $0x4e0] sm:$0xff]
      %v387 = vld [vmem:[%s169 + $0x4e8] sm:$0xf]
      %v388 = vld [vmem:[%s169 + $0x4ec] sm:$0xff]
      %v389 = vld [vmem:[%s169 + $0x4f4] sm:$0xf]
      %v390 = vld [vmem:[%s169 + $0x4f8] sm:$0xff]
      %v391 = vld [vmem:[%s169 + $0x500] sm:$0xf]
      %v392 = vld [vmem:[%s169 + $0x504] sm:$0xff]
      %v393 = vld [vmem:[%s169 + $0x50c] sm:$0xf]
      %v394 = vld [vmem:[%s169 + $0x510] sm:$0xff]
      %v395 = vld [vmem:[%s169 + $0x518] sm:$0xf]
      %v396 = vld [vmem:[%s169 + $0x51c] sm:$0xff]
      %v397 = vld [vmem:[%s169 + $0x524] sm:$0xf]
      %v398 = vld [vmem:[%s169 + $0x528] sm:$0xff]
      %v399 = vld [vmem:[%s169 + $0x530] sm:$0xf]
      %v400 = vld [vmem:[%s169 + $0x534] sm:$0xff]
      %v401 = vld [vmem:[%s169 + $0x53c] sm:$0xf]
      %v402 = vld [vmem:[%s169 + $0x540] sm:$0xff]
      %v403 = vld [vmem:[%s169 + $0x548] sm:$0xf]
      %v404 = vld [vmem:[%s169 + $0x54c] sm:$0xff]
      %v405 = vld [vmem:[%s169 + $0x554] sm:$0xf]
      %v406 = vld [vmem:[%s169 + $0x558] sm:$0xff]
      %v407 = vld [vmem:[%s169 + $0x560] sm:$0xf]
      %v408 = vld [vmem:[%s169 + $0x564] sm:$0xff]
      %v409 = vld [vmem:[%s169 + $0x56c] sm:$0xf]
      %v410 = vld [vmem:[%s169 + $0x570] sm:$0xff]
      %v411 = vld [vmem:[%s169 + $0x578] sm:$0xf]
      %v412 = vld [vmem:[%s169 + $0x57c] sm:$0xff]
      %v413 = vld [vmem:[%s169 + $0x584] sm:$0xf]
      %v414 = vld [vmem:[%s169 + $0x588] sm:$0xff]
      %v415 = vld [vmem:[%s169 + $0x590] sm:$0xf]
      %v416 = vld [vmem:[%s169 + $0x594] sm:$0xff]
      %v417 = vld [vmem:[%s169 + $0x59c] sm:$0xf]
      %v418 = vld [vmem:[%s169 + $0x5a0] sm:$0xff]
      %v419 = vld [vmem:[%s169 + $0x5a8] sm:$0xf]
      %v420 = vld [vmem:[%s169 + $0x5ac] sm:$0xff]
      %v421 = vld [vmem:[%s169 + $0x5b4] sm:$0xf]
      %v422 = vld [vmem:[%s169 + $0x5b8] sm:$0xff]
      %v423 = vld [vmem:[%s169 + $0x5c0] sm:$0xf]
      %v424 = vld [vmem:[%s169 + $0x5c4] sm:$0xff]
      %v425 = vld [vmem:[%s169 + $0x5cc] sm:$0xf]
      %v426 = vld [vmem:[%s169 + $0x5d0] sm:$0xff]
      %v427 = vld [vmem:[%s169 + $0x5d8] sm:$0xf]
      %v428 = vld [vmem:[%s169 + $0x5dc] sm:$0xff]
      %v429 = vld [vmem:[%s169 + $0x5e4] sm:$0xf]
      %v430 = vld [vmem:[%s169 + $0x5e8] sm:$0xff]
      %v431 = vld [vmem:[%s169 + $0x5f0] sm:$0xf]
      %v432 = vld [vmem:[%s169 + $0x5f4] sm:$0xff]
      %v433 = vld [vmem:[%s169 + $0x5fc] sm:$0xf]
      %v434 = vld [vmem:[%s1] sm:$0xf]
      %v435 = vld [vmem:[%s1 + $0x4] sm:$0xf]
      %v436 = vld [vmem:[%s1 + $0x8] sm:$0xf]
      %v437 = vld [vmem:[%s1 + $0xc] sm:$0xf]
      %v438 = vld [vmem:[%s1 + $0x10] sm:$0xf]
      %v439 = vld [vmem:[%s1 + $0x14] sm:$0xf]
      %v440 = vld [vmem:[%s1 + $0x18] sm:$0xf]
      %v441 = vld [vmem:[%s1 + $0x1c] sm:$0xf]
      %v442 = vld [vmem:[%s1 + $0x20] sm:$0xf]
      %v443 = vld [vmem:[%s1 + $0x24] sm:$0xf]
      %v444 = vld [vmem:[%s1 + $0x28] sm:$0xf]
      %v445 = vld [vmem:[%s1 + $0x2c] sm:$0xf]
      %v446 = vld [vmem:[%s1 + $0x30] sm:$0xf]
      %v447 = vld [vmem:[%s1 + $0x34] sm:$0xf]
      %v448 = vld [vmem:[%s1 + $0x38] sm:$0xf]
      %v449 = vld [vmem:[%s1 + $0x3c] sm:$0xf]
      %v450 = vld [vmem:[%s1 + $0x40] sm:$0xf]
      %v451 = vld [vmem:[%s1 + $0x44] sm:$0xf]
      %v452 = vld [vmem:[%s1 + $0x48] sm:$0xf]
      %v453 = vld [vmem:[%s1 + $0x4c] sm:$0xf]
      %v454 = vld [vmem:[%s1 + $0x50] sm:$0xf]
      %v455 = vld [vmem:[%s1 + $0x54] sm:$0xf]
      %v456 = vld [vmem:[%s1 + $0x58] sm:$0xf]
      %v457 = vld [vmem:[%s1 + $0x5c] sm:$0xf]
      %v458 = vld [vmem:[%s1 + $0x60] sm:$0xf]
      %v459 = vld [vmem:[%s1 + $0x64] sm:$0xf]
      %v460 = vld [vmem:[%s1 + $0x68] sm:$0xf]
      %v461 = vld [vmem:[%s1 + $0x6c] sm:$0xf]
      %v462 = vld [vmem:[%s1 + $0x70] sm:$0xf]
      %v463 = vld [vmem:[%s1 + $0x74] sm:$0xf]
      %v464 = vld [vmem:[%s1 + $0x78] sm:$0xf]
      %v465 = vld [vmem:[%s1 + $0x7c] sm:$0xf]
      %v466 = vld [vmem:[%s1 + $0x80] sm:$0xf]
      %v467 = vld [vmem:[%s1 + $0x84] sm:$0xf]
      %v468 = vld [vmem:[%s1 + $0x88] sm:$0xf]
      %v469 = vld [vmem:[%s1 + $0x8c] sm:$0xf]
      %v470 = vld [vmem:[%s2] sm:$0x1]
      %v472 = vperm.slane %v470, 0
      %v730 = vunpack.c.l.b16 %v178
      %v731 = vunpack.c.h.b16 %v178
      %v732 = vunpack.c.l.b16 %v179
      %v733 = vunpack.c.l.b16 %v180
      %v734 = vunpack.c.h.b16 %v180
      %v735 = vunpack.c.l.b16 %v181
      %v736 = vunpack.c.l.b16 %v182
      %v737 = vunpack.c.h.b16 %v182
      %v738 = vunpack.c.l.b16 %v183
      %v739 = vunpack.c.l.b16 %v184
      %v740 = vunpack.c.h.b16 %v184
      %v741 = vunpack.c.l.b16 %v185
      %v742 = vunpack.c.l.b16 %v186
      %v743 = vunpack.c.h.b16 %v186
      %v744 = vunpack.c.l.b16 %v187
      %v745 = vunpack.c.l.b16 %v188
      %v746 = vunpack.c.h.b16 %v188
      %v747 = vunpack.c.l.b16 %v189
      %v748 = vunpack.c.l.b16 %v190
      %v749 = vunpack.c.h.b16 %v190
      %v750 = vunpack.c.l.b16 %v191
      %v751 = vunpack.c.l.b16 %v192
      %v752 = vunpack.c.h.b16 %v192
      %v753 = vunpack.c.l.b16 %v193
      %v754 = vunpack.c.l.b16 %v194
      %v755 = vunpack.c.h.b16 %v194
      %v756 = vunpack.c.l.b16 %v195
      %v757 = vunpack.c.l.b16 %v196
      %v758 = vunpack.c.h.b16 %v196
      %v759 = vunpack.c.l.b16 %v197
      %v760 = vunpack.c.l.b16 %v198
      %v761 = vunpack.c.h.b16 %v198
      %v762 = vunpack.c.l.b16 %v199
      %v763 = vunpack.c.l.b16 %v200
      %v764 = vunpack.c.h.b16 %v200
      %v765 = vunpack.c.l.b16 %v201
      %v766 = vunpack.c.l.b16 %v202
      %v767 = vunpack.c.h.b16 %v202
      %v768 = vunpack.c.l.b16 %v203
      %v769 = vunpack.c.l.b16 %v204
      %v770 = vunpack.c.h.b16 %v204
      %v771 = vunpack.c.l.b16 %v205
      %v772 = vunpack.c.l.b16 %v206
      %v773 = vunpack.c.h.b16 %v206
      %v774 = vunpack.c.l.b16 %v207
      %v775 = vunpack.c.l.b16 %v208
      %v776 = vunpack.c.h.b16 %v208
      %v777 = vunpack.c.l.b16 %v209
      %v778 = vunpack.c.l.b16 %v210
      %v779 = vunpack.c.h.b16 %v210
      %v780 = vunpack.c.l.b16 %v211
      %v781 = vunpack.c.l.b16 %v212
      %v782 = vunpack.c.h.b16 %v212
      %v783 = vunpack.c.l.b16 %v213
      %v784 = vunpack.c.l.b16 %v214
      %v785 = vunpack.c.h.b16 %v214
      %v786 = vunpack.c.l.b16 %v215
      %v787 = vunpack.c.l.b16 %v216
      %v788 = vunpack.c.h.b16 %v216
      %v789 = vunpack.c.l.b16 %v217
      %v790 = vunpack.c.l.b16 %v218
      %v791 = vunpack.c.h.b16 %v218
      %v792 = vunpack.c.l.b16 %v219
      %v793 = vunpack.c.l.b16 %v220
      %v794 = vunpack.c.h.b16 %v220
      %v795 = vunpack.c.l.b16 %v221
      %v796 = vunpack.c.l.b16 %v222
      %v797 = vunpack.c.h.b16 %v222
      %v798 = vunpack.c.l.b16 %v223
      %v799 = vunpack.c.l.b16 %v224
      %v800 = vunpack.c.h.b16 %v224
      %v801 = vunpack.c.l.b16 %v225
      %v802 = vunpack.c.l.b16 %v226
      %v803 = vunpack.c.h.b16 %v226
      %v804 = vunpack.c.l.b16 %v227
      %v805 = vunpack.c.l.b16 %v228
      %v806 = vunpack.c.h.b16 %v228
      %v807 = vunpack.c.l.b16 %v229
      %v808 = vunpack.c.l.b16 %v230
      %v809 = vunpack.c.h.b16 %v230
      %v810 = vunpack.c.l.b16 %v231
      %v811 = vunpack.c.l.b16 %v232
      %v812 = vunpack.c.h.b16 %v232
      %v813 = vunpack.c.l.b16 %v233
      %v814 = vunpack.c.l.b16 %v234
      %v815 = vunpack.c.h.b16 %v234
      %v816 = vunpack.c.l.b16 %v235
      %v817 = vunpack.c.l.b16 %v236
      %v818 = vunpack.c.h.b16 %v236
      %v819 = vunpack.c.l.b16 %v237
      %v820 = vunpack.c.l.b16 %v238
      %v821 = vunpack.c.h.b16 %v238
      %v822 = vunpack.c.l.b16 %v239
      %v823 = vunpack.c.l.b16 %v240
      %v824 = vunpack.c.h.b16 %v240
      %v825 = vunpack.c.l.b16 %v241
      %v826 = vunpack.c.l.b16 %v242
      %v827 = vunpack.c.h.b16 %v242
      %v828 = vunpack.c.l.b16 %v243
      %v829 = vunpack.c.l.b16 %v244
      %v830 = vunpack.c.h.b16 %v244
      %v831 = vunpack.c.l.b16 %v245
      %v832 = vunpack.c.l.b16 %v246
      %v833 = vunpack.c.h.b16 %v246
      %v834 = vunpack.c.l.b16 %v247
      %v835 = vunpack.c.l.b16 %v248
      %v836 = vunpack.c.h.b16 %v248
      %v837 = vunpack.c.l.b16 %v249
      %v838 = vunpack.c.l.b16 %v250
      %v839 = vunpack.c.h.b16 %v250
      %v840 = vunpack.c.l.b16 %v251
      %v841 = vunpack.c.l.b16 %v252
      %v842 = vunpack.c.h.b16 %v252
      %v843 = vunpack.c.l.b16 %v253
      %v844 = vunpack.c.l.b16 %v254
      %v845 = vunpack.c.h.b16 %v254
      %v846 = vunpack.c.l.b16 %v255
      %v847 = vunpack.c.l.b16 %v256
      %v848 = vunpack.c.h.b16 %v256
      %v849 = vunpack.c.l.b16 %v257
      %v850 = vunpack.c.l.b16 %v258
      %v851 = vunpack.c.h.b16 %v258
      %v852 = vunpack.c.l.b16 %v259
      %v853 = vunpack.c.l.b16 %v260
      %v854 = vunpack.c.h.b16 %v260
      %v855 = vunpack.c.l.b16 %v261
      %v856 = vunpack.c.l.b16 %v262
      %v857 = vunpack.c.h.b16 %v262
      %v858 = vunpack.c.l.b16 %v263
      %v859 = vunpack.c.l.b16 %v264
      %v860 = vunpack.c.h.b16 %v264
      %v861 = vunpack.c.l.b16 %v265
      %v862 = vunpack.c.l.b16 %v266
      %v863 = vunpack.c.h.b16 %v266
      %v864 = vunpack.c.l.b16 %v267
      %v865 = vunpack.c.l.b16 %v268
      %v866 = vunpack.c.h.b16 %v268
      %v867 = vunpack.c.l.b16 %v269
      %v868 = vunpack.c.l.b16 %v270
      %v869 = vunpack.c.h.b16 %v270
      %v870 = vunpack.c.l.b16 %v271
      %v871 = vunpack.c.l.b16 %v272
      %v872 = vunpack.c.h.b16 %v272
      %v873 = vunpack.c.l.b16 %v273
      %v874 = vunpack.c.l.b16 %v274
      %v875 = vunpack.c.h.b16 %v274
      %v876 = vunpack.c.l.b16 %v275
      %v877 = vunpack.c.l.b16 %v276
      %v878 = vunpack.c.h.b16 %v276
      %v879 = vunpack.c.l.b16 %v277
      %v880 = vunpack.c.l.b16 %v278
      %v881 = vunpack.c.h.b16 %v278
      %v882 = vunpack.c.l.b16 %v279
      %v883 = vunpack.c.l.b16 %v280
      %v884 = vunpack.c.h.b16 %v280
      %v885 = vunpack.c.l.b16 %v281
      %v886 = vunpack.c.l.b16 %v282
      %v887 = vunpack.c.h.b16 %v282
      %v888 = vunpack.c.l.b16 %v283
      %v889 = vunpack.c.l.b16 %v284
      %v890 = vunpack.c.h.b16 %v284
      %v891 = vunpack.c.l.b16 %v285
      %v892 = vunpack.c.l.b16 %v286
      %v893 = vunpack.c.h.b16 %v286
      %v894 = vunpack.c.l.b16 %v287
      %v895 = vunpack.c.l.b16 %v288
      %v896 = vunpack.c.h.b16 %v288
      %v897 = vunpack.c.l.b16 %v289
      %v898 = vunpack.c.l.b16 %v290
      %v899 = vunpack.c.h.b16 %v290
      %v900 = vunpack.c.l.b16 %v291
      %v901 = vunpack.c.l.b16 %v292
      %v902 = vunpack.c.h.b16 %v292
      %v903 = vunpack.c.l.b16 %v293
      %v904 = vunpack.c.l.b16 %v294
      %v905 = vunpack.c.h.b16 %v294
      %v906 = vunpack.c.l.b16 %v295
      %v907 = vunpack.c.l.b16 %v296
      %v908 = vunpack.c.h.b16 %v296
      %v909 = vunpack.c.l.b16 %v297
      %v910 = vunpack.c.l.b16 %v298
      %v911 = vunpack.c.h.b16 %v298
      %v912 = vunpack.c.l.b16 %v299
      %v913 = vunpack.c.l.b16 %v300
      %v914 = vunpack.c.h.b16 %v300
      %v915 = vunpack.c.l.b16 %v301
      %v916 = vunpack.c.l.b16 %v302
      %v917 = vunpack.c.h.b16 %v302
      %v918 = vunpack.c.l.b16 %v303
      %v919 = vunpack.c.l.b16 %v304
      %v920 = vunpack.c.h.b16 %v304
      %v921 = vunpack.c.l.b16 %v305
      %v922 = vunpack.c.l.b16 %v306
      %v923 = vunpack.c.h.b16 %v306
      %v924 = vunpack.c.l.b16 %v307
      %v925 = vunpack.c.l.b16 %v308
      %v926 = vunpack.c.h.b16 %v308
      %v927 = vunpack.c.l.b16 %v309
      %v928 = vunpack.c.l.b16 %v310
      %v929 = vunpack.c.h.b16 %v310
      %v930 = vunpack.c.l.b16 %v311
      %v931 = vunpack.c.l.b16 %v312
      %v932 = vunpack.c.h.b16 %v312
      %v933 = vunpack.c.l.b16 %v313
      %v934 = vunpack.c.l.b16 %v314
      %v935 = vunpack.c.h.b16 %v314
      %v936 = vunpack.c.l.b16 %v315
      %v937 = vunpack.c.l.b16 %v316
      %v938 = vunpack.c.h.b16 %v316
      %v939 = vunpack.c.l.b16 %v317
      %v940 = vunpack.c.l.b16 %v318
      %v941 = vunpack.c.h.b16 %v318
      %v942 = vunpack.c.l.b16 %v319
      %v943 = vunpack.c.l.b16 %v320
      %v944 = vunpack.c.h.b16 %v320
      %v945 = vunpack.c.l.b16 %v321
      %v946 = vunpack.c.l.b16 %v322
      %v947 = vunpack.c.h.b16 %v322
      %v948 = vunpack.c.l.b16 %v323
      %v949 = vunpack.c.l.b16 %v324
      %v950 = vunpack.c.h.b16 %v324
      %v951 = vunpack.c.l.b16 %v325
      %v952 = vunpack.c.l.b16 %v326
      %v953 = vunpack.c.h.b16 %v326
      %v954 = vunpack.c.l.b16 %v327
      %v955 = vunpack.c.l.b16 %v328
      %v956 = vunpack.c.h.b16 %v328
      %v957 = vunpack.c.l.b16 %v329
      %v958 = vunpack.c.l.b16 %v330
      %v959 = vunpack.c.h.b16 %v330
      %v960 = vunpack.c.l.b16 %v331
      %v961 = vunpack.c.l.b16 %v332
      %v962 = vunpack.c.h.b16 %v332
      %v963 = vunpack.c.l.b16 %v333
      %v964 = vunpack.c.l.b16 %v334
      %v965 = vunpack.c.h.b16 %v334
      %v966 = vunpack.c.l.b16 %v335
      %v967 = vunpack.c.l.b16 %v336
      %v968 = vunpack.c.h.b16 %v336
      %v969 = vunpack.c.l.b16 %v337
      %v970 = vunpack.c.l.b16 %v338
      %v971 = vunpack.c.h.b16 %v338
      %v972 = vunpack.c.l.b16 %v339
      %v973 = vunpack.c.l.b16 %v340
      %v974 = vunpack.c.h.b16 %v340
      %v975 = vunpack.c.l.b16 %v341
      %v976 = vunpack.c.l.b16 %v342
      %v977 = vunpack.c.h.b16 %v342
      %v978 = vunpack.c.l.b16 %v343
      %v979 = vunpack.c.l.b16 %v344
      %v980 = vunpack.c.h.b16 %v344
      %v981 = vunpack.c.l.b16 %v345
      %v982 = vunpack.c.l.b16 %v346
      %v983 = vunpack.c.h.b16 %v346
      %v984 = vunpack.c.l.b16 %v347
      %v985 = vunpack.c.l.b16 %v348
      %v986 = vunpack.c.h.b16 %v348
      %v987 = vunpack.c.l.b16 %v349
      %v988 = vunpack.c.l.b16 %v350
      %v989 = vunpack.c.h.b16 %v350
      %v990 = vunpack.c.l.b16 %v351
      %v991 = vunpack.c.l.b16 %v352
      %v992 = vunpack.c.h.b16 %v352
      %v993 = vunpack.c.l.b16 %v353
      %v994 = vunpack.c.l.b16 %v354
      %v995 = vunpack.c.h.b16 %v354
      %v996 = vunpack.c.l.b16 %v355
      %v997 = vunpack.c.l.b16 %v356
      %v998 = vunpack.c.h.b16 %v356
      %v999 = vunpack.c.l.b16 %v357
      %v1000 = vunpack.c.l.b16 %v358
      %v1001 = vunpack.c.h.b16 %v358
      %v1002 = vunpack.c.l.b16 %v359
      %v1003 = vunpack.c.l.b16 %v360
      %v1004 = vunpack.c.h.b16 %v360
      %v1005 = vunpack.c.l.b16 %v361
      %v1006 = vunpack.c.l.b16 %v362
      %v1007 = vunpack.c.h.b16 %v362
      %v1008 = vunpack.c.l.b16 %v363
      %v1009 = vunpack.c.l.b16 %v364
      %v1010 = vunpack.c.h.b16 %v364
      %v1011 = vunpack.c.l.b16 %v365
      %v1012 = vunpack.c.l.b16 %v366
      %v1013 = vunpack.c.h.b16 %v366
      %v1014 = vunpack.c.l.b16 %v367
      %v1015 = vunpack.c.l.b16 %v368
      %v1016 = vunpack.c.h.b16 %v368
      %v1017 = vunpack.c.l.b16 %v369
      %v1018 = vunpack.c.l.b16 %v370
      %v1019 = vunpack.c.h.b16 %v370
      %v1020 = vunpack.c.l.b16 %v371
      %v1021 = vunpack.c.l.b16 %v372
      %v1022 = vunpack.c.h.b16 %v372
      %v1023 = vunpack.c.l.b16 %v373
      %v1024 = vunpack.c.l.b16 %v374
      %v1025 = vunpack.c.h.b16 %v374
      %v1026 = vunpack.c.l.b16 %v375
      %v1027 = vunpack.c.l.b16 %v376
      %v1028 = vunpack.c.h.b16 %v376
      %v1029 = vunpack.c.l.b16 %v377
      %v1030 = vunpack.c.l.b16 %v378
      %v1031 = vunpack.c.h.b16 %v378
      %v1032 = vunpack.c.l.b16 %v379
      %v1033 = vunpack.c.l.b16 %v380
      %v1034 = vunpack.c.h.b16 %v380
      %v1035 = vunpack.c.l.b16 %v381
      %v1036 = vunpack.c.l.b16 %v382
      %v1037 = vunpack.c.h.b16 %v382
      %v1038 = vunpack.c.l.b16 %v383
      %v1039 = vunpack.c.l.b16 %v384
      %v1040 = vunpack.c.h.b16 %v384
      %v1041 = vunpack.c.l.b16 %v385
      %v1042 = vunpack.c.l.b16 %v386
      %v1043 = vunpack.c.h.b16 %v386
      %v1044 = vunpack.c.l.b16 %v387
      %v1045 = vunpack.c.l.b16 %v388
      %v1046 = vunpack.c.h.b16 %v388
      %v1047 = vunpack.c.l.b16 %v389
      %v1048 = vunpack.c.l.b16 %v390
      %v1049 = vunpack.c.h.b16 %v390
      %v1050 = vunpack.c.l.b16 %v391
      %v1051 = vunpack.c.l.b16 %v392
      %v1052 = vunpack.c.h.b16 %v392
      %v1053 = vunpack.c.l.b16 %v393
      %v1054 = vunpack.c.l.b16 %v394
      %v1055 = vunpack.c.h.b16 %v394
      %v1056 = vunpack.c.l.b16 %v395
      %v1057 = vunpack.c.l.b16 %v396
      %v1058 = vunpack.c.h.b16 %v396
      %v1059 = vunpack.c.l.b16 %v397
      %v1060 = vunpack.c.l.b16 %v398
      %v1061 = vunpack.c.h.b16 %v398
      %v1062 = vunpack.c.l.b16 %v399
      %v1063 = vunpack.c.l.b16 %v400
      %v1064 = vunpack.c.h.b16 %v400
      %v1065 = vunpack.c.l.b16 %v401
      %v1066 = vunpack.c.l.b16 %v402
      %v1067 = vunpack.c.h.b16 %v402
      %v1068 = vunpack.c.l.b16 %v403
      %v1069 = vunpack.c.l.b16 %v404
      %v1070 = vunpack.c.h.b16 %v404
      %v1071 = vunpack.c.l.b16 %v405
      %v1072 = vunpack.c.l.b16 %v406
      %v1073 = vunpack.c.h.b16 %v406
      %v1074 = vunpack.c.l.b16 %v407
      %v1075 = vunpack.c.l.b16 %v408
      %v1076 = vunpack.c.h.b16 %v408
      %v1077 = vunpack.c.l.b16 %v409
      %v1078 = vunpack.c.l.b16 %v410
      %v1079 = vunpack.c.h.b16 %v410
      %v1080 = vunpack.c.l.b16 %v411
      %v1081 = vunpack.c.l.b16 %v412
      %v1082 = vunpack.c.h.b16 %v412
      %v1083 = vunpack.c.l.b16 %v413
      %v1084 = vunpack.c.l.b16 %v414
      %v1085 = vunpack.c.h.b16 %v414
      %v1086 = vunpack.c.l.b16 %v415
      %v1087 = vunpack.c.l.b16 %v416
      %v1088 = vunpack.c.h.b16 %v416
      %v1089 = vunpack.c.l.b16 %v417
      %v1090 = vunpack.c.l.b16 %v418
      %v1091 = vunpack.c.h.b16 %v418
      %v1092 = vunpack.c.l.b16 %v419
      %v1093 = vunpack.c.l.b16 %v420
      %v1094 = vunpack.c.h.b16 %v420
      %v1095 = vunpack.c.l.b16 %v421
      %v1096 = vunpack.c.l.b16 %v422
      %v1097 = vunpack.c.h.b16 %v422
      %v1098 = vunpack.c.l.b16 %v423
      %v1099 = vunpack.c.l.b16 %v424
      %v1100 = vunpack.c.h.b16 %v424
      %v1101 = vunpack.c.l.b16 %v425
      %v1102 = vunpack.c.l.b16 %v426
      %v1103 = vunpack.c.h.b16 %v426
      %v1104 = vunpack.c.l.b16 %v427
      %v1105 = vunpack.c.l.b16 %v428
      %v1106 = vunpack.c.h.b16 %v428
      %v1107 = vunpack.c.l.b16 %v429
      %v1108 = vunpack.c.l.b16 %v430
      %v1109 = vunpack.c.h.b16 %v430
      %v1110 = vunpack.c.l.b16 %v431
      %v1111 = vunpack.c.l.b16 %v432
      %v1112 = vunpack.c.h.b16 %v432
      %v1113 = vunpack.c.l.b16 %v433
      %v1114 = vpack.c.b16 %v733, %v730
      %v1115 = vpack.c.b16 %v734, %v731
      %v1116 = vpack.c.b16 %v735, %v732
      %v1117 = vpack.c.b16 %v739, %v736
      %v1118 = vpack.c.b16 %v740, %v737
      %v1119 = vpack.c.b16 %v741, %v738
      %v1120 = vpack.c.b16 %v745, %v742
      %v1121 = vpack.c.b16 %v746, %v743
      %v1122 = vpack.c.b16 %v747, %v744
      %v1123 = vpack.c.b16 %v751, %v748
      %v1124 = vpack.c.b16 %v752, %v749
      %v1125 = vpack.c.b16 %v753, %v750
      %v1126 = vpack.c.b16 %v757, %v754
      %v1127 = vpack.c.b16 %v758, %v755
      %v1128 = vpack.c.b16 %v759, %v756
      %v1129 = vpack.c.b16 %v763, %v760
      %v1130 = vpack.c.b16 %v764, %v761
      %v1131 = vpack.c.b16 %v765, %v762
      %v1132 = vpack.c.b16 %v769, %v766
      %v1133 = vpack.c.b16 %v770, %v767
      %v1134 = vpack.c.b16 %v771, %v768
      %v1135 = vpack.c.b16 %v775, %v772
      %v1136 = vpack.c.b16 %v776, %v773
      %v1137 = vpack.c.b16 %v777, %v774
      %v1138 = vpack.c.b16 %v781, %v778
      %v1139 = vpack.c.b16 %v782, %v779
      %v1140 = vpack.c.b16 %v783, %v780
      %v1141 = vpack.c.b16 %v787, %v784
      %v1142 = vpack.c.b16 %v788, %v785
      %v1143 = vpack.c.b16 %v789, %v786
      %v1144 = vpack.c.b16 %v793, %v790
      %v1145 = vpack.c.b16 %v794, %v791
      %v1146 = vpack.c.b16 %v795, %v792
      %v1147 = vpack.c.b16 %v799, %v796
      %v1148 = vpack.c.b16 %v800, %v797
      %v1149 = vpack.c.b16 %v801, %v798
      %v1150 = vpack.c.b16 %v805, %v802
      %v1151 = vpack.c.b16 %v806, %v803
      %v1152 = vpack.c.b16 %v807, %v804
      %v1153 = vpack.c.b16 %v811, %v808
      %v1154 = vpack.c.b16 %v812, %v809
      %v1155 = vpack.c.b16 %v813, %v810
      %v1156 = vpack.c.b16 %v817, %v814
      %v1157 = vpack.c.b16 %v818, %v815
      %v1158 = vpack.c.b16 %v819, %v816
      %v1159 = vpack.c.b16 %v823, %v820
      %v1160 = vpack.c.b16 %v824, %v821
      %v1161 = vpack.c.b16 %v825, %v822
      %v1162 = vpack.c.b16 %v829, %v826
      %v1163 = vpack.c.b16 %v830, %v827
      %v1164 = vpack.c.b16 %v831, %v828
      %v1165 = vpack.c.b16 %v835, %v832
      %v1166 = vpack.c.b16 %v836, %v833
      %v1167 = vpack.c.b16 %v837, %v834
      %v1168 = vpack.c.b16 %v841, %v838
      %v1169 = vpack.c.b16 %v842, %v839
      %v1170 = vpack.c.b16 %v843, %v840
      %v1171 = vpack.c.b16 %v847, %v844
      %v1172 = vpack.c.b16 %v848, %v845
      %v1173 = vpack.c.b16 %v849, %v846
      %v1174 = vpack.c.b16 %v853, %v850
      %v1175 = vpack.c.b16 %v854, %v851
      %v1176 = vpack.c.b16 %v855, %v852
      %v1177 = vpack.c.b16 %v859, %v856
      %v1178 = vpack.c.b16 %v860, %v857
      %v1179 = vpack.c.b16 %v861, %v858
      %v1180 = vpack.c.b16 %v865, %v862
      %v1181 = vpack.c.b16 %v866, %v863
      %v1182 = vpack.c.b16 %v867, %v864
      %v1183 = vpack.c.b16 %v871, %v868
      %v1184 = vpack.c.b16 %v872, %v869
      %v1185 = vpack.c.b16 %v873, %v870
      %v1186 = vpack.c.b16 %v877, %v874
      %v1187 = vpack.c.b16 %v878, %v875
      %v1188 = vpack.c.b16 %v879, %v876
      %v1189 = vpack.c.b16 %v883, %v880
      %v1190 = vpack.c.b16 %v884, %v881
      %v1191 = vpack.c.b16 %v885, %v882
      %v1192 = vpack.c.b16 %v889, %v886
      %v1193 = vpack.c.b16 %v890, %v887
      %v1194 = vpack.c.b16 %v891, %v888
      %v1195 = vpack.c.b16 %v895, %v892
      %v1196 = vpack.c.b16 %v896, %v893
      %v1197 = vpack.c.b16 %v897, %v894
      %v1198 = vpack.c.b16 %v901, %v898
      %v1199 = vpack.c.b16 %v902, %v899
      %v1200 = vpack.c.b16 %v903, %v900
      %v1201 = vpack.c.b16 %v907, %v904
      %v1202 = vpack.c.b16 %v908, %v905
      %v1203 = vpack.c.b16 %v909, %v906
      %v1204 = vpack.c.b16 %v913, %v910
      %v1205 = vpack.c.b16 %v914, %v911
      %v1206 = vpack.c.b16 %v915, %v912
      %v1207 = vpack.c.b16 %v919, %v916
      %v1208 = vpack.c.b16 %v920, %v917
      %v1209 = vpack.c.b16 %v921, %v918
      %v1210 = vpack.c.b16 %v925, %v922
      %v1211 = vpack.c.b16 %v926, %v923
      %v1212 = vpack.c.b16 %v927, %v924
      %v1213 = vpack.c.b16 %v931, %v928
      %v1214 = vpack.c.b16 %v932, %v929
      %v1215 = vpack.c.b16 %v933, %v930
      %v1216 = vpack.c.b16 %v937, %v934
      %v1217 = vpack.c.b16 %v938, %v935
      %v1218 = vpack.c.b16 %v939, %v936
      %v1219 = vpack.c.b16 %v943, %v940
      %v1220 = vpack.c.b16 %v944, %v941
      %v1221 = vpack.c.b16 %v945, %v942
      %v1222 = vpack.c.b16 %v949, %v946
      %v1223 = vpack.c.b16 %v950, %v947
      %v1224 = vpack.c.b16 %v951, %v948
      %v1225 = vpack.c.b16 %v955, %v952
      %v1226 = vpack.c.b16 %v956, %v953
      %v1227 = vpack.c.b16 %v957, %v954
      %v1228 = vpack.c.b16 %v961, %v958
      %v1229 = vpack.c.b16 %v962, %v959
      %v1230 = vpack.c.b16 %v963, %v960
      %v1231 = vpack.c.b16 %v967, %v964
      %v1232 = vpack.c.b16 %v968, %v965
      %v1233 = vpack.c.b16 %v969, %v966
      %v1234 = vpack.c.b16 %v973, %v970
      %v1235 = vpack.c.b16 %v974, %v971
      %v1236 = vpack.c.b16 %v975, %v972
      %v1237 = vpack.c.b16 %v979, %v976
      %v1238 = vpack.c.b16 %v980, %v977
      %v1239 = vpack.c.b16 %v981, %v978
      %v1240 = vpack.c.b16 %v985, %v982
      %v1241 = vpack.c.b16 %v986, %v983
      %v1242 = vpack.c.b16 %v987, %v984
      %v1243 = vpack.c.b16 %v991, %v988
      %v1244 = vpack.c.b16 %v992, %v989
      %v1245 = vpack.c.b16 %v993, %v990
      %v1246 = vpack.c.b16 %v997, %v994
      %v1247 = vpack.c.b16 %v998, %v995
      %v1248 = vpack.c.b16 %v999, %v996
      %v1249 = vpack.c.b16 %v1003, %v1000
      %v1250 = vpack.c.b16 %v1004, %v1001
      %v1251 = vpack.c.b16 %v1005, %v1002
      %v1252 = vpack.c.b16 %v1009, %v1006
      %v1253 = vpack.c.b16 %v1010, %v1007
      %v1254 = vpack.c.b16 %v1011, %v1008
      %v1255 = vpack.c.b16 %v1015, %v1012
      %v1256 = vpack.c.b16 %v1016, %v1013
      %v1257 = vpack.c.b16 %v1017, %v1014
      %v1258 = vpack.c.b16 %v1021, %v1018
      %v1259 = vpack.c.b16 %v1022, %v1019
      %v1260 = vpack.c.b16 %v1023, %v1020
      %v1261 = vpack.c.b16 %v1027, %v1024
      %v1262 = vpack.c.b16 %v1028, %v1025
      %v1263 = vpack.c.b16 %v1029, %v1026
      %v1264 = vpack.c.b16 %v1033, %v1030
      %v1265 = vpack.c.b16 %v1034, %v1031
      %v1266 = vpack.c.b16 %v1035, %v1032
      %v1267 = vpack.c.b16 %v1039, %v1036
      %v1268 = vpack.c.b16 %v1040, %v1037
      %v1269 = vpack.c.b16 %v1041, %v1038
      %v1270 = vpack.c.b16 %v1045, %v1042
      %v1271 = vpack.c.b16 %v1046, %v1043
      %v1272 = vpack.c.b16 %v1047, %v1044
      %v1273 = vpack.c.b16 %v1051, %v1048
      %v1274 = vpack.c.b16 %v1052, %v1049
      %v1275 = vpack.c.b16 %v1053, %v1050
      %v1276 = vpack.c.b16 %v1057, %v1054
      %v1277 = vpack.c.b16 %v1058, %v1055
      %v1278 = vpack.c.b16 %v1059, %v1056
      %v1279 = vpack.c.b16 %v1063, %v1060
      %v1280 = vpack.c.b16 %v1064, %v1061
      %v1281 = vpack.c.b16 %v1065, %v1062
      %v1282 = vpack.c.b16 %v1069, %v1066
      %v1283 = vpack.c.b16 %v1070, %v1067
      %v1284 = vpack.c.b16 %v1071, %v1068
      %v1285 = vpack.c.b16 %v1075, %v1072
      %v1286 = vpack.c.b16 %v1076, %v1073
      %v1287 = vpack.c.b16 %v1077, %v1074
      %v1288 = vpack.c.b16 %v1081, %v1078
      %v1289 = vpack.c.b16 %v1082, %v1079
      %v1290 = vpack.c.b16 %v1083, %v1080
      %v1291 = vpack.c.b16 %v1087, %v1084
      %v1292 = vpack.c.b16 %v1088, %v1085
      %v1293 = vpack.c.b16 %v1089, %v1086
      %v1294 = vpack.c.b16 %v1093, %v1090
      %v1295 = vpack.c.b16 %v1094, %v1091
      %v1296 = vpack.c.b16 %v1095, %v1092
      %v1297 = vpack.c.b16 %v1099, %v1096
      %v1298 = vpack.c.b16 %v1100, %v1097
      %v1299 = vpack.c.b16 %v1101, %v1098
      %v1300 = vpack.c.b16 %v1105, %v1102
      %v1301 = vpack.c.b16 %v1106, %v1103
      %v1302 = vpack.c.b16 %v1107, %v1104
      %v1303 = vpack.c.b16 %v1111, %v1108
      %v1304 = vpack.c.b16 %v1112, %v1109
      %v1305 = vpack.c.b16 %v1113, %v1110
      %v1470 = vunpack.c.l.b16 %v434
      %v1471 = vunpack.c.l.b16 %v435
      %v1472 = vunpack.c.l.b16 %v436
      %v1473 = vunpack.c.l.b16 %v437
      %v1474 = vunpack.c.l.b16 %v438
      %v1475 = vunpack.c.l.b16 %v439
      %v1476 = vunpack.c.l.b16 %v440
      %v1477 = vunpack.c.l.b16 %v441
      %v1478 = vunpack.c.l.b16 %v442
      %v1479 = vunpack.c.l.b16 %v443
      %v1480 = vunpack.c.l.b16 %v444
      %v1481 = vunpack.c.l.b16 %v445
      %v1482 = vunpack.c.l.b16 %v446
      %v1483 = vunpack.c.l.b16 %v447
      %v1484 = vunpack.c.l.b16 %v448
      %v1485 = vunpack.c.l.b16 %v449
      %v1486 = vunpack.c.l.b16 %v450
      %v1487 = vunpack.c.l.b16 %v451
      %v1488 = vunpack.c.l.b16 %v452
      %v1489 = vunpack.c.l.b16 %v453
      %v1490 = vunpack.c.l.b16 %v454
      %v1491 = vunpack.c.l.b16 %v455
      %v1492 = vunpack.c.l.b16 %v456
      %v1493 = vunpack.c.l.b16 %v457
      %v1494 = vunpack.c.l.b16 %v458
      %v1495 = vunpack.c.l.b16 %v459
      %v1496 = vunpack.c.l.b16 %v460
      %v1497 = vunpack.c.l.b16 %v461
      %v1498 = vunpack.c.l.b16 %v462
      %v1499 = vunpack.c.l.b16 %v463
      %v1500 = vunpack.c.l.b16 %v464
      %v1501 = vunpack.c.l.b16 %v465
      %v1502 = vunpack.c.l.b16 %v466
      %v1503 = vunpack.c.l.b16 %v467
      %v1504 = vunpack.c.l.b16 %v468
      %v1505 = vunpack.c.l.b16 %v469
      %v1506 = vpack.c.b16 %v1471, %v1470
      %v1507 = vpack.c.b16 %v1473, %v1472
      %v1508 = vpack.c.b16 %v1475, %v1474
      %v1509 = vpack.c.b16 %v1477, %v1476
      %v1510 = vpack.c.b16 %v1479, %v1478
      %v1511 = vpack.c.b16 %v1481, %v1480
      %v1512 = vpack.c.b16 %v1483, %v1482
      %v1513 = vpack.c.b16 %v1485, %v1484
      %v1514 = vpack.c.b16 %v1487, %v1486
      %v1515 = vpack.c.b16 %v1489, %v1488
      %v1516 = vpack.c.b16 %v1491, %v1490
      %v1517 = vpack.c.b16 %v1493, %v1492
      %v1518 = vpack.c.b16 %v1495, %v1494
      %v1519 = vpack.c.b16 %v1497, %v1496
      %v1520 = vpack.c.b16 %v1499, %v1498
      %v1521 = vpack.c.b16 %v1501, %v1500
      %v1522 = vpack.c.b16 %v1503, %v1502
      %v1523 = vpack.c.b16 %v1505, %v1504
      %vm1542 = vcmask 261120
      %v1544 = vsel %vm1542, %v1116, 0
      %v1547 = vsel %vm1542, %v1119, 0
      %v1550 = vsel %vm1542, %v1122, 0
      %v1553 = vsel %vm1542, %v1125, 0
      %v1556 = vsel %vm1542, %v1128, 0
      %v1559 = vsel %vm1542, %v1131, 0
      %v1562 = vsel %vm1542, %v1134, 0
      %v1565 = vsel %vm1542, %v1137, 0
      %v1568 = vsel %vm1542, %v1140, 0
      %v1571 = vsel %vm1542, %v1143, 0
      %v1574 = vsel %vm1542, %v1146, 0
      %v1577 = vsel %vm1542, %v1149, 0
      %v1580 = vsel %vm1542, %v1152, 0
      %v1583 = vsel %vm1542, %v1155, 0
      %v1586 = vsel %vm1542, %v1158, 0
      %v1589 = vsel %vm1542, %v1161, 0
      %v1592 = vsel %vm1542, %v1164, 0
      %v1595 = vsel %vm1542, %v1167, 0
      %v1598 = vsel %vm1542, %v1170, 0
      %v1601 = vsel %vm1542, %v1173, 0
      %v1604 = vsel %vm1542, %v1176, 0
      %v1607 = vsel %vm1542, %v1179, 0
      %v1610 = vsel %vm1542, %v1182, 0
      %v1613 = vsel %vm1542, %v1185, 0
      %v1616 = vsel %vm1542, %v1188, 0
      %v1619 = vsel %vm1542, %v1191, 0
      %v1622 = vsel %vm1542, %v1194, 0
      %v1625 = vsel %vm1542, %v1197, 0
      %v1628 = vsel %vm1542, %v1200, 0
      %v1631 = vsel %vm1542, %v1203, 0
      %v1634 = vsel %vm1542, %v1206, 0
      %v1637 = vsel %vm1542, %v1209, 0
      %v1640 = vsel %vm1542, %v1212, 0
      %v1643 = vsel %vm1542, %v1215, 0
      %v1646 = vsel %vm1542, %v1218, 0
      %v1649 = vsel %vm1542, %v1221, 0
      %v1652 = vsel %vm1542, %v1224, 0
      %v1655 = vsel %vm1542, %v1227, 0
      %v1658 = vsel %vm1542, %v1230, 0
      %v1661 = vsel %vm1542, %v1233, 0
      %v1664 = vsel %vm1542, %v1236, 0
      %v1667 = vsel %vm1542, %v1239, 0
      %v1670 = vsel %vm1542, %v1242, 0
      %v1673 = vsel %vm1542, %v1245, 0
      %v1676 = vsel %vm1542, %v1248, 0
      %v1679 = vsel %vm1542, %v1251, 0
      %v1682 = vsel %vm1542, %v1254, 0
      %v1685 = vsel %vm1542, %v1257, 0
      %v1688 = vsel %vm1542, %v1260, 0
      %v1691 = vsel %vm1542, %v1263, 0
      %v1694 = vsel %vm1542, %v1266, 0
      %v1697 = vsel %vm1542, %v1269, 0
      %v1700 = vsel %vm1542, %v1272, 0
      %v1703 = vsel %vm1542, %v1275, 0
      %v1706 = vsel %vm1542, %v1278, 0
      %v1709 = vsel %vm1542, %v1281, 0
      %v1712 = vsel %vm1542, %v1284, 0
      %v1715 = vsel %vm1542, %v1287, 0
      %v1718 = vsel %vm1542, %v1290, 0
      %v1721 = vsel %vm1542, %v1293, 0
      %v1724 = vsel %vm1542, %v1296, 0
      %v1727 = vsel %vm1542, %v1299, 0
      %v1730 = vsel %vm1542, %v1302, 0
      %v1733 = vsel %vm1542, %v1305, 0
      %1735 = vmatpush.bf16.msra.mxu0 %v1513
      %1736 = vmatpush.bf16.msra.mxu0 %v1512
      %1737 = vmatpush.bf16.msra.mxu0 %v1511
      %1738 = vmatpush.bf16.msra.mxu0 %v1510
      %1739 = vmatpush.bf16.msra.mxu0 %v1509
      %1740 = vmatpush.bf16.msra.mxu0 %v1508
      %1741 = vmatpush.bf16.msra.mxu0 %v1507
      %1742 = vmatpush.bf16.msra.mxu0 %v1506
      %1743 = vmatmul.bf16.gmra.mxu0 %v1114
      %v1744 = vpop.f32.mrf.mxu0
      %v1745 = vadd.f32 %v472, %v1744
      %v1746 = vpop.f32.mrf.mxu0
      %v1747 = vadd.f32 %v472, %v1746
      %1748 = vmatmul.bf16.gmra.mxu0 %v1117
      %v1749 = vpop.f32.mrf.mxu0
      %v1750 = vadd.f32 %v472, %v1749
      %v1751 = vpop.f32.mrf.mxu0
      %v1752 = vadd.f32 %v472, %v1751
      %1753 = vmatmul.bf16.gmra.mxu0 %v1120
      %v1754 = vpop.f32.mrf.mxu0
      %v1755 = vadd.f32 %v472, %v1754
      %v1756 = vpop.f32.mrf.mxu0
      %v1757 = vadd.f32 %v472, %v1756
      %1758 = vmatmul.bf16.gmra.mxu0 %v1123
      %v1759 = vpop.f32.mrf.mxu0
      %v1760 = vadd.f32 %v472, %v1759
      %v1761 = vpop.f32.mrf.mxu0
      %v1762 = vadd.f32 %v472, %v1761
      %1763 = vmatmul.bf16.gmra.mxu0 %v1126
      %v1764 = vpop.f32.mrf.mxu0
      %v1765 = vadd.f32 %v472, %v1764
      %v1766 = vpop.f32.mrf.mxu0
      %v1767 = vadd.f32 %v472, %v1766
      %1768 = vmatmul.bf16.gmra.mxu0 %v1129
      %v1769 = vpop.f32.mrf.mxu0
      %v1770 = vadd.f32 %v472, %v1769
      %v1771 = vpop.f32.mrf.mxu0
      %v1772 = vadd.f32 %v472, %v1771
      %1773 = vmatmul.bf16.gmra.mxu0 %v1132
      %v1774 = vpop.f32.mrf.mxu0
      %v1775 = vadd.f32 %v472, %v1774
      %v1776 = vpop.f32.mrf.mxu0
      %v1777 = vadd.f32 %v472, %v1776
      %1778 = vmatmul.bf16.gmra.mxu0 %v1135
      %v1779 = vpop.f32.mrf.mxu0
      %v1780 = vadd.f32 %v472, %v1779
      %v1781 = vpop.f32.mrf.mxu0
      %v1782 = vadd.f32 %v472, %v1781
      %1783 = vmatmul.bf16.gmra.mxu0 %v1138
      %v1784 = vpop.f32.mrf.mxu0
      %v1785 = vadd.f32 %v472, %v1784
      %v1786 = vpop.f32.mrf.mxu0
      %v1787 = vadd.f32 %v472, %v1786
      %1788 = vmatmul.bf16.gmra.mxu0 %v1141
      %v1789 = vpop.f32.mrf.mxu0
      %v1790 = vadd.f32 %v472, %v1789
      %v1791 = vpop.f32.mrf.mxu0
      %v1792 = vadd.f32 %v472, %v1791
      %1793 = vmatmul.bf16.gmra.mxu0 %v1144
      %v1794 = vpop.f32.mrf.mxu0
      %v1795 = vadd.f32 %v472, %v1794
      %v1796 = vpop.f32.mrf.mxu0
      %v1797 = vadd.f32 %v472, %v1796
      %1798 = vmatmul.bf16.gmra.mxu0 %v1147
      %v1799 = vpop.f32.mrf.mxu0
      %v1800 = vadd.f32 %v472, %v1799
      %v1801 = vpop.f32.mrf.mxu0
      %v1802 = vadd.f32 %v472, %v1801
      %1803 = vmatmul.bf16.gmra.mxu0 %v1150
      %v1804 = vpop.f32.mrf.mxu0
      %v1805 = vadd.f32 %v472, %v1804
      %v1806 = vpop.f32.mrf.mxu0
      %v1807 = vadd.f32 %v472, %v1806
      %1808 = vmatmul.bf16.gmra.mxu0 %v1153
      %v1809 = vpop.f32.mrf.mxu0
      %v1810 = vadd.f32 %v472, %v1809
      %v1811 = vpop.f32.mrf.mxu0
      %v1812 = vadd.f32 %v472, %v1811
      %1813 = vmatmul.bf16.gmra.mxu0 %v1156
      %v1814 = vpop.f32.mrf.mxu0
      %v1815 = vadd.f32 %v472, %v1814
      %v1816 = vpop.f32.mrf.mxu0
      %v1817 = vadd.f32 %v472, %v1816
      %1818 = vmatmul.bf16.gmra.mxu0 %v1159
      %v1819 = vpop.f32.mrf.mxu0
      %v1820 = vadd.f32 %v472, %v1819
      %v1821 = vpop.f32.mrf.mxu0
      %v1822 = vadd.f32 %v472, %v1821
      %1823 = vmatmul.bf16.gmra.mxu0 %v1162
      %v1824 = vpop.f32.mrf.mxu0
      %v1825 = vadd.f32 %v472, %v1824
      %v1826 = vpop.f32.mrf.mxu0
      %v1827 = vadd.f32 %v472, %v1826
      %1828 = vmatmul.bf16.gmra.mxu0 %v1165
      %v1829 = vpop.f32.mrf.mxu0
      %v1830 = vadd.f32 %v472, %v1829
      %v1831 = vpop.f32.mrf.mxu0
      %v1832 = vadd.f32 %v472, %v1831
      %1833 = vmatmul.bf16.gmra.mxu0 %v1168
      %v1834 = vpop.f32.mrf.mxu0
      %v1835 = vadd.f32 %v472, %v1834
      %v1836 = vpop.f32.mrf.mxu0
      %v1837 = vadd.f32 %v472, %v1836
      %1838 = vmatmul.bf16.gmra.mxu0 %v1171
      %v1839 = vpop.f32.mrf.mxu0
      %v1840 = vadd.f32 %v472, %v1839
      %v1841 = vpop.f32.mrf.mxu0
      %v1842 = vadd.f32 %v472, %v1841
      %1843 = vmatmul.bf16.gmra.mxu0 %v1174
      %v1844 = vpop.f32.mrf.mxu0
      %v1845 = vadd.f32 %v472, %v1844
      %v1846 = vpop.f32.mrf.mxu0
      %v1847 = vadd.f32 %v472, %v1846
      %1848 = vmatmul.bf16.gmra.mxu0 %v1177
      %v1849 = vpop.f32.mrf.mxu0
      %v1850 = vadd.f32 %v472, %v1849
      %v1851 = vpop.f32.mrf.mxu0
      %v1852 = vadd.f32 %v472, %v1851
      %1853 = vmatmul.bf16.gmra.mxu0 %v1180
      %v1854 = vpop.f32.mrf.mxu0
      %v1855 = vadd.f32 %v472, %v1854
      %v1856 = vpop.f32.mrf.mxu0
      %v1857 = vadd.f32 %v472, %v1856
      %1858 = vmatmul.bf16.gmra.mxu0 %v1183
      %v1859 = vpop.f32.mrf.mxu0
      %v1860 = vadd.f32 %v472, %v1859
      %v1861 = vpop.f32.mrf.mxu0
      %v1862 = vadd.f32 %v472, %v1861
      %1863 = vmatmul.bf16.gmra.mxu0 %v1186
      %v1864 = vpop.f32.mrf.mxu0
      %v1865 = vadd.f32 %v472, %v1864
      %v1866 = vpop.f32.mrf.mxu0
      %v1867 = vadd.f32 %v472, %v1866
      %1868 = vmatmul.bf16.gmra.mxu0 %v1189
      %v1869 = vpop.f32.mrf.mxu0
      %v1870 = vadd.f32 %v472, %v1869
      %v1871 = vpop.f32.mrf.mxu0
      %v1872 = vadd.f32 %v472, %v1871
      %1873 = vmatmul.bf16.gmra.mxu0 %v1192
      %v1874 = vpop.f32.mrf.mxu0
      %v1875 = vadd.f32 %v472, %v1874
      %v1876 = vpop.f32.mrf.mxu0
      %v1877 = vadd.f32 %v472, %v1876
      %1878 = vmatmul.bf16.gmra.mxu0 %v1195
      %v1879 = vpop.f32.mrf.mxu0
      %v1880 = vadd.f32 %v472, %v1879
      %v1881 = vpop.f32.mrf.mxu0
      %v1882 = vadd.f32 %v472, %v1881
      %1883 = vmatmul.bf16.gmra.mxu0 %v1198
      %v1884 = vpop.f32.mrf.mxu0
      %v1885 = vadd.f32 %v472, %v1884
      %v1886 = vpop.f32.mrf.mxu0
      %v1887 = vadd.f32 %v472, %v1886
      %1888 = vmatmul.bf16.gmra.mxu0 %v1201
      %v1889 = vpop.f32.mrf.mxu0
      %v1890 = vadd.f32 %v472, %v1889
      %v1891 = vpop.f32.mrf.mxu0
      %v1892 = vadd.f32 %v472, %v1891
      %1893 = vmatmul.bf16.gmra.mxu0 %v1204
      %v1894 = vpop.f32.mrf.mxu0
      %v1895 = vadd.f32 %v472, %v1894
      %v1896 = vpop.f32.mrf.mxu0
      %v1897 = vadd.f32 %v472, %v1896
      %1898 = vmatmul.bf16.gmra.mxu0 %v1207
      %v1899 = vpop.f32.mrf.mxu0
      %v1900 = vadd.f32 %v472, %v1899
      %v1901 = vpop.f32.mrf.mxu0
      %v1902 = vadd.f32 %v472, %v1901
      %1903 = vmatmul.bf16.gmra.mxu0 %v1210
      %v1904 = vpop.f32.mrf.mxu0
      %v1905 = vadd.f32 %v472, %v1904
      %v1906 = vpop.f32.mrf.mxu0
      %v1907 = vadd.f32 %v472, %v1906
      %1908 = vmatmul.bf16.gmra.mxu0 %v1213
      %v1909 = vpop.f32.mrf.mxu0
      %v1910 = vadd.f32 %v472, %v1909
      %v1911 = vpop.f32.mrf.mxu0
      %v1912 = vadd.f32 %v472, %v1911
      %1913 = vmatmul.bf16.gmra.mxu0 %v1216
      %v1914 = vpop.f32.mrf.mxu0
      %v1915 = vadd.f32 %v472, %v1914
      %v1916 = vpop.f32.mrf.mxu0
      %v1917 = vadd.f32 %v472, %v1916
      %1918 = vmatmul.bf16.gmra.mxu0 %v1219
      %v1919 = vpop.f32.mrf.mxu0
      %v1920 = vadd.f32 %v472, %v1919
      %v1921 = vpop.f32.mrf.mxu0
      %v1922 = vadd.f32 %v472, %v1921
      %1923 = vmatmul.bf16.gmra.mxu0 %v1222
      %v1924 = vpop.f32.mrf.mxu0
      %v1925 = vadd.f32 %v472, %v1924
      %v1926 = vpop.f32.mrf.mxu0
      %v1927 = vadd.f32 %v472, %v1926
      %1928 = vmatmul.bf16.gmra.mxu0 %v1225
      %v1929 = vpop.f32.mrf.mxu0
      %v1930 = vadd.f32 %v472, %v1929
      %v1931 = vpop.f32.mrf.mxu0
      %v1932 = vadd.f32 %v472, %v1931
      %1933 = vmatmul.bf16.gmra.mxu0 %v1228
      %v1934 = vpop.f32.mrf.mxu0
      %v1935 = vadd.f32 %v472, %v1934
      %v1936 = vpop.f32.mrf.mxu0
      %v1937 = vadd.f32 %v472, %v1936
      %1938 = vmatmul.bf16.gmra.mxu0 %v1231
      %v1939 = vpop.f32.mrf.mxu0
      %v1940 = vadd.f32 %v472, %v1939
      %v1941 = vpop.f32.mrf.mxu0
      %v1942 = vadd.f32 %v472, %v1941
      %1943 = vmatmul.bf16.gmra.mxu0 %v1234
      %v1944 = vpop.f32.mrf.mxu0
      %v1945 = vadd.f32 %v472, %v1944
      %v1946 = vpop.f32.mrf.mxu0
      %v1947 = vadd.f32 %v472, %v1946
      %1948 = vmatmul.bf16.gmra.mxu0 %v1237
      %v1949 = vpop.f32.mrf.mxu0
      %v1950 = vadd.f32 %v472, %v1949
      %v1951 = vpop.f32.mrf.mxu0
      %v1952 = vadd.f32 %v472, %v1951
      %1953 = vmatmul.bf16.gmra.mxu0 %v1240
      %v1954 = vpop.f32.mrf.mxu0
      %v1955 = vadd.f32 %v472, %v1954
      %v1956 = vpop.f32.mrf.mxu0
      %v1957 = vadd.f32 %v472, %v1956
      %1958 = vmatmul.bf16.gmra.mxu0 %v1243
      %v1959 = vpop.f32.mrf.mxu0
      %v1960 = vadd.f32 %v472, %v1959
      %v1961 = vpop.f32.mrf.mxu0
      %v1962 = vadd.f32 %v472, %v1961
      %1963 = vmatmul.bf16.gmra.mxu0 %v1246
      %v1964 = vpop.f32.mrf.mxu0
      %v1965 = vadd.f32 %v472, %v1964
      %v1966 = vpop.f32.mrf.mxu0
      %v1967 = vadd.f32 %v472, %v1966
      %1968 = vmatmul.bf16.gmra.mxu0 %v1249
      %v1969 = vpop.f32.mrf.mxu0
      %v1970 = vadd.f32 %v472, %v1969
      %v1971 = vpop.f32.mrf.mxu0
      %v1972 = vadd.f32 %v472, %v1971
      %1973 = vmatmul.bf16.gmra.mxu0 %v1252
      %v1974 = vpop.f32.mrf.mxu0
      %v1975 = vadd.f32 %v472, %v1974
      %v1976 = vpop.f32.mrf.mxu0
      %v1977 = vadd.f32 %v472, %v1976
      %1978 = vmatmul.bf16.gmra.mxu0 %v1255
      %v1979 = vpop.f32.mrf.mxu0
      %v1980 = vadd.f32 %v472, %v1979
      %v1981 = vpop.f32.mrf.mxu0
      %v1982 = vadd.f32 %v472, %v1981
      %1983 = vmatmul.bf16.gmra.mxu0 %v1258
      %v1984 = vpop.f32.mrf.mxu0
      %v1985 = vadd.f32 %v472, %v1984
      %v1986 = vpop.f32.mrf.mxu0
      %v1987 = vadd.f32 %v472, %v1986
      %1988 = vmatmul.bf16.gmra.mxu0 %v1261
      %v1989 = vpop.f32.mrf.mxu0
      %v1990 = vadd.f32 %v472, %v1989
      %v1991 = vpop.f32.mrf.mxu0
      %v1992 = vadd.f32 %v472, %v1991
      %1993 = vmatmul.bf16.gmra.mxu0 %v1264
      %v1994 = vpop.f32.mrf.mxu0
      %v1995 = vadd.f32 %v472, %v1994
      %v1996 = vpop.f32.mrf.mxu0
      %v1997 = vadd.f32 %v472, %v1996
      %1998 = vmatmul.bf16.gmra.mxu0 %v1267
      %v1999 = vpop.f32.mrf.mxu0
      %v2000 = vadd.f32 %v472, %v1999
      %v2001 = vpop.f32.mrf.mxu0
      %v2002 = vadd.f32 %v472, %v2001
      %2003 = vmatmul.bf16.gmra.mxu0 %v1270
      %v2004 = vpop.f32.mrf.mxu0
      %v2005 = vadd.f32 %v472, %v2004
      %v2006 = vpop.f32.mrf.mxu0
      %v2007 = vadd.f32 %v472, %v2006
      %2008 = vmatmul.bf16.gmra.mxu0 %v1273
      %v2009 = vpop.f32.mrf.mxu0
      %v2010 = vadd.f32 %v472, %v2009
      %v2011 = vpop.f32.mrf.mxu0
      %v2012 = vadd.f32 %v472, %v2011
      %2013 = vmatmul.bf16.gmra.mxu0 %v1276
      %v2014 = vpop.f32.mrf.mxu0
      %v2015 = vadd.f32 %v472, %v2014
      %v2016 = vpop.f32.mrf.mxu0
      %v2017 = vadd.f32 %v472, %v2016
      %2018 = vmatmul.bf16.gmra.mxu0 %v1279
      %v2019 = vpop.f32.mrf.mxu0
      %v2020 = vadd.f32 %v472, %v2019
      %v2021 = vpop.f32.mrf.mxu0
      %v2022 = vadd.f32 %v472, %v2021
      %2023 = vmatmul.bf16.gmra.mxu0 %v1282
      %v2024 = vpop.f32.mrf.mxu0
      %v2025 = vadd.f32 %v472, %v2024
      %v2026 = vpop.f32.mrf.mxu0
      %v2027 = vadd.f32 %v472, %v2026
      %2028 = vmatmul.bf16.gmra.mxu0 %v1285
      %v2029 = vpop.f32.mrf.mxu0
      %v2030 = vadd.f32 %v472, %v2029
      %v2031 = vpop.f32.mrf.mxu0
      %v2032 = vadd.f32 %v472, %v2031
      %2033 = vmatmul.bf16.gmra.mxu0 %v1288
      %v2034 = vpop.f32.mrf.mxu0
      %v2035 = vadd.f32 %v472, %v2034
      %v2036 = vpop.f32.mrf.mxu0
      %v2037 = vadd.f32 %v472, %v2036
      %2038 = vmatmul.bf16.gmra.mxu0 %v1291
      %v2039 = vpop.f32.mrf.mxu0
      %v2040 = vadd.f32 %v472, %v2039
      %v2041 = vpop.f32.mrf.mxu0
      %v2042 = vadd.f32 %v472, %v2041
      %2043 = vmatmul.bf16.gmra.mxu0 %v1294
      %v2044 = vpop.f32.mrf.mxu0
      %v2045 = vadd.f32 %v472, %v2044
      %v2046 = vpop.f32.mrf.mxu0
      %v2047 = vadd.f32 %v472, %v2046
      %2048 = vmatmul.bf16.gmra.mxu0 %v1297
      %v2049 = vpop.f32.mrf.mxu0
      %v2050 = vadd.f32 %v472, %v2049
      %v2051 = vpop.f32.mrf.mxu0
      %v2052 = vadd.f32 %v472, %v2051
      %2053 = vmatmul.bf16.gmra.mxu0 %v1300
      %v2054 = vpop.f32.mrf.mxu0
      %v2055 = vadd.f32 %v472, %v2054
      %v2056 = vpop.f32.mrf.mxu0
      %v2057 = vadd.f32 %v472, %v2056
      %2058 = vmatmul.bf16.gmra.mxu0 %v1303
      %v2059 = vpop.f32.mrf.mxu0
      %v2060 = vadd.f32 %v472, %v2059
      %v2061 = vpop.f32.mrf.mxu0
      %v2062 = vadd.f32 %v472, %v2061
      %2063 = vdwg.mxu0
      %2064 = vmatpush.bf16.msra.mxu0 %v1521
      %2065 = vmatpush.bf16.msra.mxu0 %v1520
      %2066 = vmatpush.bf16.msra.mxu0 %v1519
      %2067 = vmatpush.bf16.msra.mxu0 %v1518
      %2068 = vmatpush.bf16.msra.mxu0 %v1517
      %2069 = vmatpush.bf16.msra.mxu0 %v1516
      %2070 = vmatpush.bf16.msra.mxu0 %v1515
      %2071 = vmatpush.bf16.msra.mxu0 %v1514
      %2072 = vmatmul.bf16.gmra.mxu0 %v1115
      %v2073 = vpop.f32.mrf.mxu0
      %v2074 = vadd.f32 %v1745, %v2073
      %v2075 = vpop.f32.mrf.mxu0
      %v2076 = vadd.f32 %v1747, %v2075
      %2077 = vmatmul.bf16.gmra.mxu0 %v1118
      %v2078 = vpop.f32.mrf.mxu0
      %v2079 = vadd.f32 %v1750, %v2078
      %v2080 = vpop.f32.mrf.mxu0
      %v2081 = vadd.f32 %v1752, %v2080
      %2082 = vmatmul.bf16.gmra.mxu0 %v1121
      %v2083 = vpop.f32.mrf.mxu0
      %v2084 = vadd.f32 %v1755, %v2083
      %v2085 = vpop.f32.mrf.mxu0
      %v2086 = vadd.f32 %v1757, %v2085
      %2087 = vmatmul.bf16.gmra.mxu0 %v1124
      %v2088 = vpop.f32.mrf.mxu0
      %v2089 = vadd.f32 %v1760, %v2088
      %v2090 = vpop.f32.mrf.mxu0
      %v2091 = vadd.f32 %v1762, %v2090
      %2092 = vmatmul.bf16.gmra.mxu0 %v1127
      %v2093 = vpop.f32.mrf.mxu0
      %v2094 = vadd.f32 %v1765, %v2093
      %v2095 = vpop.f32.mrf.mxu0
      %v2096 = vadd.f32 %v1767, %v2095
      %2097 = vmatmul.bf16.gmra.mxu0 %v1130
      %v2098 = vpop.f32.mrf.mxu0
      %v2099 = vadd.f32 %v1770, %v2098
      %v2100 = vpop.f32.mrf.mxu0
      %v2101 = vadd.f32 %v1772, %v2100
      %2102 = vmatmul.bf16.gmra.mxu0 %v1133
      %v2103 = vpop.f32.mrf.mxu0
      %v2104 = vadd.f32 %v1775, %v2103
      %v2105 = vpop.f32.mrf.mxu0
      %v2106 = vadd.f32 %v1777, %v2105
      %2107 = vmatmul.bf16.gmra.mxu0 %v1136
      %v2108 = vpop.f32.mrf.mxu0
      %v2109 = vadd.f32 %v1780, %v2108
      %v2110 = vpop.f32.mrf.mxu0
      %v2111 = vadd.f32 %v1782, %v2110
      %2112 = vmatmul.bf16.gmra.mxu0 %v1139
      %v2113 = vpop.f32.mrf.mxu0
      %v2114 = vadd.f32 %v1785, %v2113
      %v2115 = vpop.f32.mrf.mxu0
      %v2116 = vadd.f32 %v1787, %v2115
      %2117 = vmatmul.bf16.gmra.mxu0 %v1142
      %v2118 = vpop.f32.mrf.mxu0
      %v2119 = vadd.f32 %v1790, %v2118
      %v2120 = vpop.f32.mrf.mxu0
      %v2121 = vadd.f32 %v1792, %v2120
      %2122 = vmatmul.bf16.gmra.mxu0 %v1145
      %v2123 = vpop.f32.mrf.mxu0
      %v2124 = vadd.f32 %v1795, %v2123
      %v2125 = vpop.f32.mrf.mxu0
      %v2126 = vadd.f32 %v1797, %v2125
      %2127 = vmatmul.bf16.gmra.mxu0 %v1148
      %v2128 = vpop.f32.mrf.mxu0
      %v2129 = vadd.f32 %v1800, %v2128
      %v2130 = vpop.f32.mrf.mxu0
      %v2131 = vadd.f32 %v1802, %v2130
      %2132 = vmatmul.bf16.gmra.mxu0 %v1151
      %v2133 = vpop.f32.mrf.mxu0
      %v2134 = vadd.f32 %v1805, %v2133
      %v2135 = vpop.f32.mrf.mxu0
      %v2136 = vadd.f32 %v1807, %v2135
      %2137 = vmatmul.bf16.gmra.mxu0 %v1154
      %v2138 = vpop.f32.mrf.mxu0
      %v2139 = vadd.f32 %v1810, %v2138
      %v2140 = vpop.f32.mrf.mxu0
      %v2141 = vadd.f32 %v1812, %v2140
      %2142 = vmatmul.bf16.gmra.mxu0 %v1157
      %v2143 = vpop.f32.mrf.mxu0
      %v2144 = vadd.f32 %v1815, %v2143
      %v2145 = vpop.f32.mrf.mxu0
      %v2146 = vadd.f32 %v1817, %v2145
      %2147 = vmatmul.bf16.gmra.mxu0 %v1160
      %v2148 = vpop.f32.mrf.mxu0
      %v2149 = vadd.f32 %v1820, %v2148
      %v2150 = vpop.f32.mrf.mxu0
      %v2151 = vadd.f32 %v1822, %v2150
      %2152 = vmatmul.bf16.gmra.mxu0 %v1163
      %v2153 = vpop.f32.mrf.mxu0
      %v2154 = vadd.f32 %v1825, %v2153
      %v2155 = vpop.f32.mrf.mxu0
      %v2156 = vadd.f32 %v1827, %v2155
      %2157 = vmatmul.bf16.gmra.mxu0 %v1166
      %v2158 = vpop.f32.mrf.mxu0
      %v2159 = vadd.f32 %v1830, %v2158
      %v2160 = vpop.f32.mrf.mxu0
      %v2161 = vadd.f32 %v1832, %v2160
      %2162 = vmatmul.bf16.gmra.mxu0 %v1169
      %v2163 = vpop.f32.mrf.mxu0
      %v2164 = vadd.f32 %v1835, %v2163
      %v2165 = vpop.f32.mrf.mxu0
      %v2166 = vadd.f32 %v1837, %v2165
      %2167 = vmatmul.bf16.gmra.mxu0 %v1172
      %v2168 = vpop.f32.mrf.mxu0
      %v2169 = vadd.f32 %v1840, %v2168
      %v2170 = vpop.f32.mrf.mxu0
      %v2171 = vadd.f32 %v1842, %v2170
      %2172 = vmatmul.bf16.gmra.mxu0 %v1175
      %v2173 = vpop.f32.mrf.mxu0
      %v2174 = vadd.f32 %v1845, %v2173
      %v2175 = vpop.f32.mrf.mxu0
      %v2176 = vadd.f32 %v1847, %v2175
      %2177 = vmatmul.bf16.gmra.mxu0 %v1178
      %v2178 = vpop.f32.mrf.mxu0
      %v2179 = vadd.f32 %v1850, %v2178
      %v2180 = vpop.f32.mrf.mxu0
      %v2181 = vadd.f32 %v1852, %v2180
      %2182 = vmatmul.bf16.gmra.mxu0 %v1181
      %v2183 = vpop.f32.mrf.mxu0
      %v2184 = vadd.f32 %v1855, %v2183
      %v2185 = vpop.f32.mrf.mxu0
      %v2186 = vadd.f32 %v1857, %v2185
      %2187 = vmatmul.bf16.gmra.mxu0 %v1184
      %v2188 = vpop.f32.mrf.mxu0
      %v2189 = vadd.f32 %v1860, %v2188
      %v2190 = vpop.f32.mrf.mxu0
      %v2191 = vadd.f32 %v1862, %v2190
      %2192 = vmatmul.bf16.gmra.mxu0 %v1187
      %v2193 = vpop.f32.mrf.mxu0
      %v2194 = vadd.f32 %v1865, %v2193
      %v2195 = vpop.f32.mrf.mxu0
      %v2196 = vadd.f32 %v1867, %v2195
      %2197 = vmatmul.bf16.gmra.mxu0 %v1190
      %v2198 = vpop.f32.mrf.mxu0
      %v2199 = vadd.f32 %v1870, %v2198
      %v2200 = vpop.f32.mrf.mxu0
      %v2201 = vadd.f32 %v1872, %v2200
      %2202 = vmatmul.bf16.gmra.mxu0 %v1193
      %v2203 = vpop.f32.mrf.mxu0
      %v2204 = vadd.f32 %v1875, %v2203
      %v2205 = vpop.f32.mrf.mxu0
      %v2206 = vadd.f32 %v1877, %v2205
      %2207 = vmatmul.bf16.gmra.mxu0 %v1196
      %v2208 = vpop.f32.mrf.mxu0
      %v2209 = vadd.f32 %v1880, %v2208
      %v2210 = vpop.f32.mrf.mxu0
      %v2211 = vadd.f32 %v1882, %v2210
      %2212 = vmatmul.bf16.gmra.mxu0 %v1199
      %v2213 = vpop.f32.mrf.mxu0
      %v2214 = vadd.f32 %v1885, %v2213
      %v2215 = vpop.f32.mrf.mxu0
      %v2216 = vadd.f32 %v1887, %v2215
      %2217 = vmatmul.bf16.gmra.mxu0 %v1202
      %v2218 = vpop.f32.mrf.mxu0
      %v2219 = vadd.f32 %v1890, %v2218
      %v2220 = vpop.f32.mrf.mxu0
      %v2221 = vadd.f32 %v1892, %v2220
      %2222 = vmatmul.bf16.gmra.mxu0 %v1205
      %v2223 = vpop.f32.mrf.mxu0
      %v2224 = vadd.f32 %v1895, %v2223
      %v2225 = vpop.f32.mrf.mxu0
      %v2226 = vadd.f32 %v1897, %v2225
      %2227 = vmatmul.bf16.gmra.mxu0 %v1208
      %v2228 = vpop.f32.mrf.mxu0
      %v2229 = vadd.f32 %v1900, %v2228
      %v2230 = vpop.f32.mrf.mxu0
      %v2231 = vadd.f32 %v1902, %v2230
      %2232 = vmatmul.bf16.gmra.mxu0 %v1211
      %v2233 = vpop.f32.mrf.mxu0
      %v2234 = vadd.f32 %v1905, %v2233
      %v2235 = vpop.f32.mrf.mxu0
      %v2236 = vadd.f32 %v1907, %v2235
      %2237 = vmatmul.bf16.gmra.mxu0 %v1214
      %v2238 = vpop.f32.mrf.mxu0
      %v2239 = vadd.f32 %v1910, %v2238
      %v2240 = vpop.f32.mrf.mxu0
      %v2241 = vadd.f32 %v1912, %v2240
      %2242 = vmatmul.bf16.gmra.mxu0 %v1217
      %v2243 = vpop.f32.mrf.mxu0
      %v2244 = vadd.f32 %v1915, %v2243
      %v2245 = vpop.f32.mrf.mxu0
      %v2246 = vadd.f32 %v1917, %v2245
      %2247 = vmatmul.bf16.gmra.mxu0 %v1220
      %v2248 = vpop.f32.mrf.mxu0
      %v2249 = vadd.f32 %v1920, %v2248
      %v2250 = vpop.f32.mrf.mxu0
      %v2251 = vadd.f32 %v1922, %v2250
      %2252 = vmatmul.bf16.gmra.mxu0 %v1223
      %v2253 = vpop.f32.mrf.mxu0
      %v2254 = vadd.f32 %v1925, %v2253
      %v2255 = vpop.f32.mrf.mxu0
      %v2256 = vadd.f32 %v1927, %v2255
      %2257 = vmatmul.bf16.gmra.mxu0 %v1226
      %v2258 = vpop.f32.mrf.mxu0
      %v2259 = vadd.f32 %v1930, %v2258
      %v2260 = vpop.f32.mrf.mxu0
      %v2261 = vadd.f32 %v1932, %v2260
      %2262 = vmatmul.bf16.gmra.mxu0 %v1229
      %v2263 = vpop.f32.mrf.mxu0
      %v2264 = vadd.f32 %v1935, %v2263
      %v2265 = vpop.f32.mrf.mxu0
      %v2266 = vadd.f32 %v1937, %v2265
      %2267 = vmatmul.bf16.gmra.mxu0 %v1232
      %v2268 = vpop.f32.mrf.mxu0
      %v2269 = vadd.f32 %v1940, %v2268
      %v2270 = vpop.f32.mrf.mxu0
      %v2271 = vadd.f32 %v1942, %v2270
      %2272 = vmatmul.bf16.gmra.mxu0 %v1235
      %v2273 = vpop.f32.mrf.mxu0
      %v2274 = vadd.f32 %v1945, %v2273
      %v2275 = vpop.f32.mrf.mxu0
      %v2276 = vadd.f32 %v1947, %v2275
      %2277 = vmatmul.bf16.gmra.mxu0 %v1238
      %v2278 = vpop.f32.mrf.mxu0
      %v2279 = vadd.f32 %v1950, %v2278
      %v2280 = vpop.f32.mrf.mxu0
      %v2281 = vadd.f32 %v1952, %v2280
      %2282 = vmatmul.bf16.gmra.mxu0 %v1241
      %v2283 = vpop.f32.mrf.mxu0
      %v2284 = vadd.f32 %v1955, %v2283
      %v2285 = vpop.f32.mrf.mxu0
      %v2286 = vadd.f32 %v1957, %v2285
      %2287 = vmatmul.bf16.gmra.mxu0 %v1244
      %v2288 = vpop.f32.mrf.mxu0
      %v2289 = vadd.f32 %v1960, %v2288
      %v2290 = vpop.f32.mrf.mxu0
      %v2291 = vadd.f32 %v1962, %v2290
      %2292 = vmatmul.bf16.gmra.mxu0 %v1247
      %v2293 = vpop.f32.mrf.mxu0
      %v2294 = vadd.f32 %v1965, %v2293
      %v2295 = vpop.f32.mrf.mxu0
      %v2296 = vadd.f32 %v1967, %v2295
      %2297 = vmatmul.bf16.gmra.mxu0 %v1250
      %v2298 = vpop.f32.mrf.mxu0
      %v2299 = vadd.f32 %v1970, %v2298
      %v2300 = vpop.f32.mrf.mxu0
      %v2301 = vadd.f32 %v1972, %v2300
      %2302 = vmatmul.bf16.gmra.mxu0 %v1253
      %v2303 = vpop.f32.mrf.mxu0
      %v2304 = vadd.f32 %v1975, %v2303
      %v2305 = vpop.f32.mrf.mxu0
      %v2306 = vadd.f32 %v1977, %v2305
      %2307 = vmatmul.bf16.gmra.mxu0 %v1256
      %v2308 = vpop.f32.mrf.mxu0
      %v2309 = vadd.f32 %v1980, %v2308
      %v2310 = vpop.f32.mrf.mxu0
      %v2311 = vadd.f32 %v1982, %v2310
      %2312 = vmatmul.bf16.gmra.mxu0 %v1259
      %v2313 = vpop.f32.mrf.mxu0
      %v2314 = vadd.f32 %v1985, %v2313
      %v2315 = vpop.f32.mrf.mxu0
      %v2316 = vadd.f32 %v1987, %v2315
      %2317 = vmatmul.bf16.gmra.mxu0 %v1262
      %v2318 = vpop.f32.mrf.mxu0
      %v2319 = vadd.f32 %v1990, %v2318
      %v2320 = vpop.f32.mrf.mxu0
      %v2321 = vadd.f32 %v1992, %v2320
      %2322 = vmatmul.bf16.gmra.mxu0 %v1265
      %v2323 = vpop.f32.mrf.mxu0
      %v2324 = vadd.f32 %v1995, %v2323
      %v2325 = vpop.f32.mrf.mxu0
      %v2326 = vadd.f32 %v1997, %v2325
      %2327 = vmatmul.bf16.gmra.mxu0 %v1268
      %v2328 = vpop.f32.mrf.mxu0
      %v2329 = vadd.f32 %v2000, %v2328
      %v2330 = vpop.f32.mrf.mxu0
      %v2331 = vadd.f32 %v2002, %v2330
      %2332 = vmatmul.bf16.gmra.mxu0 %v1271
      %v2333 = vpop.f32.mrf.mxu0
      %v2334 = vadd.f32 %v2005, %v2333
      %v2335 = vpop.f32.mrf.mxu0
      %v2336 = vadd.f32 %v2007, %v2335
      %2337 = vmatmul.bf16.gmra.mxu0 %v1274
      %v2338 = vpop.f32.mrf.mxu0
      %v2339 = vadd.f32 %v2010, %v2338
      %v2340 = vpop.f32.mrf.mxu0
      %v2341 = vadd.f32 %v2012, %v2340
      %2342 = vmatmul.bf16.gmra.mxu0 %v1277
      %v2343 = vpop.f32.mrf.mxu0
      %v2344 = vadd.f32 %v2015, %v2343
      %v2345 = vpop.f32.mrf.mxu0
      %v2346 = vadd.f32 %v2017, %v2345
      %2347 = vmatmul.bf16.gmra.mxu0 %v1280
      %v2348 = vpop.f32.mrf.mxu0
      %v2349 = vadd.f32 %v2020, %v2348
      %v2350 = vpop.f32.mrf.mxu0
      %v2351 = vadd.f32 %v2022, %v2350
      %2352 = vmatmul.bf16.gmra.mxu0 %v1283
      %v2353 = vpop.f32.mrf.mxu0
      %v2354 = vadd.f32 %v2025, %v2353
      %v2355 = vpop.f32.mrf.mxu0
      %v2356 = vadd.f32 %v2027, %v2355
      %2357 = vmatmul.bf16.gmra.mxu0 %v1286
      %v2358 = vpop.f32.mrf.mxu0
      %v2359 = vadd.f32 %v2030, %v2358
      %v2360 = vpop.f32.mrf.mxu0
      %v2361 = vadd.f32 %v2032, %v2360
      %2362 = vmatmul.bf16.gmra.mxu0 %v1289
      %v2363 = vpop.f32.mrf.mxu0
      %v2364 = vadd.f32 %v2035, %v2363
      %v2365 = vpop.f32.mrf.mxu0
      %v2366 = vadd.f32 %v2037, %v2365
      %2367 = vmatmul.bf16.gmra.mxu0 %v1292
      %v2368 = vpop.f32.mrf.mxu0
      %v2369 = vadd.f32 %v2040, %v2368
      %v2370 = vpop.f32.mrf.mxu0
      %v2371 = vadd.f32 %v2042, %v2370
      %2372 = vmatmul.bf16.gmra.mxu0 %v1295
      %v2373 = vpop.f32.mrf.mxu0
      %v2374 = vadd.f32 %v2045, %v2373
      %v2375 = vpop.f32.mrf.mxu0
      %v2376 = vadd.f32 %v2047, %v2375
      %2377 = vmatmul.bf16.gmra.mxu0 %v1298
      %v2378 = vpop.f32.mrf.mxu0
      %v2379 = vadd.f32 %v2050, %v2378
      %v2380 = vpop.f32.mrf.mxu0
      %v2381 = vadd.f32 %v2052, %v2380
      %2382 = vmatmul.bf16.gmra.mxu0 %v1301
      %v2383 = vpop.f32.mrf.mxu0
      %v2384 = vadd.f32 %v2055, %v2383
      %v2385 = vpop.f32.mrf.mxu0
      %v2386 = vadd.f32 %v2057, %v2385
      %2387 = vmatmul.bf16.gmra.mxu0 %v1304
      %v2388 = vpop.f32.mrf.mxu0
      %v2389 = vadd.f32 %v2060, %v2388
      %v2390 = vpop.f32.mrf.mxu0
      %v2391 = vadd.f32 %v2062, %v2390
      %2392 = vdwg.mxu0
      %2393 = vmatpush.bf16.msra.mxu0 0
      %2394 = vmatpush.bf16.msra.mxu0 0
      %2395 = vmatpush.bf16.msra.mxu0 0
      %2396 = vmatpush.bf16.msra.mxu0 0
      %2397 = vmatpush.bf16.msra.mxu0 0
      %2398 = vmatpush.bf16.msra.mxu0 0
      %2399 = vmatpush.bf16.msra.mxu0 %v1523
      %2400 = vmatpush.bf16.msra.mxu0 %v1522
      %2401 = vmatmul.bf16.gmra.mxu0 %v1544
      %v2402 = vpop.f32.mrf.mxu0
      %v2403 = vadd.f32 %v2074, %v2402
      %v2404 = vpop.f32.mrf.mxu0
      %v2405 = vadd.f32 %v2076, %v2404
      %2406 = vmatmul.bf16.gmra.mxu0 %v1547
      %v2407 = vpop.f32.mrf.mxu0
      %v2408 = vadd.f32 %v2079, %v2407
      %v2409 = vpop.f32.mrf.mxu0
      %v2410 = vadd.f32 %v2081, %v2409
      %2411 = vmatmul.bf16.gmra.mxu0 %v1550
      %v2412 = vpop.f32.mrf.mxu0
      %v2413 = vadd.f32 %v2084, %v2412
      %v2414 = vpop.f32.mrf.mxu0
      %v2415 = vadd.f32 %v2086, %v2414
      %2416 = vmatmul.bf16.gmra.mxu0 %v1553
      %v2417 = vpop.f32.mrf.mxu0
      %v2418 = vadd.f32 %v2089, %v2417
      %v2419 = vpop.f32.mrf.mxu0
      %v2420 = vadd.f32 %v2091, %v2419
      %2421 = vmatmul.bf16.gmra.mxu0 %v1556
      %v2422 = vpop.f32.mrf.mxu0
      %v2423 = vadd.f32 %v2094, %v2422
      %v2424 = vpop.f32.mrf.mxu0
      %v2425 = vadd.f32 %v2096, %v2424
      %2426 = vmatmul.bf16.gmra.mxu0 %v1559
      %v2427 = vpop.f32.mrf.mxu0
      %v2428 = vadd.f32 %v2099, %v2427
      %v2429 = vpop.f32.mrf.mxu0
      %v2430 = vadd.f32 %v2101, %v2429
      %2431 = vmatmul.bf16.gmra.mxu0 %v1562
      %v2432 = vpop.f32.mrf.mxu0
      %v2433 = vadd.f32 %v2104, %v2432
      %v2434 = vpop.f32.mrf.mxu0
      %v2435 = vadd.f32 %v2106, %v2434
      %2436 = vmatmul.bf16.gmra.mxu0 %v1565
      %v2437 = vpop.f32.mrf.mxu0
      %v2438 = vadd.f32 %v2109, %v2437
      %v2439 = vpop.f32.mrf.mxu0
      %v2440 = vadd.f32 %v2111, %v2439
      %2441 = vmatmul.bf16.gmra.mxu0 %v1568
      %v2442 = vpop.f32.mrf.mxu0
      %v2443 = vadd.f32 %v2114, %v2442
      %v2444 = vpop.f32.mrf.mxu0
      %v2445 = vadd.f32 %v2116, %v2444
      %2446 = vmatmul.bf16.gmra.mxu0 %v1571
      %v2447 = vpop.f32.mrf.mxu0
      %v2448 = vadd.f32 %v2119, %v2447
      %v2449 = vpop.f32.mrf.mxu0
      %v2450 = vadd.f32 %v2121, %v2449
      %2451 = vmatmul.bf16.gmra.mxu0 %v1574
      %v2452 = vpop.f32.mrf.mxu0
      %v2453 = vadd.f32 %v2124, %v2452
      %v2454 = vpop.f32.mrf.mxu0
      %v2455 = vadd.f32 %v2126, %v2454
      %2456 = vmatmul.bf16.gmra.mxu0 %v1577
      %v2457 = vpop.f32.mrf.mxu0
      %v2458 = vadd.f32 %v2129, %v2457
      %v2459 = vpop.f32.mrf.mxu0
      %v2460 = vadd.f32 %v2131, %v2459
      %2461 = vmatmul.bf16.gmra.mxu0 %v1580
      %v2462 = vpop.f32.mrf.mxu0
      %v2463 = vadd.f32 %v2134, %v2462
      %v2464 = vpop.f32.mrf.mxu0
      %v2465 = vadd.f32 %v2136, %v2464
      %2466 = vmatmul.bf16.gmra.mxu0 %v1583
      %v2467 = vpop.f32.mrf.mxu0
      %v2468 = vadd.f32 %v2139, %v2467
      %v2469 = vpop.f32.mrf.mxu0
      %v2470 = vadd.f32 %v2141, %v2469
      %2471 = vmatmul.bf16.gmra.mxu0 %v1586
      %v2472 = vpop.f32.mrf.mxu0
      %v2473 = vadd.f32 %v2144, %v2472
      %v2474 = vpop.f32.mrf.mxu0
      %v2475 = vadd.f32 %v2146, %v2474
      %2476 = vmatmul.bf16.gmra.mxu0 %v1589
      %v2477 = vpop.f32.mrf.mxu0
      %v2478 = vadd.f32 %v2149, %v2477
      %v2479 = vpop.f32.mrf.mxu0
      %v2480 = vadd.f32 %v2151, %v2479
      %2481 = vmatmul.bf16.gmra.mxu0 %v1592
      %v2482 = vpop.f32.mrf.mxu0
      %v2483 = vadd.f32 %v2154, %v2482
      %v2484 = vpop.f32.mrf.mxu0
      %v2485 = vadd.f32 %v2156, %v2484
      %2486 = vmatmul.bf16.gmra.mxu0 %v1595
      %v2487 = vpop.f32.mrf.mxu0
      %v2488 = vadd.f32 %v2159, %v2487
      %v2489 = vpop.f32.mrf.mxu0
      %v2490 = vadd.f32 %v2161, %v2489
      %2491 = vmatmul.bf16.gmra.mxu0 %v1598
      %v2492 = vpop.f32.mrf.mxu0
      %v2493 = vadd.f32 %v2164, %v2492
      %v2494 = vpop.f32.mrf.mxu0
      %v2495 = vadd.f32 %v2166, %v2494
      %2496 = vmatmul.bf16.gmra.mxu0 %v1601
      %v2497 = vpop.f32.mrf.mxu0
      %v2498 = vadd.f32 %v2169, %v2497
      %v2499 = vpop.f32.mrf.mxu0
      %v2500 = vadd.f32 %v2171, %v2499
      %2501 = vmatmul.bf16.gmra.mxu0 %v1604
      %v2502 = vpop.f32.mrf.mxu0
      %v2503 = vadd.f32 %v2174, %v2502
      %v2504 = vpop.f32.mrf.mxu0
      %v2505 = vadd.f32 %v2176, %v2504
      %2506 = vmatmul.bf16.gmra.mxu0 %v1607
      %v2507 = vpop.f32.mrf.mxu0
      %v2508 = vadd.f32 %v2179, %v2507
      %v2509 = vpop.f32.mrf.mxu0
      %v2510 = vadd.f32 %v2181, %v2509
      %2511 = vmatmul.bf16.gmra.mxu0 %v1610
      %v2512 = vpop.f32.mrf.mxu0
      %v2513 = vadd.f32 %v2184, %v2512
      %v2514 = vpop.f32.mrf.mxu0
      %v2515 = vadd.f32 %v2186, %v2514
      %2516 = vmatmul.bf16.gmra.mxu0 %v1613
      %v2517 = vpop.f32.mrf.mxu0
      %v2518 = vadd.f32 %v2189, %v2517
      %v2519 = vpop.f32.mrf.mxu0
      %v2520 = vadd.f32 %v2191, %v2519
      %2521 = vmatmul.bf16.gmra.mxu0 %v1616
      %v2522 = vpop.f32.mrf.mxu0
      %v2523 = vadd.f32 %v2194, %v2522
      %v2524 = vpop.f32.mrf.mxu0
      %v2525 = vadd.f32 %v2196, %v2524
      %2526 = vmatmul.bf16.gmra.mxu0 %v1619
      %v2527 = vpop.f32.mrf.mxu0
      %v2528 = vadd.f32 %v2199, %v2527
      %v2529 = vpop.f32.mrf.mxu0
      %v2530 = vadd.f32 %v2201, %v2529
      %2531 = vmatmul.bf16.gmra.mxu0 %v1622
      %v2532 = vpop.f32.mrf.mxu0
      %v2533 = vadd.f32 %v2204, %v2532
      %v2534 = vpop.f32.mrf.mxu0
      %v2535 = vadd.f32 %v2206, %v2534
      %2536 = vmatmul.bf16.gmra.mxu0 %v1625
      %v2537 = vpop.f32.mrf.mxu0
      %v2538 = vadd.f32 %v2209, %v2537
      %v2539 = vpop.f32.mrf.mxu0
      %v2540 = vadd.f32 %v2211, %v2539
      %2541 = vmatmul.bf16.gmra.mxu0 %v1628
      %v2542 = vpop.f32.mrf.mxu0
      %v2543 = vadd.f32 %v2214, %v2542
      %v2544 = vpop.f32.mrf.mxu0
      %v2545 = vadd.f32 %v2216, %v2544
      %2546 = vmatmul.bf16.gmra.mxu0 %v1631
      %v2547 = vpop.f32.mrf.mxu0
      %v2548 = vadd.f32 %v2219, %v2547
      %v2549 = vpop.f32.mrf.mxu0
      %v2550 = vadd.f32 %v2221, %v2549
      %2551 = vmatmul.bf16.gmra.mxu0 %v1634
      %v2552 = vpop.f32.mrf.mxu0
      %v2553 = vadd.f32 %v2224, %v2552
      %v2554 = vpop.f32.mrf.mxu0
      %v2555 = vadd.f32 %v2226, %v2554
      %2556 = vmatmul.bf16.gmra.mxu0 %v1637
      %v2557 = vpop.f32.mrf.mxu0
      %v2558 = vadd.f32 %v2229, %v2557
      %v2559 = vpop.f32.mrf.mxu0
      %v2560 = vadd.f32 %v2231, %v2559
      %2561 = vmatmul.bf16.gmra.mxu0 %v1640
      %v2562 = vpop.f32.mrf.mxu0
      %v2563 = vadd.f32 %v2234, %v2562
      %v2564 = vpop.f32.mrf.mxu0
      %v2565 = vadd.f32 %v2236, %v2564
      %2566 = vmatmul.bf16.gmra.mxu0 %v1643
      %v2567 = vpop.f32.mrf.mxu0
      %v2568 = vadd.f32 %v2239, %v2567
      %v2569 = vpop.f32.mrf.mxu0
      %v2570 = vadd.f32 %v2241, %v2569
      %2571 = vmatmul.bf16.gmra.mxu0 %v1646
      %v2572 = vpop.f32.mrf.mxu0
      %v2573 = vadd.f32 %v2244, %v2572
      %v2574 = vpop.f32.mrf.mxu0
      %v2575 = vadd.f32 %v2246, %v2574
      %2576 = vmatmul.bf16.gmra.mxu0 %v1649
      %v2577 = vpop.f32.mrf.mxu0
      %v2578 = vadd.f32 %v2249, %v2577
      %v2579 = vpop.f32.mrf.mxu0
      %v2580 = vadd.f32 %v2251, %v2579
      %2581 = vmatmul.bf16.gmra.mxu0 %v1652
      %v2582 = vpop.f32.mrf.mxu0
      %v2583 = vadd.f32 %v2254, %v2582
      %v2584 = vpop.f32.mrf.mxu0
      %v2585 = vadd.f32 %v2256, %v2584
      %2586 = vmatmul.bf16.gmra.mxu0 %v1655
      %v2587 = vpop.f32.mrf.mxu0
      %v2588 = vadd.f32 %v2259, %v2587
      %v2589 = vpop.f32.mrf.mxu0
      %v2590 = vadd.f32 %v2261, %v2589
      %2591 = vmatmul.bf16.gmra.mxu0 %v1658
      %v2592 = vpop.f32.mrf.mxu0
      %v2593 = vadd.f32 %v2264, %v2592
      %v2594 = vpop.f32.mrf.mxu0
      %v2595 = vadd.f32 %v2266, %v2594
      %2596 = vmatmul.bf16.gmra.mxu0 %v1661
      %v2597 = vpop.f32.mrf.mxu0
      %v2598 = vadd.f32 %v2269, %v2597
      %v2599 = vpop.f32.mrf.mxu0
      %v2600 = vadd.f32 %v2271, %v2599
      %2601 = vmatmul.bf16.gmra.mxu0 %v1664
      %v2602 = vpop.f32.mrf.mxu0
      %v2603 = vadd.f32 %v2274, %v2602
      %v2604 = vpop.f32.mrf.mxu0
      %v2605 = vadd.f32 %v2276, %v2604
      %2606 = vmatmul.bf16.gmra.mxu0 %v1667
      %v2607 = vpop.f32.mrf.mxu0
      %v2608 = vadd.f32 %v2279, %v2607
      %v2609 = vpop.f32.mrf.mxu0
      %v2610 = vadd.f32 %v2281, %v2609
      %2611 = vmatmul.bf16.gmra.mxu0 %v1670
      %v2612 = vpop.f32.mrf.mxu0
      %v2613 = vadd.f32 %v2284, %v2612
      %v2614 = vpop.f32.mrf.mxu0
      %v2615 = vadd.f32 %v2286, %v2614
      %2616 = vmatmul.bf16.gmra.mxu0 %v1673
      %v2617 = vpop.f32.mrf.mxu0
      %v2618 = vadd.f32 %v2289, %v2617
      %v2619 = vpop.f32.mrf.mxu0
      %v2620 = vadd.f32 %v2291, %v2619
      %2621 = vmatmul.bf16.gmra.mxu0 %v1676
      %v2622 = vpop.f32.mrf.mxu0
      %v2623 = vadd.f32 %v2294, %v2622
      %v2624 = vpop.f32.mrf.mxu0
      %v2625 = vadd.f32 %v2296, %v2624
      %2626 = vmatmul.bf16.gmra.mxu0 %v1679
      %v2627 = vpop.f32.mrf.mxu0
      %v2628 = vadd.f32 %v2299, %v2627
      %v2629 = vpop.f32.mrf.mxu0
      %v2630 = vadd.f32 %v2301, %v2629
      %2631 = vmatmul.bf16.gmra.mxu0 %v1682
      %v2632 = vpop.f32.mrf.mxu0
      %v2633 = vadd.f32 %v2304, %v2632
      %v2634 = vpop.f32.mrf.mxu0
      %v2635 = vadd.f32 %v2306, %v2634
      %2636 = vmatmul.bf16.gmra.mxu0 %v1685
      %v2637 = vpop.f32.mrf.mxu0
      %v2638 = vadd.f32 %v2309, %v2637
      %v2639 = vpop.f32.mrf.mxu0
      %v2640 = vadd.f32 %v2311, %v2639
      %2641 = vmatmul.bf16.gmra.mxu0 %v1688
      %v2642 = vpop.f32.mrf.mxu0
      %v2643 = vadd.f32 %v2314, %v2642
      %v2644 = vpop.f32.mrf.mxu0
      %v2645 = vadd.f32 %v2316, %v2644
      %2646 = vmatmul.bf16.gmra.mxu0 %v1691
      %v2647 = vpop.f32.mrf.mxu0
      %v2648 = vadd.f32 %v2319, %v2647
      %v2649 = vpop.f32.mrf.mxu0
      %v2650 = vadd.f32 %v2321, %v2649
      %2651 = vmatmul.bf16.gmra.mxu0 %v1694
      %v2652 = vpop.f32.mrf.mxu0
      %v2653 = vadd.f32 %v2324, %v2652
      %v2654 = vpop.f32.mrf.mxu0
      %v2655 = vadd.f32 %v2326, %v2654
      %2656 = vmatmul.bf16.gmra.mxu0 %v1697
      %v2657 = vpop.f32.mrf.mxu0
      %v2658 = vadd.f32 %v2329, %v2657
      %v2659 = vpop.f32.mrf.mxu0
      %v2660 = vadd.f32 %v2331, %v2659
      %2661 = vmatmul.bf16.gmra.mxu0 %v1700
      %v2662 = vpop.f32.mrf.mxu0
      %v2663 = vadd.f32 %v2334, %v2662
      %v2664 = vpop.f32.mrf.mxu0
      %v2665 = vadd.f32 %v2336, %v2664
      %2666 = vmatmul.bf16.gmra.mxu0 %v1703
      %v2667 = vpop.f32.mrf.mxu0
      %v2668 = vadd.f32 %v2339, %v2667
      %v2669 = vpop.f32.mrf.mxu0
      %v2670 = vadd.f32 %v2341, %v2669
      %2671 = vmatmul.bf16.gmra.mxu0 %v1706
      %v2672 = vpop.f32.mrf.mxu0
      %v2673 = vadd.f32 %v2344, %v2672
      %v2674 = vpop.f32.mrf.mxu0
      %v2675 = vadd.f32 %v2346, %v2674
      %2676 = vmatmul.bf16.gmra.mxu0 %v1709
      %v2677 = vpop.f32.mrf.mxu0
      %v2678 = vadd.f32 %v2349, %v2677
      %v2679 = vpop.f32.mrf.mxu0
      %v2680 = vadd.f32 %v2351, %v2679
      %2681 = vmatmul.bf16.gmra.mxu0 %v1712
      %v2682 = vpop.f32.mrf.mxu0
      %v2683 = vadd.f32 %v2354, %v2682
      %v2684 = vpop.f32.mrf.mxu0
      %v2685 = vadd.f32 %v2356, %v2684
      %2686 = vmatmul.bf16.gmra.mxu0 %v1715
      %v2687 = vpop.f32.mrf.mxu0
      %v2688 = vadd.f32 %v2359, %v2687
      %v2689 = vpop.f32.mrf.mxu0
      %v2690 = vadd.f32 %v2361, %v2689
      %2691 = vmatmul.bf16.gmra.mxu0 %v1718
      %v2692 = vpop.f32.mrf.mxu0
      %v2693 = vadd.f32 %v2364, %v2692
      %v2694 = vpop.f32.mrf.mxu0
      %v2695 = vadd.f32 %v2366, %v2694
      %2696 = vmatmul.bf16.gmra.mxu0 %v1721
      %v2697 = vpop.f32.mrf.mxu0
      %v2698 = vadd.f32 %v2369, %v2697
      %v2699 = vpop.f32.mrf.mxu0
      %v2700 = vadd.f32 %v2371, %v2699
      %2701 = vmatmul.bf16.gmra.mxu0 %v1724
      %v2702 = vpop.f32.mrf.mxu0
      %v2703 = vadd.f32 %v2374, %v2702
      %v2704 = vpop.f32.mrf.mxu0
      %v2705 = vadd.f32 %v2376, %v2704
      %2706 = vmatmul.bf16.gmra.mxu0 %v1727
      %v2707 = vpop.f32.mrf.mxu0
      %v2708 = vadd.f32 %v2379, %v2707
      %v2709 = vpop.f32.mrf.mxu0
      %v2710 = vadd.f32 %v2381, %v2709
      %2711 = vmatmul.bf16.gmra.mxu0 %v1730
      %v2712 = vpop.f32.mrf.mxu0
      %v2713 = vadd.f32 %v2384, %v2712
      %v2714 = vpop.f32.mrf.mxu0
      %v2715 = vadd.f32 %v2386, %v2714
      %2716 = vmatmul.bf16.gmra.mxu0 %v1733
      %v2717 = vpop.f32.mrf.mxu0
      %v2718 = vadd.f32 %v2389, %v2717
      %v2719 = vpop.f32.mrf.mxu0
      %v2720 = vadd.f32 %v2391, %v2719
      %2721 = vdwg.mxu0
      %v2722 = vxor.u32 %v2403, 2147483648
      %v2723 = vxor.u32 %v2405, 2147483648
      %v2724 = vxor.u32 %v2408, 2147483648
      %v2725 = vxor.u32 %v2410, 2147483648
      %v2726 = vxor.u32 %v2413, 2147483648
      %v2727 = vxor.u32 %v2415, 2147483648
      %v2728 = vxor.u32 %v2418, 2147483648
      %v2729 = vxor.u32 %v2420, 2147483648
      %v2730 = vxor.u32 %v2423, 2147483648
      %v2731 = vxor.u32 %v2425, 2147483648
      %v2732 = vxor.u32 %v2428, 2147483648
      %v2733 = vxor.u32 %v2430, 2147483648
      %v2734 = vxor.u32 %v2433, 2147483648
      %v2735 = vxor.u32 %v2435, 2147483648
      %v2736 = vxor.u32 %v2438, 2147483648
      %v2737 = vxor.u32 %v2440, 2147483648
      %v2738 = vxor.u32 %v2443, 2147483648
      %v2739 = vxor.u32 %v2445, 2147483648
      %v2740 = vxor.u32 %v2448, 2147483648
      %v2741 = vxor.u32 %v2450, 2147483648
      %v2742 = vxor.u32 %v2453, 2147483648
      %v2743 = vxor.u32 %v2455, 2147483648
      %v2744 = vxor.u32 %v2458, 2147483648
      %v2745 = vxor.u32 %v2460, 2147483648
      %v2746 = vxor.u32 %v2463, 2147483648
      %v2747 = vxor.u32 %v2465, 2147483648
      %v2748 = vxor.u32 %v2468, 2147483648
      %v2749 = vxor.u32 %v2470, 2147483648
      %v2750 = vxor.u32 %v2473, 2147483648
      %v2751 = vxor.u32 %v2475, 2147483648
      %v2752 = vxor.u32 %v2478, 2147483648
      %v2753 = vxor.u32 %v2480, 2147483648
      %v2754 = vxor.u32 %v2483, 2147483648
      %v2755 = vxor.u32 %v2485, 2147483648
      %v2756 = vxor.u32 %v2488, 2147483648
      %v2757 = vxor.u32 %v2490, 2147483648
      %v2758 = vxor.u32 %v2493, 2147483648
      %v2759 = vxor.u32 %v2495, 2147483648
      %v2760 = vxor.u32 %v2498, 2147483648
      %v2761 = vxor.u32 %v2500, 2147483648
      %v2762 = vxor.u32 %v2503, 2147483648
      %v2763 = vxor.u32 %v2505, 2147483648
      %v2764 = vxor.u32 %v2508, 2147483648
      %v2765 = vxor.u32 %v2510, 2147483648
      %v2766 = vxor.u32 %v2513, 2147483648
      %v2767 = vxor.u32 %v2515, 2147483648
      %v2768 = vxor.u32 %v2518, 2147483648
      %v2769 = vxor.u32 %v2520, 2147483648
      %v2770 = vxor.u32 %v2523, 2147483648
      %v2771 = vxor.u32 %v2525, 2147483648
      %v2772 = vxor.u32 %v2528, 2147483648
      %v2773 = vxor.u32 %v2530, 2147483648
      %v2774 = vxor.u32 %v2533, 2147483648
      %v2775 = vxor.u32 %v2535, 2147483648
      %v2776 = vxor.u32 %v2538, 2147483648
      %v2777 = vxor.u32 %v2540, 2147483648
      %v2778 = vxor.u32 %v2543, 2147483648
      %v2779 = vxor.u32 %v2545, 2147483648
      %v2780 = vxor.u32 %v2548, 2147483648
      %v2781 = vxor.u32 %v2550, 2147483648
      %v2782 = vxor.u32 %v2553, 2147483648
      %v2783 = vxor.u32 %v2555, 2147483648
      %v2784 = vxor.u32 %v2558, 2147483648
      %v2785 = vxor.u32 %v2560, 2147483648
      %v2786 = vxor.u32 %v2563, 2147483648
      %v2787 = vxor.u32 %v2565, 2147483648
      %v2788 = vxor.u32 %v2568, 2147483648
      %v2789 = vxor.u32 %v2570, 2147483648
      %v2790 = vxor.u32 %v2573, 2147483648
      %v2791 = vxor.u32 %v2575, 2147483648
      %v2792 = vxor.u32 %v2578, 2147483648
      %v2793 = vxor.u32 %v2580, 2147483648
      %v2794 = vxor.u32 %v2583, 2147483648
      %v2795 = vxor.u32 %v2585, 2147483648
      %v2796 = vxor.u32 %v2588, 2147483648
      %v2797 = vxor.u32 %v2590, 2147483648
      %v2798 = vxor.u32 %v2593, 2147483648
      %v2799 = vxor.u32 %v2595, 2147483648
      %v2800 = vxor.u32 %v2598, 2147483648
      %v2801 = vxor.u32 %v2600, 2147483648
      %v2802 = vxor.u32 %v2603, 2147483648
      %v2803 = vxor.u32 %v2605, 2147483648
      %v2804 = vxor.u32 %v2608, 2147483648
      %v2805 = vxor.u32 %v2610, 2147483648
      %v2806 = vxor.u32 %v2613, 2147483648
      %v2807 = vxor.u32 %v2615, 2147483648
      %v2808 = vxor.u32 %v2618, 2147483648
      %v2809 = vxor.u32 %v2620, 2147483648
      %v2810 = vxor.u32 %v2623, 2147483648
      %v2811 = vxor.u32 %v2625, 2147483648
      %v2812 = vxor.u32 %v2628, 2147483648
      %v2813 = vxor.u32 %v2630, 2147483648
      %v2814 = vxor.u32 %v2633, 2147483648
      %v2815 = vxor.u32 %v2635, 2147483648
      %v2816 = vxor.u32 %v2638, 2147483648
      %v2817 = vxor.u32 %v2640, 2147483648
      %v2818 = vxor.u32 %v2643, 2147483648
      %v2819 = vxor.u32 %v2645, 2147483648
      %v2820 = vxor.u32 %v2648, 2147483648
      %v2821 = vxor.u32 %v2650, 2147483648
      %v2822 = vxor.u32 %v2653, 2147483648
      %v2823 = vxor.u32 %v2655, 2147483648
      %v2824 = vxor.u32 %v2658, 2147483648
      %v2825 = vxor.u32 %v2660, 2147483648
      %v2826 = vxor.u32 %v2663, 2147483648
      %v2827 = vxor.u32 %v2665, 2147483648
      %v2828 = vxor.u32 %v2668, 2147483648
      %v2829 = vxor.u32 %v2670, 2147483648
      %v2830 = vxor.u32 %v2673, 2147483648
      %v2831 = vxor.u32 %v2675, 2147483648
      %v2832 = vxor.u32 %v2678, 2147483648
      %v2833 = vxor.u32 %v2680, 2147483648
      %v2834 = vxor.u32 %v2683, 2147483648
      %v2835 = vxor.u32 %v2685, 2147483648
      %v2836 = vxor.u32 %v2688, 2147483648
      %v2837 = vxor.u32 %v2690, 2147483648
      %v2838 = vxor.u32 %v2693, 2147483648
      %v2839 = vxor.u32 %v2695, 2147483648
      %v2840 = vxor.u32 %v2698, 2147483648
      %v2841 = vxor.u32 %v2700, 2147483648
      %v2842 = vxor.u32 %v2703, 2147483648
      %v2843 = vxor.u32 %v2705, 2147483648
      %v2844 = vxor.u32 %v2708, 2147483648
      %v2845 = vxor.u32 %v2710, 2147483648
      %v2846 = vxor.u32 %v2713, 2147483648
      %v2847 = vxor.u32 %v2715, 2147483648
      %v2848 = vxor.u32 %v2718, 2147483648
      %v2849 = vxor.u32 %v2720, 2147483648
      %v2850 = vmul.f32 %v2722, 1.442695
      %v2851 = vpow.pop %v2850
      %v2852 = vmul.f32 %v2723, 1.442695
      %v2853 = vpow.pop %v2852
      %v2854 = vmul.f32 %v2724, 1.442695
      %v2855 = vpow.pop %v2854
      %v2856 = vmul.f32 %v2725, 1.442695
      %v2857 = vpow.pop %v2856
      %v2858 = vmul.f32 %v2726, 1.442695
      %v2859 = vpow.pop %v2858
      %v2860 = vmul.f32 %v2727, 1.442695
      %v2861 = vpow.pop %v2860
      %v2862 = vmul.f32 %v2728, 1.442695
      %v2863 = vpow.pop %v2862
      %v2864 = vmul.f32 %v2729, 1.442695
      %v2865 = vpow.pop %v2864
      %v2866 = vmul.f32 %v2730, 1.442695
      %v2867 = vpow.pop %v2866
      %v2868 = vmul.f32 %v2731, 1.442695
      %v2869 = vpow.pop %v2868
      %v2870 = vmul.f32 %v2732, 1.442695
      %v2871 = vpow.pop %v2870
      %v2872 = vmul.f32 %v2733, 1.442695
      %v2873 = vpow.pop %v2872
      %v2874 = vmul.f32 %v2734, 1.442695
      %v2875 = vpow.pop %v2874
      %v2876 = vmul.f32 %v2735, 1.442695
      %v2877 = vpow.pop %v2876
      %v2878 = vmul.f32 %v2736, 1.442695
      %v2879 = vpow.pop %v2878
      %v2880 = vmul.f32 %v2737, 1.442695
      %v2881 = vpow.pop %v2880
      %v2882 = vmul.f32 %v2738, 1.442695
      %v2883 = vpow.pop %v2882
      %v2884 = vmul.f32 %v2739, 1.442695
      %v2885 = vpow.pop %v2884
      %v2886 = vmul.f32 %v2740, 1.442695
      %v2887 = vpow.pop %v2886
      %v2888 = vmul.f32 %v2741, 1.442695
      %v2889 = vpow.pop %v2888
      %v2890 = vmul.f32 %v2742, 1.442695
      %v2891 = vpow.pop %v2890
      %v2892 = vmul.f32 %v2743, 1.442695
      %v2893 = vpow.pop %v2892
      %v2894 = vmul.f32 %v2744, 1.442695
      %v2895 = vpow.pop %v2894
      %v2896 = vmul.f32 %v2745, 1.442695
      %v2897 = vpow.pop %v2896
      %v2898 = vmul.f32 %v2746, 1.442695
      %v2899 = vpow.pop %v2898
      %v2900 = vmul.f32 %v2747, 1.442695
      %v2901 = vpow.pop %v2900
      %v2902 = vmul.f32 %v2748, 1.442695
      %v2903 = vpow.pop %v2902
      %v2904 = vmul.f32 %v2749, 1.442695
      %v2905 = vpow.pop %v2904
      %v2906 = vmul.f32 %v2750, 1.442695
      %v2907 = vpow.pop %v2906
      %v2908 = vmul.f32 %v2751, 1.442695
      %v2909 = vpow.pop %v2908
      %v2910 = vmul.f32 %v2752, 1.442695
      %v2911 = vpow.pop %v2910
      %v2912 = vmul.f32 %v2753, 1.442695
      %v2913 = vpow.pop %v2912
      %v2914 = vmul.f32 %v2754, 1.442695
      %v2915 = vpow.pop %v2914
      %v2916 = vmul.f32 %v2755, 1.442695
      %v2917 = vpow.pop %v2916
      %v2918 = vmul.f32 %v2756, 1.442695
      %v2919 = vpow.pop %v2918
      %v2920 = vmul.f32 %v2757, 1.442695
      %v2921 = vpow.pop %v2920
      %v2922 = vmul.f32 %v2758, 1.442695
      %v2923 = vpow.pop %v2922
      %v2924 = vmul.f32 %v2759, 1.442695
      %v2925 = vpow.pop %v2924
      %v2926 = vmul.f32 %v2760, 1.442695
      %v2927 = vpow.pop %v2926
      %v2928 = vmul.f32 %v2761, 1.442695
      %v2929 = vpow.pop %v2928
      %v2930 = vmul.f32 %v2762, 1.442695
      %v2931 = vpow.pop %v2930
      %v2932 = vmul.f32 %v2763, 1.442695
      %v2933 = vpow.pop %v2932
      %v2934 = vmul.f32 %v2764, 1.442695
      %v2935 = vpow.pop %v2934
      %v2936 = vmul.f32 %v2765, 1.442695
      %v2937 = vpow.pop %v2936
      %v2938 = vmul.f32 %v2766, 1.442695
      %v2939 = vpow.pop %v2938
      %v2940 = vmul.f32 %v2767, 1.442695
      %v2941 = vpow.pop %v2940
      %v2942 = vmul.f32 %v2768, 1.442695
      %v2943 = vpow.pop %v2942
      %v2944 = vmul.f32 %v2769, 1.442695
      %v2945 = vpow.pop %v2944
      %v2946 = vmul.f32 %v2770, 1.442695
      %v2947 = vpow.pop %v2946
      %v2948 = vmul.f32 %v2771, 1.442695
      %v2949 = vpow.pop %v2948
      %v2950 = vmul.f32 %v2772, 1.442695
      %v2951 = vpow.pop %v2950
      %v2952 = vmul.f32 %v2773, 1.442695
      %v2953 = vpow.pop %v2952
      %v2954 = vmul.f32 %v2774, 1.442695
      %v2955 = vpow.pop %v2954
      %v2956 = vmul.f32 %v2775, 1.442695
      %v2957 = vpow.pop %v2956
      %v2958 = vmul.f32 %v2776, 1.442695
      %v2959 = vpow.pop %v2958
      %v2960 = vmul.f32 %v2777, 1.442695
      %v2961 = vpow.pop %v2960
      %v2962 = vmul.f32 %v2778, 1.442695
      %v2963 = vpow.pop %v2962
      %v2964 = vmul.f32 %v2779, 1.442695
      %v2965 = vpow.pop %v2964
      %v2966 = vmul.f32 %v2780, 1.442695
      %v2967 = vpow.pop %v2966
      %v2968 = vmul.f32 %v2781, 1.442695
      %v2969 = vpow.pop %v2968
      %v2970 = vmul.f32 %v2782, 1.442695
      %v2971 = vpow.pop %v2970
      %v2972 = vmul.f32 %v2783, 1.442695
      %v2973 = vpow.pop %v2972
      %v2974 = vmul.f32 %v2784, 1.442695
      %v2975 = vpow.pop %v2974
      %v2976 = vmul.f32 %v2785, 1.442695
      %v2977 = vpow.pop %v2976
      %v2978 = vmul.f32 %v2786, 1.442695
      %v2979 = vpow.pop %v2978
      %v2980 = vmul.f32 %v2787, 1.442695
      %v2981 = vpow.pop %v2980
      %v2982 = vmul.f32 %v2788, 1.442695
      %v2983 = vpow.pop %v2982
      %v2984 = vmul.f32 %v2789, 1.442695
      %v2985 = vpow.pop %v2984
      %v2986 = vmul.f32 %v2790, 1.442695
      %v2987 = vpow.pop %v2986
      %v2988 = vmul.f32 %v2791, 1.442695
      %v2989 = vpow.pop %v2988
      %v2990 = vmul.f32 %v2792, 1.442695
      %v2991 = vpow.pop %v2990
      %v2992 = vmul.f32 %v2793, 1.442695
      %v2993 = vpow.pop %v2992
      %v2994 = vmul.f32 %v2794, 1.442695
      %v2995 = vpow.pop %v2994
      %v2996 = vmul.f32 %v2795, 1.442695
      %v2997 = vpow.pop %v2996
      %v2998 = vmul.f32 %v2796, 1.442695
      %v2999 = vpow.pop %v2998
      %v3000 = vmul.f32 %v2797, 1.442695
      %v3001 = vpow.pop %v3000
      %v3002 = vmul.f32 %v2798, 1.442695
      %v3003 = vpow.pop %v3002
      %v3004 = vmul.f32 %v2799, 1.442695
      %v3005 = vpow.pop %v3004
      %v3006 = vmul.f32 %v2800, 1.442695
      %v3007 = vpow.pop %v3006
      %v3008 = vmul.f32 %v2801, 1.442695
      %v3009 = vpow.pop %v3008
      %v3010 = vmul.f32 %v2802, 1.442695
      %v3011 = vpow.pop %v3010
      %v3012 = vmul.f32 %v2803, 1.442695
      %v3013 = vpow.pop %v3012
      %v3014 = vmul.f32 %v2804, 1.442695
      %v3015 = vpow.pop %v3014
      %v3016 = vmul.f32 %v2805, 1.442695
      %v3017 = vpow.pop %v3016
      %v3018 = vmul.f32 %v2806, 1.442695
      %v3019 = vpow.pop %v3018
      %v3020 = vmul.f32 %v2807, 1.442695
      %v3021 = vpow.pop %v3020
      %v3022 = vmul.f32 %v2808, 1.442695
      %v3023 = vpow.pop %v3022
      %v3024 = vmul.f32 %v2809, 1.442695
      %v3025 = vpow.pop %v3024
      %v3026 = vmul.f32 %v2810, 1.442695
      %v3027 = vpow.pop %v3026
      %v3028 = vmul.f32 %v2811, 1.442695
      %v3029 = vpow.pop %v3028
      %v3030 = vmul.f32 %v2812, 1.442695
      %v3031 = vpow.pop %v3030
      %v3032 = vmul.f32 %v2813, 1.442695
      %v3033 = vpow.pop %v3032
      %v3034 = vmul.f32 %v2814, 1.442695
      %v3035 = vpow.pop %v3034
      %v3036 = vmul.f32 %v2815, 1.442695
      %v3037 = vpow.pop %v3036
      %v3038 = vmul.f32 %v2816, 1.442695
      %v3039 = vpow.pop %v3038
      %v3040 = vmul.f32 %v2817, 1.442695
      %v3041 = vpow.pop %v3040
      %v3042 = vmul.f32 %v2818, 1.442695
      %v3043 = vpow.pop %v3042
      %v3044 = vmul.f32 %v2819, 1.442695
      %v3045 = vpow.pop %v3044
      %v3046 = vmul.f32 %v2820, 1.442695
      %v3047 = vpow.pop %v3046
      %v3048 = vmul.f32 %v2821, 1.442695
      %v3049 = vpow.pop %v3048
      %v3050 = vmul.f32 %v2822, 1.442695
      %v3051 = vpow.pop %v3050
      %v3052 = vmul.f32 %v2823, 1.442695
      %v3053 = vpow.pop %v3052
      %v3054 = vmul.f32 %v2824, 1.442695
      %v3055 = vpow.pop %v3054
      %v3056 = vmul.f32 %v2825, 1.442695
      %v3057 = vpow.pop %v3056
      %v3058 = vmul.f32 %v2826, 1.442695
      %v3059 = vpow.pop %v3058
      %v3060 = vmul.f32 %v2827, 1.442695
      %v3061 = vpow.pop %v3060
      %v3062 = vmul.f32 %v2828, 1.442695
      %v3063 = vpow.pop %v3062
      %v3064 = vmul.f32 %v2829, 1.442695
      %v3065 = vpow.pop %v3064
      %v3066 = vmul.f32 %v2830, 1.442695
      %v3067 = vpow.pop %v3066
      %v3068 = vmul.f32 %v2831, 1.442695
      %v3069 = vpow.pop %v3068
      %v3070 = vmul.f32 %v2832, 1.442695
      %v3071 = vpow.pop %v3070
      %v3072 = vmul.f32 %v2833, 1.442695
      %v3073 = vpow.pop %v3072
      %v3074 = vmul.f32 %v2834, 1.442695
      %v3075 = vpow.pop %v3074
      %v3076 = vmul.f32 %v2835, 1.442695
      %v3077 = vpow.pop %v3076
      %v3078 = vmul.f32 %v2836, 1.442695
      %v3079 = vpow.pop %v3078
      %v3080 = vmul.f32 %v2837, 1.442695
      %v3081 = vpow.pop %v3080
      %v3082 = vmul.f32 %v2838, 1.442695
      %v3083 = vpow.pop %v3082
      %v3084 = vmul.f32 %v2839, 1.442695
      %v3085 = vpow.pop %v3084
      %v3086 = vmul.f32 %v2840, 1.442695
      %v3087 = vpow.pop %v3086
      %v3088 = vmul.f32 %v2841, 1.442695
      %v3089 = vpow.pop %v3088
      %v3090 = vmul.f32 %v2842, 1.442695
      %v3091 = vpow.pop %v3090
      %v3092 = vmul.f32 %v2843, 1.442695
      %v3093 = vpow.pop %v3092
      %v3094 = vmul.f32 %v2844, 1.442695
      %v3095 = vpow.pop %v3094
      %v3096 = vmul.f32 %v2845, 1.442695
      %v3097 = vpow.pop %v3096
      %v3098 = vmul.f32 %v2846, 1.442695
      %v3099 = vpow.pop %v3098
      %v3100 = vmul.f32 %v2847, 1.442695
      %v3101 = vpow.pop %v3100
      %v3102 = vmul.f32 %v2848, 1.442695
      %v3103 = vpow.pop %v3102
      %v3104 = vmul.f32 %v2849, 1.442695
      %v3105 = vpow.pop %v3104
      %v3106 = vadd.f32 %v2851, 1.0
      %v3107 = vadd.f32 %v2853, 1.0
      %v3108 = vadd.f32 %v2855, 1.0
      %v3109 = vadd.f32 %v2857, 1.0
      %v3110 = vadd.f32 %v2859, 1.0
      %v3111 = vadd.f32 %v2861, 1.0
      %v3112 = vadd.f32 %v2863, 1.0
      %v3113 = vadd.f32 %v2865, 1.0
      %v3114 = vadd.f32 %v2867, 1.0
      %v3115 = vadd.f32 %v2869, 1.0
      %v3116 = vadd.f32 %v2871, 1.0
      %v3117 = vadd.f32 %v2873, 1.0
      %v3118 = vadd.f32 %v2875, 1.0
      %v3119 = vadd.f32 %v2877, 1.0
      %v3120 = vadd.f32 %v2879, 1.0
      %v3121 = vadd.f32 %v2881, 1.0
      %v3122 = vadd.f32 %v2883, 1.0
      %v3123 = vadd.f32 %v2885, 1.0
      %v3124 = vadd.f32 %v2887, 1.0
      %v3125 = vadd.f32 %v2889, 1.0
      %v3126 = vadd.f32 %v2891, 1.0
      %v3127 = vadd.f32 %v2893, 1.0
      %v3128 = vadd.f32 %v2895, 1.0
      %v3129 = vadd.f32 %v2897, 1.0
      %v3130 = vadd.f32 %v2899, 1.0
      %v3131 = vadd.f32 %v2901, 1.0
      %v3132 = vadd.f32 %v2903, 1.0
      %v3133 = vadd.f32 %v2905, 1.0
      %v3134 = vadd.f32 %v2907, 1.0
      %v3135 = vadd.f32 %v2909, 1.0
      %v3136 = vadd.f32 %v2911, 1.0
      %v3137 = vadd.f32 %v2913, 1.0
      %v3138 = vadd.f32 %v2915, 1.0
      %v3139 = vadd.f32 %v2917, 1.0
      %v3140 = vadd.f32 %v2919, 1.0
      %v3141 = vadd.f32 %v2921, 1.0
      %v3142 = vadd.f32 %v2923, 1.0
      %v3143 = vadd.f32 %v2925, 1.0
      %v3144 = vadd.f32 %v2927, 1.0
      %v3145 = vadd.f32 %v2929, 1.0
      %v3146 = vadd.f32 %v2931, 1.0
      %v3147 = vadd.f32 %v2933, 1.0
      %v3148 = vadd.f32 %v2935, 1.0
      %v3149 = vadd.f32 %v2937, 1.0
      %v3150 = vadd.f32 %v2939, 1.0
      %v3151 = vadd.f32 %v2941, 1.0
      %v3152 = vadd.f32 %v2943, 1.0
      %v3153 = vadd.f32 %v2945, 1.0
      %v3154 = vadd.f32 %v2947, 1.0
      %v3155 = vadd.f32 %v2949, 1.0
      %v3156 = vadd.f32 %v2951, 1.0
      %v3157 = vadd.f32 %v2953, 1.0
      %v3158 = vadd.f32 %v2955, 1.0
      %v3159 = vadd.f32 %v2957, 1.0
      %v3160 = vadd.f32 %v2959, 1.0
      %v3161 = vadd.f32 %v2961, 1.0
      %v3162 = vadd.f32 %v2963, 1.0
      %v3163 = vadd.f32 %v2965, 1.0
      %v3164 = vadd.f32 %v2967, 1.0
      %v3165 = vadd.f32 %v2969, 1.0
      %v3166 = vadd.f32 %v2971, 1.0
      %v3167 = vadd.f32 %v2973, 1.0
      %v3168 = vadd.f32 %v2975, 1.0
      %v3169 = vadd.f32 %v2977, 1.0
      %v3170 = vadd.f32 %v2979, 1.0
      %v3171 = vadd.f32 %v2981, 1.0
      %v3172 = vadd.f32 %v2983, 1.0
      %v3173 = vadd.f32 %v2985, 1.0
      %v3174 = vadd.f32 %v2987, 1.0
      %v3175 = vadd.f32 %v2989, 1.0
      %v3176 = vadd.f32 %v2991, 1.0
      %v3177 = vadd.f32 %v2993, 1.0
      %v3178 = vadd.f32 %v2995, 1.0
      %v3179 = vadd.f32 %v2997, 1.0
      %v3180 = vadd.f32 %v2999, 1.0
      %v3181 = vadd.f32 %v3001, 1.0
      %v3182 = vadd.f32 %v3003, 1.0
      %v3183 = vadd.f32 %v3005, 1.0
      %v3184 = vadd.f32 %v3007, 1.0
      %v3185 = vadd.f32 %v3009, 1.0
      %v3186 = vadd.f32 %v3011, 1.0
      %v3187 = vadd.f32 %v3013, 1.0
      %v3188 = vadd.f32 %v3015, 1.0
      %v3189 = vadd.f32 %v3017, 1.0
      %v3190 = vadd.f32 %v3019, 1.0
      %v3191 = vadd.f32 %v3021, 1.0
      %v3192 = vadd.f32 %v3023, 1.0
      %v3193 = vadd.f32 %v3025, 1.0
      %v3194 = vadd.f32 %v3027, 1.0
      %v3195 = vadd.f32 %v3029, 1.0
      %v3196 = vadd.f32 %v3031, 1.0
      %v3197 = vadd.f32 %v3033, 1.0
      %v3198 = vadd.f32 %v3035, 1.0
      %v3199 = vadd.f32 %v3037, 1.0
      %v3200 = vadd.f32 %v3039, 1.0
      %v3201 = vadd.f32 %v3041, 1.0
      %v3202 = vadd.f32 %v3043, 1.0
      %v3203 = vadd.f32 %v3045, 1.0
      %v3204 = vadd.f32 %v3047, 1.0
      %v3205 = vadd.f32 %v3049, 1.0
      %v3206 = vadd.f32 %v3051, 1.0
      %v3207 = vadd.f32 %v3053, 1.0
      %v3208 = vadd.f32 %v3055, 1.0
      %v3209 = vadd.f32 %v3057, 1.0
      %v3210 = vadd.f32 %v3059, 1.0
      %v3211 = vadd.f32 %v3061, 1.0
      %v3212 = vadd.f32 %v3063, 1.0
      %v3213 = vadd.f32 %v3065, 1.0
      %v3214 = vadd.f32 %v3067, 1.0
      %v3215 = vadd.f32 %v3069, 1.0
      %v3216 = vadd.f32 %v3071, 1.0
      %v3217 = vadd.f32 %v3073, 1.0
      %v3218 = vadd.f32 %v3075, 1.0
      %v3219 = vadd.f32 %v3077, 1.0
      %v3220 = vadd.f32 %v3079, 1.0
      %v3221 = vadd.f32 %v3081, 1.0
      %v3222 = vadd.f32 %v3083, 1.0
      %v3223 = vadd.f32 %v3085, 1.0
      %v3224 = vadd.f32 %v3087, 1.0
      %v3225 = vadd.f32 %v3089, 1.0
      %v3226 = vadd.f32 %v3091, 1.0
      %v3227 = vadd.f32 %v3093, 1.0
      %v3228 = vadd.f32 %v3095, 1.0
      %v3229 = vadd.f32 %v3097, 1.0
      %v3230 = vadd.f32 %v3099, 1.0
      %v3231 = vadd.f32 %v3101, 1.0
      %v3232 = vadd.f32 %v3103, 1.0
      %v3233 = vadd.f32 %v3105, 1.0
      %v3234 = vrcp.pop %v3106
      %v3235 = vmul.f32 %v3106, %v3234
      %v3236 = vsub.f32 1.0, %v3235
      %v3237 = vmul.f32 %v3234, %v3236
      %v3238 = vadd.f32 %v3234, %v3237
      %vm3239 = vweird.f32 %v3106
      %vm3240 = vweird.f32 %v3234
      %vm3241 = vmor %vm3239, %vm3240
      %v3242 = vsel %vm3241, %v3234, %v3238
      %v3243 = vand.u32 2147483647, %v3106
      %vm3244 = vcmp.eq.f32.partialorder %v3243, 8.507059e+37
      %v3245 = vand.u32 %v3106, 2147483648
      %v3246 = vor.u32 1.1754944e-38, %v3245
      %v3247 = vsel %vm3244, %v3246, %v3242
      %v3248 = vmul.f32 1.0, %v3247
      %v3249 = vrcp.pop %v3107
      %v3250 = vmul.f32 %v3107, %v3249
      %v3251 = vsub.f32 1.0, %v3250
      %v3252 = vmul.f32 %v3249, %v3251
      %v3253 = vadd.f32 %v3249, %v3252
      %vm3254 = vweird.f32 %v3107
      %vm3255 = vweird.f32 %v3249
      %vm3256 = vmor %vm3254, %vm3255
      %v3257 = vsel %vm3256, %v3249, %v3253
      %v3258 = vand.u32 2147483647, %v3107
      %vm3259 = vcmp.eq.f32.partialorder %v3258, 8.507059e+37
      %v3260 = vand.u32 %v3107, 2147483648
      %v3261 = vor.u32 1.1754944e-38, %v3260
      %v3262 = vsel %vm3259, %v3261, %v3257
      %v3263 = vmul.f32 1.0, %v3262
      %v3264 = vrcp.pop %v3108
      %v3265 = vmul.f32 %v3108, %v3264
      %v3266 = vsub.f32 1.0, %v3265
      %v3267 = vmul.f32 %v3264, %v3266
      %v3268 = vadd.f32 %v3264, %v3267
      %vm3269 = vweird.f32 %v3108
      %vm3270 = vweird.f32 %v3264
      %vm3271 = vmor %vm3269, %vm3270
      %v3272 = vsel %vm3271, %v3264, %v3268
      %v3273 = vand.u32 2147483647, %v3108
      %vm3274 = vcmp.eq.f32.partialorder %v3273, 8.507059e+37
      %v3275 = vand.u32 %v3108, 2147483648
      %v3276 = vor.u32 1.1754944e-38, %v3275
      %v3277 = vsel %vm3274, %v3276, %v3272
      %v3278 = vmul.f32 1.0, %v3277
      %v3279 = vrcp.pop %v3109
      %v3280 = vmul.f32 %v3109, %v3279
      %v3281 = vsub.f32 1.0, %v3280
      %v3282 = vmul.f32 %v3279, %v3281
      %v3283 = vadd.f32 %v3279, %v3282
      %vm3284 = vweird.f32 %v3109
      %vm3285 = vweird.f32 %v3279
      %vm3286 = vmor %vm3284, %vm3285
      %v3287 = vsel %vm3286, %v3279, %v3283
      %v3288 = vand.u32 2147483647, %v3109
      %vm3289 = vcmp.eq.f32.partialorder %v3288, 8.507059e+37
      %v3290 = vand.u32 %v3109, 2147483648
      %v3291 = vor.u32 1.1754944e-38, %v3290
      %v3292 = vsel %vm3289, %v3291, %v3287
      %v3293 = vmul.f32 1.0, %v3292
      %v3294 = vrcp.pop %v3110
      %v3295 = vmul.f32 %v3110, %v3294
      %v3296 = vsub.f32 1.0, %v3295
      %v3297 = vmul.f32 %v3294, %v3296
      %v3298 = vadd.f32 %v3294, %v3297
      %vm3299 = vweird.f32 %v3110
      %vm3300 = vweird.f32 %v3294
      %vm3301 = vmor %vm3299, %vm3300
      %v3302 = vsel %vm3301, %v3294, %v3298
      %v3303 = vand.u32 2147483647, %v3110
      %vm3304 = vcmp.eq.f32.partialorder %v3303, 8.507059e+37
      %v3305 = vand.u32 %v3110, 2147483648
      %v3306 = vor.u32 1.1754944e-38, %v3305
      %v3307 = vsel %vm3304, %v3306, %v3302
      %v3308 = vmul.f32 1.0, %v3307
      %v3309 = vrcp.pop %v3111
      %v3310 = vmul.f32 %v3111, %v3309
      %v3311 = vsub.f32 1.0, %v3310
      %v3312 = vmul.f32 %v3309, %v3311
      %v3313 = vadd.f32 %v3309, %v3312
      %vm3314 = vweird.f32 %v3111
      %vm3315 = vweird.f32 %v3309
      %vm3316 = vmor %vm3314, %vm3315
      %v3317 = vsel %vm3316, %v3309, %v3313
      %v3318 = vand.u32 2147483647, %v3111
      %vm3319 = vcmp.eq.f32.partialorder %v3318, 8.507059e+37
      %v3320 = vand.u32 %v3111, 2147483648
      %v3321 = vor.u32 1.1754944e-38, %v3320
      %v3322 = vsel %vm3319, %v3321, %v3317
      %v3323 = vmul.f32 1.0, %v3322
      %v3324 = vrcp.pop %v3112
      %v3325 = vmul.f32 %v3112, %v3324
      %v3326 = vsub.f32 1.0, %v3325
      %v3327 = vmul.f32 %v3324, %v3326
      %v3328 = vadd.f32 %v3324, %v3327
      %vm3329 = vweird.f32 %v3112
      %vm3330 = vweird.f32 %v3324
      %vm3331 = vmor %vm3329, %vm3330
      %v3332 = vsel %vm3331, %v3324, %v3328
      %v3333 = vand.u32 2147483647, %v3112
      %vm3334 = vcmp.eq.f32.partialorder %v3333, 8.507059e+37
      %v3335 = vand.u32 %v3112, 2147483648
      %v3336 = vor.u32 1.1754944e-38, %v3335
      %v3337 = vsel %vm3334, %v3336, %v3332
      %v3338 = vmul.f32 1.0, %v3337
      %v3339 = vrcp.pop %v3113
      %v3340 = vmul.f32 %v3113, %v3339
      %v3341 = vsub.f32 1.0, %v3340
      %v3342 = vmul.f32 %v3339, %v3341
      %v3343 = vadd.f32 %v3339, %v3342
      %vm3344 = vweird.f32 %v3113
      %vm3345 = vweird.f32 %v3339
      %vm3346 = vmor %vm3344, %vm3345
      %v3347 = vsel %vm3346, %v3339, %v3343
      %v3348 = vand.u32 2147483647, %v3113
      %vm3349 = vcmp.eq.f32.partialorder %v3348, 8.507059e+37
      %v3350 = vand.u32 %v3113, 2147483648
      %v3351 = vor.u32 1.1754944e-38, %v3350
      %v3352 = vsel %vm3349, %v3351, %v3347
      %v3353 = vmul.f32 1.0, %v3352
      %v3354 = vrcp.pop %v3114
      %v3355 = vmul.f32 %v3114, %v3354
      %v3356 = vsub.f32 1.0, %v3355
      %v3357 = vmul.f32 %v3354, %v3356
      %v3358 = vadd.f32 %v3354, %v3357
      %vm3359 = vweird.f32 %v3114
      %vm3360 = vweird.f32 %v3354
      %vm3361 = vmor %vm3359, %vm3360
      %v3362 = vsel %vm3361, %v3354, %v3358
      %v3363 = vand.u32 2147483647, %v3114
      %vm3364 = vcmp.eq.f32.partialorder %v3363, 8.507059e+37
      %v3365 = vand.u32 %v3114, 2147483648
      %v3366 = vor.u32 1.1754944e-38, %v3365
      %v3367 = vsel %vm3364, %v3366, %v3362
      %v3368 = vmul.f32 1.0, %v3367
      %v3369 = vrcp.pop %v3115
      %v3370 = vmul.f32 %v3115, %v3369
      %v3371 = vsub.f32 1.0, %v3370
      %v3372 = vmul.f32 %v3369, %v3371
      %v3373 = vadd.f32 %v3369, %v3372
      %vm3374 = vweird.f32 %v3115
      %vm3375 = vweird.f32 %v3369
      %vm3376 = vmor %vm3374, %vm3375
      %v3377 = vsel %vm3376, %v3369, %v3373
      %v3378 = vand.u32 2147483647, %v3115
      %vm3379 = vcmp.eq.f32.partialorder %v3378, 8.507059e+37
      %v3380 = vand.u32 %v3115, 2147483648
      %v3381 = vor.u32 1.1754944e-38, %v3380
      %v3382 = vsel %vm3379, %v3381, %v3377
      %v3383 = vmul.f32 1.0, %v3382
      %v3384 = vrcp.pop %v3116
      %v3385 = vmul.f32 %v3116, %v3384
      %v3386 = vsub.f32 1.0, %v3385
      %v3387 = vmul.f32 %v3384, %v3386
      %v3388 = vadd.f32 %v3384, %v3387
      %vm3389 = vweird.f32 %v3116
      %vm3390 = vweird.f32 %v3384
      %vm3391 = vmor %vm3389, %vm3390
      %v3392 = vsel %vm3391, %v3384, %v3388
      %v3393 = vand.u32 2147483647, %v3116
      %vm3394 = vcmp.eq.f32.partialorder %v3393, 8.507059e+37
      %v3395 = vand.u32 %v3116, 2147483648
      %v3396 = vor.u32 1.1754944e-38, %v3395
      %v3397 = vsel %vm3394, %v3396, %v3392
      %v3398 = vmul.f32 1.0, %v3397
      %v3399 = vrcp.pop %v3117
      %v3400 = vmul.f32 %v3117, %v3399
      %v3401 = vsub.f32 1.0, %v3400
      %v3402 = vmul.f32 %v3399, %v3401
      %v3403 = vadd.f32 %v3399, %v3402
      %vm3404 = vweird.f32 %v3117
      %vm3405 = vweird.f32 %v3399
      %vm3406 = vmor %vm3404, %vm3405
      %v3407 = vsel %vm3406, %v3399, %v3403
      %v3408 = vand.u32 2147483647, %v3117
      %vm3409 = vcmp.eq.f32.partialorder %v3408, 8.507059e+37
      %v3410 = vand.u32 %v3117, 2147483648
      %v3411 = vor.u32 1.1754944e-38, %v3410
      %v3412 = vsel %vm3409, %v3411, %v3407
      %v3413 = vmul.f32 1.0, %v3412
      %v3414 = vrcp.pop %v3118
      %v3415 = vmul.f32 %v3118, %v3414
      %v3416 = vsub.f32 1.0, %v3415
      %v3417 = vmul.f32 %v3414, %v3416
      %v3418 = vadd.f32 %v3414, %v3417
      %vm3419 = vweird.f32 %v3118
      %vm3420 = vweird.f32 %v3414
      %vm3421 = vmor %vm3419, %vm3420
      %v3422 = vsel %vm3421, %v3414, %v3418
      %v3423 = vand.u32 2147483647, %v3118
      %vm3424 = vcmp.eq.f32.partialorder %v3423, 8.507059e+37
      %v3425 = vand.u32 %v3118, 2147483648
      %v3426 = vor.u32 1.1754944e-38, %v3425
      %v3427 = vsel %vm3424, %v3426, %v3422
      %v3428 = vmul.f32 1.0, %v3427
      %v3429 = vrcp.pop %v3119
      %v3430 = vmul.f32 %v3119, %v3429
      %v3431 = vsub.f32 1.0, %v3430
      %v3432 = vmul.f32 %v3429, %v3431
      %v3433 = vadd.f32 %v3429, %v3432
      %vm3434 = vweird.f32 %v3119
      %vm3435 = vweird.f32 %v3429
      %vm3436 = vmor %vm3434, %vm3435
      %v3437 = vsel %vm3436, %v3429, %v3433
      %v3438 = vand.u32 2147483647, %v3119
      %vm3439 = vcmp.eq.f32.partialorder %v3438, 8.507059e+37
      %v3440 = vand.u32 %v3119, 2147483648
      %v3441 = vor.u32 1.1754944e-38, %v3440
      %v3442 = vsel %vm3439, %v3441, %v3437
      %v3443 = vmul.f32 1.0, %v3442
      %v3444 = vrcp.pop %v3120
      %v3445 = vmul.f32 %v3120, %v3444
      %v3446 = vsub.f32 1.0, %v3445
      %v3447 = vmul.f32 %v3444, %v3446
      %v3448 = vadd.f32 %v3444, %v3447
      %vm3449 = vweird.f32 %v3120
      %vm3450 = vweird.f32 %v3444
      %vm3451 = vmor %vm3449, %vm3450
      %v3452 = vsel %vm3451, %v3444, %v3448
      %v3453 = vand.u32 2147483647, %v3120
      %vm3454 = vcmp.eq.f32.partialorder %v3453, 8.507059e+37
      %v3455 = vand.u32 %v3120, 2147483648
      %v3456 = vor.u32 1.1754944e-38, %v3455
      %v3457 = vsel %vm3454, %v3456, %v3452
      %v3458 = vmul.f32 1.0, %v3457
      %v3459 = vrcp.pop %v3121
      %v3460 = vmul.f32 %v3121, %v3459
      %v3461 = vsub.f32 1.0, %v3460
      %v3462 = vmul.f32 %v3459, %v3461
      %v3463 = vadd.f32 %v3459, %v3462
      %vm3464 = vweird.f32 %v3121
      %vm3465 = vweird.f32 %v3459
      %vm3466 = vmor %vm3464, %vm3465
      %v3467 = vsel %vm3466, %v3459, %v3463
      %v3468 = vand.u32 2147483647, %v3121
      %vm3469 = vcmp.eq.f32.partialorder %v3468, 8.507059e+37
      %v3470 = vand.u32 %v3121, 2147483648
      %v3471 = vor.u32 1.1754944e-38, %v3470
      %v3472 = vsel %vm3469, %v3471, %v3467
      %v3473 = vmul.f32 1.0, %v3472
      %v3474 = vrcp.pop %v3122
      %v3475 = vmul.f32 %v3122, %v3474
      %v3476 = vsub.f32 1.0, %v3475
      %v3477 = vmul.f32 %v3474, %v3476
      %v3478 = vadd.f32 %v3474, %v3477
      %vm3479 = vweird.f32 %v3122
      %vm3480 = vweird.f32 %v3474
      %vm3481 = vmor %vm3479, %vm3480
      %v3482 = vsel %vm3481, %v3474, %v3478
      %v3483 = vand.u32 2147483647, %v3122
      %vm3484 = vcmp.eq.f32.partialorder %v3483, 8.507059e+37
      %v3485 = vand.u32 %v3122, 2147483648
      %v3486 = vor.u32 1.1754944e-38, %v3485
      %v3487 = vsel %vm3484, %v3486, %v3482
      %v3488 = vmul.f32 1.0, %v3487
      %v3489 = vrcp.pop %v3123
      %v3490 = vmul.f32 %v3123, %v3489
      %v3491 = vsub.f32 1.0, %v3490
      %v3492 = vmul.f32 %v3489, %v3491
      %v3493 = vadd.f32 %v3489, %v3492
      %vm3494 = vweird.f32 %v3123
      %vm3495 = vweird.f32 %v3489
      %vm3496 = vmor %vm3494, %vm3495
      %v3497 = vsel %vm3496, %v3489, %v3493
      %v3498 = vand.u32 2147483647, %v3123
      %vm3499 = vcmp.eq.f32.partialorder %v3498, 8.507059e+37
      %v3500 = vand.u32 %v3123, 2147483648
      %v3501 = vor.u32 1.1754944e-38, %v3500
      %v3502 = vsel %vm3499, %v3501, %v3497
      %v3503 = vmul.f32 1.0, %v3502
      %v3504 = vrcp.pop %v3124
      %v3505 = vmul.f32 %v3124, %v3504
      %v3506 = vsub.f32 1.0, %v3505
      %v3507 = vmul.f32 %v3504, %v3506
      %v3508 = vadd.f32 %v3504, %v3507
      %vm3509 = vweird.f32 %v3124
      %vm3510 = vweird.f32 %v3504
      %vm3511 = vmor %vm3509, %vm3510
      %v3512 = vsel %vm3511, %v3504, %v3508
      %v3513 = vand.u32 2147483647, %v3124
      %vm3514 = vcmp.eq.f32.partialorder %v3513, 8.507059e+37
      %v3515 = vand.u32 %v3124, 2147483648
      %v3516 = vor.u32 1.1754944e-38, %v3515
      %v3517 = vsel %vm3514, %v3516, %v3512
      %v3518 = vmul.f32 1.0, %v3517
      %v3519 = vrcp.pop %v3125
      %v3520 = vmul.f32 %v3125, %v3519
      %v3521 = vsub.f32 1.0, %v3520
      %v3522 = vmul.f32 %v3519, %v3521
      %v3523 = vadd.f32 %v3519, %v3522
      %vm3524 = vweird.f32 %v3125
      %vm3525 = vweird.f32 %v3519
      %vm3526 = vmor %vm3524, %vm3525
      %v3527 = vsel %vm3526, %v3519, %v3523
      %v3528 = vand.u32 2147483647, %v3125
      %vm3529 = vcmp.eq.f32.partialorder %v3528, 8.507059e+37
      %v3530 = vand.u32 %v3125, 2147483648
      %v3531 = vor.u32 1.1754944e-38, %v3530
      %v3532 = vsel %vm3529, %v3531, %v3527
      %v3533 = vmul.f32 1.0, %v3532
      %v3534 = vrcp.pop %v3126
      %v3535 = vmul.f32 %v3126, %v3534
      %v3536 = vsub.f32 1.0, %v3535
      %v3537 = vmul.f32 %v3534, %v3536
      %v3538 = vadd.f32 %v3534, %v3537
      %vm3539 = vweird.f32 %v3126
      %vm3540 = vweird.f32 %v3534
      %vm3541 = vmor %vm3539, %vm3540
      %v3542 = vsel %vm3541, %v3534, %v3538
      %v3543 = vand.u32 2147483647, %v3126
      %vm3544 = vcmp.eq.f32.partialorder %v3543, 8.507059e+37
      %v3545 = vand.u32 %v3126, 2147483648
      %v3546 = vor.u32 1.1754944e-38, %v3545
      %v3547 = vsel %vm3544, %v3546, %v3542
      %v3548 = vmul.f32 1.0, %v3547
      %v3549 = vrcp.pop %v3127
      %v3550 = vmul.f32 %v3127, %v3549
      %v3551 = vsub.f32 1.0, %v3550
      %v3552 = vmul.f32 %v3549, %v3551
      %v3553 = vadd.f32 %v3549, %v3552
      %vm3554 = vweird.f32 %v3127
      %vm3555 = vweird.f32 %v3549
      %vm3556 = vmor %vm3554, %vm3555
      %v3557 = vsel %vm3556, %v3549, %v3553
      %v3558 = vand.u32 2147483647, %v3127
      %vm3559 = vcmp.eq.f32.partialorder %v3558, 8.507059e+37
      %v3560 = vand.u32 %v3127, 2147483648
      %v3561 = vor.u32 1.1754944e-38, %v3560
      %v3562 = vsel %vm3559, %v3561, %v3557
      %v3563 = vmul.f32 1.0, %v3562
      %v3564 = vrcp.pop %v3128
      %v3565 = vmul.f32 %v3128, %v3564
      %v3566 = vsub.f32 1.0, %v3565
      %v3567 = vmul.f32 %v3564, %v3566
      %v3568 = vadd.f32 %v3564, %v3567
      %vm3569 = vweird.f32 %v3128
      %vm3570 = vweird.f32 %v3564
      %vm3571 = vmor %vm3569, %vm3570
      %v3572 = vsel %vm3571, %v3564, %v3568
      %v3573 = vand.u32 2147483647, %v3128
      %vm3574 = vcmp.eq.f32.partialorder %v3573, 8.507059e+37
      %v3575 = vand.u32 %v3128, 2147483648
      %v3576 = vor.u32 1.1754944e-38, %v3575
      %v3577 = vsel %vm3574, %v3576, %v3572
      %v3578 = vmul.f32 1.0, %v3577
      %v3579 = vrcp.pop %v3129
      %v3580 = vmul.f32 %v3129, %v3579
      %v3581 = vsub.f32 1.0, %v3580
      %v3582 = vmul.f32 %v3579, %v3581
      %v3583 = vadd.f32 %v3579, %v3582
      %vm3584 = vweird.f32 %v3129
      %vm3585 = vweird.f32 %v3579
      %vm3586 = vmor %vm3584, %vm3585
      %v3587 = vsel %vm3586, %v3579, %v3583
      %v3588 = vand.u32 2147483647, %v3129
      %vm3589 = vcmp.eq.f32.partialorder %v3588, 8.507059e+37
      %v3590 = vand.u32 %v3129, 2147483648
      %v3591 = vor.u32 1.1754944e-38, %v3590
      %v3592 = vsel %vm3589, %v3591, %v3587
      %v3593 = vmul.f32 1.0, %v3592
      %v3594 = vrcp.pop %v3130
      %v3595 = vmul.f32 %v3130, %v3594
      %v3596 = vsub.f32 1.0, %v3595
      %v3597 = vmul.f32 %v3594, %v3596
      %v3598 = vadd.f32 %v3594, %v3597
      %vm3599 = vweird.f32 %v3130
      %vm3600 = vweird.f32 %v3594
      %vm3601 = vmor %vm3599, %vm3600
      %v3602 = vsel %vm3601, %v3594, %v3598
      %v3603 = vand.u32 2147483647, %v3130
      %vm3604 = vcmp.eq.f32.partialorder %v3603, 8.507059e+37
      %v3605 = vand.u32 %v3130, 2147483648
      %v3606 = vor.u32 1.1754944e-38, %v3605
      %v3607 = vsel %vm3604, %v3606, %v3602
      %v3608 = vmul.f32 1.0, %v3607
      %v3609 = vrcp.pop %v3131
      %v3610 = vmul.f32 %v3131, %v3609
      %v3611 = vsub.f32 1.0, %v3610
      %v3612 = vmul.f32 %v3609, %v3611
      %v3613 = vadd.f32 %v3609, %v3612
      %vm3614 = vweird.f32 %v3131
      %vm3615 = vweird.f32 %v3609
      %vm3616 = vmor %vm3614, %vm3615
      %v3617 = vsel %vm3616, %v3609, %v3613
      %v3618 = vand.u32 2147483647, %v3131
      %vm3619 = vcmp.eq.f32.partialorder %v3618, 8.507059e+37
      %v3620 = vand.u32 %v3131, 2147483648
      %v3621 = vor.u32 1.1754944e-38, %v3620
      %v3622 = vsel %vm3619, %v3621, %v3617
      %v3623 = vmul.f32 1.0, %v3622
      %v3624 = vrcp.pop %v3132
      %v3625 = vmul.f32 %v3132, %v3624
      %v3626 = vsub.f32 1.0, %v3625
      %v3627 = vmul.f32 %v3624, %v3626
      %v3628 = vadd.f32 %v3624, %v3627
      %vm3629 = vweird.f32 %v3132
      %vm3630 = vweird.f32 %v3624
      %vm3631 = vmor %vm3629, %vm3630
      %v3632 = vsel %vm3631, %v3624, %v3628
      %v3633 = vand.u32 2147483647, %v3132
      %vm3634 = vcmp.eq.f32.partialorder %v3633, 8.507059e+37
      %v3635 = vand.u32 %v3132, 2147483648
      %v3636 = vor.u32 1.1754944e-38, %v3635
      %v3637 = vsel %vm3634, %v3636, %v3632
      %v3638 = vmul.f32 1.0, %v3637
      %v3639 = vrcp.pop %v3133
      %v3640 = vmul.f32 %v3133, %v3639
      %v3641 = vsub.f32 1.0, %v3640
      %v3642 = vmul.f32 %v3639, %v3641
      %v3643 = vadd.f32 %v3639, %v3642
      %vm3644 = vweird.f32 %v3133
      %vm3645 = vweird.f32 %v3639
      %vm3646 = vmor %vm3644, %vm3645
      %v3647 = vsel %vm3646, %v3639, %v3643
      %v3648 = vand.u32 2147483647, %v3133
      %vm3649 = vcmp.eq.f32.partialorder %v3648, 8.507059e+37
      %v3650 = vand.u32 %v3133, 2147483648
      %v3651 = vor.u32 1.1754944e-38, %v3650
      %v3652 = vsel %vm3649, %v3651, %v3647
      %v3653 = vmul.f32 1.0, %v3652
      %v3654 = vrcp.pop %v3134
      %v3655 = vmul.f32 %v3134, %v3654
      %v3656 = vsub.f32 1.0, %v3655
      %v3657 = vmul.f32 %v3654, %v3656
      %v3658 = vadd.f32 %v3654, %v3657
      %vm3659 = vweird.f32 %v3134
      %vm3660 = vweird.f32 %v3654
      %vm3661 = vmor %vm3659, %vm3660
      %v3662 = vsel %vm3661, %v3654, %v3658
      %v3663 = vand.u32 2147483647, %v3134
      %vm3664 = vcmp.eq.f32.partialorder %v3663, 8.507059e+37
      %v3665 = vand.u32 %v3134, 2147483648
      %v3666 = vor.u32 1.1754944e-38, %v3665
      %v3667 = vsel %vm3664, %v3666, %v3662
      %v3668 = vmul.f32 1.0, %v3667
      %v3669 = vrcp.pop %v3135
      %v3670 = vmul.f32 %v3135, %v3669
      %v3671 = vsub.f32 1.0, %v3670
      %v3672 = vmul.f32 %v3669, %v3671
      %v3673 = vadd.f32 %v3669, %v3672
      %vm3674 = vweird.f32 %v3135
      %vm3675 = vweird.f32 %v3669
      %vm3676 = vmor %vm3674, %vm3675
      %v3677 = vsel %vm3676, %v3669, %v3673
      %v3678 = vand.u32 2147483647, %v3135
      %vm3679 = vcmp.eq.f32.partialorder %v3678, 8.507059e+37
      %v3680 = vand.u32 %v3135, 2147483648
      %v3681 = vor.u32 1.1754944e-38, %v3680
      %v3682 = vsel %vm3679, %v3681, %v3677
      %v3683 = vmul.f32 1.0, %v3682
      %v3684 = vrcp.pop %v3136
      %v3685 = vmul.f32 %v3136, %v3684
      %v3686 = vsub.f32 1.0, %v3685
      %v3687 = vmul.f32 %v3684, %v3686
      %v3688 = vadd.f32 %v3684, %v3687
      %vm3689 = vweird.f32 %v3136
      %vm3690 = vweird.f32 %v3684
      %vm3691 = vmor %vm3689, %vm3690
      %v3692 = vsel %vm3691, %v3684, %v3688
      %v3693 = vand.u32 2147483647, %v3136
      %vm3694 = vcmp.eq.f32.partialorder %v3693, 8.507059e+37
      %v3695 = vand.u32 %v3136, 2147483648
      %v3696 = vor.u32 1.1754944e-38, %v3695
      %v3697 = vsel %vm3694, %v3696, %v3692
      %v3698 = vmul.f32 1.0, %v3697
      %v3699 = vrcp.pop %v3137
      %v3700 = vmul.f32 %v3137, %v3699
      %v3701 = vsub.f32 1.0, %v3700
      %v3702 = vmul.f32 %v3699, %v3701
      %v3703 = vadd.f32 %v3699, %v3702
      %vm3704 = vweird.f32 %v3137
      %vm3705 = vweird.f32 %v3699
      %vm3706 = vmor %vm3704, %vm3705
      %v3707 = vsel %vm3706, %v3699, %v3703
      %v3708 = vand.u32 2147483647, %v3137
      %vm3709 = vcmp.eq.f32.partialorder %v3708, 8.507059e+37
      %v3710 = vand.u32 %v3137, 2147483648
      %v3711 = vor.u32 1.1754944e-38, %v3710
      %v3712 = vsel %vm3709, %v3711, %v3707
      %v3713 = vmul.f32 1.0, %v3712
      %v3714 = vrcp.pop %v3138
      %v3715 = vmul.f32 %v3138, %v3714
      %v3716 = vsub.f32 1.0, %v3715
      %v3717 = vmul.f32 %v3714, %v3716
      %v3718 = vadd.f32 %v3714, %v3717
      %vm3719 = vweird.f32 %v3138
      %vm3720 = vweird.f32 %v3714
      %vm3721 = vmor %vm3719, %vm3720
      %v3722 = vsel %vm3721, %v3714, %v3718
      %v3723 = vand.u32 2147483647, %v3138
      %vm3724 = vcmp.eq.f32.partialorder %v3723, 8.507059e+37
      %v3725 = vand.u32 %v3138, 2147483648
      %v3726 = vor.u32 1.1754944e-38, %v3725
      %v3727 = vsel %vm3724, %v3726, %v3722
      %v3728 = vmul.f32 1.0, %v3727
      %v3729 = vrcp.pop %v3139
      %v3730 = vmul.f32 %v3139, %v3729
      %v3731 = vsub.f32 1.0, %v3730
      %v3732 = vmul.f32 %v3729, %v3731
      %v3733 = vadd.f32 %v3729, %v3732
      %vm3734 = vweird.f32 %v3139
      %vm3735 = vweird.f32 %v3729
      %vm3736 = vmor %vm3734, %vm3735
      %v3737 = vsel %vm3736, %v3729, %v3733
      %v3738 = vand.u32 2147483647, %v3139
      %vm3739 = vcmp.eq.f32.partialorder %v3738, 8.507059e+37
      %v3740 = vand.u32 %v3139, 2147483648
      %v3741 = vor.u32 1.1754944e-38, %v3740
      %v3742 = vsel %vm3739, %v3741, %v3737
      %v3743 = vmul.f32 1.0, %v3742
      %v3744 = vrcp.pop %v3140
      %v3745 = vmul.f32 %v3140, %v3744
      %v3746 = vsub.f32 1.0, %v3745
      %v3747 = vmul.f32 %v3744, %v3746
      %v3748 = vadd.f32 %v3744, %v3747
      %vm3749 = vweird.f32 %v3140
      %vm3750 = vweird.f32 %v3744
      %vm3751 = vmor %vm3749, %vm3750
      %v3752 = vsel %vm3751, %v3744, %v3748
      %v3753 = vand.u32 2147483647, %v3140
      %vm3754 = vcmp.eq.f32.partialorder %v3753, 8.507059e+37
      %v3755 = vand.u32 %v3140, 2147483648
      %v3756 = vor.u32 1.1754944e-38, %v3755
      %v3757 = vsel %vm3754, %v3756, %v3752
      %v3758 = vmul.f32 1.0, %v3757
      %v3759 = vrcp.pop %v3141
      %v3760 = vmul.f32 %v3141, %v3759
      %v3761 = vsub.f32 1.0, %v3760
      %v3762 = vmul.f32 %v3759, %v3761
      %v3763 = vadd.f32 %v3759, %v3762
      %vm3764 = vweird.f32 %v3141
      %vm3765 = vweird.f32 %v3759
      %vm3766 = vmor %vm3764, %vm3765
      %v3767 = vsel %vm3766, %v3759, %v3763
      %v3768 = vand.u32 2147483647, %v3141
      %vm3769 = vcmp.eq.f32.partialorder %v3768, 8.507059e+37
      %v3770 = vand.u32 %v3141, 2147483648
      %v3771 = vor.u32 1.1754944e-38, %v3770
      %v3772 = vsel %vm3769, %v3771, %v3767
      %v3773 = vmul.f32 1.0, %v3772
      %v3774 = vrcp.pop %v3142
      %v3775 = vmul.f32 %v3142, %v3774
      %v3776 = vsub.f32 1.0, %v3775
      %v3777 = vmul.f32 %v3774, %v3776
      %v3778 = vadd.f32 %v3774, %v3777
      %vm3779 = vweird.f32 %v3142
      %vm3780 = vweird.f32 %v3774
      %vm3781 = vmor %vm3779, %vm3780
      %v3782 = vsel %vm3781, %v3774, %v3778
      %v3783 = vand.u32 2147483647, %v3142
      %vm3784 = vcmp.eq.f32.partialorder %v3783, 8.507059e+37
      %v3785 = vand.u32 %v3142, 2147483648
      %v3786 = vor.u32 1.1754944e-38, %v3785
      %v3787 = vsel %vm3784, %v3786, %v3782
      %v3788 = vmul.f32 1.0, %v3787
      %v3789 = vrcp.pop %v3143
      %v3790 = vmul.f32 %v3143, %v3789
      %v3791 = vsub.f32 1.0, %v3790
      %v3792 = vmul.f32 %v3789, %v3791
      %v3793 = vadd.f32 %v3789, %v3792
      %vm3794 = vweird.f32 %v3143
      %vm3795 = vweird.f32 %v3789
      %vm3796 = vmor %vm3794, %vm3795
      %v3797 = vsel %vm3796, %v3789, %v3793
      %v3798 = vand.u32 2147483647, %v3143
      %vm3799 = vcmp.eq.f32.partialorder %v3798, 8.507059e+37
      %v3800 = vand.u32 %v3143, 2147483648
      %v3801 = vor.u32 1.1754944e-38, %v3800
      %v3802 = vsel %vm3799, %v3801, %v3797
      %v3803 = vmul.f32 1.0, %v3802
      %v3804 = vrcp.pop %v3144
      %v3805 = vmul.f32 %v3144, %v3804
      %v3806 = vsub.f32 1.0, %v3805
      %v3807 = vmul.f32 %v3804, %v3806
      %v3808 = vadd.f32 %v3804, %v3807
      %vm3809 = vweird.f32 %v3144
      %vm3810 = vweird.f32 %v3804
      %vm3811 = vmor %vm3809, %vm3810
      %v3812 = vsel %vm3811, %v3804, %v3808
      %v3813 = vand.u32 2147483647, %v3144
      %vm3814 = vcmp.eq.f32.partialorder %v3813, 8.507059e+37
      %v3815 = vand.u32 %v3144, 2147483648
      %v3816 = vor.u32 1.1754944e-38, %v3815
      %v3817 = vsel %vm3814, %v3816, %v3812
      %v3818 = vmul.f32 1.0, %v3817
      %v3819 = vrcp.pop %v3145
      %v3820 = vmul.f32 %v3145, %v3819
      %v3821 = vsub.f32 1.0, %v3820
      %v3822 = vmul.f32 %v3819, %v3821
      %v3823 = vadd.f32 %v3819, %v3822
      %vm3824 = vweird.f32 %v3145
      %vm3825 = vweird.f32 %v3819
      %vm3826 = vmor %vm3824, %vm3825
      %v3827 = vsel %vm3826, %v3819, %v3823
      %v3828 = vand.u32 2147483647, %v3145
      %vm3829 = vcmp.eq.f32.partialorder %v3828, 8.507059e+37
      %v3830 = vand.u32 %v3145, 2147483648
      %v3831 = vor.u32 1.1754944e-38, %v3830
      %v3832 = vsel %vm3829, %v3831, %v3827
      %v3833 = vmul.f32 1.0, %v3832
      %v3834 = vrcp.pop %v3146
      %v3835 = vmul.f32 %v3146, %v3834
      %v3836 = vsub.f32 1.0, %v3835
      %v3837 = vmul.f32 %v3834, %v3836
      %v3838 = vadd.f32 %v3834, %v3837
      %vm3839 = vweird.f32 %v3146
      %vm3840 = vweird.f32 %v3834
      %vm3841 = vmor %vm3839, %vm3840
      %v3842 = vsel %vm3841, %v3834, %v3838
      %v3843 = vand.u32 2147483647, %v3146
      %vm3844 = vcmp.eq.f32.partialorder %v3843, 8.507059e+37
      %v3845 = vand.u32 %v3146, 2147483648
      %v3846 = vor.u32 1.1754944e-38, %v3845
      %v3847 = vsel %vm3844, %v3846, %v3842
      %v3848 = vmul.f32 1.0, %v3847
      %v3849 = vrcp.pop %v3147
      %v3850 = vmul.f32 %v3147, %v3849
      %v3851 = vsub.f32 1.0, %v3850
      %v3852 = vmul.f32 %v3849, %v3851
      %v3853 = vadd.f32 %v3849, %v3852
      %vm3854 = vweird.f32 %v3147
      %vm3855 = vweird.f32 %v3849
      %vm3856 = vmor %vm3854, %vm3855
      %v3857 = vsel %vm3856, %v3849, %v3853
      %v3858 = vand.u32 2147483647, %v3147
      %vm3859 = vcmp.eq.f32.partialorder %v3858, 8.507059e+37
      %v3860 = vand.u32 %v3147, 2147483648
      %v3861 = vor.u32 1.1754944e-38, %v3860
      %v3862 = vsel %vm3859, %v3861, %v3857
      %v3863 = vmul.f32 1.0, %v3862
      %v3864 = vrcp.pop %v3148
      %v3865 = vmul.f32 %v3148, %v3864
      %v3866 = vsub.f32 1.0, %v3865
      %v3867 = vmul.f32 %v3864, %v3866
      %v3868 = vadd.f32 %v3864, %v3867
      %vm3869 = vweird.f32 %v3148
      %vm3870 = vweird.f32 %v3864
      %vm3871 = vmor %vm3869, %vm3870
      %v3872 = vsel %vm3871, %v3864, %v3868
      %v3873 = vand.u32 2147483647, %v3148
      %vm3874 = vcmp.eq.f32.partialorder %v3873, 8.507059e+37
      %v3875 = vand.u32 %v3148, 2147483648
      %v3876 = vor.u32 1.1754944e-38, %v3875
      %v3877 = vsel %vm3874, %v3876, %v3872
      %v3878 = vmul.f32 1.0, %v3877
      %v3879 = vrcp.pop %v3149
      %v3880 = vmul.f32 %v3149, %v3879
      %v3881 = vsub.f32 1.0, %v3880
      %v3882 = vmul.f32 %v3879, %v3881
      %v3883 = vadd.f32 %v3879, %v3882
      %vm3884 = vweird.f32 %v3149
      %vm3885 = vweird.f32 %v3879
      %vm3886 = vmor %vm3884, %vm3885
      %v3887 = vsel %vm3886, %v3879, %v3883
      %v3888 = vand.u32 2147483647, %v3149
      %vm3889 = vcmp.eq.f32.partialorder %v3888, 8.507059e+37
      %v3890 = vand.u32 %v3149, 2147483648
      %v3891 = vor.u32 1.1754944e-38, %v3890
      %v3892 = vsel %vm3889, %v3891, %v3887
      %v3893 = vmul.f32 1.0, %v3892
      %v3894 = vrcp.pop %v3150
      %v3895 = vmul.f32 %v3150, %v3894
      %v3896 = vsub.f32 1.0, %v3895
      %v3897 = vmul.f32 %v3894, %v3896
      %v3898 = vadd.f32 %v3894, %v3897
      %vm3899 = vweird.f32 %v3150
      %vm3900 = vweird.f32 %v3894
      %vm3901 = vmor %vm3899, %vm3900
      %v3902 = vsel %vm3901, %v3894, %v3898
      %v3903 = vand.u32 2147483647, %v3150
      %vm3904 = vcmp.eq.f32.partialorder %v3903, 8.507059e+37
      %v3905 = vand.u32 %v3150, 2147483648
      %v3906 = vor.u32 1.1754944e-38, %v3905
      %v3907 = vsel %vm3904, %v3906, %v3902
      %v3908 = vmul.f32 1.0, %v3907
      %v3909 = vrcp.pop %v3151
      %v3910 = vmul.f32 %v3151, %v3909
      %v3911 = vsub.f32 1.0, %v3910
      %v3912 = vmul.f32 %v3909, %v3911
      %v3913 = vadd.f32 %v3909, %v3912
      %vm3914 = vweird.f32 %v3151
      %vm3915 = vweird.f32 %v3909
      %vm3916 = vmor %vm3914, %vm3915
      %v3917 = vsel %vm3916, %v3909, %v3913
      %v3918 = vand.u32 2147483647, %v3151
      %vm3919 = vcmp.eq.f32.partialorder %v3918, 8.507059e+37
      %v3920 = vand.u32 %v3151, 2147483648
      %v3921 = vor.u32 1.1754944e-38, %v3920
      %v3922 = vsel %vm3919, %v3921, %v3917
      %v3923 = vmul.f32 1.0, %v3922
      %v3924 = vrcp.pop %v3152
      %v3925 = vmul.f32 %v3152, %v3924
      %v3926 = vsub.f32 1.0, %v3925
      %v3927 = vmul.f32 %v3924, %v3926
      %v3928 = vadd.f32 %v3924, %v3927
      %vm3929 = vweird.f32 %v3152
      %vm3930 = vweird.f32 %v3924
      %vm3931 = vmor %vm3929, %vm3930
      %v3932 = vsel %vm3931, %v3924, %v3928
      %v3933 = vand.u32 2147483647, %v3152
      %vm3934 = vcmp.eq.f32.partialorder %v3933, 8.507059e+37
      %v3935 = vand.u32 %v3152, 2147483648
      %v3936 = vor.u32 1.1754944e-38, %v3935
      %v3937 = vsel %vm3934, %v3936, %v3932
      %v3938 = vmul.f32 1.0, %v3937
      %v3939 = vrcp.pop %v3153
      %v3940 = vmul.f32 %v3153, %v3939
      %v3941 = vsub.f32 1.0, %v3940
      %v3942 = vmul.f32 %v3939, %v3941
      %v3943 = vadd.f32 %v3939, %v3942
      %vm3944 = vweird.f32 %v3153
      %vm3945 = vweird.f32 %v3939
      %vm3946 = vmor %vm3944, %vm3945
      %v3947 = vsel %vm3946, %v3939, %v3943
      %v3948 = vand.u32 2147483647, %v3153
      %vm3949 = vcmp.eq.f32.partialorder %v3948, 8.507059e+37
      %v3950 = vand.u32 %v3153, 2147483648
      %v3951 = vor.u32 1.1754944e-38, %v3950
      %v3952 = vsel %vm3949, %v3951, %v3947
      %v3953 = vmul.f32 1.0, %v3952
      %v3954 = vrcp.pop %v3154
      %v3955 = vmul.f32 %v3154, %v3954
      %v3956 = vsub.f32 1.0, %v3955
      %v3957 = vmul.f32 %v3954, %v3956
      %v3958 = vadd.f32 %v3954, %v3957
      %vm3959 = vweird.f32 %v3154
      %vm3960 = vweird.f32 %v3954
      %vm3961 = vmor %vm3959, %vm3960
      %v3962 = vsel %vm3961, %v3954, %v3958
      %v3963 = vand.u32 2147483647, %v3154
      %vm3964 = vcmp.eq.f32.partialorder %v3963, 8.507059e+37
      %v3965 = vand.u32 %v3154, 2147483648
      %v3966 = vor.u32 1.1754944e-38, %v3965
      %v3967 = vsel %vm3964, %v3966, %v3962
      %v3968 = vmul.f32 1.0, %v3967
      %v3969 = vrcp.pop %v3155
      %v3970 = vmul.f32 %v3155, %v3969
      %v3971 = vsub.f32 1.0, %v3970
      %v3972 = vmul.f32 %v3969, %v3971
      %v3973 = vadd.f32 %v3969, %v3972
      %vm3974 = vweird.f32 %v3155
      %vm3975 = vweird.f32 %v3969
      %vm3976 = vmor %vm3974, %vm3975
      %v3977 = vsel %vm3976, %v3969, %v3973
      %v3978 = vand.u32 2147483647, %v3155
      %vm3979 = vcmp.eq.f32.partialorder %v3978, 8.507059e+37
      %v3980 = vand.u32 %v3155, 2147483648
      %v3981 = vor.u32 1.1754944e-38, %v3980
      %v3982 = vsel %vm3979, %v3981, %v3977
      %v3983 = vmul.f32 1.0, %v3982
      %v3984 = vrcp.pop %v3156
      %v3985 = vmul.f32 %v3156, %v3984
      %v3986 = vsub.f32 1.0, %v3985
      %v3987 = vmul.f32 %v3984, %v3986
      %v3988 = vadd.f32 %v3984, %v3987
      %vm3989 = vweird.f32 %v3156
      %vm3990 = vweird.f32 %v3984
      %vm3991 = vmor %vm3989, %vm3990
      %v3992 = vsel %vm3991, %v3984, %v3988
      %v3993 = vand.u32 2147483647, %v3156
      %vm3994 = vcmp.eq.f32.partialorder %v3993, 8.507059e+37
      %v3995 = vand.u32 %v3156, 2147483648
      %v3996 = vor.u32 1.1754944e-38, %v3995
      %v3997 = vsel %vm3994, %v3996, %v3992
      %v3998 = vmul.f32 1.0, %v3997
      %v3999 = vrcp.pop %v3157
      %v4000 = vmul.f32 %v3157, %v3999
      %v4001 = vsub.f32 1.0, %v4000
      %v4002 = vmul.f32 %v3999, %v4001
      %v4003 = vadd.f32 %v3999, %v4002
      %vm4004 = vweird.f32 %v3157
      %vm4005 = vweird.f32 %v3999
      %vm4006 = vmor %vm4004, %vm4005
      %v4007 = vsel %vm4006, %v3999, %v4003
      %v4008 = vand.u32 2147483647, %v3157
      %vm4009 = vcmp.eq.f32.partialorder %v4008, 8.507059e+37
      %v4010 = vand.u32 %v3157, 2147483648
      %v4011 = vor.u32 1.1754944e-38, %v4010
      %v4012 = vsel %vm4009, %v4011, %v4007
      %v4013 = vmul.f32 1.0, %v4012
      %v4014 = vrcp.pop %v3158
      %v4015 = vmul.f32 %v3158, %v4014
      %v4016 = vsub.f32 1.0, %v4015
      %v4017 = vmul.f32 %v4014, %v4016
      %v4018 = vadd.f32 %v4014, %v4017
      %vm4019 = vweird.f32 %v3158
      %vm4020 = vweird.f32 %v4014
      %vm4021 = vmor %vm4019, %vm4020
      %v4022 = vsel %vm4021, %v4014, %v4018
      %v4023 = vand.u32 2147483647, %v3158
      %vm4024 = vcmp.eq.f32.partialorder %v4023, 8.507059e+37
      %v4025 = vand.u32 %v3158, 2147483648
      %v4026 = vor.u32 1.1754944e-38, %v4025
      %v4027 = vsel %vm4024, %v4026, %v4022
      %v4028 = vmul.f32 1.0, %v4027
      %v4029 = vrcp.pop %v3159
      %v4030 = vmul.f32 %v3159, %v4029
      %v4031 = vsub.f32 1.0, %v4030
      %v4032 = vmul.f32 %v4029, %v4031
      %v4033 = vadd.f32 %v4029, %v4032
      %vm4034 = vweird.f32 %v3159
      %vm4035 = vweird.f32 %v4029
      %vm4036 = vmor %vm4034, %vm4035
      %v4037 = vsel %vm4036, %v4029, %v4033
      %v4038 = vand.u32 2147483647, %v3159
      %vm4039 = vcmp.eq.f32.partialorder %v4038, 8.507059e+37
      %v4040 = vand.u32 %v3159, 2147483648
      %v4041 = vor.u32 1.1754944e-38, %v4040
      %v4042 = vsel %vm4039, %v4041, %v4037
      %v4043 = vmul.f32 1.0, %v4042
      %v4044 = vrcp.pop %v3160
      %v4045 = vmul.f32 %v3160, %v4044
      %v4046 = vsub.f32 1.0, %v4045
      %v4047 = vmul.f32 %v4044, %v4046
      %v4048 = vadd.f32 %v4044, %v4047
      %vm4049 = vweird.f32 %v3160
      %vm4050 = vweird.f32 %v4044
      %vm4051 = vmor %vm4049, %vm4050
      %v4052 = vsel %vm4051, %v4044, %v4048
      %v4053 = vand.u32 2147483647, %v3160
      %vm4054 = vcmp.eq.f32.partialorder %v4053, 8.507059e+37
      %v4055 = vand.u32 %v3160, 2147483648
      %v4056 = vor.u32 1.1754944e-38, %v4055
      %v4057 = vsel %vm4054, %v4056, %v4052
      %v4058 = vmul.f32 1.0, %v4057
      %v4059 = vrcp.pop %v3161
      %v4060 = vmul.f32 %v3161, %v4059
      %v4061 = vsub.f32 1.0, %v4060
      %v4062 = vmul.f32 %v4059, %v4061
      %v4063 = vadd.f32 %v4059, %v4062
      %vm4064 = vweird.f32 %v3161
      %vm4065 = vweird.f32 %v4059
      %vm4066 = vmor %vm4064, %vm4065
      %v4067 = vsel %vm4066, %v4059, %v4063
      %v4068 = vand.u32 2147483647, %v3161
      %vm4069 = vcmp.eq.f32.partialorder %v4068, 8.507059e+37
      %v4070 = vand.u32 %v3161, 2147483648
      %v4071 = vor.u32 1.1754944e-38, %v4070
      %v4072 = vsel %vm4069, %v4071, %v4067
      %v4073 = vmul.f32 1.0, %v4072
      %v4074 = vrcp.pop %v3162
      %v4075 = vmul.f32 %v3162, %v4074
      %v4076 = vsub.f32 1.0, %v4075
      %v4077 = vmul.f32 %v4074, %v4076
      %v4078 = vadd.f32 %v4074, %v4077
      %vm4079 = vweird.f32 %v3162
      %vm4080 = vweird.f32 %v4074
      %vm4081 = vmor %vm4079, %vm4080
      %v4082 = vsel %vm4081, %v4074, %v4078
      %v4083 = vand.u32 2147483647, %v3162
      %vm4084 = vcmp.eq.f32.partialorder %v4083, 8.507059e+37
      %v4085 = vand.u32 %v3162, 2147483648
      %v4086 = vor.u32 1.1754944e-38, %v4085
      %v4087 = vsel %vm4084, %v4086, %v4082
      %v4088 = vmul.f32 1.0, %v4087
      %v4089 = vrcp.pop %v3163
      %v4090 = vmul.f32 %v3163, %v4089
      %v4091 = vsub.f32 1.0, %v4090
      %v4092 = vmul.f32 %v4089, %v4091
      %v4093 = vadd.f32 %v4089, %v4092
      %vm4094 = vweird.f32 %v3163
      %vm4095 = vweird.f32 %v4089
      %vm4096 = vmor %vm4094, %vm4095
      %v4097 = vsel %vm4096, %v4089, %v4093
      %v4098 = vand.u32 2147483647, %v3163
      %vm4099 = vcmp.eq.f32.partialorder %v4098, 8.507059e+37
      %v4100 = vand.u32 %v3163, 2147483648
      %v4101 = vor.u32 1.1754944e-38, %v4100
      %v4102 = vsel %vm4099, %v4101, %v4097
      %v4103 = vmul.f32 1.0, %v4102
      %v4104 = vrcp.pop %v3164
      %v4105 = vmul.f32 %v3164, %v4104
      %v4106 = vsub.f32 1.0, %v4105
      %v4107 = vmul.f32 %v4104, %v4106
      %v4108 = vadd.f32 %v4104, %v4107
      %vm4109 = vweird.f32 %v3164
      %vm4110 = vweird.f32 %v4104
      %vm4111 = vmor %vm4109, %vm4110
      %v4112 = vsel %vm4111, %v4104, %v4108
      %v4113 = vand.u32 2147483647, %v3164
      %vm4114 = vcmp.eq.f32.partialorder %v4113, 8.507059e+37
      %v4115 = vand.u32 %v3164, 2147483648
      %v4116 = vor.u32 1.1754944e-38, %v4115
      %v4117 = vsel %vm4114, %v4116, %v4112
      %v4118 = vmul.f32 1.0, %v4117
      %v4119 = vrcp.pop %v3165
      %v4120 = vmul.f32 %v3165, %v4119
      %v4121 = vsub.f32 1.0, %v4120
      %v4122 = vmul.f32 %v4119, %v4121
      %v4123 = vadd.f32 %v4119, %v4122
      %vm4124 = vweird.f32 %v3165
      %vm4125 = vweird.f32 %v4119
      %vm4126 = vmor %vm4124, %vm4125
      %v4127 = vsel %vm4126, %v4119, %v4123
      %v4128 = vand.u32 2147483647, %v3165
      %vm4129 = vcmp.eq.f32.partialorder %v4128, 8.507059e+37
      %v4130 = vand.u32 %v3165, 2147483648
      %v4131 = vor.u32 1.1754944e-38, %v4130
      %v4132 = vsel %vm4129, %v4131, %v4127
      %v4133 = vmul.f32 1.0, %v4132
      %v4134 = vrcp.pop %v3166
      %v4135 = vmul.f32 %v3166, %v4134
      %v4136 = vsub.f32 1.0, %v4135
      %v4137 = vmul.f32 %v4134, %v4136
      %v4138 = vadd.f32 %v4134, %v4137
      %vm4139 = vweird.f32 %v3166
      %vm4140 = vweird.f32 %v4134
      %vm4141 = vmor %vm4139, %vm4140
      %v4142 = vsel %vm4141, %v4134, %v4138
      %v4143 = vand.u32 2147483647, %v3166
      %vm4144 = vcmp.eq.f32.partialorder %v4143, 8.507059e+37
      %v4145 = vand.u32 %v3166, 2147483648
      %v4146 = vor.u32 1.1754944e-38, %v4145
      %v4147 = vsel %vm4144, %v4146, %v4142
      %v4148 = vmul.f32 1.0, %v4147
      %v4149 = vrcp.pop %v3167
      %v4150 = vmul.f32 %v3167, %v4149
      %v4151 = vsub.f32 1.0, %v4150
      %v4152 = vmul.f32 %v4149, %v4151
      %v4153 = vadd.f32 %v4149, %v4152
      %vm4154 = vweird.f32 %v3167
      %vm4155 = vweird.f32 %v4149
      %vm4156 = vmor %vm4154, %vm4155
      %v4157 = vsel %vm4156, %v4149, %v4153
      %v4158 = vand.u32 2147483647, %v3167
      %vm4159 = vcmp.eq.f32.partialorder %v4158, 8.507059e+37
      %v4160 = vand.u32 %v3167, 2147483648
      %v4161 = vor.u32 1.1754944e-38, %v4160
      %v4162 = vsel %vm4159, %v4161, %v4157
      %v4163 = vmul.f32 1.0, %v4162
      %v4164 = vrcp.pop %v3168
      %v4165 = vmul.f32 %v3168, %v4164
      %v4166 = vsub.f32 1.0, %v4165
      %v4167 = vmul.f32 %v4164, %v4166
      %v4168 = vadd.f32 %v4164, %v4167
      %vm4169 = vweird.f32 %v3168
      %vm4170 = vweird.f32 %v4164
      %vm4171 = vmor %vm4169, %vm4170
      %v4172 = vsel %vm4171, %v4164, %v4168
      %v4173 = vand.u32 2147483647, %v3168
      %vm4174 = vcmp.eq.f32.partialorder %v4173, 8.507059e+37
      %v4175 = vand.u32 %v3168, 2147483648
      %v4176 = vor.u32 1.1754944e-38, %v4175
      %v4177 = vsel %vm4174, %v4176, %v4172
      %v4178 = vmul.f32 1.0, %v4177
      %v4179 = vrcp.pop %v3169
      %v4180 = vmul.f32 %v3169, %v4179
      %v4181 = vsub.f32 1.0, %v4180
      %v4182 = vmul.f32 %v4179, %v4181
      %v4183 = vadd.f32 %v4179, %v4182
      %vm4184 = vweird.f32 %v3169
      %vm4185 = vweird.f32 %v4179
      %vm4186 = vmor %vm4184, %vm4185
      %v4187 = vsel %vm4186, %v4179, %v4183
      %v4188 = vand.u32 2147483647, %v3169
      %vm4189 = vcmp.eq.f32.partialorder %v4188, 8.507059e+37
      %v4190 = vand.u32 %v3169, 2147483648
      %v4191 = vor.u32 1.1754944e-38, %v4190
      %v4192 = vsel %vm4189, %v4191, %v4187
      %v4193 = vmul.f32 1.0, %v4192
      %v4194 = vrcp.pop %v3170
      %v4195 = vmul.f32 %v3170, %v4194
      %v4196 = vsub.f32 1.0, %v4195
      %v4197 = vmul.f32 %v4194, %v4196
      %v4198 = vadd.f32 %v4194, %v4197
      %vm4199 = vweird.f32 %v3170
      %vm4200 = vweird.f32 %v4194
      %vm4201 = vmor %vm4199, %vm4200
      %v4202 = vsel %vm4201, %v4194, %v4198
      %v4203 = vand.u32 2147483647, %v3170
      %vm4204 = vcmp.eq.f32.partialorder %v4203, 8.507059e+37
      %v4205 = vand.u32 %v3170, 2147483648
      %v4206 = vor.u32 1.1754944e-38, %v4205
      %v4207 = vsel %vm4204, %v4206, %v4202
      %v4208 = vmul.f32 1.0, %v4207
      %v4209 = vrcp.pop %v3171
      %v4210 = vmul.f32 %v3171, %v4209
      %v4211 = vsub.f32 1.0, %v4210
      %v4212 = vmul.f32 %v4209, %v4211
      %v4213 = vadd.f32 %v4209, %v4212
      %vm4214 = vweird.f32 %v3171
      %vm4215 = vweird.f32 %v4209
      %vm4216 = vmor %vm4214, %vm4215
      %v4217 = vsel %vm4216, %v4209, %v4213
      %v4218 = vand.u32 2147483647, %v3171
      %vm4219 = vcmp.eq.f32.partialorder %v4218, 8.507059e+37
      %v4220 = vand.u32 %v3171, 2147483648
      %v4221 = vor.u32 1.1754944e-38, %v4220
      %v4222 = vsel %vm4219, %v4221, %v4217
      %v4223 = vmul.f32 1.0, %v4222
      %v4224 = vrcp.pop %v3172
      %v4225 = vmul.f32 %v3172, %v4224
      %v4226 = vsub.f32 1.0, %v4225
      %v4227 = vmul.f32 %v4224, %v4226
      %v4228 = vadd.f32 %v4224, %v4227
      %vm4229 = vweird.f32 %v3172
      %vm4230 = vweird.f32 %v4224
      %vm4231 = vmor %vm4229, %vm4230
      %v4232 = vsel %vm4231, %v4224, %v4228
      %v4233 = vand.u32 2147483647, %v3172
      %vm4234 = vcmp.eq.f32.partialorder %v4233, 8.507059e+37
      %v4235 = vand.u32 %v3172, 2147483648
      %v4236 = vor.u32 1.1754944e-38, %v4235
      %v4237 = vsel %vm4234, %v4236, %v4232
      %v4238 = vmul.f32 1.0, %v4237
      %v4239 = vrcp.pop %v3173
      %v4240 = vmul.f32 %v3173, %v4239
      %v4241 = vsub.f32 1.0, %v4240
      %v4242 = vmul.f32 %v4239, %v4241
      %v4243 = vadd.f32 %v4239, %v4242
      %vm4244 = vweird.f32 %v3173
      %vm4245 = vweird.f32 %v4239
      %vm4246 = vmor %vm4244, %vm4245
      %v4247 = vsel %vm4246, %v4239, %v4243
      %v4248 = vand.u32 2147483647, %v3173
      %vm4249 = vcmp.eq.f32.partialorder %v4248, 8.507059e+37
      %v4250 = vand.u32 %v3173, 2147483648
      %v4251 = vor.u32 1.1754944e-38, %v4250
      %v4252 = vsel %vm4249, %v4251, %v4247
      %v4253 = vmul.f32 1.0, %v4252
      %v4254 = vrcp.pop %v3174
      %v4255 = vmul.f32 %v3174, %v4254
      %v4256 = vsub.f32 1.0, %v4255
      %v4257 = vmul.f32 %v4254, %v4256
      %v4258 = vadd.f32 %v4254, %v4257
      %vm4259 = vweird.f32 %v3174
      %vm4260 = vweird.f32 %v4254
      %vm4261 = vmor %vm4259, %vm4260
      %v4262 = vsel %vm4261, %v4254, %v4258
      %v4263 = vand.u32 2147483647, %v3174
      %vm4264 = vcmp.eq.f32.partialorder %v4263, 8.507059e+37
      %v4265 = vand.u32 %v3174, 2147483648
      %v4266 = vor.u32 1.1754944e-38, %v4265
      %v4267 = vsel %vm4264, %v4266, %v4262
      %v4268 = vmul.f32 1.0, %v4267
      %v4269 = vrcp.pop %v3175
      %v4270 = vmul.f32 %v3175, %v4269
      %v4271 = vsub.f32 1.0, %v4270
      %v4272 = vmul.f32 %v4269, %v4271
      %v4273 = vadd.f32 %v4269, %v4272
      %vm4274 = vweird.f32 %v3175
      %vm4275 = vweird.f32 %v4269
      %vm4276 = vmor %vm4274, %vm4275
      %v4277 = vsel %vm4276, %v4269, %v4273
      %v4278 = vand.u32 2147483647, %v3175
      %vm4279 = vcmp.eq.f32.partialorder %v4278, 8.507059e+37
      %v4280 = vand.u32 %v3175, 2147483648
      %v4281 = vor.u32 1.1754944e-38, %v4280
      %v4282 = vsel %vm4279, %v4281, %v4277
      %v4283 = vmul.f32 1.0, %v4282
      %v4284 = vrcp.pop %v3176
      %v4285 = vmul.f32 %v3176, %v4284
      %v4286 = vsub.f32 1.0, %v4285
      %v4287 = vmul.f32 %v4284, %v4286
      %v4288 = vadd.f32 %v4284, %v4287
      %vm4289 = vweird.f32 %v3176
      %vm4290 = vweird.f32 %v4284
      %vm4291 = vmor %vm4289, %vm4290
      %v4292 = vsel %vm4291, %v4284, %v4288
      %v4293 = vand.u32 2147483647, %v3176
      %vm4294 = vcmp.eq.f32.partialorder %v4293, 8.507059e+37
      %v4295 = vand.u32 %v3176, 2147483648
      %v4296 = vor.u32 1.1754944e-38, %v4295
      %v4297 = vsel %vm4294, %v4296, %v4292
      %v4298 = vmul.f32 1.0, %v4297
      %v4299 = vrcp.pop %v3177
      %v4300 = vmul.f32 %v3177, %v4299
      %v4301 = vsub.f32 1.0, %v4300
      %v4302 = vmul.f32 %v4299, %v4301
      %v4303 = vadd.f32 %v4299, %v4302
      %vm4304 = vweird.f32 %v3177
      %vm4305 = vweird.f32 %v4299
      %vm4306 = vmor %vm4304, %vm4305
      %v4307 = vsel %vm4306, %v4299, %v4303
      %v4308 = vand.u32 2147483647, %v3177
      %vm4309 = vcmp.eq.f32.partialorder %v4308, 8.507059e+37
      %v4310 = vand.u32 %v3177, 2147483648
      %v4311 = vor.u32 1.1754944e-38, %v4310
      %v4312 = vsel %vm4309, %v4311, %v4307
      %v4313 = vmul.f32 1.0, %v4312
      %v4314 = vrcp.pop %v3178
      %v4315 = vmul.f32 %v3178, %v4314
      %v4316 = vsub.f32 1.0, %v4315
      %v4317 = vmul.f32 %v4314, %v4316
      %v4318 = vadd.f32 %v4314, %v4317
      %vm4319 = vweird.f32 %v3178
      %vm4320 = vweird.f32 %v4314
      %vm4321 = vmor %vm4319, %vm4320
      %v4322 = vsel %vm4321, %v4314, %v4318
      %v4323 = vand.u32 2147483647, %v3178
      %vm4324 = vcmp.eq.f32.partialorder %v4323, 8.507059e+37
      %v4325 = vand.u32 %v3178, 2147483648
      %v4326 = vor.u32 1.1754944e-38, %v4325
      %v4327 = vsel %vm4324, %v4326, %v4322
      %v4328 = vmul.f32 1.0, %v4327
      %v4329 = vrcp.pop %v3179
      %v4330 = vmul.f32 %v3179, %v4329
      %v4331 = vsub.f32 1.0, %v4330
      %v4332 = vmul.f32 %v4329, %v4331
      %v4333 = vadd.f32 %v4329, %v4332
      %vm4334 = vweird.f32 %v3179
      %vm4335 = vweird.f32 %v4329
      %vm4336 = vmor %vm4334, %vm4335
      %v4337 = vsel %vm4336, %v4329, %v4333
      %v4338 = vand.u32 2147483647, %v3179
      %vm4339 = vcmp.eq.f32.partialorder %v4338, 8.507059e+37
      %v4340 = vand.u32 %v3179, 2147483648
      %v4341 = vor.u32 1.1754944e-38, %v4340
      %v4342 = vsel %vm4339, %v4341, %v4337
      %v4343 = vmul.f32 1.0, %v4342
      %v4344 = vrcp.pop %v3180
      %v4345 = vmul.f32 %v3180, %v4344
      %v4346 = vsub.f32 1.0, %v4345
      %v4347 = vmul.f32 %v4344, %v4346
      %v4348 = vadd.f32 %v4344, %v4347
      %vm4349 = vweird.f32 %v3180
      %vm4350 = vweird.f32 %v4344
      %vm4351 = vmor %vm4349, %vm4350
      %v4352 = vsel %vm4351, %v4344, %v4348
      %v4353 = vand.u32 2147483647, %v3180
      %vm4354 = vcmp.eq.f32.partialorder %v4353, 8.507059e+37
      %v4355 = vand.u32 %v3180, 2147483648
      %v4356 = vor.u32 1.1754944e-38, %v4355
      %v4357 = vsel %vm4354, %v4356, %v4352
      %v4358 = vmul.f32 1.0, %v4357
      %v4359 = vrcp.pop %v3181
      %v4360 = vmul.f32 %v3181, %v4359
      %v4361 = vsub.f32 1.0, %v4360
      %v4362 = vmul.f32 %v4359, %v4361
      %v4363 = vadd.f32 %v4359, %v4362
      %vm4364 = vweird.f32 %v3181
      %vm4365 = vweird.f32 %v4359
      %vm4366 = vmor %vm4364, %vm4365
      %v4367 = vsel %vm4366, %v4359, %v4363
      %v4368 = vand.u32 2147483647, %v3181
      %vm4369 = vcmp.eq.f32.partialorder %v4368, 8.507059e+37
      %v4370 = vand.u32 %v3181, 2147483648
      %v4371 = vor.u32 1.1754944e-38, %v4370
      %v4372 = vsel %vm4369, %v4371, %v4367
      %v4373 = vmul.f32 1.0, %v4372
      %v4374 = vrcp.pop %v3182
      %v4375 = vmul.f32 %v3182, %v4374
      %v4376 = vsub.f32 1.0, %v4375
      %v4377 = vmul.f32 %v4374, %v4376
      %v4378 = vadd.f32 %v4374, %v4377
      %vm4379 = vweird.f32 %v3182
      %vm4380 = vweird.f32 %v4374
      %vm4381 = vmor %vm4379, %vm4380
      %v4382 = vsel %vm4381, %v4374, %v4378
      %v4383 = vand.u32 2147483647, %v3182
      %vm4384 = vcmp.eq.f32.partialorder %v4383, 8.507059e+37
      %v4385 = vand.u32 %v3182, 2147483648
      %v4386 = vor.u32 1.1754944e-38, %v4385
      %v4387 = vsel %vm4384, %v4386, %v4382
      %v4388 = vmul.f32 1.0, %v4387
      %v4389 = vrcp.pop %v3183
      %v4390 = vmul.f32 %v3183, %v4389
      %v4391 = vsub.f32 1.0, %v4390
      %v4392 = vmul.f32 %v4389, %v4391
      %v4393 = vadd.f32 %v4389, %v4392
      %vm4394 = vweird.f32 %v3183
      %vm4395 = vweird.f32 %v4389
      %vm4396 = vmor %vm4394, %vm4395
      %v4397 = vsel %vm4396, %v4389, %v4393
      %v4398 = vand.u32 2147483647, %v3183
      %vm4399 = vcmp.eq.f32.partialorder %v4398, 8.507059e+37
      %v4400 = vand.u32 %v3183, 2147483648
      %v4401 = vor.u32 1.1754944e-38, %v4400
      %v4402 = vsel %vm4399, %v4401, %v4397
      %v4403 = vmul.f32 1.0, %v4402
      %v4404 = vrcp.pop %v3184
      %v4405 = vmul.f32 %v3184, %v4404
      %v4406 = vsub.f32 1.0, %v4405
      %v4407 = vmul.f32 %v4404, %v4406
      %v4408 = vadd.f32 %v4404, %v4407
      %vm4409 = vweird.f32 %v3184
      %vm4410 = vweird.f32 %v4404
      %vm4411 = vmor %vm4409, %vm4410
      %v4412 = vsel %vm4411, %v4404, %v4408
      %v4413 = vand.u32 2147483647, %v3184
      %vm4414 = vcmp.eq.f32.partialorder %v4413, 8.507059e+37
      %v4415 = vand.u32 %v3184, 2147483648
      %v4416 = vor.u32 1.1754944e-38, %v4415
      %v4417 = vsel %vm4414, %v4416, %v4412
      %v4418 = vmul.f32 1.0, %v4417
      %v4419 = vrcp.pop %v3185
      %v4420 = vmul.f32 %v3185, %v4419
      %v4421 = vsub.f32 1.0, %v4420
      %v4422 = vmul.f32 %v4419, %v4421
      %v4423 = vadd.f32 %v4419, %v4422
      %vm4424 = vweird.f32 %v3185
      %vm4425 = vweird.f32 %v4419
      %vm4426 = vmor %vm4424, %vm4425
      %v4427 = vsel %vm4426, %v4419, %v4423
      %v4428 = vand.u32 2147483647, %v3185
      %vm4429 = vcmp.eq.f32.partialorder %v4428, 8.507059e+37
      %v4430 = vand.u32 %v3185, 2147483648
      %v4431 = vor.u32 1.1754944e-38, %v4430
      %v4432 = vsel %vm4429, %v4431, %v4427
      %v4433 = vmul.f32 1.0, %v4432
      %v4434 = vrcp.pop %v3186
      %v4435 = vmul.f32 %v3186, %v4434
      %v4436 = vsub.f32 1.0, %v4435
      %v4437 = vmul.f32 %v4434, %v4436
      %v4438 = vadd.f32 %v4434, %v4437
      %vm4439 = vweird.f32 %v3186
      %vm4440 = vweird.f32 %v4434
      %vm4441 = vmor %vm4439, %vm4440
      %v4442 = vsel %vm4441, %v4434, %v4438
      %v4443 = vand.u32 2147483647, %v3186
      %vm4444 = vcmp.eq.f32.partialorder %v4443, 8.507059e+37
      %v4445 = vand.u32 %v3186, 2147483648
      %v4446 = vor.u32 1.1754944e-38, %v4445
      %v4447 = vsel %vm4444, %v4446, %v4442
      %v4448 = vmul.f32 1.0, %v4447
      %v4449 = vrcp.pop %v3187
      %v4450 = vmul.f32 %v3187, %v4449
      %v4451 = vsub.f32 1.0, %v4450
      %v4452 = vmul.f32 %v4449, %v4451
      %v4453 = vadd.f32 %v4449, %v4452
      %vm4454 = vweird.f32 %v3187
      %vm4455 = vweird.f32 %v4449
      %vm4456 = vmor %vm4454, %vm4455
      %v4457 = vsel %vm4456, %v4449, %v4453
      %v4458 = vand.u32 2147483647, %v3187
      %vm4459 = vcmp.eq.f32.partialorder %v4458, 8.507059e+37
      %v4460 = vand.u32 %v3187, 2147483648
      %v4461 = vor.u32 1.1754944e-38, %v4460
      %v4462 = vsel %vm4459, %v4461, %v4457
      %v4463 = vmul.f32 1.0, %v4462
      %v4464 = vrcp.pop %v3188
      %v4465 = vmul.f32 %v3188, %v4464
      %v4466 = vsub.f32 1.0, %v4465
      %v4467 = vmul.f32 %v4464, %v4466
      %v4468 = vadd.f32 %v4464, %v4467
      %vm4469 = vweird.f32 %v3188
      %vm4470 = vweird.f32 %v4464
      %vm4471 = vmor %vm4469, %vm4470
      %v4472 = vsel %vm4471, %v4464, %v4468
      %v4473 = vand.u32 2147483647, %v3188
      %vm4474 = vcmp.eq.f32.partialorder %v4473, 8.507059e+37
      %v4475 = vand.u32 %v3188, 2147483648
      %v4476 = vor.u32 1.1754944e-38, %v4475
      %v4477 = vsel %vm4474, %v4476, %v4472
      %v4478 = vmul.f32 1.0, %v4477
      %v4479 = vrcp.pop %v3189
      %v4480 = vmul.f32 %v3189, %v4479
      %v4481 = vsub.f32 1.0, %v4480
      %v4482 = vmul.f32 %v4479, %v4481
      %v4483 = vadd.f32 %v4479, %v4482
      %vm4484 = vweird.f32 %v3189
      %vm4485 = vweird.f32 %v4479
      %vm4486 = vmor %vm4484, %vm4485
      %v4487 = vsel %vm4486, %v4479, %v4483
      %v4488 = vand.u32 2147483647, %v3189
      %vm4489 = vcmp.eq.f32.partialorder %v4488, 8.507059e+37
      %v4490 = vand.u32 %v3189, 2147483648
      %v4491 = vor.u32 1.1754944e-38, %v4490
      %v4492 = vsel %vm4489, %v4491, %v4487
      %v4493 = vmul.f32 1.0, %v4492
      %v4494 = vrcp.pop %v3190
      %v4495 = vmul.f32 %v3190, %v4494
      %v4496 = vsub.f32 1.0, %v4495
      %v4497 = vmul.f32 %v4494, %v4496
      %v4498 = vadd.f32 %v4494, %v4497
      %vm4499 = vweird.f32 %v3190
      %vm4500 = vweird.f32 %v4494
      %vm4501 = vmor %vm4499, %vm4500
      %v4502 = vsel %vm4501, %v4494, %v4498
      %v4503 = vand.u32 2147483647, %v3190
      %vm4504 = vcmp.eq.f32.partialorder %v4503, 8.507059e+37
      %v4505 = vand.u32 %v3190, 2147483648
      %v4506 = vor.u32 1.1754944e-38, %v4505
      %v4507 = vsel %vm4504, %v4506, %v4502
      %v4508 = vmul.f32 1.0, %v4507
      %v4509 = vrcp.pop %v3191
      %v4510 = vmul.f32 %v3191, %v4509
      %v4511 = vsub.f32 1.0, %v4510
      %v4512 = vmul.f32 %v4509, %v4511
      %v4513 = vadd.f32 %v4509, %v4512
      %vm4514 = vweird.f32 %v3191
      %vm4515 = vweird.f32 %v4509
      %vm4516 = vmor %vm4514, %vm4515
      %v4517 = vsel %vm4516, %v4509, %v4513
      %v4518 = vand.u32 2147483647, %v3191
      %vm4519 = vcmp.eq.f32.partialorder %v4518, 8.507059e+37
      %v4520 = vand.u32 %v3191, 2147483648
      %v4521 = vor.u32 1.1754944e-38, %v4520
      %v4522 = vsel %vm4519, %v4521, %v4517
      %v4523 = vmul.f32 1.0, %v4522
      %v4524 = vrcp.pop %v3192
      %v4525 = vmul.f32 %v3192, %v4524
      %v4526 = vsub.f32 1.0, %v4525
      %v4527 = vmul.f32 %v4524, %v4526
      %v4528 = vadd.f32 %v4524, %v4527
      %vm4529 = vweird.f32 %v3192
      %vm4530 = vweird.f32 %v4524
      %vm4531 = vmor %vm4529, %vm4530
      %v4532 = vsel %vm4531, %v4524, %v4528
      %v4533 = vand.u32 2147483647, %v3192
      %vm4534 = vcmp.eq.f32.partialorder %v4533, 8.507059e+37
      %v4535 = vand.u32 %v3192, 2147483648
      %v4536 = vor.u32 1.1754944e-38, %v4535
      %v4537 = vsel %vm4534, %v4536, %v4532
      %v4538 = vmul.f32 1.0, %v4537
      %v4539 = vrcp.pop %v3193
      %v4540 = vmul.f32 %v3193, %v4539
      %v4541 = vsub.f32 1.0, %v4540
      %v4542 = vmul.f32 %v4539, %v4541
      %v4543 = vadd.f32 %v4539, %v4542
      %vm4544 = vweird.f32 %v3193
      %vm4545 = vweird.f32 %v4539
      %vm4546 = vmor %vm4544, %vm4545
      %v4547 = vsel %vm4546, %v4539, %v4543
      %v4548 = vand.u32 2147483647, %v3193
      %vm4549 = vcmp.eq.f32.partialorder %v4548, 8.507059e+37
      %v4550 = vand.u32 %v3193, 2147483648
      %v4551 = vor.u32 1.1754944e-38, %v4550
      %v4552 = vsel %vm4549, %v4551, %v4547
      %v4553 = vmul.f32 1.0, %v4552
      %v4554 = vrcp.pop %v3194
      %v4555 = vmul.f32 %v3194, %v4554
      %v4556 = vsub.f32 1.0, %v4555
      %v4557 = vmul.f32 %v4554, %v4556
      %v4558 = vadd.f32 %v4554, %v4557
      %vm4559 = vweird.f32 %v3194
      %vm4560 = vweird.f32 %v4554
      %vm4561 = vmor %vm4559, %vm4560
      %v4562 = vsel %vm4561, %v4554, %v4558
      %v4563 = vand.u32 2147483647, %v3194
      %vm4564 = vcmp.eq.f32.partialorder %v4563, 8.507059e+37
      %v4565 = vand.u32 %v3194, 2147483648
      %v4566 = vor.u32 1.1754944e-38, %v4565
      %v4567 = vsel %vm4564, %v4566, %v4562
      %v4568 = vmul.f32 1.0, %v4567
      %v4569 = vrcp.pop %v3195
      %v4570 = vmul.f32 %v3195, %v4569
      %v4571 = vsub.f32 1.0, %v4570
      %v4572 = vmul.f32 %v4569, %v4571
      %v4573 = vadd.f32 %v4569, %v4572
      %vm4574 = vweird.f32 %v3195
      %vm4575 = vweird.f32 %v4569
      %vm4576 = vmor %vm4574, %vm4575
      %v4577 = vsel %vm4576, %v4569, %v4573
      %v4578 = vand.u32 2147483647, %v3195
      %vm4579 = vcmp.eq.f32.partialorder %v4578, 8.507059e+37
      %v4580 = vand.u32 %v3195, 2147483648
      %v4581 = vor.u32 1.1754944e-38, %v4580
      %v4582 = vsel %vm4579, %v4581, %v4577
      %v4583 = vmul.f32 1.0, %v4582
      %v4584 = vrcp.pop %v3196
      %v4585 = vmul.f32 %v3196, %v4584
      %v4586 = vsub.f32 1.0, %v4585
      %v4587 = vmul.f32 %v4584, %v4586
      %v4588 = vadd.f32 %v4584, %v4587
      %vm4589 = vweird.f32 %v3196
      %vm4590 = vweird.f32 %v4584
      %vm4591 = vmor %vm4589, %vm4590
      %v4592 = vsel %vm4591, %v4584, %v4588
      %v4593 = vand.u32 2147483647, %v3196
      %vm4594 = vcmp.eq.f32.partialorder %v4593, 8.507059e+37
      %v4595 = vand.u32 %v3196, 2147483648
      %v4596 = vor.u32 1.1754944e-38, %v4595
      %v4597 = vsel %vm4594, %v4596, %v4592
      %v4598 = vmul.f32 1.0, %v4597
      %v4599 = vrcp.pop %v3197
      %v4600 = vmul.f32 %v3197, %v4599
      %v4601 = vsub.f32 1.0, %v4600
      %v4602 = vmul.f32 %v4599, %v4601
      %v4603 = vadd.f32 %v4599, %v4602
      %vm4604 = vweird.f32 %v3197
      %vm4605 = vweird.f32 %v4599
      %vm4606 = vmor %vm4604, %vm4605
      %v4607 = vsel %vm4606, %v4599, %v4603
      %v4608 = vand.u32 2147483647, %v3197
      %vm4609 = vcmp.eq.f32.partialorder %v4608, 8.507059e+37
      %v4610 = vand.u32 %v3197, 2147483648
      %v4611 = vor.u32 1.1754944e-38, %v4610
      %v4612 = vsel %vm4609, %v4611, %v4607
      %v4613 = vmul.f32 1.0, %v4612
      %v4614 = vrcp.pop %v3198
      %v4615 = vmul.f32 %v3198, %v4614
      %v4616 = vsub.f32 1.0, %v4615
      %v4617 = vmul.f32 %v4614, %v4616
      %v4618 = vadd.f32 %v4614, %v4617
      %vm4619 = vweird.f32 %v3198
      %vm4620 = vweird.f32 %v4614
      %vm4621 = vmor %vm4619, %vm4620
      %v4622 = vsel %vm4621, %v4614, %v4618
      %v4623 = vand.u32 2147483647, %v3198
      %vm4624 = vcmp.eq.f32.partialorder %v4623, 8.507059e+37
      %v4625 = vand.u32 %v3198, 2147483648
      %v4626 = vor.u32 1.1754944e-38, %v4625
      %v4627 = vsel %vm4624, %v4626, %v4622
      %v4628 = vmul.f32 1.0, %v4627
      %v4629 = vrcp.pop %v3199
      %v4630 = vmul.f32 %v3199, %v4629
      %v4631 = vsub.f32 1.0, %v4630
      %v4632 = vmul.f32 %v4629, %v4631
      %v4633 = vadd.f32 %v4629, %v4632
      %vm4634 = vweird.f32 %v3199
      %vm4635 = vweird.f32 %v4629
      %vm4636 = vmor %vm4634, %vm4635
      %v4637 = vsel %vm4636, %v4629, %v4633
      %v4638 = vand.u32 2147483647, %v3199
      %vm4639 = vcmp.eq.f32.partialorder %v4638, 8.507059e+37
      %v4640 = vand.u32 %v3199, 2147483648
      %v4641 = vor.u32 1.1754944e-38, %v4640
      %v4642 = vsel %vm4639, %v4641, %v4637
      %v4643 = vmul.f32 1.0, %v4642
      %v4644 = vrcp.pop %v3200
      %v4645 = vmul.f32 %v3200, %v4644
      %v4646 = vsub.f32 1.0, %v4645
      %v4647 = vmul.f32 %v4644, %v4646
      %v4648 = vadd.f32 %v4644, %v4647
      %vm4649 = vweird.f32 %v3200
      %vm4650 = vweird.f32 %v4644
      %vm4651 = vmor %vm4649, %vm4650
      %v4652 = vsel %vm4651, %v4644, %v4648
      %v4653 = vand.u32 2147483647, %v3200
      %vm4654 = vcmp.eq.f32.partialorder %v4653, 8.507059e+37
      %v4655 = vand.u32 %v3200, 2147483648
      %v4656 = vor.u32 1.1754944e-38, %v4655
      %v4657 = vsel %vm4654, %v4656, %v4652
      %v4658 = vmul.f32 1.0, %v4657
      %v4659 = vrcp.pop %v3201
      %v4660 = vmul.f32 %v3201, %v4659
      %v4661 = vsub.f32 1.0, %v4660
      %v4662 = vmul.f32 %v4659, %v4661
      %v4663 = vadd.f32 %v4659, %v4662
      %vm4664 = vweird.f32 %v3201
      %vm4665 = vweird.f32 %v4659
      %vm4666 = vmor %vm4664, %vm4665
      %v4667 = vsel %vm4666, %v4659, %v4663
      %v4668 = vand.u32 2147483647, %v3201
      %vm4669 = vcmp.eq.f32.partialorder %v4668, 8.507059e+37
      %v4670 = vand.u32 %v3201, 2147483648
      %v4671 = vor.u32 1.1754944e-38, %v4670
      %v4672 = vsel %vm4669, %v4671, %v4667
      %v4673 = vmul.f32 1.0, %v4672
      %v4674 = vrcp.pop %v3202
      %v4675 = vmul.f32 %v3202, %v4674
      %v4676 = vsub.f32 1.0, %v4675
      %v4677 = vmul.f32 %v4674, %v4676
      %v4678 = vadd.f32 %v4674, %v4677
      %vm4679 = vweird.f32 %v3202
      %vm4680 = vweird.f32 %v4674
      %vm4681 = vmor %vm4679, %vm4680
      %v4682 = vsel %vm4681, %v4674, %v4678
      %v4683 = vand.u32 2147483647, %v3202
      %vm4684 = vcmp.eq.f32.partialorder %v4683, 8.507059e+37
      %v4685 = vand.u32 %v3202, 2147483648
      %v4686 = vor.u32 1.1754944e-38, %v4685
      %v4687 = vsel %vm4684, %v4686, %v4682
      %v4688 = vmul.f32 1.0, %v4687
      %v4689 = vrcp.pop %v3203
      %v4690 = vmul.f32 %v3203, %v4689
      %v4691 = vsub.f32 1.0, %v4690
      %v4692 = vmul.f32 %v4689, %v4691
      %v4693 = vadd.f32 %v4689, %v4692
      %vm4694 = vweird.f32 %v3203
      %vm4695 = vweird.f32 %v4689
      %vm4696 = vmor %vm4694, %vm4695
      %v4697 = vsel %vm4696, %v4689, %v4693
      %v4698 = vand.u32 2147483647, %v3203
      %vm4699 = vcmp.eq.f32.partialorder %v4698, 8.507059e+37
      %v4700 = vand.u32 %v3203, 2147483648
      %v4701 = vor.u32 1.1754944e-38, %v4700
      %v4702 = vsel %vm4699, %v4701, %v4697
      %v4703 = vmul.f32 1.0, %v4702
      %v4704 = vrcp.pop %v3204
      %v4705 = vmul.f32 %v3204, %v4704
      %v4706 = vsub.f32 1.0, %v4705
      %v4707 = vmul.f32 %v4704, %v4706
      %v4708 = vadd.f32 %v4704, %v4707
      %vm4709 = vweird.f32 %v3204
      %vm4710 = vweird.f32 %v4704
      %vm4711 = vmor %vm4709, %vm4710
      %v4712 = vsel %vm4711, %v4704, %v4708
      %v4713 = vand.u32 2147483647, %v3204
      %vm4714 = vcmp.eq.f32.partialorder %v4713, 8.507059e+37
      %v4715 = vand.u32 %v3204, 2147483648
      %v4716 = vor.u32 1.1754944e-38, %v4715
      %v4717 = vsel %vm4714, %v4716, %v4712
      %v4718 = vmul.f32 1.0, %v4717
      %v4719 = vrcp.pop %v3205
      %v4720 = vmul.f32 %v3205, %v4719
      %v4721 = vsub.f32 1.0, %v4720
      %v4722 = vmul.f32 %v4719, %v4721
      %v4723 = vadd.f32 %v4719, %v4722
      %vm4724 = vweird.f32 %v3205
      %vm4725 = vweird.f32 %v4719
      %vm4726 = vmor %vm4724, %vm4725
      %v4727 = vsel %vm4726, %v4719, %v4723
      %v4728 = vand.u32 2147483647, %v3205
      %vm4729 = vcmp.eq.f32.partialorder %v4728, 8.507059e+37
      %v4730 = vand.u32 %v3205, 2147483648
      %v4731 = vor.u32 1.1754944e-38, %v4730
      %v4732 = vsel %vm4729, %v4731, %v4727
      %v4733 = vmul.f32 1.0, %v4732
      %v4734 = vrcp.pop %v3206
      %v4735 = vmul.f32 %v3206, %v4734
      %v4736 = vsub.f32 1.0, %v4735
      %v4737 = vmul.f32 %v4734, %v4736
      %v4738 = vadd.f32 %v4734, %v4737
      %vm4739 = vweird.f32 %v3206
      %vm4740 = vweird.f32 %v4734
      %vm4741 = vmor %vm4739, %vm4740
      %v4742 = vsel %vm4741, %v4734, %v4738
      %v4743 = vand.u32 2147483647, %v3206
      %vm4744 = vcmp.eq.f32.partialorder %v4743, 8.507059e+37
      %v4745 = vand.u32 %v3206, 2147483648
      %v4746 = vor.u32 1.1754944e-38, %v4745
      %v4747 = vsel %vm4744, %v4746, %v4742
      %v4748 = vmul.f32 1.0, %v4747
      %v4749 = vrcp.pop %v3207
      %v4750 = vmul.f32 %v3207, %v4749
      %v4751 = vsub.f32 1.0, %v4750
      %v4752 = vmul.f32 %v4749, %v4751
      %v4753 = vadd.f32 %v4749, %v4752
      %vm4754 = vweird.f32 %v3207
      %vm4755 = vweird.f32 %v4749
      %vm4756 = vmor %vm4754, %vm4755
      %v4757 = vsel %vm4756, %v4749, %v4753
      %v4758 = vand.u32 2147483647, %v3207
      %vm4759 = vcmp.eq.f32.partialorder %v4758, 8.507059e+37
      %v4760 = vand.u32 %v3207, 2147483648
      %v4761 = vor.u32 1.1754944e-38, %v4760
      %v4762 = vsel %vm4759, %v4761, %v4757
      %v4763 = vmul.f32 1.0, %v4762
      %v4764 = vrcp.pop %v3208
      %v4765 = vmul.f32 %v3208, %v4764
      %v4766 = vsub.f32 1.0, %v4765
      %v4767 = vmul.f32 %v4764, %v4766
      %v4768 = vadd.f32 %v4764, %v4767
      %vm4769 = vweird.f32 %v3208
      %vm4770 = vweird.f32 %v4764
      %vm4771 = vmor %vm4769, %vm4770
      %v4772 = vsel %vm4771, %v4764, %v4768
      %v4773 = vand.u32 2147483647, %v3208
      %vm4774 = vcmp.eq.f32.partialorder %v4773, 8.507059e+37
      %v4775 = vand.u32 %v3208, 2147483648
      %v4776 = vor.u32 1.1754944e-38, %v4775
      %v4777 = vsel %vm4774, %v4776, %v4772
      %v4778 = vmul.f32 1.0, %v4777
      %v4779 = vrcp.pop %v3209
      %v4780 = vmul.f32 %v3209, %v4779
      %v4781 = vsub.f32 1.0, %v4780
      %v4782 = vmul.f32 %v4779, %v4781
      %v4783 = vadd.f32 %v4779, %v4782
      %vm4784 = vweird.f32 %v3209
      %vm4785 = vweird.f32 %v4779
      %vm4786 = vmor %vm4784, %vm4785
      %v4787 = vsel %vm4786, %v4779, %v4783
      %v4788 = vand.u32 2147483647, %v3209
      %vm4789 = vcmp.eq.f32.partialorder %v4788, 8.507059e+37
      %v4790 = vand.u32 %v3209, 2147483648
      %v4791 = vor.u32 1.1754944e-38, %v4790
      %v4792 = vsel %vm4789, %v4791, %v4787
      %v4793 = vmul.f32 1.0, %v4792
      %v4794 = vrcp.pop %v3210
      %v4795 = vmul.f32 %v3210, %v4794
      %v4796 = vsub.f32 1.0, %v4795
      %v4797 = vmul.f32 %v4794, %v4796
      %v4798 = vadd.f32 %v4794, %v4797
      %vm4799 = vweird.f32 %v3210
      %vm4800 = vweird.f32 %v4794
      %vm4801 = vmor %vm4799, %vm4800
      %v4802 = vsel %vm4801, %v4794, %v4798
      %v4803 = vand.u32 2147483647, %v3210
      %vm4804 = vcmp.eq.f32.partialorder %v4803, 8.507059e+37
      %v4805 = vand.u32 %v3210, 2147483648
      %v4806 = vor.u32 1.1754944e-38, %v4805
      %v4807 = vsel %vm4804, %v4806, %v4802
      %v4808 = vmul.f32 1.0, %v4807
      %v4809 = vrcp.pop %v3211
      %v4810 = vmul.f32 %v3211, %v4809
      %v4811 = vsub.f32 1.0, %v4810
      %v4812 = vmul.f32 %v4809, %v4811
      %v4813 = vadd.f32 %v4809, %v4812
      %vm4814 = vweird.f32 %v3211
      %vm4815 = vweird.f32 %v4809
      %vm4816 = vmor %vm4814, %vm4815
      %v4817 = vsel %vm4816, %v4809, %v4813
      %v4818 = vand.u32 2147483647, %v3211
      %vm4819 = vcmp.eq.f32.partialorder %v4818, 8.507059e+37
      %v4820 = vand.u32 %v3211, 2147483648
      %v4821 = vor.u32 1.1754944e-38, %v4820
      %v4822 = vsel %vm4819, %v4821, %v4817
      %v4823 = vmul.f32 1.0, %v4822
      %v4824 = vrcp.pop %v3212
      %v4825 = vmul.f32 %v3212, %v4824
      %v4826 = vsub.f32 1.0, %v4825
      %v4827 = vmul.f32 %v4824, %v4826
      %v4828 = vadd.f32 %v4824, %v4827
      %vm4829 = vweird.f32 %v3212
      %vm4830 = vweird.f32 %v4824
      %vm4831 = vmor %vm4829, %vm4830
      %v4832 = vsel %vm4831, %v4824, %v4828
      %v4833 = vand.u32 2147483647, %v3212
      %vm4834 = vcmp.eq.f32.partialorder %v4833, 8.507059e+37
      %v4835 = vand.u32 %v3212, 2147483648
      %v4836 = vor.u32 1.1754944e-38, %v4835
      %v4837 = vsel %vm4834, %v4836, %v4832
      %v4838 = vmul.f32 1.0, %v4837
      %v4839 = vrcp.pop %v3213
      %v4840 = vmul.f32 %v3213, %v4839
      %v4841 = vsub.f32 1.0, %v4840
      %v4842 = vmul.f32 %v4839, %v4841
      %v4843 = vadd.f32 %v4839, %v4842
      %vm4844 = vweird.f32 %v3213
      %vm4845 = vweird.f32 %v4839
      %vm4846 = vmor %vm4844, %vm4845
      %v4847 = vsel %vm4846, %v4839, %v4843
      %v4848 = vand.u32 2147483647, %v3213
      %vm4849 = vcmp.eq.f32.partialorder %v4848, 8.507059e+37
      %v4850 = vand.u32 %v3213, 2147483648
      %v4851 = vor.u32 1.1754944e-38, %v4850
      %v4852 = vsel %vm4849, %v4851, %v4847
      %v4853 = vmul.f32 1.0, %v4852
      %v4854 = vrcp.pop %v3214
      %v4855 = vmul.f32 %v3214, %v4854
      %v4856 = vsub.f32 1.0, %v4855
      %v4857 = vmul.f32 %v4854, %v4856
      %v4858 = vadd.f32 %v4854, %v4857
      %vm4859 = vweird.f32 %v3214
      %vm4860 = vweird.f32 %v4854
      %vm4861 = vmor %vm4859, %vm4860
      %v4862 = vsel %vm4861, %v4854, %v4858
      %v4863 = vand.u32 2147483647, %v3214
      %vm4864 = vcmp.eq.f32.partialorder %v4863, 8.507059e+37
      %v4865 = vand.u32 %v3214, 2147483648
      %v4866 = vor.u32 1.1754944e-38, %v4865
      %v4867 = vsel %vm4864, %v4866, %v4862
      %v4868 = vmul.f32 1.0, %v4867
      %v4869 = vrcp.pop %v3215
      %v4870 = vmul.f32 %v3215, %v4869
      %v4871 = vsub.f32 1.0, %v4870
      %v4872 = vmul.f32 %v4869, %v4871
      %v4873 = vadd.f32 %v4869, %v4872
      %vm4874 = vweird.f32 %v3215
      %vm4875 = vweird.f32 %v4869
      %vm4876 = vmor %vm4874, %vm4875
      %v4877 = vsel %vm4876, %v4869, %v4873
      %v4878 = vand.u32 2147483647, %v3215
      %vm4879 = vcmp.eq.f32.partialorder %v4878, 8.507059e+37
      %v4880 = vand.u32 %v3215, 2147483648
      %v4881 = vor.u32 1.1754944e-38, %v4880
      %v4882 = vsel %vm4879, %v4881, %v4877
      %v4883 = vmul.f32 1.0, %v4882
      %v4884 = vrcp.pop %v3216
      %v4885 = vmul.f32 %v3216, %v4884
      %v4886 = vsub.f32 1.0, %v4885
      %v4887 = vmul.f32 %v4884, %v4886
      %v4888 = vadd.f32 %v4884, %v4887
      %vm4889 = vweird.f32 %v3216
      %vm4890 = vweird.f32 %v4884
      %vm4891 = vmor %vm4889, %vm4890
      %v4892 = vsel %vm4891, %v4884, %v4888
      %v4893 = vand.u32 2147483647, %v3216
      %vm4894 = vcmp.eq.f32.partialorder %v4893, 8.507059e+37
      %v4895 = vand.u32 %v3216, 2147483648
      %v4896 = vor.u32 1.1754944e-38, %v4895
      %v4897 = vsel %vm4894, %v4896, %v4892
      %v4898 = vmul.f32 1.0, %v4897
      %v4899 = vrcp.pop %v3217
      %v4900 = vmul.f32 %v3217, %v4899
      %v4901 = vsub.f32 1.0, %v4900
      %v4902 = vmul.f32 %v4899, %v4901
      %v4903 = vadd.f32 %v4899, %v4902
      %vm4904 = vweird.f32 %v3217
      %vm4905 = vweird.f32 %v4899
      %vm4906 = vmor %vm4904, %vm4905
      %v4907 = vsel %vm4906, %v4899, %v4903
      %v4908 = vand.u32 2147483647, %v3217
      %vm4909 = vcmp.eq.f32.partialorder %v4908, 8.507059e+37
      %v4910 = vand.u32 %v3217, 2147483648
      %v4911 = vor.u32 1.1754944e-38, %v4910
      %v4912 = vsel %vm4909, %v4911, %v4907
      %v4913 = vmul.f32 1.0, %v4912
      %v4914 = vrcp.pop %v3218
      %v4915 = vmul.f32 %v3218, %v4914
      %v4916 = vsub.f32 1.0, %v4915
      %v4917 = vmul.f32 %v4914, %v4916
      %v4918 = vadd.f32 %v4914, %v4917
      %vm4919 = vweird.f32 %v3218
      %vm4920 = vweird.f32 %v4914
      %vm4921 = vmor %vm4919, %vm4920
      %v4922 = vsel %vm4921, %v4914, %v4918
      %v4923 = vand.u32 2147483647, %v3218
      %vm4924 = vcmp.eq.f32.partialorder %v4923, 8.507059e+37
      %v4925 = vand.u32 %v3218, 2147483648
      %v4926 = vor.u32 1.1754944e-38, %v4925
      %v4927 = vsel %vm4924, %v4926, %v4922
      %v4928 = vmul.f32 1.0, %v4927
      %v4929 = vrcp.pop %v3219
      %v4930 = vmul.f32 %v3219, %v4929
      %v4931 = vsub.f32 1.0, %v4930
      %v4932 = vmul.f32 %v4929, %v4931
      %v4933 = vadd.f32 %v4929, %v4932
      %vm4934 = vweird.f32 %v3219
      %vm4935 = vweird.f32 %v4929
      %vm4936 = vmor %vm4934, %vm4935
      %v4937 = vsel %vm4936, %v4929, %v4933
      %v4938 = vand.u32 2147483647, %v3219
      %vm4939 = vcmp.eq.f32.partialorder %v4938, 8.507059e+37
      %v4940 = vand.u32 %v3219, 2147483648
      %v4941 = vor.u32 1.1754944e-38, %v4940
      %v4942 = vsel %vm4939, %v4941, %v4937
      %v4943 = vmul.f32 1.0, %v4942
      %v4944 = vrcp.pop %v3220
      %v4945 = vmul.f32 %v3220, %v4944
      %v4946 = vsub.f32 1.0, %v4945
      %v4947 = vmul.f32 %v4944, %v4946
      %v4948 = vadd.f32 %v4944, %v4947
      %vm4949 = vweird.f32 %v3220
      %vm4950 = vweird.f32 %v4944
      %vm4951 = vmor %vm4949, %vm4950
      %v4952 = vsel %vm4951, %v4944, %v4948
      %v4953 = vand.u32 2147483647, %v3220
      %vm4954 = vcmp.eq.f32.partialorder %v4953, 8.507059e+37
      %v4955 = vand.u32 %v3220, 2147483648
      %v4956 = vor.u32 1.1754944e-38, %v4955
      %v4957 = vsel %vm4954, %v4956, %v4952
      %v4958 = vmul.f32 1.0, %v4957
      %v4959 = vrcp.pop %v3221
      %v4960 = vmul.f32 %v3221, %v4959
      %v4961 = vsub.f32 1.0, %v4960
      %v4962 = vmul.f32 %v4959, %v4961
      %v4963 = vadd.f32 %v4959, %v4962
      %vm4964 = vweird.f32 %v3221
      %vm4965 = vweird.f32 %v4959
      %vm4966 = vmor %vm4964, %vm4965
      %v4967 = vsel %vm4966, %v4959, %v4963
      %v4968 = vand.u32 2147483647, %v3221
      %vm4969 = vcmp.eq.f32.partialorder %v4968, 8.507059e+37
      %v4970 = vand.u32 %v3221, 2147483648
      %v4971 = vor.u32 1.1754944e-38, %v4970
      %v4972 = vsel %vm4969, %v4971, %v4967
      %v4973 = vmul.f32 1.0, %v4972
      %v4974 = vrcp.pop %v3222
      %v4975 = vmul.f32 %v3222, %v4974
      %v4976 = vsub.f32 1.0, %v4975
      %v4977 = vmul.f32 %v4974, %v4976
      %v4978 = vadd.f32 %v4974, %v4977
      %vm4979 = vweird.f32 %v3222
      %vm4980 = vweird.f32 %v4974
      %vm4981 = vmor %vm4979, %vm4980
      %v4982 = vsel %vm4981, %v4974, %v4978
      %v4983 = vand.u32 2147483647, %v3222
      %vm4984 = vcmp.eq.f32.partialorder %v4983, 8.507059e+37
      %v4985 = vand.u32 %v3222, 2147483648
      %v4986 = vor.u32 1.1754944e-38, %v4985
      %v4987 = vsel %vm4984, %v4986, %v4982
      %v4988 = vmul.f32 1.0, %v4987
      %v4989 = vrcp.pop %v3223
      %v4990 = vmul.f32 %v3223, %v4989
      %v4991 = vsub.f32 1.0, %v4990
      %v4992 = vmul.f32 %v4989, %v4991
      %v4993 = vadd.f32 %v4989, %v4992
      %vm4994 = vweird.f32 %v3223
      %vm4995 = vweird.f32 %v4989
      %vm4996 = vmor %vm4994, %vm4995
      %v4997 = vsel %vm4996, %v4989, %v4993
      %v4998 = vand.u32 2147483647, %v3223
      %vm4999 = vcmp.eq.f32.partialorder %v4998, 8.507059e+37
      %v5000 = vand.u32 %v3223, 2147483648
      %v5001 = vor.u32 1.1754944e-38, %v5000
      %v5002 = vsel %vm4999, %v5001, %v4997
      %v5003 = vmul.f32 1.0, %v5002
      %v5004 = vrcp.pop %v3224
      %v5005 = vmul.f32 %v3224, %v5004
      %v5006 = vsub.f32 1.0, %v5005
      %v5007 = vmul.f32 %v5004, %v5006
      %v5008 = vadd.f32 %v5004, %v5007
      %vm5009 = vweird.f32 %v3224
      %vm5010 = vweird.f32 %v5004
      %vm5011 = vmor %vm5009, %vm5010
      %v5012 = vsel %vm5011, %v5004, %v5008
      %v5013 = vand.u32 2147483647, %v3224
      %vm5014 = vcmp.eq.f32.partialorder %v5013, 8.507059e+37
      %v5015 = vand.u32 %v3224, 2147483648
      %v5016 = vor.u32 1.1754944e-38, %v5015
      %v5017 = vsel %vm5014, %v5016, %v5012
      %v5018 = vmul.f32 1.0, %v5017
      %v5019 = vrcp.pop %v3225
      %v5020 = vmul.f32 %v3225, %v5019
      %v5021 = vsub.f32 1.0, %v5020
      %v5022 = vmul.f32 %v5019, %v5021
      %v5023 = vadd.f32 %v5019, %v5022
      %vm5024 = vweird.f32 %v3225
      %vm5025 = vweird.f32 %v5019
      %vm5026 = vmor %vm5024, %vm5025
      %v5027 = vsel %vm5026, %v5019, %v5023
      %v5028 = vand.u32 2147483647, %v3225
      %vm5029 = vcmp.eq.f32.partialorder %v5028, 8.507059e+37
      %v5030 = vand.u32 %v3225, 2147483648
      %v5031 = vor.u32 1.1754944e-38, %v5030
      %v5032 = vsel %vm5029, %v5031, %v5027
      %v5033 = vmul.f32 1.0, %v5032
      %v5034 = vrcp.pop %v3226
      %v5035 = vmul.f32 %v3226, %v5034
      %v5036 = vsub.f32 1.0, %v5035
      %v5037 = vmul.f32 %v5034, %v5036
      %v5038 = vadd.f32 %v5034, %v5037
      %vm5039 = vweird.f32 %v3226
      %vm5040 = vweird.f32 %v5034
      %vm5041 = vmor %vm5039, %vm5040
      %v5042 = vsel %vm5041, %v5034, %v5038
      %v5043 = vand.u32 2147483647, %v3226
      %vm5044 = vcmp.eq.f32.partialorder %v5043, 8.507059e+37
      %v5045 = vand.u32 %v3226, 2147483648
      %v5046 = vor.u32 1.1754944e-38, %v5045
      %v5047 = vsel %vm5044, %v5046, %v5042
      %v5048 = vmul.f32 1.0, %v5047
      %v5049 = vrcp.pop %v3227
      %v5050 = vmul.f32 %v3227, %v5049
      %v5051 = vsub.f32 1.0, %v5050
      %v5052 = vmul.f32 %v5049, %v5051
      %v5053 = vadd.f32 %v5049, %v5052
      %vm5054 = vweird.f32 %v3227
      %vm5055 = vweird.f32 %v5049
      %vm5056 = vmor %vm5054, %vm5055
      %v5057 = vsel %vm5056, %v5049, %v5053
      %v5058 = vand.u32 2147483647, %v3227
      %vm5059 = vcmp.eq.f32.partialorder %v5058, 8.507059e+37
      %v5060 = vand.u32 %v3227, 2147483648
      %v5061 = vor.u32 1.1754944e-38, %v5060
      %v5062 = vsel %vm5059, %v5061, %v5057
      %v5063 = vmul.f32 1.0, %v5062
      %v5064 = vrcp.pop %v3228
      %v5065 = vmul.f32 %v3228, %v5064
      %v5066 = vsub.f32 1.0, %v5065
      %v5067 = vmul.f32 %v5064, %v5066
      %v5068 = vadd.f32 %v5064, %v5067
      %vm5069 = vweird.f32 %v3228
      %vm5070 = vweird.f32 %v5064
      %vm5071 = vmor %vm5069, %vm5070
      %v5072 = vsel %vm5071, %v5064, %v5068
      %v5073 = vand.u32 2147483647, %v3228
      %vm5074 = vcmp.eq.f32.partialorder %v5073, 8.507059e+37
      %v5075 = vand.u32 %v3228, 2147483648
      %v5076 = vor.u32 1.1754944e-38, %v5075
      %v5077 = vsel %vm5074, %v5076, %v5072
      %v5078 = vmul.f32 1.0, %v5077
      %v5079 = vrcp.pop %v3229
      %v5080 = vmul.f32 %v3229, %v5079
      %v5081 = vsub.f32 1.0, %v5080
      %v5082 = vmul.f32 %v5079, %v5081
      %v5083 = vadd.f32 %v5079, %v5082
      %vm5084 = vweird.f32 %v3229
      %vm5085 = vweird.f32 %v5079
      %vm5086 = vmor %vm5084, %vm5085
      %v5087 = vsel %vm5086, %v5079, %v5083
      %v5088 = vand.u32 2147483647, %v3229
      %vm5089 = vcmp.eq.f32.partialorder %v5088, 8.507059e+37
      %v5090 = vand.u32 %v3229, 2147483648
      %v5091 = vor.u32 1.1754944e-38, %v5090
      %v5092 = vsel %vm5089, %v5091, %v5087
      %v5093 = vmul.f32 1.0, %v5092
      %v5094 = vrcp.pop %v3230
      %v5095 = vmul.f32 %v3230, %v5094
      %v5096 = vsub.f32 1.0, %v5095
      %v5097 = vmul.f32 %v5094, %v5096
      %v5098 = vadd.f32 %v5094, %v5097
      %vm5099 = vweird.f32 %v3230
      %vm5100 = vweird.f32 %v5094
      %vm5101 = vmor %vm5099, %vm5100
      %v5102 = vsel %vm5101, %v5094, %v5098
      %v5103 = vand.u32 2147483647, %v3230
      %vm5104 = vcmp.eq.f32.partialorder %v5103, 8.507059e+37
      %v5105 = vand.u32 %v3230, 2147483648
      %v5106 = vor.u32 1.1754944e-38, %v5105
      %v5107 = vsel %vm5104, %v5106, %v5102
      %v5108 = vmul.f32 1.0, %v5107
      %v5109 = vrcp.pop %v3231
      %v5110 = vmul.f32 %v3231, %v5109
      %v5111 = vsub.f32 1.0, %v5110
      %v5112 = vmul.f32 %v5109, %v5111
      %v5113 = vadd.f32 %v5109, %v5112
      %vm5114 = vweird.f32 %v3231
      %vm5115 = vweird.f32 %v5109
      %vm5116 = vmor %vm5114, %vm5115
      %v5117 = vsel %vm5116, %v5109, %v5113
      %v5118 = vand.u32 2147483647, %v3231
      %vm5119 = vcmp.eq.f32.partialorder %v5118, 8.507059e+37
      %v5120 = vand.u32 %v3231, 2147483648
      %v5121 = vor.u32 1.1754944e-38, %v5120
      %v5122 = vsel %vm5119, %v5121, %v5117
      %v5123 = vmul.f32 1.0, %v5122
      %v5124 = vrcp.pop %v3232
      %v5125 = vmul.f32 %v3232, %v5124
      %v5126 = vsub.f32 1.0, %v5125
      %v5127 = vmul.f32 %v5124, %v5126
      %v5128 = vadd.f32 %v5124, %v5127
      %vm5129 = vweird.f32 %v3232
      %vm5130 = vweird.f32 %v5124
      %vm5131 = vmor %vm5129, %vm5130
      %v5132 = vsel %vm5131, %v5124, %v5128
      %v5133 = vand.u32 2147483647, %v3232
      %vm5134 = vcmp.eq.f32.partialorder %v5133, 8.507059e+37
      %v5135 = vand.u32 %v3232, 2147483648
      %v5136 = vor.u32 1.1754944e-38, %v5135
      %v5137 = vsel %vm5134, %v5136, %v5132
      %v5138 = vmul.f32 1.0, %v5137
      %v5139 = vrcp.pop %v3233
      %v5140 = vmul.f32 %v3233, %v5139
      %v5141 = vsub.f32 1.0, %v5140
      %v5142 = vmul.f32 %v5139, %v5141
      %v5143 = vadd.f32 %v5139, %v5142
      %vm5144 = vweird.f32 %v3233
      %vm5145 = vweird.f32 %v5139
      %vm5146 = vmor %vm5144, %vm5145
      %v5147 = vsel %vm5146, %v5139, %v5143
      %v5148 = vand.u32 2147483647, %v3233
      %vm5149 = vcmp.eq.f32.partialorder %v5148, 8.507059e+37
      %v5150 = vand.u32 %v3233, 2147483648
      %v5151 = vor.u32 1.1754944e-38, %v5150
      %v5152 = vsel %vm5149, %v5151, %v5147
      %v5153 = vmul.f32 1.0, %v5152
      %5154 = vst [vmem:[%s175] sm:$0xff] %v3248
      %5155 = vst [vmem:[%s175 + $0x8] sm:$0xff] %v3263
      %5156 = vst [vmem:[%s175 + $0x10] sm:$0xff] %v3278
      %5157 = vst [vmem:[%s175 + $0x18] sm:$0xff] %v3293
      %5158 = vst [vmem:[%s175 + $0x20] sm:$0xff] %v3308
      %5159 = vst [vmem:[%s175 + $0x28] sm:$0xff] %v3323
      %5160 = vst [vmem:[%s175 + $0x30] sm:$0xff] %v3338
      %5161 = vst [vmem:[%s175 + $0x38] sm:$0xff] %v3353
      %5162 = vst [vmem:[%s175 + $0x40] sm:$0xff] %v3368
      %5163 = vst [vmem:[%s175 + $0x48] sm:$0xff] %v3383
      %5164 = vst [vmem:[%s175 + $0x50] sm:$0xff] %v3398
      %5165 = vst [vmem:[%s175 + $0x58] sm:$0xff] %v3413
      %5166 = vst [vmem:[%s175 + $0x60] sm:$0xff] %v3428
      %5167 = vst [vmem:[%s175 + $0x68] sm:$0xff] %v3443
      %5168 = vst [vmem:[%s175 + $0x70] sm:$0xff] %v3458
      %5169 = vst [vmem:[%s175 + $0x78] sm:$0xff] %v3473
      %5170 = vst [vmem:[%s175 + $0x80] sm:$0xff] %v3488
      %5171 = vst [vmem:[%s175 + $0x88] sm:$0xff] %v3503
      %5172 = vst [vmem:[%s175 + $0x90] sm:$0xff] %v3518
      %5173 = vst [vmem:[%s175 + $0x98] sm:$0xff] %v3533
      %5174 = vst [vmem:[%s175 + $0xa0] sm:$0xff] %v3548
      %5175 = vst [vmem:[%s175 + $0xa8] sm:$0xff] %v3563
      %5176 = vst [vmem:[%s175 + $0xb0] sm:$0xff] %v3578
      %5177 = vst [vmem:[%s175 + $0xb8] sm:$0xff] %v3593
      %5178 = vst [vmem:[%s175 + $0xc0] sm:$0xff] %v3608
      %5179 = vst [vmem:[%s175 + $0xc8] sm:$0xff] %v3623
      %5180 = vst [vmem:[%s175 + $0xd0] sm:$0xff] %v3638
      %5181 = vst [vmem:[%s175 + $0xd8] sm:$0xff] %v3653
      %5182 = vst [vmem:[%s175 + $0xe0] sm:$0xff] %v3668
      %5183 = vst [vmem:[%s175 + $0xe8] sm:$0xff] %v3683
      %5184 = vst [vmem:[%s175 + $0xf0] sm:$0xff] %v3698
      %5185 = vst [vmem:[%s175 + $0xf8] sm:$0xff] %v3713
      %5186 = vst [vmem:[%s175 + $0x100] sm:$0xff] %v3728
      %5187 = vst [vmem:[%s175 + $0x108] sm:$0xff] %v3743
      %5188 = vst [vmem:[%s175 + $0x110] sm:$0xff] %v3758
      %5189 = vst [vmem:[%s175 + $0x118] sm:$0xff] %v3773
      %5190 = vst [vmem:[%s175 + $0x120] sm:$0xff] %v3788
      %5191 = vst [vmem:[%s175 + $0x128] sm:$0xff] %v3803
      %5192 = vst [vmem:[%s175 + $0x130] sm:$0xff] %v3818
      %5193 = vst [vmem:[%s175 + $0x138] sm:$0xff] %v3833
      %5194 = vst [vmem:[%s175 + $0x140] sm:$0xff] %v3848
      %5195 = vst [vmem:[%s175 + $0x148] sm:$0xff] %v3863
      %5196 = vst [vmem:[%s175 + $0x150] sm:$0xff] %v3878
      %5197 = vst [vmem:[%s175 + $0x158] sm:$0xff] %v3893
      %5198 = vst [vmem:[%s175 + $0x160] sm:$0xff] %v3908
      %5199 = vst [vmem:[%s175 + $0x168] sm:$0xff] %v3923
      %5200 = vst [vmem:[%s175 + $0x170] sm:$0xff] %v3938
      %5201 = vst [vmem:[%s175 + $0x178] sm:$0xff] %v3953
      %5202 = vst [vmem:[%s175 + $0x180] sm:$0xff] %v3968
      %5203 = vst [vmem:[%s175 + $0x188] sm:$0xff] %v3983
      %5204 = vst [vmem:[%s175 + $0x190] sm:$0xff] %v3998
      %5205 = vst [vmem:[%s175 + $0x198] sm:$0xff] %v4013
      %5206 = vst [vmem:[%s175 + $0x1a0] sm:$0xff] %v4028
      %5207 = vst [vmem:[%s175 + $0x1a8] sm:$0xff] %v4043
      %5208 = vst [vmem:[%s175 + $0x1b0] sm:$0xff] %v4058
      %5209 = vst [vmem:[%s175 + $0x1b8] sm:$0xff] %v4073
      %5210 = vst [vmem:[%s175 + $0x1c0] sm:$0xff] %v4088
      %5211 = vst [vmem:[%s175 + $0x1c8] sm:$0xff] %v4103
      %5212 = vst [vmem:[%s175 + $0x1d0] sm:$0xff] %v4118
      %5213 = vst [vmem:[%s175 + $0x1d8] sm:$0xff] %v4133
      %5214 = vst [vmem:[%s175 + $0x1e0] sm:$0xff] %v4148
      %5215 = vst [vmem:[%s175 + $0x1e8] sm:$0xff] %v4163
      %5216 = vst [vmem:[%s175 + $0x1f0] sm:$0xff] %v4178
      %5217 = vst [vmem:[%s175 + $0x1f8] sm:$0xff] %v4193
      %5218 = vst [vmem:[%s175 + $0x200] sm:$0xff] %v4208
      %5219 = vst [vmem:[%s175 + $0x208] sm:$0xff] %v4223
      %5220 = vst [vmem:[%s175 + $0x210] sm:$0xff] %v4238
      %5221 = vst [vmem:[%s175 + $0x218] sm:$0xff] %v4253
      %5222 = vst [vmem:[%s175 + $0x220] sm:$0xff] %v4268
      %5223 = vst [vmem:[%s175 + $0x228] sm:$0xff] %v4283
      %5224 = vst [vmem:[%s175 + $0x230] sm:$0xff] %v4298
      %5225 = vst [vmem:[%s175 + $0x238] sm:$0xff] %v4313
      %5226 = vst [vmem:[%s175 + $0x240] sm:$0xff] %v4328
      %5227 = vst [vmem:[%s175 + $0x248] sm:$0xff] %v4343
      %5228 = vst [vmem:[%s175 + $0x250] sm:$0xff] %v4358
      %5229 = vst [vmem:[%s175 + $0x258] sm:$0xff] %v4373
      %5230 = vst [vmem:[%s175 + $0x260] sm:$0xff] %v4388
      %5231 = vst [vmem:[%s175 + $0x268] sm:$0xff] %v4403
      %5232 = vst [vmem:[%s175 + $0x270] sm:$0xff] %v4418
      %5233 = vst [vmem:[%s175 + $0x278] sm:$0xff] %v4433
      %5234 = vst [vmem:[%s175 + $0x280] sm:$0xff] %v4448
      %5235 = vst [vmem:[%s175 + $0x288] sm:$0xff] %v4463
      %5236 = vst [vmem:[%s175 + $0x290] sm:$0xff] %v4478
      %5237 = vst [vmem:[%s175 + $0x298] sm:$0xff] %v4493
      %5238 = vst [vmem:[%s175 + $0x2a0] sm:$0xff] %v4508
      %5239 = vst [vmem:[%s175 + $0x2a8] sm:$0xff] %v4523
      %5240 = vst [vmem:[%s175 + $0x2b0] sm:$0xff] %v4538
      %5241 = vst [vmem:[%s175 + $0x2b8] sm:$0xff] %v4553
      %5242 = vst [vmem:[%s175 + $0x2c0] sm:$0xff] %v4568
      %5243 = vst [vmem:[%s175 + $0x2c8] sm:$0xff] %v4583
      %5244 = vst [vmem:[%s175 + $0x2d0] sm:$0xff] %v4598
      %5245 = vst [vmem:[%s175 + $0x2d8] sm:$0xff] %v4613
      %5246 = vst [vmem:[%s175 + $0x2e0] sm:$0xff] %v4628
      %5247 = vst [vmem:[%s175 + $0x2e8] sm:$0xff] %v4643
      %5248 = vst [vmem:[%s175 + $0x2f0] sm:$0xff] %v4658
      %5249 = vst [vmem:[%s175 + $0x2f8] sm:$0xff] %v4673
      %5250 = vst [vmem:[%s175 + $0x300] sm:$0xff] %v4688
      %5251 = vst [vmem:[%s175 + $0x308] sm:$0xff] %v4703
      %5252 = vst [vmem:[%s175 + $0x310] sm:$0xff] %v4718
      %5253 = vst [vmem:[%s175 + $0x318] sm:$0xff] %v4733
      %5254 = vst [vmem:[%s175 + $0x320] sm:$0xff] %v4748
      %5255 = vst [vmem:[%s175 + $0x328] sm:$0xff] %v4763
      %5256 = vst [vmem:[%s175 + $0x330] sm:$0xff] %v4778
      %5257 = vst [vmem:[%s175 + $0x338] sm:$0xff] %v4793
      %5258 = vst [vmem:[%s175 + $0x340] sm:$0xff] %v4808
      %5259 = vst [vmem:[%s175 + $0x348] sm:$0xff] %v4823
      %5260 = vst [vmem:[%s175 + $0x350] sm:$0xff] %v4838
      %5261 = vst [vmem:[%s175 + $0x358] sm:$0xff] %v4853
      %5262 = vst [vmem:[%s175 + $0x360] sm:$0xff] %v4868
      %5263 = vst [vmem:[%s175 + $0x368] sm:$0xff] %v4883
      %5264 = vst [vmem:[%s175 + $0x370] sm:$0xff] %v4898
      %5265 = vst [vmem:[%s175 + $0x378] sm:$0xff] %v4913
      %5266 = vst [vmem:[%s175 + $0x380] sm:$0xff] %v4928
      %5267 = vst [vmem:[%s175 + $0x388] sm:$0xff] %v4943
      %5268 = vst [vmem:[%s175 + $0x390] sm:$0xff] %v4958
      %5269 = vst [vmem:[%s175 + $0x398] sm:$0xff] %v4973
      %5270 = vst [vmem:[%s175 + $0x3a0] sm:$0xff] %v4988
      %5271 = vst [vmem:[%s175 + $0x3a8] sm:$0xff] %v5003
      %5272 = vst [vmem:[%s175 + $0x3b0] sm:$0xff] %v5018
      %5273 = vst [vmem:[%s175 + $0x3b8] sm:$0xff] %v5033
      %5274 = vst [vmem:[%s175 + $0x3c0] sm:$0xff] %v5048
      %5275 = vst [vmem:[%s175 + $0x3c8] sm:$0xff] %v5063
      %5276 = vst [vmem:[%s175 + $0x3d0] sm:$0xff] %v5078
      %5277 = vst [vmem:[%s175 + $0x3d8] sm:$0xff] %v5093
      %5278 = vst [vmem:[%s175 + $0x3e0] sm:$0xff] %v5108
      %5279 = vst [vmem:[%s175 + $0x3e8] sm:$0xff] %v5123
      %5280 = vst [vmem:[%s175 + $0x3f0] sm:$0xff] %v5138
      %5281 = vst [vmem:[%s175 + $0x3f8] sm:$0xff] %v5153
      %s5282 = smul.u32 128, %s14
      %p5283 = scmp.lt.s32.totalorder %s5282, 255
      %s5284 = scalar_select %p5283, %s5282, 255
      %s5285 = smul.addr %s5284, 8
      %s5286 = scalar_lea.vmem %s3, %s5285
      // Predicated region
      $region33: #{image_decoder64.9} parent=31 // pred_check
        %p5287 = pneg %p100
      $region34: #{image_decoder64.9} parent=31 // pred_check_branch
        %5289 = sbr.rel (%p5287) target = $region36
      $region35: #{image_decoder64.9} parent=31 // pred_region
        %s5290 = smul.u32 128, %s14
      $region36: #{image_decoder64.9} parent=31 // pred_fallthru
        _
    $region32: #{image_decoder64.9} parent=5 // pred_fallthru
      _
    %p5291 = scmp.le.s32.totalorder 2, %s9
    // Predicated region
    $region37: #{image_decoder64.9} parent=5 // pred_check
      %p5292 = pneg %p5291
    $region38: #{image_decoder64.9} parent=5 // pred_check_branch
      %5294 = sbr.rel (%p5292) target = $region40
    $region39: #{image_decoder64.9} parent=5 // pred_region
      %s5295 = ssub.s32 %s9, 2
      // Predicated region
      $region41: #{image_decoder64.9} parent=39 // pred_check
        %p5296 = pneg %p106
      $region42: #{image_decoder64.9} parent=39 // pred_check_branch
        %5298 = sbr.rel (%p5296) target = $region44
      $region43: #{image_decoder64.9} parent=39 // pred_region
        %s5299 = smul.u32 128, %s15
        %p5300 = scmp.lt.s32.totalorder %s5299, 255
        %s5301 = scalar_select %p5300, %s5299, 255
        %s5302 = smul.addr %s5301, 8
        %s5303 = scalar_lea.vmem %s3, %s5302
      $region44: #{image_decoder64.9} parent=39 // pred_fallthru
        _
    $region40: #{image_decoder64.9} parent=5 // pred_fallthru
      _
  $region6: #{image_decoder64.9} parent=0 // loop_footer
    %s13 = sadd.s32 1, %s9
  $region7: #{image_decoder64.9} parent=0 // loop_footer_branch
    %8 = sbr.rel target = $region3
  $region8: #{image_decoder64.9} parent=0 // loop_exit
    _

</llo_original>
